<compile_context>
chip_gen: v7x
topology: tpu7x:2x2x1
jax: 0.10.0
libtpu: 0.0.40
codegen_flags: <defaults>
</compile_context>

<pallas_src>
import functools

import jax
import jax.numpy as jnp
from jax import lax
from jax.experimental import pallas as pl
from jax.experimental.pallas import tpu as pltpu

NEG_SLOPE = 0.2
BN_EPS = 1e-5
LANE = 128


def _round_up(x, m):
    return (x + m - 1) // m * m


def _leaky(y):
    return jnp.where(y > 0, y, NEG_SLOPE * y)


# ------------------------------ fused kernel ------------------------------- #

def _conv3x3_taps(src_pad_ref, w_ref, Ho, Wo, stride):
    """3x3 'same' conv from a 1-px halo-padded VMEM ref as 9 accumulated tap matmuls.

    src_pad_ref: (Hs+2, Ws+2, C) f32, zero halo ring.
    w_ref:       (9*C, Kp) bf16, row block t = weights of tap t (dy, dx) = divmod(t, 3).
    Returns:     (Ho*Wo, Kp) f32 accumulator.
    """
    C = src_pad_ref.shape[-1]
    HW = Ho * Wo
    acc = None
    for t in range(9):
        dy, dx = divmod(t, 3)
        if stride == 1:
            tap = src_pad_ref[dy:dy + Ho, dx:dx + Wo, :]
        else:
            tap = src_pad_ref[pl.ds(dy, Ho, stride=stride),
                              pl.ds(dx, Wo, stride=stride), :]
        d = jnp.dot(tap.reshape(HW, C).astype(jnp.bfloat16),
                    w_ref[t * C:(t + 1) * C, :],
                    preferred_element_type=jnp.float32)
        acc = d if acc is None else acc + d
    return acc


def _resblock_body(x_ref, w1_ref, s1_ref, b1_ref, w2_ref, s2_ref, b2_ref,
                   wsc_ref, ssc_ref, bsc_ref, o_ref, xpad, y1pad, stride):
    H, W, Cp = x_ref.shape            # lane-dense (Cp = round_up(Cin, 128))
    Ho, Wo, Cout = o_ref.shape        # true output channel count
    Kp = y1pad.shape[-1]              # lane-padded intermediate channels
    HW = Ho * Wo

    # Zero the halo buffers exactly once; border ring + pad lanes stay zero because
    # only the interior (full lane width) is overwritten on every grid step.
    @pl.when(pl.program_id(0) == 0)
    def _init():
        xpad[...] = jnp.zeros_like(xpad)
        y1pad[...] = jnp.zeros_like(y1pad)

    # interior fill of the input halo buffer (unmasked: x_ref is already lane-dense)
    xpad[1:H + 1, 1:W + 1, :] = x_ref[...]

    # conv1 (strided) + folded BN1 + LeakyReLU   (padded output lanes stay exactly 0)
    y1 = _conv3x3_taps(xpad, w1_ref, Ho, Wo, stride)
    y1 = _leaky(y1 * s1_ref[...] + b1_ref[...])

    # halo for conv2 (stays in VMEM)
    y1pad[1:Ho + 1, 1:Wo + 1, :] = y1.reshape(Ho, Wo, Kp)

    # conv2 + folded BN2
    y2 = _conv3x3_taps(y1pad, w2_ref, Ho, Wo, 1)
    y2 = y2 * s2_ref[...] + b2_ref[...]

    # shortcut: 1x1 (strided) projection + BN, or identity.  A 1x1 conv needs no halo,
    # so read the un-padded input block directly.
    if wsc_ref is not None:
        if stride == 1:
            xs = x_ref[...]
        else:
            xs = x_ref[pl.ds(0, Ho, stride=stride), pl.ds(0, Wo, stride=stride), :]
        sc = jnp.dot(xs.reshape(HW, Cp).astype(jnp.bfloat16), wsc_ref[...],
                     preferred_element_type=jnp.float32)
        sc = sc * ssc_ref[...] + bsc_ref[...]
    else:
        # identity shortcut: wrapper asserts stride == 1 and Cin == Cout (so Cp == Kp);
        # padded lanes of x are zero, matching y2's zero padded lanes.
        sc = x_ref[...].reshape(HW, Cp)

    out = _leaky(y2 + sc)
    # write only the Cout lanes actually needed to HBM
    o_ref[...] = out.reshape(Ho, Wo, Kp)[:, :, :Cout].astype(o_ref.dtype)


def _resblock_proj_kernel(x_ref, w1_ref, s1_ref, b1_ref, w2_ref, s2_ref, b2_ref,
                          wsc_ref, ssc_ref, bsc_ref, o_ref, xpad, y1pad, *, stride):
    _resblock_body(x_ref, w1_ref, s1_ref, b1_ref, w2_ref, s2_ref, b2_ref,
                   wsc_ref, ssc_ref, bsc_ref, o_ref, xpad, y1pad, stride)


def _resblock_id_kernel(x_ref, w1_ref, s1_ref, b1_ref, w2_ref, s2_ref, b2_ref,
                        o_ref, xpad, y1pad, *, stride):
    _resblock_body(x_ref, w1_ref, s1_ref, b1_ref, w2_ref, s2_ref, b2_ref,
                   None, None, None, o_ref, xpad, y1pad, stride)


# ------------------------------ module wrapper ------------------------------ #

def residual_block(x_nchw, params, stride=1):
    """Forward pass of ResidualBlock (PyTorch NCHW in/out).

    BatchNorm is inference-mode only: running statistics and affine parameters must
    already be folded into per-channel (scale, bias) in `params`.
    """
    N, Cin, H, W = x_nchw.shape
    Cout = params["w1"].shape[-1]
    Cp = _round_up(Cin, LANE)    # lane-padded input channels (kernel-internal)
    Kp = _round_up(Cout, LANE)   # lane-padded intermediate channels (kernel-internal)
    Ho = (H - 1) // stride + 1
    Wo = (W - 1) // stride + 1
    has_proj = params["wsc"] is not None
    if not has_proj:
        assert stride == 1 and Cin == Cout, (
            "identity shortcut requires stride == 1 and in_channels == out_channels")

    # NCHW -> NHWC with the channel pad folded in (one fused XLA pad+transpose),
    # so the kernel input block and the halo interior fill are lane-dense.
    x = jnp.transpose(x_nchw, (0, 2, 3, 1)).astype(jnp.float32)
    if Cp != Cin:
        x = jnp.pad(x, ((0, 0), (0, 0), (0, 0), (0, Cp - Cin)))

    def pad_vec(v):
        return jnp.pad(v.astype(jnp.float32), (0, Kp - v.shape[0])).reshape(1, Kp)

    # weights: HWIO, zero-padded to lane width, flattened to tap-major (9*C, Kp), bf16
    w1 = jnp.pad(params["w1"], ((0, 0), (0, 0), (0, Cp - Cin), (0, Kp - Cout)))
    w1 = w1.reshape(9 * Cp, Kp).astype(jnp.bfloat16)
    w2 = jnp.pad(params["w2"], ((0, 0), (0, 0), (0, Kp - Cout), (0, Kp - Cout)))
    w2 = w2.reshape(9 * Kp, Kp).astype(jnp.bfloat16)
    s1, b1 = pad_vec(params["s1"]), pad_vec(params["b1"])
    s2, b2 = pad_vec(params["s2"]), pad_vec(params["b2"])

    inputs = [x, w1, s1, b1, w2, s2, b2]
    in_specs = [
        pl.BlockSpec((None, H, W, Cp), lambda n: (n, 0, 0, 0)),
        pl.BlockSpec((9 * Cp, Kp), lambda n: (0, 0)),
        pl.BlockSpec((1, Kp), lambda n: (0, 0)),
        pl.BlockSpec((1, Kp), lambda n: (0, 0)),
        pl.BlockSpec((9 * Kp, Kp), lambda n: (0, 0)),
        pl.BlockSpec((1, Kp), lambda n: (0, 0)),
        pl.BlockSpec((1, Kp), lambda n: (0, 0)),
    ]
    if has_proj:
        wsc = jnp.pad(params["wsc"], ((0, Cp - Cin), (0, Kp - Cout))).astype(jnp.bfloat16)
        inputs += [wsc, pad_vec(params["ssc"]), pad_vec(params["bsc"])]
        in_specs += [
            pl.BlockSpec((Cp, Kp), lambda n: (0, 0)),
            pl.BlockSpec((1, Kp), lambda n: (0, 0)),
            pl.BlockSpec((1, Kp), lambda n: (0, 0)),
        ]
        kernel = functools.partial(_resblock_proj_kernel, stride=stride)
    else:
        kernel = functools.partial(_resblock_id_kernel, stride=stride)

    out = pl.pallas_call(
        kernel,
        out_shape=jax.ShapeDtypeStruct((N, Ho, Wo, Cout), jnp.float32),
        grid=(N,),
        in_specs=in_specs,
        out_specs=pl.BlockSpec((None, Ho, Wo, Cout), lambda n: (n, 0, 0, 0)),
        scratch_shapes=[
            pltpu.VMEM((H + 2, W + 2, Cp), jnp.float32),    # halo-padded input
            pltpu.VMEM((Ho + 2, Wo + 2, Kp), jnp.float32),  # halo-padded conv1 output
        ],
        compiler_params=pltpu.CompilerParams(dimension_semantics=("parallel",)),
    )(*inputs)

    return jnp.transpose(out, (0, 3, 1, 2))  # NHWC -> NCHW


# ----------------------------- params / reference --------------------------- #

def make_params(key, cin, cout, stride):
    keys = jax.random.split(key, 16)

    def bn_fold(k0, c):
        gamma = 1.0 + 0.1 * jax.random.normal(keys[k0], (c,), jnp.float32)
        beta = 0.1 * jax.random.normal(keys[k0 + 1], (c,), jnp.float32)
        mean = 0.1 * jax.random.normal(keys[k0 + 2], (c,), jnp.float32)
        var = 1.0 + 0.5 * jax.random.uniform(keys[k0 + 3], (c,), jnp.float32)
        scale = gamma / jnp.sqrt(var + BN_EPS)
        bias = beta - mean * scale
        return scale, bias

    w1 = 0.1 * jax.random.normal(keys[0], (3, 3, cin, cout), jnp.float32)   # HWIO
    w2 = 0.1 * jax.random.normal(keys[1], (3, 3, cout, cout), jnp.float32)  # HWIO
    s1, b1 = bn_fold(2, cout)
    s2, b2 = bn_fold(6, cout)
    p = dict(w1=w1, w2=w2, s1=s1, b1=b1, s2=s2, b2=b2, wsc=None, ssc=None, bsc=None)
    if stride != 1 or cin != cout:
        p["wsc"] = 0.1 * jax.random.normal(keys[10], (cin, cout), jnp.float32)
        p["ssc"], p["bsc"] = bn_fold(11, cout)
    return p


def reference(x_nchw, params, stride):
    """Pure-JAX reference (lax.conv) for correctness checking."""
    x = jnp.transpose(x_nchw, (0, 2, 3, 1))
    dn = ("NHWC", "HWIO", "NHWC")
    out = lax.conv_general_dilated(x, params["w1"], (stride, stride),
                                   [(1, 1), (1, 1)], dimension_numbers=dn)
    out = out * params["s1"] + params["b1"]
    out = jnp.where(out > 0, out, NEG_SLOPE * out)
    out = lax.conv_general_dilated(out, params["w2"], (1, 1),
                                   [(1, 1), (1, 1)], dimension_numbers=dn)
    out = out * params["s2"] + params["b2"]
    if params["wsc"] is not None:
        wsc = params["wsc"].reshape(1, 1, *params["wsc"].shape)
        sc = lax.conv_general_dilated(x, wsc, (stride, stride),
                                      [(0, 0), (0, 0)], dimension_numbers=dn)
        sc = sc * params["ssc"] + params["bsc"]
    else:
        sc = x
    out = out + sc
    out = jnp.where(out > 0, out, NEG_SLOPE * out)
    return jnp.transpose(out, (0, 3, 1, 2))


if __name__ == "__main__":
    key = jax.random.PRNGKey(0)
    kx1, kx3, kp1, kp2, kp3 = jax.random.split(key, 5)

    # Case 1: in=4 -> out=8, stride=1 (projection shortcut, channels change).
    x = jax.random.normal(kx1, (2, 4, 16, 16), jnp.float32)
    params1 = make_params(kp1, 4, 8, stride=1)
    y1 = jax.block_until_ready(residual_block(x, params1, stride=1))
    r1 = jax.block_until_ready(reference(x, params1, stride=1))
    assert y1.shape == (2, 8, 16, 16)
    assert jnp.allclose(y1, r1, atol=2e-2, rtol=2e-2), float(jnp.max(jnp.abs(y1 - r1)))

    # Case 2: in=4 -> out=8, stride=2 (strided conv + strided 1x1 shortcut).
    params2 = make_params(kp2, 4, 8, stride=2)
    y2 = jax.block_until_ready(residual_block(x, params2, stride=2))
    r2 = jax.block_until_ready(reference(x, params2, stride=2))
    assert y2.shape == (2, 8, 8, 8)
    assert jnp.allclose(y2, r2, atol=2e-2, rtol=2e-2), float(jnp.max(jnp.abs(y2 - r2)))

    # Case 3: in=8 -> out=8, stride=1 (identity shortcut).
    x3 = jax.random.normal(kx3, (2, 8, 16, 16), jnp.float32)
    params3 = make_params(kp3, 8, 8, stride=1)
    y3 = jax.block_until_ready(residual_block(x3, params3, stride=1))
    r3 = jax.block_until_ready(reference(x3, params3, stride=1))
    assert y3.shape == (2, 8, 16, 16)
    assert jnp.allclose(y3, r3, atol=2e-2, rtol=2e-2), float(jnp.max(jnp.abs(y3 - r3)))

    print("KERNEL_OK")
</pallas_src>

<mosaic_0001>
module attributes {stable_mosaic.version = 11 : i64} {
  func.func @_resblock_proj_kernel(%arg0: i32, %arg1: memref<1x16x16x128xf32, #tpu.memory_space<vmem>>, %arg2: memref<1152x128xbf16, #tpu.memory_space<vmem>>, %arg3: memref<1x128xf32, #tpu.memory_space<vmem>>, %arg4: memref<1x128xf32, #tpu.memory_space<vmem>>, %arg5: memref<1152x128xbf16, #tpu.memory_space<vmem>>, %arg6: memref<1x128xf32, #tpu.memory_space<vmem>>, %arg7: memref<1x128xf32, #tpu.memory_space<vmem>>, %arg8: memref<128x128xbf16, #tpu.memory_space<vmem>>, %arg9: memref<1x128xf32, #tpu.memory_space<vmem>>, %arg10: memref<1x128xf32, #tpu.memory_space<vmem>>, %arg11: memref<1x16x16x8xf32, #tpu.memory_space<vmem>>, %arg12: memref<18x18x128xf32, #tpu.memory_space<vmem>>, %arg13: memref<18x18x128xf32, #tpu.memory_space<vmem>>) attributes {dimension_semantics = [#tpu.dimension_semantics<parallel>], iteration_bounds = array<i64: 2>, scalar_prefetch = 0 : i64, scratch_operands = 2 : i64, tpu.core_type = #tpu.core_type<tc>, window_params = [{transform_indices = @transform_0, window_bounds = array<i64: 1, 16, 16, 128>}, {pipeline_mode = #tpu.pipeline_mode<synchronous>, transform_indices = @transform_1, window_bounds = array<i64: 1152, 128>}, {pipeline_mode = #tpu.pipeline_mode<synchronous>, transform_indices = @transform_2, window_bounds = array<i64: 1, 128>}, {pipeline_mode = #tpu.pipeline_mode<synchronous>, transform_indices = @transform_3, window_bounds = array<i64: 1, 128>}, {pipeline_mode = #tpu.pipeline_mode<synchronous>, transform_indices = @transform_4, window_bounds = array<i64: 1152, 128>}, {pipeline_mode = #tpu.pipeline_mode<synchronous>, transform_indices = @transform_5, window_bounds = array<i64: 1, 128>}, {pipeline_mode = #tpu.pipeline_mode<synchronous>, transform_indices = @transform_6, window_bounds = array<i64: 1, 128>}, {pipeline_mode = #tpu.pipeline_mode<synchronous>, transform_indices = @transform_7, window_bounds = array<i64: 128, 128>}, {pipeline_mode = #tpu.pipeline_mode<synchronous>, transform_indices = @transform_8, window_bounds = array<i64: 1, 128>}, {pipeline_mode = #tpu.pipeline_mode<synchronous>, transform_indices = @transform_9, window_bounds = array<i64: 1, 128>}, {transform_indices = @transform_10, window_bounds = array<i64: 1, 16, 16, 8>}]} {
    %c0_i32 = arith.constant 0 : i32
    %0 = arith.cmpi eq, %arg0, %c0_i32 : i32
    %1 = arith.extui %0 : i1 to i32
    %c0_i32_0 = arith.constant 0 : i32
    %2 = arith.cmpi ne, %1, %c0_i32_0 : i32
    scf.if %2 {
      %cst_134 = arith.constant 0.000000e+00 : f32
      %154 = vector.broadcast %cst_134 : f32 to vector<18x18x128xf32>
      %c0_135 = arith.constant 0 : index
      %c0_136 = arith.constant 0 : index
      %c0_137 = arith.constant 0 : index
      %155 = vector.load %arg12[%c0_135, %c0_136, %c0_137] : memref<18x18x128xf32, #tpu.memory_space<vmem>>, vector<18x18x128xf32>
      tpu.vector_store %arg12[%c0_135, %c0_136, %c0_137], %154 {strides = array<i32>} : memref<18x18x128xf32, #tpu.memory_space<vmem>>, vector<18x18x128xf32>,
      %cst_138 = arith.constant 0.000000e+00 : f32
      %156 = vector.broadcast %cst_138 : f32 to vector<18x18x128xf32>
      %c0_139 = arith.constant 0 : index
      %c0_140 = arith.constant 0 : index
      %c0_141 = arith.constant 0 : index
      %157 = vector.load %arg13[%c0_139, %c0_140, %c0_141] : memref<18x18x128xf32, #tpu.memory_space<vmem>>, vector<18x18x128xf32>
      tpu.vector_store %arg13[%c0_139, %c0_140, %c0_141], %156 {strides = array<i32>} : memref<18x18x128xf32, #tpu.memory_space<vmem>>, vector<18x18x128xf32>,
    } else {
    }
    %c0 = arith.constant 0 : index
    %c0_1 = arith.constant 0 : index
    %c0_2 = arith.constant 0 : index
    %c0_3 = arith.constant 0 : index
    %3 = vector.load %arg1[%c0, %c0_1, %c0_2, %c0_3] : memref<1x16x16x128xf32, #tpu.memory_space<vmem>>, vector<1x16x16x128xf32>
    %4 = vector.shape_cast %3 : vector<1x16x16x128xf32> to vector<16x16x128xf32>
    %c1 = arith.constant 1 : index
    %c1_4 = arith.constant 1 : index
    %c0_5 = arith.constant 0 : index
    %5 = vector.load %arg12[%c1, %c1_4, %c0_5] : memref<18x18x128xf32, #tpu.memory_space<vmem>>, vector<16x16x128xf32>
    tpu.vector_store %arg12[%c1, %c1_4, %c0_5], %4 {strides = array<i32>} : memref<18x18x128xf32, #tpu.memory_space<vmem>>, vector<16x16x128xf32>,
    %c0_6 = arith.constant 0 : index
    %c0_7 = arith.constant 0 : index
    %c0_8 = arith.constant 0 : index
    %6 = vector.load %arg12[%c0_6, %c0_7, %c0_8] : memref<18x18x128xf32, #tpu.memory_space<vmem>>, vector<16x16x128xf32>
    %7 = vector.shape_cast %6 : vector<16x16x128xf32> to vector<256x128xf32>
    %8 = arith.truncf %7 : vector<256x128xf32> to vector<256x128xbf16>
    %c0_9 = arith.constant 0 : index
    %c0_10 = arith.constant 0 : index
    %9 = vector.load %arg2[%c0_9, %c0_10] : memref<1152x128xbf16, #tpu.memory_space<vmem>>, vector<128x128xbf16>
    %cst = arith.constant dense<0.000000e+00> : vector<256x128xf32>
    %10 = tpu.matmul %8, %9, %cst {dimension_numbers = #tpu.dot_dimension_numbers<[1], [0], [0], [1], [0, 0, 1, 1], [], []>} : vector<256x128xbf16>, vector<128x128xbf16>, vector<256x128xf32> -> vector<256x128xf32>
    %c0_11 = arith.constant 0 : index
    %c1_12 = arith.constant 1 : index
    %c0_13 = arith.constant 0 : index
    %11 = vector.load %arg12[%c0_11, %c1_12, %c0_13] : memref<18x18x128xf32, #tpu.memory_space<vmem>>, vector<16x16x128xf32>
    %12 = vector.shape_cast %11 : vector<16x16x128xf32> to vector<256x128xf32>
    %13 = arith.truncf %12 : vector<256x128xf32> to vector<256x128xbf16>
    %c128 = arith.constant 128 : index
    %c0_14 = arith.constant 0 : index
    %14 = vector.load %arg2[%c128, %c0_14] : memref<1152x128xbf16, #tpu.memory_space<vmem>>, vector<128x128xbf16>
    %cst_15 = arith.constant dense<0.000000e+00> : vector<256x128xf32>
    %15 = tpu.matmul %13, %14, %cst_15 {dimension_numbers = #tpu.dot_dimension_numbers<[1], [0], [0], [1], [0, 0, 1, 1], [], []>} : vector<256x128xbf16>, vector<128x128xbf16>, vector<256x128xf32> -> vector<256x128xf32>
    %16 = arith.addf %10, %15 : vector<256x128xf32>
    %c0_16 = arith.constant 0 : index
    %c2 = arith.constant 2 : index
    %c0_17 = arith.constant 0 : index
    %17 = vector.load %arg12[%c0_16, %c2, %c0_17] : memref<18x18x128xf32, #tpu.memory_space<vmem>>, vector<16x16x128xf32>
    %18 = vector.shape_cast %17 : vector<16x16x128xf32> to vector<256x128xf32>
    %19 = arith.truncf %18 : vector<256x128xf32> to vector<256x128xbf16>
    %c256 = arith.constant 256 : index
    %c0_18 = arith.constant 0 : index
    %20 = vector.load %arg2[%c256, %c0_18] : memref<1152x128xbf16, #tpu.memory_space<vmem>>, vector<128x128xbf16>
    %cst_19 = arith.constant dense<0.000000e+00> : vector<256x128xf32>
    %21 = tpu.matmul %19, %20, %cst_19 {dimension_numbers = #tpu.dot_dimension_numbers<[1], [0], [0], [1], [0, 0, 1, 1], [], []>} : vector<256x128xbf16>, vector<128x128xbf16>, vector<256x128xf32> -> vector<256x128xf32>
    %22 = arith.addf %16, %21 : vector<256x128xf32>
    %c1_20 = arith.constant 1 : index
    %c0_21 = arith.constant 0 : index
    %c0_22 = arith.constant 0 : index
    %23 = vector.load %arg12[%c1_20, %c0_21, %c0_22] : memref<18x18x128xf32, #tpu.memory_space<vmem>>, vector<16x16x128xf32>
    %24 = vector.shape_cast %23 : vector<16x16x128xf32> to vector<256x128xf32>
    %25 = arith.truncf %24 : vector<256x128xf32> to vector<256x128xbf16>
    %c384 = arith.constant 384 : index
    %c0_23 = arith.constant 0 : index
    %26 = vector.load %arg2[%c384, %c0_23] : memref<1152x128xbf16, #tpu.memory_space<vmem>>, vector<128x128xbf16>
    %cst_24 = arith.constant dense<0.000000e+00> : vector<256x128xf32>
    %27 = tpu.matmul %25, %26, %cst_24 {dimension_numbers = #tpu.dot_dimension_numbers<[1], [0], [0], [1], [0, 0, 1, 1], [], []>} : vector<256x128xbf16>, vector<128x128xbf16>, vector<256x128xf32> -> vector<256x128xf32>
    %28 = arith.addf %22, %27 : vector<256x128xf32>
    %c1_25 = arith.constant 1 : index
    %c1_26 = arith.constant 1 : index
    %c0_27 = arith.constant 0 : index
    %29 = vector.load %arg12[%c1_25, %c1_26, %c0_27] : memref<18x18x128xf32, #tpu.memory_space<vmem>>, vector<16x16x128xf32>
    %30 = vector.shape_cast %29 : vector<16x16x128xf32> to vector<256x128xf32>
    %31 = arith.truncf %30 : vector<256x128xf32> to vector<256x128xbf16>
    %c512 = arith.constant 512 : index
    %c0_28 = arith.constant 0 : index
    %32 = vector.load %arg2[%c512, %c0_28] : memref<1152x128xbf16, #tpu.memory_space<vmem>>, vector<128x128xbf16>
    %cst_29 = arith.constant dense<0.000000e+00> : vector<256x128xf32>
    %33 = tpu.matmul %31, %32, %cst_29 {dimension_numbers = #tpu.dot_dimension_numbers<[1], [0], [0], [1], [0, 0, 1, 1], [], []>} : vector<256x128xbf16>, vector<128x128xbf16>, vector<256x128xf32> -> vector<256x128xf32>
    %34 = arith.addf %28, %33 : vector<256x128xf32>
    %c1_30 = arith.constant 1 : index
    %c2_31 = arith.constant 2 : index
    %c0_32 = arith.constant 0 : index
    %35 = vector.load %arg12[%c1_30, %c2_31, %c0_32] : memref<18x18x128xf32, #tpu.memory_space<vmem>>, vector<16x16x128xf32>
    %36 = vector.shape_cast %35 : vector<16x16x128xf32> to vector<256x128xf32>
    %37 = arith.truncf %36 : vector<256x128xf32> to vector<256x128xbf16>
    %c640 = arith.constant 640 : index
    %c0_33 = arith.constant 0 : index
    %38 = vector.load %arg2[%c640, %c0_33] : memref<1152x128xbf16, #tpu.memory_space<vmem>>, vector<128x128xbf16>
    %cst_34 = arith.constant dense<0.000000e+00> : vector<256x128xf32>
    %39 = tpu.matmul %37, %38, %cst_34 {dimension_numbers = #tpu.dot_dimension_numbers<[1], [0], [0], [1], [0, 0, 1, 1], [], []>} : vector<256x128xbf16>, vector<128x128xbf16>, vector<256x128xf32> -> vector<256x128xf32>
    %40 = arith.addf %34, %39 : vector<256x128xf32>
    %c2_35 = arith.constant 2 : index
    %c0_36 = arith.constant 0 : index
    %c0_37 = arith.constant 0 : index
    %41 = vector.load %arg12[%c2_35, %c0_36, %c0_37] : memref<18x18x128xf32, #tpu.memory_space<vmem>>, vector<16x16x128xf32>
    %42 = vector.shape_cast %41 : vector<16x16x128xf32> to vector<256x128xf32>
    %43 = arith.truncf %42 : vector<256x128xf32> to vector<256x128xbf16>
    %c768 = arith.constant 768 : index
    %c0_38 = arith.constant 0 : index
    %44 = vector.load %arg2[%c768, %c0_38] : memref<1152x128xbf16, #tpu.memory_space<vmem>>, vector<128x128xbf16>
    %cst_39 = arith.constant dense<0.000000e+00> : vector<256x128xf32>
    %45 = tpu.matmul %43, %44, %cst_39 {dimension_numbers = #tpu.dot_dimension_numbers<[1], [0], [0], [1], [0, 0, 1, 1], [], []>} : vector<256x128xbf16>, vector<128x128xbf16>, vector<256x128xf32> -> vector<256x128xf32>
    %46 = arith.addf %40, %45 : vector<256x128xf32>
    %c2_40 = arith.constant 2 : index
    %c1_41 = arith.constant 1 : index
    %c0_42 = arith.constant 0 : index
    %47 = vector.load %arg12[%c2_40, %c1_41, %c0_42] : memref<18x18x128xf32, #tpu.memory_space<vmem>>, vector<16x16x128xf32>
    %48 = vector.shape_cast %47 : vector<16x16x128xf32> to vector<256x128xf32>
    %49 = arith.truncf %48 : vector<256x128xf32> to vector<256x128xbf16>
    %c896 = arith.constant 896 : index
    %c0_43 = arith.constant 0 : index
    %50 = vector.load %arg2[%c896, %c0_43] : memref<1152x128xbf16, #tpu.memory_space<vmem>>, vector<128x128xbf16>
    %cst_44 = arith.constant dense<0.000000e+00> : vector<256x128xf32>
    %51 = tpu.matmul %49, %50, %cst_44 {dimension_numbers = #tpu.dot_dimension_numbers<[1], [0], [0], [1], [0, 0, 1, 1], [], []>} : vector<256x128xbf16>, vector<128x128xbf16>, vector<256x128xf32> -> vector<256x128xf32>
    %52 = arith.addf %46, %51 : vector<256x128xf32>
    %c2_45 = arith.constant 2 : index
    %c2_46 = arith.constant 2 : index
    %c0_47 = arith.constant 0 : index
    %53 = vector.load %arg12[%c2_45, %c2_46, %c0_47] : memref<18x18x128xf32, #tpu.memory_space<vmem>>, vector<16x16x128xf32>
    %54 = vector.shape_cast %53 : vector<16x16x128xf32> to vector<256x128xf32>
    %55 = arith.truncf %54 : vector<256x128xf32> to vector<256x128xbf16>
    %c1024 = arith.constant 1024 : index
    %c0_48 = arith.constant 0 : index
    %56 = vector.load %arg2[%c1024, %c0_48] : memref<1152x128xbf16, #tpu.memory_space<vmem>>, vector<128x128xbf16>
    %cst_49 = arith.constant dense<0.000000e+00> : vector<256x128xf32>
    %57 = tpu.matmul %55, %56, %cst_49 {dimension_numbers = #tpu.dot_dimension_numbers<[1], [0], [0], [1], [0, 0, 1, 1], [], []>} : vector<256x128xbf16>, vector<128x128xbf16>, vector<256x128xf32> -> vector<256x128xf32>
    %58 = arith.addf %52, %57 : vector<256x128xf32>
    %c0_50 = arith.constant 0 : index
    %c0_51 = arith.constant 0 : index
    %59 = vector.load %arg3[%c0_50, %c0_51] : memref<1x128xf32, #tpu.memory_space<vmem>>, vector<1x128xf32>
    %60 = vector.broadcast %59 : vector<1x128xf32> to vector<256x128xf32>
    %61 = arith.mulf %58, %60 : vector<256x128xf32>
    %c0_52 = arith.constant 0 : index
    %c0_53 = arith.constant 0 : index
    %62 = vector.load %arg4[%c0_52, %c0_53] : memref<1x128xf32, #tpu.memory_space<vmem>>, vector<1x128xf32>
    %63 = vector.broadcast %62 : vector<1x128xf32> to vector<256x128xf32>
    %64 = arith.addf %61, %63 : vector<256x128xf32>
    %cst_54 = arith.constant 0.000000e+00 : f32
    %65 = vector.broadcast %cst_54 : f32 to vector<256x128xf32>
    %66 = arith.cmpf ogt, %64, %65 : vector<256x128xf32>
    %cst_55 = arith.constant 2.000000e-01 : f32
    %67 = vector.broadcast %cst_55 : f32 to vector<256x128xf32>
    %68 = arith.mulf %67, %64 : vector<256x128xf32>
    %69 = arith.select %66, %64, %68 : vector<256x128xi1>, vector<256x128xf32>
    %70 = vector.shape_cast %69 : vector<256x128xf32> to vector<16x16x128xf32>
    %c1_56 = arith.constant 1 : index
    %c1_57 = arith.constant 1 : index
    %c0_58 = arith.constant 0 : index
    %71 = vector.load %arg13[%c1_56, %c1_57, %c0_58] : memref<18x18x128xf32, #tpu.memory_space<vmem>>, vector<16x16x128xf32>
    tpu.vector_store %arg13[%c1_56, %c1_57, %c0_58], %70 {strides = array<i32>} : memref<18x18x128xf32, #tpu.memory_space<vmem>>, vector<16x16x128xf32>,
    %c0_59 = arith.constant 0 : index
    %c0_60 = arith.constant 0 : index
    %c0_61 = arith.constant 0 : index
    %72 = vector.load %arg13[%c0_59, %c0_60, %c0_61] : memref<18x18x128xf32, #tpu.memory_space<vmem>>, vector<16x16x128xf32>
    %73 = vector.shape_cast %72 : vector<16x16x128xf32> to vector<256x128xf32>
    %74 = arith.truncf %73 : vector<256x128xf32> to vector<256x128xbf16>
    %c0_62 = arith.constant 0 : index
    %c0_63 = arith.constant 0 : index
    %75 = vector.load %arg5[%c0_62, %c0_63] : memref<1152x128xbf16, #tpu.memory_space<vmem>>, vector<128x128xbf16>
    %cst_64 = arith.constant dense<0.000000e+00> : vector<256x128xf32>
    %76 = tpu.matmul %74, %75, %cst_64 {dimension_numbers = #tpu.dot_dimension_numbers<[1], [0], [0], [1], [0, 0, 1, 1], [], []>} : vector<256x128xbf16>, vector<128x128xbf16>, vector<256x128xf32> -> vector<256x128xf32>
    %c0_65 = arith.constant 0 : index
    %c1_66 = arith.constant 1 : index
    %c0_67 = arith.constant 0 : index
    %77 = vector.load %arg13[%c0_65, %c1_66, %c0_67] : memref<18x18x128xf32, #tpu.memory_space<vmem>>, vector<16x16x128xf32>
    %78 = vector.shape_cast %77 : vector<16x16x128xf32> to vector<256x128xf32>
    %79 = arith.truncf %78 : vector<256x128xf32> to vector<256x128xbf16>
    %c128_68 = arith.constant 128 : index
    %c0_69 = arith.constant 0 : index
    %80 = vector.load %arg5[%c128_68, %c0_69] : memref<1152x128xbf16, #tpu.memory_space<vmem>>, vector<128x128xbf16>
    %cst_70 = arith.constant dense<0.000000e+00> : vector<256x128xf32>
    %81 = tpu.matmul %79, %80, %cst_70 {dimension_numbers = #tpu.dot_dimension_numbers<[1], [0], [0], [1], [0, 0, 1, 1], [], []>} : vector<256x128xbf16>, vector<128x128xbf16>, vector<256x128xf32> -> vector<256x128xf32>
    %82 = arith.addf %76, %81 : vector<256x128xf32>
    %c0_71 = arith.constant 0 : index
    %c2_72 = arith.constant 2 : index
    %c0_73 = arith.constant 0 : index
    %83 = vector.load %arg13[%c0_71, %c2_72, %c0_73] : memref<18x18x128xf32, #tpu.memory_space<vmem>>, vector<16x16x128xf32>
    %84 = vector.shape_cast %83 : vector<16x16x128xf32> to vector<256x128xf32>
    %85 = arith.truncf %84 : vector<256x128xf32> to vector<256x128xbf16>
    %c256_74 = arith.constant 256 : index
    %c0_75 = arith.constant 0 : index
    %86 = vector.load %arg5[%c256_74, %c0_75] : memref<1152x128xbf16, #tpu.memory_space<vmem>>, vector<128x128xbf16>
    %cst_76 = arith.constant dense<0.000000e+00> : vector<256x128xf32>
    %87 = tpu.matmul %85, %86, %cst_76 {dimension_numbers = #tpu.dot_dimension_numbers<[1], [0], [0], [1], [0, 0, 1, 1], [], []>} : vector<256x128xbf16>, vector<128x128xbf16>, vector<256x128xf32> -> vector<256x128xf32>
    %88 = arith.addf %82, %87 : vector<256x128xf32>
    %c1_77 = arith.constant 1 : index
    %c0_78 = arith.constant 0 : index
    %c0_79 = arith.constant 0 : index
    %89 = vector.load %arg13[%c1_77, %c0_78, %c0_79] : memref<18x18x128xf32, #tpu.memory_space<vmem>>, vector<16x16x128xf32>
    %90 = vector.shape_cast %89 : vector<16x16x128xf32> to vector<256x128xf32>
    %91 = arith.truncf %90 : vector<256x128xf32> to vector<256x128xbf16>
    %c384_80 = arith.constant 384 : index
    %c0_81 = arith.constant 0 : index
    %92 = vector.load %arg5[%c384_80, %c0_81] : memref<1152x128xbf16, #tpu.memory_space<vmem>>, vector<128x128xbf16>
    %cst_82 = arith.constant dense<0.000000e+00> : vector<256x128xf32>
    %93 = tpu.matmul %91, %92, %cst_82 {dimension_numbers = #tpu.dot_dimension_numbers<[1], [0], [0], [1], [0, 0, 1, 1], [], []>} : vector<256x128xbf16>, vector<128x128xbf16>, vector<256x128xf32> -> vector<256x128xf32>
    %94 = arith.addf %88, %93 : vector<256x128xf32>
    %c1_83 = arith.constant 1 : index
    %c1_84 = arith.constant 1 : index
    %c0_85 = arith.constant 0 : index
    %95 = vector.load %arg13[%c1_83, %c1_84, %c0_85] : memref<18x18x128xf32, #tpu.memory_space<vmem>>, vector<16x16x128xf32>
    %96 = vector.shape_cast %95 : vector<16x16x128xf32> to vector<256x128xf32>
    %97 = arith.truncf %96 : vector<256x128xf32> to vector<256x128xbf16>
    %c512_86 = arith.constant 512 : index
    %c0_87 = arith.constant 0 : index
    %98 = vector.load %arg5[%c512_86, %c0_87] : memref<1152x128xbf16, #tpu.memory_space<vmem>>, vector<128x128xbf16>
    %cst_88 = arith.constant dense<0.000000e+00> : vector<256x128xf32>
    %99 = tpu.matmul %97, %98, %cst_88 {dimension_numbers = #tpu.dot_dimension_numbers<[1], [0], [0], [1], [0, 0, 1, 1], [], []>} : vector<256x128xbf16>, vector<128x128xbf16>, vector<256x128xf32> -> vector<256x128xf32>
    %100 = arith.addf %94, %99 : vector<256x128xf32>
    %c1_89 = arith.constant 1 : index
    %c2_90 = arith.constant 2 : index
    %c0_91 = arith.constant 0 : index
    %101 = vector.load %arg13[%c1_89, %c2_90, %c0_91] : memref<18x18x128xf32, #tpu.memory_space<vmem>>, vector<16x16x128xf32>
    %102 = vector.shape_cast %101 : vector<16x16x128xf32> to vector<256x128xf32>
    %103 = arith.truncf %102 : vector<256x128xf32> to vector<256x128xbf16>
    %c640_92 = arith.constant 640 : index
    %c0_93 = arith.constant 0 : index
    %104 = vector.load %arg5[%c640_92, %c0_93] : memref<1152x128xbf16, #tpu.memory_space<vmem>>, vector<128x128xbf16>
    %cst_94 = arith.constant dense<0.000000e+00> : vector<256x128xf32>
    %105 = tpu.matmul %103, %104, %cst_94 {dimension_numbers = #tpu.dot_dimension_numbers<[1], [0], [0], [1], [0, 0, 1, 1], [], []>} : vector<256x128xbf16>, vector<128x128xbf16>, vector<256x128xf32> -> vector<256x128xf32>
    %106 = arith.addf %100, %105 : vector<256x128xf32>
    %c2_95 = arith.constant 2 : index
    %c0_96 = arith.constant 0 : index
    %c0_97 = arith.constant 0 : index
    %107 = vector.load %arg13[%c2_95, %c0_96, %c0_97] : memref<18x18x128xf32, #tpu.memory_space<vmem>>, vector<16x16x128xf32>
    %108 = vector.shape_cast %107 : vector<16x16x128xf32> to vector<256x128xf32>
    %109 = arith.truncf %108 : vector<256x128xf32> to vector<256x128xbf16>
    %c768_98 = arith.constant 768 : index
    %c0_99 = arith.constant 0 : index
    %110 = vector.load %arg5[%c768_98, %c0_99] : memref<1152x128xbf16, #tpu.memory_space<vmem>>, vector<128x128xbf16>
    %cst_100 = arith.constant dense<0.000000e+00> : vector<256x128xf32>
    %111 = tpu.matmul %109, %110, %cst_100 {dimension_numbers = #tpu.dot_dimension_numbers<[1], [0], [0], [1], [0, 0, 1, 1], [], []>} : vector<256x128xbf16>, vector<128x128xbf16>, vector<256x128xf32> -> vector<256x128xf32>
    %112 = arith.addf %106, %111 : vector<256x128xf32>
    %c2_101 = arith.constant 2 : index
    %c1_102 = arith.constant 1 : index
    %c0_103 = arith.constant 0 : index
    %113 = vector.load %arg13[%c2_101, %c1_102, %c0_103] : memref<18x18x128xf32, #tpu.memory_space<vmem>>, vector<16x16x128xf32>
    %114 = vector.shape_cast %113 : vector<16x16x128xf32> to vector<256x128xf32>
    %115 = arith.truncf %114 : vector<256x128xf32> to vector<256x128xbf16>
    %c896_104 = arith.constant 896 : index
    %c0_105 = arith.constant 0 : index
    %116 = vector.load %arg5[%c896_104, %c0_105] : memref<1152x128xbf16, #tpu.memory_space<vmem>>, vector<128x128xbf16>
    %cst_106 = arith.constant dense<0.000000e+00> : vector<256x128xf32>
    %117 = tpu.matmul %115, %116, %cst_106 {dimension_numbers = #tpu.dot_dimension_numbers<[1], [0], [0], [1], [0, 0, 1, 1], [], []>} : vector<256x128xbf16>, vector<128x128xbf16>, vector<256x128xf32> -> vector<256x128xf32>
    %118 = arith.addf %112, %117 : vector<256x128xf32>
    %c2_107 = arith.constant 2 : index
    %c2_108 = arith.constant 2 : index
    %c0_109 = arith.constant 0 : index
    %119 = vector.load %arg13[%c2_107, %c2_108, %c0_109] : memref<18x18x128xf32, #tpu.memory_space<vmem>>, vector<16x16x128xf32>
    %120 = vector.shape_cast %119 : vector<16x16x128xf32> to vector<256x128xf32>
    %121 = arith.truncf %120 : vector<256x128xf32> to vector<256x128xbf16>
    %c1024_110 = arith.constant 1024 : index
    %c0_111 = arith.constant 0 : index
    %122 = vector.load %arg5[%c1024_110, %c0_111] : memref<1152x128xbf16, #tpu.memory_space<vmem>>, vector<128x128xbf16>
    %cst_112 = arith.constant dense<0.000000e+00> : vector<256x128xf32>
    %123 = tpu.matmul %121, %122, %cst_112 {dimension_numbers = #tpu.dot_dimension_numbers<[1], [0], [0], [1], [0, 0, 1, 1], [], []>} : vector<256x128xbf16>, vector<128x128xbf16>, vector<256x128xf32> -> vector<256x128xf32>
    %124 = arith.addf %118, %123 : vector<256x128xf32>
    %c0_113 = arith.constant 0 : index
    %c0_114 = arith.constant 0 : index
    %125 = vector.load %arg6[%c0_113, %c0_114] : memref<1x128xf32, #tpu.memory_space<vmem>>, vector<1x128xf32>
    %126 = vector.broadcast %125 : vector<1x128xf32> to vector<256x128xf32>
    %127 = arith.mulf %124, %126 : vector<256x128xf32>
    %c0_115 = arith.constant 0 : index
    %c0_116 = arith.constant 0 : index
    %128 = vector.load %arg7[%c0_115, %c0_116] : memref<1x128xf32, #tpu.memory_space<vmem>>, vector<1x128xf32>
    %129 = vector.broadcast %128 : vector<1x128xf32> to vector<256x128xf32>
    %130 = arith.addf %127, %129 : vector<256x128xf32>
    %c0_117 = arith.constant 0 : index
    %c0_118 = arith.constant 0 : index
    %c0_119 = arith.constant 0 : index
    %c0_120 = arith.constant 0 : index
    %131 = vector.load %arg1[%c0_117, %c0_118, %c0_119, %c0_120] : memref<1x16x16x128xf32, #tpu.memory_space<vmem>>, vector<1x16x16x128xf32>
    %132 = vector.shape_cast %131 : vector<1x16x16x128xf32> to vector<16x16x128xf32>
    %133 = vector.shape_cast %132 : vector<16x16x128xf32> to vector<256x128xf32>
    %134 = arith.truncf %133 : vector<256x128xf32> to vector<256x128xbf16>
    %c0_121 = arith.constant 0 : index
    %c0_122 = arith.constant 0 : index
    %135 = vector.load %arg8[%c0_121, %c0_122] : memref<128x128xbf16, #tpu.memory_space<vmem>>, vector<128x128xbf16>
    %cst_123 = arith.constant dense<0.000000e+00> : vector<256x128xf32>
    %136 = tpu.matmul %134, %135, %cst_123 {dimension_numbers = #tpu.dot_dimension_numbers<[1], [0], [0], [1], [0, 0, 1, 1], [], []>} : vector<256x128xbf16>, vector<128x128xbf16>, vector<256x128xf32> -> vector<256x128xf32>
    %c0_124 = arith.constant 0 : index
    %c0_125 = arith.constant 0 : index
    %137 = vector.load %arg9[%c0_124, %c0_125] : memref<1x128xf32, #tpu.memory_space<vmem>>, vector<1x128xf32>
    %138 = vector.broadcast %137 : vector<1x128xf32> to vector<256x128xf32>
    %139 = arith.mulf %136, %138 : vector<256x128xf32>
    %c0_126 = arith.constant 0 : index
    %c0_127 = arith.constant 0 : index
    %140 = vector.load %arg10[%c0_126, %c0_127] : memref<1x128xf32, #tpu.memory_space<vmem>>, vector<1x128xf32>
    %141 = vector.broadcast %140 : vector<1x128xf32> to vector<256x128xf32>
    %142 = arith.addf %139, %141 : vector<256x128xf32>
    %143 = arith.addf %130, %142 : vector<256x128xf32>
    %cst_128 = arith.constant 0.000000e+00 : f32
    %144 = vector.broadcast %cst_128 : f32 to vector<256x128xf32>
    %145 = arith.cmpf ogt, %143, %144 : vector<256x128xf32>
    %cst_129 = arith.constant 2.000000e-01 : f32
    %146 = vector.broadcast %cst_129 : f32 to vector<256x128xf32>
    %147 = arith.mulf %146, %143 : vector<256x128xf32>
    %148 = arith.select %145, %143, %147 : vector<256x128xi1>, vector<256x128xf32>
    %149 = vector.shape_cast %148 : vector<256x128xf32> to vector<16x16x128xf32>
    %150 = vector.extract_strided_slice %149 {offsets = [0, 0, 0], sizes = [16, 16, 8], strides = [1, 1, 1]} : vector<16x16x128xf32> to vector<16x16x8xf32>
    %c0_130 = arith.constant 0 : index
    %c0_131 = arith.constant 0 : index
    %c0_132 = arith.constant 0 : index
    %c0_133 = arith.constant 0 : index
    %151 = vector.load %arg11[%c0_130, %c0_131, %c0_132, %c0_133] : memref<1x16x16x8xf32, #tpu.memory_space<vmem>>, vector<1x16x16x8xf32>
    %152 = vector.shape_cast %151 : vector<1x16x16x8xf32> to vector<16x16x8xf32>
    %153 = vector.shape_cast %150 : vector<16x16x8xf32> to vector<1x16x16x8xf32>
    tpu.vector_store %arg11[%c0_130, %c0_131, %c0_132, %c0_133], %153 {strides = array<i32>} : memref<1x16x16x8xf32, #tpu.memory_space<vmem>>, vector<1x16x16x8xf32>,
    return
  }
  func.func @transform_0(%arg0: i32) -> (i32, i32, i32, i32) {
    %c0_i32 = arith.constant 0 : i32
    %c0_i32_0 = arith.constant 0 : i32
    %c0_i32_1 = arith.constant 0 : i32
    %c0_i32_2 = arith.constant 0 : i32
    return %arg0, %c0_i32, %c0_i32_0, %c0_i32_1 : i32, i32, i32, i32
  }
  func.func @transform_1(%arg0: i32) -> (i32, i32) {
    %c0_i32 = arith.constant 0 : i32
    %c0_i32_0 = arith.constant 0 : i32
    %c0_i32_1 = arith.constant 0 : i32
    return %c0_i32, %c0_i32_0 : i32, i32
  }
  func.func @transform_2(%arg0: i32) -> (i32, i32) {
    %c0_i32 = arith.constant 0 : i32
    %c0_i32_0 = arith.constant 0 : i32
    %c0_i32_1 = arith.constant 0 : i32
    return %c0_i32, %c0_i32_0 : i32, i32
  }
  func.func @transform_3(%arg0: i32) -> (i32, i32) {
    %c0_i32 = arith.constant 0 : i32
    %c0_i32_0 = arith.constant 0 : i32
    %c0_i32_1 = arith.constant 0 : i32
    return %c0_i32, %c0_i32_0 : i32, i32
  }
  func.func @transform_4(%arg0: i32) -> (i32, i32) {
    %c0_i32 = arith.constant 0 : i32
    %c0_i32_0 = arith.constant 0 : i32
    %c0_i32_1 = arith.constant 0 : i32
    return %c0_i32, %c0_i32_0 : i32, i32
  }
  func.func @transform_5(%arg0: i32) -> (i32, i32) {
    %c0_i32 = arith.constant 0 : i32
    %c0_i32_0 = arith.constant 0 : i32
    %c0_i32_1 = arith.constant 0 : i32
    return %c0_i32, %c0_i32_0 : i32, i32
  }
  func.func @transform_6(%arg0: i32) -> (i32, i32) {
    %c0_i32 = arith.constant 0 : i32
    %c0_i32_0 = arith.constant 0 : i32
    %c0_i32_1 = arith.constant 0 : i32
    return %c0_i32, %c0_i32_0 : i32, i32
  }
  func.func @transform_7(%arg0: i32) -> (i32, i32) {
    %c0_i32 = arith.constant 0 : i32
    %c0_i32_0 = arith.constant 0 : i32
    %c0_i32_1 = arith.constant 0 : i32
    return %c0_i32, %c0_i32_0 : i32, i32
  }
  func.func @transform_8(%arg0: i32) -> (i32, i32) {
    %c0_i32 = arith.constant 0 : i32
    %c0_i32_0 = arith.constant 0 : i32
    %c0_i32_1 = arith.constant 0 : i32
    return %c0_i32, %c0_i32_0 : i32, i32
  }
  func.func @transform_9(%arg0: i32) -> (i32, i32) {
    %c0_i32 = arith.constant 0 : i32
    %c0_i32_0 = arith.constant 0 : i32
    %c0_i32_1 = arith.constant 0 : i32
    return %c0_i32, %c0_i32_0 : i32, i32
  }
  func.func @transform_10(%arg0: i32) -> (i32, i32, i32, i32) {
    %c0_i32 = arith.constant 0 : i32
    %c0_i32_0 = arith.constant 0 : i32
    %c0_i32_1 = arith.constant 0 : i32
    %c0_i32_2 = arith.constant 0 : i32
    return %arg0, %c0_i32, %c0_i32_0, %c0_i32_1 : i32, i32, i32, i32
  }
}

</mosaic_0001>

<llo_original>
// kernel: tpu_custom_call.1
$region0: #{tpu_custom_call.1}
  #allocation0 [shape = 'u32[]', space=smem, size = 0x4, offset = 0x4, fixed_abs, tag = 'smem constant byte address 0x4 - core index']
  #allocation1 [shape = 'u32[144,128]{1,0:T(1,128)}', space=vmem, size = 0x12000, scoped, tag = 'internal scratch']
  #allocation2 [shape = 'f32[18,18,128]{2,1,0:T(8,128)}', space=vmem, size = 0x36000, scoped, tag = 'scratch operand']
  #allocation3 [shape = 'f32[18,18,128]{2,1,0:T(8,128)}', space=vmem, size = 0x36000, scoped, tag = 'scratch operand']
  %s0 = inlined_call_operand.hbm [shape: f32[2,16,16,128], index: 0, kind: input, shape index: {}]
  %s1 = inlined_call_operand.hbm [shape: bf16[1152,128], index: 1, kind: input, shape index: {}]
  %s2 = inlined_call_operand.vmem [shape: f32[1,128], index: 2, kind: input, shape index: {}]
  %s3 = inlined_call_operand.vmem [shape: f32[1,128], index: 3, kind: input, shape index: {}]
  %s4 = inlined_call_operand.hbm [shape: bf16[1152,128], index: 4, kind: input, shape index: {}]
  %s5 = inlined_call_operand.vmem [shape: f32[1,128], index: 5, kind: input, shape index: {}]
  %s6 = inlined_call_operand.vmem [shape: f32[1,128], index: 6, kind: input, shape index: {}]
  %s7 = inlined_call_operand.hbm [shape: bf16[128,128], index: 7, kind: input, shape index: {}]
  %s8 = inlined_call_operand.vmem [shape: f32[1,128], index: 8, kind: input, shape index: {}]
  %s9 = inlined_call_operand.vmem [shape: f32[1,128], index: 9, kind: input, shape index: {}]
  %s10 = inlined_call_operand.vmem [shape: f32[2,16,16,8], index: 10, kind: output, shape index: {}]
  %s11 = sld [smem:[#allocation0]]
  $region93: #{tpu_custom_call.1} parent=0
    _
  %s13 = ssub.s32 1, %s11
  %s14 = scalar_select 0, %s13, %s11
  $region1: #{tpu_custom_call.1} parent=0
    #allocation4 [shape = 'u8[262144]{0}', space=vmem, size = 0x40000, scoped, tag = 'input window, operand 0']
    #allocation5 [shape = 's32[2]{0}', space=sflag, size = 0x8, scoped, tag = 'scoped memory for tpu_custom_call.1']
    #allocation6 [shape = 'u8[294912]{0}', space=vmem, size = 0x48000, scoped, tag = 'input window, operand 1, single buffered']
    #allocation7 [shape = 's32[1]{0}', space=sflag, size = 0x4, scoped, tag = 'scoped memory for tpu_custom_call.1']
    #allocation8 [shape = 'u8[294912]{0}', space=vmem, size = 0x48000, scoped, tag = 'input window, operand 4, single buffered']
    #allocation9 [shape = 'u8[32768]{0}', space=vmem, size = 0x8000, scoped, tag = 'input window, operand 7, single buffered']
    #allocation10 [shape = 's32[1]{0}', space=sflag, size = 0x4, scoped, tag = 'scoped memory for tpu_custom_call.1']
    %15 = vsyncpa [#allocation5], 0
    %s16 = scalar_lea.sflag [#allocation5], 1
    %17 = vsyncpa %s16, 0
    %18 = vsyncpa [#allocation7], 0
    %19 = vsyncpa [#allocation10], 0
    loop: start=0, step=1, limit=4
    $region2: #{tpu_custom_call.1} parent=1 // loop_pre_header
      _
    $region3: #{tpu_custom_call.1} parent=1 // loop_header
      %s21 = sphi 0, %s25
      %p22 = scmp.ge.s32.totalorder %s21, 4
      %s31 = sphi 0, %s33
      %s34 = sphi 0, %s31
      %s35 = sphi 0, %s34
      %s51 = sphi 0, %s35
      %s55 = sphi 0, %s55
      %s57 = sphi 0, %s55
      %s58 = sphi 0, %s57
      %s72 = sphi 0, %s58
      %s76 = sphi 0, %s76
      %s78 = sphi 0, %s76
      %s79 = sphi 0, %s78
      %s93 = sphi 0, %s79
      %s97 = sphi 0, %s97
      %s99 = sphi 0, %s97
      %s100 = sphi 0, %s99
      %s114 = sphi 0, %s100
      %s118 = sphi 0, %s118
      %s120 = sphi 0, %s118
      %s121 = sphi 0, %s120
      %s135 = sphi 0, %s121
      %s139 = sphi 0, %s139
      %s141 = sphi 0, %s139
      %s142 = sphi 0, %s141
      %s156 = sphi 0, %s142
      %s160 = sphi 0, %s160
      %s162 = sphi 0, %s160
      %s163 = sphi 0, %s162
      %s177 = sphi 0, %s163
      %s181 = sphi 0, %s181
      %s183 = sphi 0, %s181
      %s184 = sphi 0, %s183
      %s198 = sphi 0, %s184
      %s202 = sphi 0, %s202
      %s204 = sphi 0, %s202
      %s205 = sphi 0, %s204
      %s219 = sphi 0, %s205
      %s223 = sphi 0, %s223
      %s225 = sphi 0, %s223
      %s226 = sphi 0, %s225
      %s240 = sphi 0, %s226
      %s246 = sphi 0, %s248
      %s249 = sphi 0, %s246
      %s250 = sphi 0, %s249
      %s266 = sphi 0, %s250
    $region4: #{tpu_custom_call.1} parent=1 // loop_header_branch
      %24 = sbr.rel (%p22) target = $region8
    $region5: #{tpu_custom_call.1} parent=1 // loop_body
      %s26 = ssub.s32 %s21, 1
      %s27 = ssub.s32 %s21, 2
      %s28 = sadd.s32 %s21, 1
      %s29 = ssub.s32 %s21, %s28
      %p30 = scmp.eq.s32.totalorder %s29, 0
      %s32 = sadd.s32 %s31, 1
      %s33 = scalar_select %p30, %s31, %s32
      %p36 = pneg %p30
      %p37 = scmp.eq.s32.totalorder %s21, 1
      %p38 = por %p36, %p37
      %p39 = scmp.ne.s32.totalorder %s31, %s34
      %p40 = scmp.eq.s32.totalorder %s21, 0
      %p41 = por %p39, %p40
      %p42 = scmp.ne.s32.totalorder %s31, %s34
      %p43 = scmp.eq.s32.totalorder %s26, 1
      %p44 = por %p42, %p43
      %p45 = scmp.ne.s32.totalorder %s34, %s35
      %p46 = scmp.eq.s32.totalorder %s26, 0
      %p47 = por %p45, %p46
      %p48 = scmp.ne.s32.totalorder %s34, %s35
      %p49 = scmp.eq.s32.totalorder %s27, 1
      %p50 = por %p48, %p49
      %p52 = scmp.ne.s32.totalorder %s35, %s51
      %p53 = scmp.eq.s32.totalorder %s27, 0
      %p54 = por %p52, %p53
      %s56 = sadd.s32 %s55, 1
      %p59 = scmp.eq.s32.totalorder %s21, 1
      %p60 = scmp.ne.s32.totalorder %s55, %s57
      %p61 = scmp.eq.s32.totalorder %s21, 0
      %p62 = por %p60, %p61
      %p63 = scmp.ne.s32.totalorder %s55, %s57
      %p64 = scmp.eq.s32.totalorder %s26, 1
      %p65 = por %p63, %p64
      %p66 = scmp.ne.s32.totalorder %s57, %s58
      %p67 = scmp.eq.s32.totalorder %s26, 0
      %p68 = por %p66, %p67
      %p69 = scmp.ne.s32.totalorder %s57, %s58
      %p70 = scmp.eq.s32.totalorder %s27, 1
      %p71 = por %p69, %p70
      %p73 = scmp.ne.s32.totalorder %s58, %s72
      %p74 = scmp.eq.s32.totalorder %s27, 0
      %p75 = por %p73, %p74
      %s77 = sadd.s32 %s76, 1
      %p80 = scmp.eq.s32.totalorder %s21, 1
      %p81 = scmp.ne.s32.totalorder %s76, %s78
      %p82 = scmp.eq.s32.totalorder %s21, 0
      %p83 = por %p81, %p82
      %p84 = scmp.ne.s32.totalorder %s76, %s78
      %p85 = scmp.eq.s32.totalorder %s26, 1
      %p86 = por %p84, %p85
      %p87 = scmp.ne.s32.totalorder %s78, %s79
      %p88 = scmp.eq.s32.totalorder %s26, 0
      %p89 = por %p87, %p88
      %p90 = scmp.ne.s32.totalorder %s78, %s79
      %p91 = scmp.eq.s32.totalorder %s27, 1
      %p92 = por %p90, %p91
      %p94 = scmp.ne.s32.totalorder %s79, %s93
      %p95 = scmp.eq.s32.totalorder %s27, 0
      %p96 = por %p94, %p95
      %s98 = sadd.s32 %s97, 1
      %p101 = scmp.eq.s32.totalorder %s21, 1
      %p102 = scmp.ne.s32.totalorder %s97, %s99
      %p103 = scmp.eq.s32.totalorder %s21, 0
      %p104 = por %p102, %p103
      %p105 = scmp.ne.s32.totalorder %s97, %s99
      %p106 = scmp.eq.s32.totalorder %s26, 1
      %p107 = por %p105, %p106
      %p108 = scmp.ne.s32.totalorder %s99, %s100
      %p109 = scmp.eq.s32.totalorder %s26, 0
      %p110 = por %p108, %p109
      %p111 = scmp.ne.s32.totalorder %s99, %s100
      %p112 = scmp.eq.s32.totalorder %s27, 1
      %p113 = por %p111, %p112
      %p115 = scmp.ne.s32.totalorder %s100, %s114
      %p116 = scmp.eq.s32.totalorder %s27, 0
      %p117 = por %p115, %p116
      %s119 = sadd.s32 %s118, 1
      %p122 = scmp.eq.s32.totalorder %s21, 1
      %p123 = scmp.ne.s32.totalorder %s118, %s120
      %p124 = scmp.eq.s32.totalorder %s21, 0
      %p125 = por %p123, %p124
      %p126 = scmp.ne.s32.totalorder %s118, %s120
      %p127 = scmp.eq.s32.totalorder %s26, 1
      %p128 = por %p126, %p127
      %p129 = scmp.ne.s32.totalorder %s120, %s121
      %p130 = scmp.eq.s32.totalorder %s26, 0
      %p131 = por %p129, %p130
      %p132 = scmp.ne.s32.totalorder %s120, %s121
      %p133 = scmp.eq.s32.totalorder %s27, 1
      %p134 = por %p132, %p133
      %p136 = scmp.ne.s32.totalorder %s121, %s135
      %p137 = scmp.eq.s32.totalorder %s27, 0
      %p138 = por %p136, %p137
      %s140 = sadd.s32 %s139, 1
      %p143 = scmp.eq.s32.totalorder %s21, 1
      %p144 = scmp.ne.s32.totalorder %s139, %s141
      %p145 = scmp.eq.s32.totalorder %s21, 0
      %p146 = por %p144, %p145
      %p147 = scmp.ne.s32.totalorder %s139, %s141
      %p148 = scmp.eq.s32.totalorder %s26, 1
      %p149 = por %p147, %p148
      %p150 = scmp.ne.s32.totalorder %s141, %s142
      %p151 = scmp.eq.s32.totalorder %s26, 0
      %p152 = por %p150, %p151
      %p153 = scmp.ne.s32.totalorder %s141, %s142
      %p154 = scmp.eq.s32.totalorder %s27, 1
      %p155 = por %p153, %p154
      %p157 = scmp.ne.s32.totalorder %s142, %s156
      %p158 = scmp.eq.s32.totalorder %s27, 0
      %p159 = por %p157, %p158
      %s161 = sadd.s32 %s160, 1
      %p164 = scmp.eq.s32.totalorder %s21, 1
      %p165 = scmp.ne.s32.totalorder %s160, %s162
      %p166 = scmp.eq.s32.totalorder %s21, 0
      %p167 = por %p165, %p166
      %p168 = scmp.ne.s32.totalorder %s160, %s162
      %p169 = scmp.eq.s32.totalorder %s26, 1
      %p170 = por %p168, %p169
      %p171 = scmp.ne.s32.totalorder %s162, %s163
      %p172 = scmp.eq.s32.totalorder %s26, 0
      %p173 = por %p171, %p172
      %p174 = scmp.ne.s32.totalorder %s162, %s163
      %p175 = scmp.eq.s32.totalorder %s27, 1
      %p176 = por %p174, %p175
      %p178 = scmp.ne.s32.totalorder %s163, %s177
      %p179 = scmp.eq.s32.totalorder %s27, 0
      %p180 = por %p178, %p179
      %s182 = sadd.s32 %s181, 1
      %p185 = scmp.eq.s32.totalorder %s21, 1
      %p186 = scmp.ne.s32.totalorder %s181, %s183
      %p187 = scmp.eq.s32.totalorder %s21, 0
      %p188 = por %p186, %p187
      %p189 = scmp.ne.s32.totalorder %s181, %s183
      %p190 = scmp.eq.s32.totalorder %s26, 1
      %p191 = por %p189, %p190
      %p192 = scmp.ne.s32.totalorder %s183, %s184
      %p193 = scmp.eq.s32.totalorder %s26, 0
      %p194 = por %p192, %p193
      %p195 = scmp.ne.s32.totalorder %s183, %s184
      %p196 = scmp.eq.s32.totalorder %s27, 1
      %p197 = por %p195, %p196
      %p199 = scmp.ne.s32.totalorder %s184, %s198
      %p200 = scmp.eq.s32.totalorder %s27, 0
      %p201 = por %p199, %p200
      %s203 = sadd.s32 %s202, 1
      %p206 = scmp.eq.s32.totalorder %s21, 1
      %p207 = scmp.ne.s32.totalorder %s202, %s204
      %p208 = scmp.eq.s32.totalorder %s21, 0
      %p209 = por %p207, %p208
      %p210 = scmp.ne.s32.totalorder %s202, %s204
      %p211 = scmp.eq.s32.totalorder %s26, 1
      %p212 = por %p210, %p211
      %p213 = scmp.ne.s32.totalorder %s204, %s205
      %p214 = scmp.eq.s32.totalorder %s26, 0
      %p215 = por %p213, %p214
      %p216 = scmp.ne.s32.totalorder %s204, %s205
      %p217 = scmp.eq.s32.totalorder %s27, 1
      %p218 = por %p216, %p217
      %p220 = scmp.ne.s32.totalorder %s205, %s219
      %p221 = scmp.eq.s32.totalorder %s27, 0
      %p222 = por %p220, %p221
      %s224 = sadd.s32 %s223, 1
      %p227 = scmp.eq.s32.totalorder %s21, 1
      %p228 = scmp.ne.s32.totalorder %s223, %s225
      %p229 = scmp.eq.s32.totalorder %s21, 0
      %p230 = por %p228, %p229
      %p231 = scmp.ne.s32.totalorder %s223, %s225
      %p232 = scmp.eq.s32.totalorder %s26, 1
      %p233 = por %p231, %p232
      %p234 = scmp.ne.s32.totalorder %s225, %s226
      %p235 = scmp.eq.s32.totalorder %s26, 0
      %p236 = por %p234, %p235
      %p237 = scmp.ne.s32.totalorder %s225, %s226
      %p238 = scmp.eq.s32.totalorder %s27, 1
      %p239 = por %p237, %p238
      %p241 = scmp.ne.s32.totalorder %s226, %s240
      %p242 = scmp.eq.s32.totalorder %s27, 0
      %p243 = por %p241, %p242
      %s244 = ssub.s32 %s21, %s28
      %p245 = scmp.eq.s32.totalorder %s244, 0
      %s247 = sadd.s32 %s246, 1
      %s248 = scalar_select %p245, %s246, %s247
      %p251 = pneg %p245
      %p252 = scmp.eq.s32.totalorder %s21, 1
      %p253 = por %p251, %p252
      %p254 = scmp.ne.s32.totalorder %s246, %s249
      %p255 = scmp.eq.s32.totalorder %s21, 0
      %p256 = por %p254, %p255
      %p257 = scmp.ne.s32.totalorder %s246, %s249
      %p258 = scmp.eq.s32.totalorder %s26, 1
      %p259 = por %p257, %p258
      %p260 = scmp.ne.s32.totalorder %s249, %s250
      %p261 = scmp.eq.s32.totalorder %s26, 0
      %p262 = por %p260, %p261
      %p263 = scmp.ne.s32.totalorder %s249, %s250
      %p264 = scmp.eq.s32.totalorder %s27, 1
      %p265 = por %p263, %p264
      %p267 = scmp.ne.s32.totalorder %s250, %s266
      %p268 = scmp.eq.s32.totalorder %s27, 0
      %p269 = por %p267, %p268
      %p270 = scmp.le.s32.totalorder 1, %s21
      %p271 = scmp.lt.s32.totalorder %s21, 3
      %p272 = pnand %p270, %p271
      %p273 = pneg %p272
      // Predicated region
      $region9: #{tpu_custom_call.1} parent=5 // pred_check
        _
      $region10: #{tpu_custom_call.1} parent=5 // pred_check_branch
        %275 = sbr.rel (%p272) target = $region12
      $region11: #{tpu_custom_call.1} parent=5 // pred_region
        %s276 = ssub.s32 %s21, 1
        // Predicated region
        $region13: #{tpu_custom_call.1} parent=11 // pred_check
          %p277 = pneg %p68
        $region14: #{tpu_custom_call.1} parent=11 // pred_check_branch
          %279 = sbr.rel (%p277) target = $region16
        $region15: #{tpu_custom_call.1} parent=11 // pred_region
          %s281 = ssub.s32 9216, 9216
          %282 = vsyncadd [#allocation7], %s281
          %s283 = sshll.u32 [#allocation6], 4
          %s284 = int_to_ptr.vmem [resolvable:$true] %s283
          %289 = dma.hbm_to_vmem [thread:$0]  %s1, 9216, %s284, [#allocation7], 64, 64, 4
        $region16: #{tpu_custom_call.1} parent=11 // pred_fallthru
          _
        // Predicated region
        $region17: #{tpu_custom_call.1} parent=11 // pred_check
          %p290 = pneg %p89
        $region18: #{tpu_custom_call.1} parent=11 // pred_check_branch
          %292 = sbr.rel (%p290) target = $region20
        $region19: #{tpu_custom_call.1} parent=11 // pred_region
          _
        $region20: #{tpu_custom_call.1} parent=11 // pred_fallthru
          _
        // Predicated region
        $region21: #{tpu_custom_call.1} parent=11 // pred_check
          %p293 = pneg %p110
        $region22: #{tpu_custom_call.1} parent=11 // pred_check_branch
          %295 = sbr.rel (%p293) target = $region24
        $region23: #{tpu_custom_call.1} parent=11 // pred_region
          _
        $region24: #{tpu_custom_call.1} parent=11 // pred_fallthru
          _
        // Predicated region
        $region25: #{tpu_custom_call.1} parent=11 // pred_check
          %p296 = pneg %p131
        $region26: #{tpu_custom_call.1} parent=11 // pred_check_branch
          %298 = sbr.rel (%p296) target = $region28
        $region27: #{tpu_custom_call.1} parent=11 // pred_region
          %s300 = ssub.s32 9216, 9216
          %301 = vsyncadd [#allocation7], %s300
          %s302 = sshll.u32 [#allocation8], 4
          %s303 = int_to_ptr.vmem [resolvable:$true] %s302
          %308 = dma.hbm_to_vmem [thread:$0]  %s4, 9216, %s303, [#allocation7], 64, 64, 4
        $region28: #{tpu_custom_call.1} parent=11 // pred_fallthru
          _
        // Predicated region
        $region29: #{tpu_custom_call.1} parent=11 // pred_check
          %p309 = pneg %p152
        $region30: #{tpu_custom_call.1} parent=11 // pred_check_branch
          %311 = sbr.rel (%p309) target = $region32
        $region31: #{tpu_custom_call.1} parent=11 // pred_region
          _
        $region32: #{tpu_custom_call.1} parent=11 // pred_fallthru
          _
        // Predicated region
        $region33: #{tpu_custom_call.1} parent=11 // pred_check
          %p312 = pneg %p173
        $region34: #{tpu_custom_call.1} parent=11 // pred_check_branch
          %314 = sbr.rel (%p312) target = $region36
        $region35: #{tpu_custom_call.1} parent=11 // pred_region
          _
        $region36: #{tpu_custom_call.1} parent=11 // pred_fallthru
          _
        // Predicated region
        $region37: #{tpu_custom_call.1} parent=11 // pred_check
          %p315 = pneg %p194
        $region38: #{tpu_custom_call.1} parent=11 // pred_check_branch
          %317 = sbr.rel (%p315) target = $region40
        $region39: #{tpu_custom_call.1} parent=11 // pred_region
          %s319 = ssub.s32 1024, 1024
          %320 = vsyncadd [#allocation10], %s319
          %s321 = sshll.u32 [#allocation9], 4
          %s322 = int_to_ptr.vmem [resolvable:$true] %s321
          %327 = dma.hbm_to_vmem [thread:$0]  %s7, 1024, %s322, [#allocation10], 64, 64, 4
        $region40: #{tpu_custom_call.1} parent=11 // pred_fallthru
          _
        // Predicated region
        $region41: #{tpu_custom_call.1} parent=11 // pred_check
          %p328 = pneg %p215
        $region42: #{tpu_custom_call.1} parent=11 // pred_check_branch
          %330 = sbr.rel (%p328) target = $region44
        $region43: #{tpu_custom_call.1} parent=11 // pred_region
          _
        $region44: #{tpu_custom_call.1} parent=11 // pred_fallthru
          _
        // Predicated region
        $region45: #{tpu_custom_call.1} parent=11 // pred_check
          %p331 = pneg %p236
        $region46: #{tpu_custom_call.1} parent=11 // pred_check_branch
          %333 = sbr.rel (%p331) target = $region48
        $region47: #{tpu_custom_call.1} parent=11 // pred_region
          _
        $region48: #{tpu_custom_call.1} parent=11 // pred_fallthru
          _
      $region12: #{tpu_custom_call.1} parent=5 // pred_fallthru
        _
      %p334 = scmp.lt.s32.totalorder %s21, 2
      // Predicated region
      $region49: #{tpu_custom_call.1} parent=5 // pred_check
        %p335 = pneg %p334
      $region50: #{tpu_custom_call.1} parent=5 // pred_check_branch
        %337 = sbr.rel (%p335) target = $region52
      $region51: #{tpu_custom_call.1} parent=5 // pred_region
        // Predicated region
        $region53: #{tpu_custom_call.1} parent=51 // pred_check
          %p338 = pneg %p41
        $region54: #{tpu_custom_call.1} parent=51 // pred_check_branch
          %340 = sbr.rel (%p338) target = $region56
        $region55: #{tpu_custom_call.1} parent=51 // pred_region
          %s341 = sand.u32 %s31, 1
          %s342 = scalar_lea.sflag [#allocation5], %s341
          %s343 = sand.u32 %s31, 1
          %s344 = smul.addr %s343, 256
          %s345 = scalar_lea.vmem [#allocation4], %s344
          %s347 = ssub.s32 4096, 4096
          %348 = vsyncadd %s342, %s347
          %s349 = smul.addr %s21, 32
          %s350 = smul.addr %s349, 128
          %s351 = scalar_lea.hbm %s0, %s350
          %s352 = sshll.u32 %s345, 4
          %s353 = int_to_ptr.vmem [resolvable:$true] %s352
          %358 = dma.hbm_to_vmem [thread:$0]  %s351, 4096, %s353, %s342, 128, 128, 8
        $region56: #{tpu_custom_call.1} parent=51 // pred_fallthru
          _
      $region52: #{tpu_custom_call.1} parent=5 // pred_fallthru
        _
      %p359 = scmp.le.s32.totalorder 1, %s21
      %p360 = scmp.lt.s32.totalorder %s21, 3
      %p361 = pnand %p359, %p360
      %p362 = pneg %p361
      // Predicated region
      $region57: #{tpu_custom_call.1} parent=5 // pred_check
        _
      $region58: #{tpu_custom_call.1} parent=5 // pred_check_branch
        %364 = sbr.rel (%p361) target = $region60
      $region59: #{tpu_custom_call.1} parent=5 // pred_region
        %s365 = ssub.s32 %s21, 1
        %s366 = sand.u32 %s34, 1
        %s367 = scalar_lea.sflag [#allocation5], %s366
        %s368 = sand.u32 %s34, 1
        %s369 = smul.addr %s368, 256
        %s370 = scalar_lea.vmem [#allocation4], %s369
        // Predicated region
        $region61: #{tpu_custom_call.1} parent=59 // pred_check
          %p371 = pneg %p47
        $region62: #{tpu_custom_call.1} parent=59 // pred_check_branch
          %373 = sbr.rel (%p371) target = $region64
        $region63: #{tpu_custom_call.1} parent=59 // pred_region
          %374 = dma.done %s367, 4096
        $region64: #{tpu_custom_call.1} parent=59 // pred_fallthru
          _
        // Predicated region
        $region65: #{tpu_custom_call.1} parent=59 // pred_check
          %p375 = pneg %p68
        $region66: #{tpu_custom_call.1} parent=59 // pred_check_branch
          %377 = sbr.rel (%p375) target = $region68
        $region67: #{tpu_custom_call.1} parent=59 // pred_region
          %378 = dma.done [#allocation7], 9216
        $region68: #{tpu_custom_call.1} parent=59 // pred_fallthru
          _
        // Predicated region
        $region69: #{tpu_custom_call.1} parent=59 // pred_check
          %p379 = pneg %p131
        $region70: #{tpu_custom_call.1} parent=59 // pred_check_branch
          %381 = sbr.rel (%p379) target = $region72
        $region71: #{tpu_custom_call.1} parent=59 // pred_region
          %382 = dma.done [#allocation7], 9216
        $region72: #{tpu_custom_call.1} parent=59 // pred_fallthru
          _
        // Predicated region
        $region73: #{tpu_custom_call.1} parent=59 // pred_check
          %p383 = pneg %p194
        $region74: #{tpu_custom_call.1} parent=59 // pred_check_branch
          %385 = sbr.rel (%p383) target = $region76
        $region75: #{tpu_custom_call.1} parent=59 // pred_region
          %386 = dma.done [#allocation10], 1024
        $region76: #{tpu_custom_call.1} parent=59 // pred_fallthru
          _
        %s387 = sand.u32 %s34, 1
        %s388 = scalar_lea.sflag [#allocation5], %s387
        %s389 = sand.u32 %s34, 1
        %s390 = smul.addr %s389, 256
        %s391 = scalar_lea.vmem [#allocation4], %s390
        %p392 = pneg %p47
        %p393 = pneg %p44
        %p394 = pneg %p68
        %p395 = pneg %p65
        %p396 = pneg %p89
        %p397 = pneg %p86
        %p398 = pneg %p110
        %p399 = pneg %p107
        %p400 = pneg %p131
        %p401 = pneg %p128
        %p402 = pneg %p152
        %p403 = pneg %p149
        %p404 = pneg %p173
        %p405 = pneg %p170
        %p406 = pneg %p194
        %p407 = pneg %p191
        %p408 = pneg %p215
        %p409 = pneg %p212
        %p410 = pneg %p236
        %p411 = pneg %p233
        %p412 = pneg %p262
        %p413 = pneg %p259
        %p414 = scmp.lt.s32.totalorder %s26, 1
        %s415 = scalar_select %p414, %s26, 1
        %s416 = smul.addr %s415, 32
        %s417 = smul.addr %s416, 8
        %s418 = scalar_lea.vmem %s10, %s417
        %p419 = scmp.lt.s32.totalorder %s26, 1
        %s420 = scalar_select %p419, %s26, 1
        %s421 = smul.addr %s420, 32
        %s422 = smul.addr %s421, 8
        %s423 = scalar_lea.vmem %s10, %s422
        %p425 = scmp.eq.s32.totalorder %s26, 0
        // Predicated region
        $region77: #{tpu_custom_call.1} parent=59 // pred_check
          %p426 = pneg %p425
        $region78: #{tpu_custom_call.1} parent=59 // pred_check_branch
          %428 = sbr.rel (%p426) target = $region80
        $region79: #{tpu_custom_call.1} parent=59 // pred_region
          %429 = vst [vmem:[#allocation2] sm:$0xff] 0.0
          %430 = vst [vmem:[#allocation2 + $0x8] sm:$0xff] 0.0
          %431 = vst [vmem:[#allocation2 + $0x10] sm:$0x3] 0.0
          %432 = vst [vmem:[#allocation2 + $0x18] sm:$0xff] 0.0
          %433 = vst [vmem:[#allocation2 + $0x20] sm:$0xff] 0.0
          %434 = vst [vmem:[#allocation2 + $0x28] sm:$0x3] 0.0
          %435 = vst [vmem:[#allocation2 + $0x30] sm:$0xff] 0.0
          %436 = vst [vmem:[#allocation2 + $0x38] sm:$0xff] 0.0
          %437 = vst [vmem:[#allocation2 + $0x40] sm:$0x3] 0.0
          %438 = vst [vmem:[#allocation2 + $0x48] sm:$0xff] 0.0
          %439 = vst [vmem:[#allocation2 + $0x50] sm:$0xff] 0.0
          %440 = vst [vmem:[#allocation2 + $0x58] sm:$0x3] 0.0
          %441 = vst [vmem:[#allocation2 + $0x60] sm:$0xff] 0.0
          %442 = vst [vmem:[#allocation2 + $0x68] sm:$0xff] 0.0
          %443 = vst [vmem:[#allocation2 + $0x70] sm:$0x3] 0.0
          %444 = vst [vmem:[#allocation2 + $0x78] sm:$0xff] 0.0
          %445 = vst [vmem:[#allocation2 + $0x80] sm:$0xff] 0.0
          %446 = vst [vmem:[#allocation2 + $0x88] sm:$0x3] 0.0
          %447 = vst [vmem:[#allocation2 + $0x90] sm:$0xff] 0.0
          %448 = vst [vmem:[#allocation2 + $0x98] sm:$0xff] 0.0
          %449 = vst [vmem:[#allocation2 + $0xa0] sm:$0x3] 0.0
          %450 = vst [vmem:[#allocation2 + $0xa8] sm:$0xff] 0.0
          %451 = vst [vmem:[#allocation2 + $0xb0] sm:$0xff] 0.0
          %452 = vst [vmem:[#allocation2 + $0xb8] sm:$0x3] 0.0
          %453 = vst [vmem:[#allocation2 + $0xc0] sm:$0xff] 0.0
          %454 = vst [vmem:[#allocation2 + $0xc8] sm:$0xff] 0.0
          %455 = vst [vmem:[#allocation2 + $0xd0] sm:$0x3] 0.0
          %456 = vst [vmem:[#allocation2 + $0xd8] sm:$0xff] 0.0
          %457 = vst [vmem:[#allocation2 + $0xe0] sm:$0xff] 0.0
          %458 = vst [vmem:[#allocation2 + $0xe8] sm:$0x3] 0.0
          %459 = vst [vmem:[#allocation2 + $0xf0] sm:$0xff] 0.0
          %460 = vst [vmem:[#allocation2 + $0xf8] sm:$0xff] 0.0
          %461 = vst [vmem:[#allocation2 + $0x100] sm:$0x3] 0.0
          %462 = vst [vmem:[#allocation2 + $0x108] sm:$0xff] 0.0
          %463 = vst [vmem:[#allocation2 + $0x110] sm:$0xff] 0.0
          %464 = vst [vmem:[#allocation2 + $0x118] sm:$0x3] 0.0
          %465 = vst [vmem:[#allocation2 + $0x120] sm:$0xff] 0.0
          %466 = vst [vmem:[#allocation2 + $0x128] sm:$0xff] 0.0
          %467 = vst [vmem:[#allocation2 + $0x130] sm:$0x3] 0.0
          %468 = vst [vmem:[#allocation2 + $0x138] sm:$0xff] 0.0
          %469 = vst [vmem:[#allocation2 + $0x140] sm:$0xff] 0.0
          %470 = vst [vmem:[#allocation2 + $0x148] sm:$0x3] 0.0
          %471 = vst [vmem:[#allocation2 + $0x150] sm:$0xff] 0.0
          %472 = vst [vmem:[#allocation2 + $0x158] sm:$0xff] 0.0
          %473 = vst [vmem:[#allocation2 + $0x160] sm:$0x3] 0.0
          %474 = vst [vmem:[#allocation2 + $0x168] sm:$0xff] 0.0
          %475 = vst [vmem:[#allocation2 + $0x170] sm:$0xff] 0.0
          %476 = vst [vmem:[#allocation2 + $0x178] sm:$0x3] 0.0
          %477 = vst [vmem:[#allocation2 + $0x180] sm:$0xff] 0.0
          %478 = vst [vmem:[#allocation2 + $0x188] sm:$0xff] 0.0
          %479 = vst [vmem:[#allocation2 + $0x190] sm:$0x3] 0.0
          %480 = vst [vmem:[#allocation2 + $0x198] sm:$0xff] 0.0
          %481 = vst [vmem:[#allocation2 + $0x1a0] sm:$0xff] 0.0
          %482 = vst [vmem:[#allocation2 + $0x1a8] sm:$0x3] 0.0
          %483 = vst [vmem:[#allocation3] sm:$0xff] 0.0
          %484 = vst [vmem:[#allocation3 + $0x8] sm:$0xff] 0.0
          %485 = vst [vmem:[#allocation3 + $0x10] sm:$0x3] 0.0
          %486 = vst [vmem:[#allocation3 + $0x18] sm:$0xff] 0.0
          %487 = vst [vmem:[#allocation3 + $0x20] sm:$0xff] 0.0
          %488 = vst [vmem:[#allocation3 + $0x28] sm:$0x3] 0.0
          %489 = vst [vmem:[#allocation3 + $0x30] sm:$0xff] 0.0
          %490 = vst [vmem:[#allocation3 + $0x38] sm:$0xff] 0.0
          %491 = vst [vmem:[#allocation3 + $0x40] sm:$0x3] 0.0
          %492 = vst [vmem:[#allocation3 + $0x48] sm:$0xff] 0.0
          %493 = vst [vmem:[#allocation3 + $0x50] sm:$0xff] 0.0
          %494 = vst [vmem:[#allocation3 + $0x58] sm:$0x3] 0.0
          %495 = vst [vmem:[#allocation3 + $0x60] sm:$0xff] 0.0
          %496 = vst [vmem:[#allocation3 + $0x68] sm:$0xff] 0.0
          %497 = vst [vmem:[#allocation3 + $0x70] sm:$0x3] 0.0
          %498 = vst [vmem:[#allocation3 + $0x78] sm:$0xff] 0.0
          %499 = vst [vmem:[#allocation3 + $0x80] sm:$0xff] 0.0
          %500 = vst [vmem:[#allocation3 + $0x88] sm:$0x3] 0.0
          %501 = vst [vmem:[#allocation3 + $0x90] sm:$0xff] 0.0
          %502 = vst [vmem:[#allocation3 + $0x98] sm:$0xff] 0.0
          %503 = vst [vmem:[#allocation3 + $0xa0] sm:$0x3] 0.0
          %504 = vst [vmem:[#allocation3 + $0xa8] sm:$0xff] 0.0
          %505 = vst [vmem:[#allocation3 + $0xb0] sm:$0xff] 0.0
          %506 = vst [vmem:[#allocation3 + $0xb8] sm:$0x3] 0.0
          %507 = vst [vmem:[#allocation3 + $0xc0] sm:$0xff] 0.0
          %508 = vst [vmem:[#allocation3 + $0xc8] sm:$0xff] 0.0
          %509 = vst [vmem:[#allocation3 + $0xd0] sm:$0x3] 0.0
          %510 = vst [vmem:[#allocation3 + $0xd8] sm:$0xff] 0.0
          %511 = vst [vmem:[#allocation3 + $0xe0] sm:$0xff] 0.0
          %512 = vst [vmem:[#allocation3 + $0xe8] sm:$0x3] 0.0
          %513 = vst [vmem:[#allocation3 + $0xf0] sm:$0xff] 0.0
          %514 = vst [vmem:[#allocation3 + $0xf8] sm:$0xff] 0.0
          %515 = vst [vmem:[#allocation3 + $0x100] sm:$0x3] 0.0
          %516 = vst [vmem:[#allocation3 + $0x108] sm:$0xff] 0.0
          %517 = vst [vmem:[#allocation3 + $0x110] sm:$0xff] 0.0
          %518 = vst [vmem:[#allocation3 + $0x118] sm:$0x3] 0.0
          %519 = vst [vmem:[#allocation3 + $0x120] sm:$0xff] 0.0
          %520 = vst [vmem:[#allocation3 + $0x128] sm:$0xff] 0.0
          %521 = vst [vmem:[#allocation3 + $0x130] sm:$0x3] 0.0
          %522 = vst [vmem:[#allocation3 + $0x138] sm:$0xff] 0.0
          %523 = vst [vmem:[#allocation3 + $0x140] sm:$0xff] 0.0
          %524 = vst [vmem:[#allocation3 + $0x148] sm:$0x3] 0.0
          %525 = vst [vmem:[#allocation3 + $0x150] sm:$0xff] 0.0
          %526 = vst [vmem:[#allocation3 + $0x158] sm:$0xff] 0.0
          %527 = vst [vmem:[#allocation3 + $0x160] sm:$0x3] 0.0
          %528 = vst [vmem:[#allocation3 + $0x168] sm:$0xff] 0.0
          %529 = vst [vmem:[#allocation3 + $0x170] sm:$0xff] 0.0
          %530 = vst [vmem:[#allocation3 + $0x178] sm:$0x3] 0.0
          %531 = vst [vmem:[#allocation3 + $0x180] sm:$0xff] 0.0
          %532 = vst [vmem:[#allocation3 + $0x188] sm:$0xff] 0.0
          %533 = vst [vmem:[#allocation3 + $0x190] sm:$0x3] 0.0
          %534 = vst [vmem:[#allocation3 + $0x198] sm:$0xff] 0.0
          %535 = vst [vmem:[#allocation3 + $0x1a0] sm:$0xff] 0.0
          %536 = vst [vmem:[#allocation3 + $0x1a8] sm:$0x3] 0.0
        $region80: #{tpu_custom_call.1} parent=59 // pred_fallthru
          _
        %v537 = vld [vmem:[%s370] sm:$0xff]
        %v538 = vld [vmem:[%s370 + $0x8] sm:$0xff]
        %v539 = vld [vmem:[%s370 + $0x10] sm:$0xff]
        %v540 = vld [vmem:[%s370 + $0x18] sm:$0xff]
        %v541 = vld [vmem:[%s370 + $0x20] sm:$0xff]
        %v542 = vld [vmem:[%s370 + $0x28] sm:$0xff]
        %v543 = vld [vmem:[%s370 + $0x30] sm:$0xff]
        %v544 = vld [vmem:[%s370 + $0x38] sm:$0xff]
        %v545 = vld [vmem:[%s370 + $0x40] sm:$0xff]
        %v546 = vld [vmem:[%s370 + $0x48] sm:$0xff]
        %v547 = vld [vmem:[%s370 + $0x50] sm:$0xff]
        %v548 = vld [vmem:[%s370 + $0x58] sm:$0xff]
        %v549 = vld [vmem:[%s370 + $0x60] sm:$0xff]
        %v550 = vld [vmem:[%s370 + $0x68] sm:$0xff]
        %v551 = vld [vmem:[%s370 + $0x70] sm:$0xff]
        %v552 = vld [vmem:[%s370 + $0x78] sm:$0xff]
        %v553 = vld [vmem:[%s370 + $0x80] sm:$0xff]
        %v554 = vld [vmem:[%s370 + $0x88] sm:$0xff]
        %v555 = vld [vmem:[%s370 + $0x90] sm:$0xff]
        %v556 = vld [vmem:[%s370 + $0x98] sm:$0xff]
        %v557 = vld [vmem:[%s370 + $0xa0] sm:$0xff]
        %v558 = vld [vmem:[%s370 + $0xa8] sm:$0xff]
        %v559 = vld [vmem:[%s370 + $0xb0] sm:$0xff]
        %v560 = vld [vmem:[%s370 + $0xb8] sm:$0xff]
        %v561 = vld [vmem:[%s370 + $0xc0] sm:$0xff]
        %v562 = vld [vmem:[%s370 + $0xc8] sm:$0xff]
        %v563 = vld [vmem:[%s370 + $0xd0] sm:$0xff]
        %v564 = vld [vmem:[%s370 + $0xd8] sm:$0xff]
        %v565 = vld [vmem:[%s370 + $0xe0] sm:$0xff]
        %v566 = vld [vmem:[%s370 + $0xe8] sm:$0xff]
        %v567 = vld [vmem:[%s370 + $0xf0] sm:$0xff]
        %v568 = vld [vmem:[%s370 + $0xf8] sm:$0xff]
        %s569 = scalar_lea.vmem [#allocation2], 24
        %570 = vst [vmem:[%s569 + $0x1] sm:$0xff] %v537
        %571 = vst [vmem:[%s569 + $0x9] sm:$0xff] %v538
        %572 = vst [vmem:[%s569 + $0x19] sm:$0xff] %v539
        %573 = vst [vmem:[%s569 + $0x21] sm:$0xff] %v540
        %574 = vst [vmem:[%s569 + $0x31] sm:$0xff] %v541
        %575 = vst [vmem:[%s569 + $0x39] sm:$0xff] %v542
        %576 = vst [vmem:[%s569 + $0x49] sm:$0xff] %v543
        %577 = vst [vmem:[%s569 + $0x51] sm:$0xff] %v544
        %578 = vst [vmem:[%s569 + $0x61] sm:$0xff] %v545
        %579 = vst [vmem:[%s569 + $0x69] sm:$0xff] %v546
        %580 = vst [vmem:[%s569 + $0x79] sm:$0xff] %v547
        %581 = vst [vmem:[%s569 + $0x81] sm:$0xff] %v548
        %582 = vst [vmem:[%s569 + $0x91] sm:$0xff] %v549
        %583 = vst [vmem:[%s569 + $0x99] sm:$0xff] %v550
        %584 = vst [vmem:[%s569 + $0xa9] sm:$0xff] %v551
        %585 = vst [vmem:[%s569 + $0xb1] sm:$0xff] %v552
        %586 = vst [vmem:[%s569 + $0xc1] sm:$0xff] %v553
        %587 = vst [vmem:[%s569 + $0xc9] sm:$0xff] %v554
        %588 = vst [vmem:[%s569 + $0xd9] sm:$0xff] %v555
        %589 = vst [vmem:[%s569 + $0xe1] sm:$0xff] %v556
        %590 = vst [vmem:[%s569 + $0xf1] sm:$0xff] %v557
        %591 = vst [vmem:[%s569 + $0xf9] sm:$0xff] %v558
        %592 = vst [vmem:[%s569 + $0x109] sm:$0xff] %v559
        %593 = vst [vmem:[%s569 + $0x111] sm:$0xff] %v560
        %594 = vst [vmem:[%s569 + $0x121] sm:$0xff] %v561
        %595 = vst [vmem:[%s569 + $0x129] sm:$0xff] %v562
        %596 = vst [vmem:[%s569 + $0x139] sm:$0xff] %v563
        %597 = vst [vmem:[%s569 + $0x141] sm:$0xff] %v564
        %598 = vst [vmem:[%s569 + $0x151] sm:$0xff] %v565
        %599 = vst [vmem:[%s569 + $0x159] sm:$0xff] %v566
        %600 = vst [vmem:[%s569 + $0x169] sm:$0xff] %v567
        %601 = vst [vmem:[%s569 + $0x171] sm:$0xff] %v568
        %v602 = vld [vmem:[#allocation2] sm:$0xff]
        %v603 = vld [vmem:[#allocation2 + $0x8] sm:$0xff]
        %v604 = vld [vmem:[#allocation2 + $0x18] sm:$0xff]
        %v605 = vld [vmem:[#allocation2 + $0x20] sm:$0xff]
        %v606 = vld [vmem:[#allocation2 + $0x30] sm:$0xff]
        %v607 = vld [vmem:[#allocation2 + $0x38] sm:$0xff]
        %v608 = vld [vmem:[#allocation2 + $0x48] sm:$0xff]
        %v609 = vld [vmem:[#allocation2 + $0x50] sm:$0xff]
        %v610 = vld [vmem:[#allocation2 + $0x60] sm:$0xff]
        %v611 = vld [vmem:[#allocation2 + $0x68] sm:$0xff]
        %v612 = vld [vmem:[#allocation2 + $0x78] sm:$0xff]
        %v613 = vld [vmem:[#allocation2 + $0x80] sm:$0xff]
        %v614 = vld [vmem:[#allocation2 + $0x90] sm:$0xff]
        %v615 = vld [vmem:[#allocation2 + $0x98] sm:$0xff]
        %v616 = vld [vmem:[#allocation2 + $0xa8] sm:$0xff]
        %v617 = vld [vmem:[#allocation2 + $0xb0] sm:$0xff]
        %v618 = vld [vmem:[#allocation2 + $0xc0] sm:$0xff]
        %v619 = vld [vmem:[#allocation2 + $0xc8] sm:$0xff]
        %v620 = vld [vmem:[#allocation2 + $0xd8] sm:$0xff]
        %v621 = vld [vmem:[#allocation2 + $0xe0] sm:$0xff]
        %v622 = vld [vmem:[#allocation2 + $0xf0] sm:$0xff]
        %v623 = vld [vmem:[#allocation2 + $0xf8] sm:$0xff]
        %v624 = vld [vmem:[#allocation2 + $0x108] sm:$0xff]
        %v625 = vld [vmem:[#allocation2 + $0x110] sm:$0xff]
        %v626 = vld [vmem:[#allocation2 + $0x120] sm:$0xff]
        %v627 = vld [vmem:[#allocation2 + $0x128] sm:$0xff]
        %v628 = vld [vmem:[#allocation2 + $0x138] sm:$0xff]
        %v629 = vld [vmem:[#allocation2 + $0x140] sm:$0xff]
        %v630 = vld [vmem:[#allocation2 + $0x150] sm:$0xff]
        %v631 = vld [vmem:[#allocation2 + $0x158] sm:$0xff]
        %v632 = vld [vmem:[#allocation2 + $0x168] sm:$0xff]
        %v633 = vld [vmem:[#allocation2 + $0x170] sm:$0xff]
        %v634 = vpack.c.bf16 %v603, %v602
        %v635 = vpack.c.bf16 %v605, %v604
        %v636 = vpack.c.bf16 %v607, %v606
        %v637 = vpack.c.bf16 %v609, %v608
        %v638 = vpack.c.bf16 %v611, %v610
        %v639 = vpack.c.bf16 %v613, %v612
        %v640 = vpack.c.bf16 %v615, %v614
        %v641 = vpack.c.bf16 %v617, %v616
        %v642 = vpack.c.bf16 %v619, %v618
        %v643 = vpack.c.bf16 %v621, %v620
        %v644 = vpack.c.bf16 %v623, %v622
        %v645 = vpack.c.bf16 %v625, %v624
        %v646 = vpack.c.bf16 %v627, %v626
        %v647 = vpack.c.bf16 %v629, %v628
        %v648 = vpack.c.bf16 %v631, %v630
        %v649 = vpack.c.bf16 %v633, %v632
        %v650 = vld [vmem:[#allocation6] sm:$0xf]
        %v651 = vld [vmem:[#allocation6 + $0x4] sm:$0xf]
        %v652 = vld [vmem:[#allocation6 + $0x8] sm:$0xf]
        %v653 = vld [vmem:[#allocation6 + $0xc] sm:$0xf]
        %v654 = vld [vmem:[#allocation6 + $0x10] sm:$0xf]
        %v655 = vld [vmem:[#allocation6 + $0x14] sm:$0xf]
        %v656 = vld [vmem:[#allocation6 + $0x18] sm:$0xf]
        %v657 = vld [vmem:[#allocation6 + $0x1c] sm:$0xf]
        %v658 = vld [vmem:[#allocation6 + $0x20] sm:$0xf]
        %v659 = vld [vmem:[#allocation6 + $0x24] sm:$0xf]
        %v660 = vld [vmem:[#allocation6 + $0x28] sm:$0xf]
        %v661 = vld [vmem:[#allocation6 + $0x2c] sm:$0xf]
        %v662 = vld [vmem:[#allocation6 + $0x30] sm:$0xf]
        %v663 = vld [vmem:[#allocation6 + $0x34] sm:$0xf]
        %v664 = vld [vmem:[#allocation6 + $0x38] sm:$0xf]
        %v665 = vld [vmem:[#allocation6 + $0x3c] sm:$0xf]
        %v666 = vld [vmem:[#allocation2 + $0x1] sm:$0xff]
        %v667 = vld [vmem:[#allocation2 + $0x9] sm:$0xff]
        %v668 = vld [vmem:[#allocation2 + $0x19] sm:$0xff]
        %v669 = vld [vmem:[#allocation2 + $0x21] sm:$0xff]
        %v670 = vld [vmem:[#allocation2 + $0x31] sm:$0xff]
        %v671 = vld [vmem:[#allocation2 + $0x39] sm:$0xff]
        %v672 = vld [vmem:[#allocation2 + $0x49] sm:$0xff]
        %v673 = vld [vmem:[#allocation2 + $0x51] sm:$0xff]
        %v674 = vld [vmem:[#allocation2 + $0x61] sm:$0xff]
        %v675 = vld [vmem:[#allocation2 + $0x69] sm:$0xff]
        %v676 = vld [vmem:[#allocation2 + $0x79] sm:$0xff]
        %v677 = vld [vmem:[#allocation2 + $0x81] sm:$0xff]
        %v678 = vld [vmem:[#allocation2 + $0x91] sm:$0xff]
        %v679 = vld [vmem:[#allocation2 + $0x99] sm:$0xff]
        %v680 = vld [vmem:[#allocation2 + $0xa9] sm:$0xff]
        %v681 = vld [vmem:[#allocation2 + $0xb1] sm:$0xff]
        %v682 = vld [vmem:[#allocation2 + $0xc1] sm:$0xff]
        %v683 = vld [vmem:[#allocation2 + $0xc9] sm:$0xff]
        %v684 = vld [vmem:[#allocation2 + $0xd9] sm:$0xff]
        %v685 = vld [vmem:[#allocation2 + $0xe1] sm:$0xff]
        %v686 = vld [vmem:[#allocation2 + $0xf1] sm:$0xff]
        %v687 = vld [vmem:[#allocation2 + $0xf9] sm:$0xff]
        %v688 = vld [vmem:[#allocation2 + $0x109] sm:$0xff]
        %v689 = vld [vmem:[#allocation2 + $0x111] sm:$0xff]
        %v690 = vld [vmem:[#allocation2 + $0x121] sm:$0xff]
        %v691 = vld [vmem:[#allocation2 + $0x129] sm:$0xff]
        %v692 = vld [vmem:[#allocation2 + $0x139] sm:$0xff]
        %v693 = vld [vmem:[#allocation2 + $0x141] sm:$0xff]
        %v694 = vld [vmem:[#allocation2 + $0x151] sm:$0xff]
        %v695 = vld [vmem:[#allocation2 + $0x159] sm:$0xff]
        %v696 = vld [vmem:[#allocation2 + $0x169] sm:$0xff]
        %v697 = vld [vmem:[#allocation2 + $0x171] sm:$0xff]
        %v698 = vpack.c.bf16 %v667, %v666
        %v699 = vpack.c.bf16 %v669, %v668
        %v700 = vpack.c.bf16 %v671, %v670
        %v701 = vpack.c.bf16 %v673, %v672
        %v702 = vpack.c.bf16 %v675, %v674
        %v703 = vpack.c.bf16 %v677, %v676
        %v704 = vpack.c.bf16 %v679, %v678
        %v705 = vpack.c.bf16 %v681, %v680
        %v706 = vpack.c.bf16 %v683, %v682
        %v707 = vpack.c.bf16 %v685, %v684
        %v708 = vpack.c.bf16 %v687, %v686
        %v709 = vpack.c.bf16 %v689, %v688
        %v710 = vpack.c.bf16 %v691, %v690
        %v711 = vpack.c.bf16 %v693, %v692
        %v712 = vpack.c.bf16 %v695, %v694
        %v713 = vpack.c.bf16 %v697, %v696
        %v714 = vld [vmem:[#allocation6 + $0x40] sm:$0xf]
        %v715 = vld [vmem:[#allocation6 + $0x44] sm:$0xf]
        %v716 = vld [vmem:[#allocation6 + $0x48] sm:$0xf]
        %v717 = vld [vmem:[#allocation6 + $0x4c] sm:$0xf]
        %v718 = vld [vmem:[#allocation6 + $0x50] sm:$0xf]
        %v719 = vld [vmem:[#allocation6 + $0x54] sm:$0xf]
        %v720 = vld [vmem:[#allocation6 + $0x58] sm:$0xf]
        %v721 = vld [vmem:[#allocation6 + $0x5c] sm:$0xf]
        %v722 = vld [vmem:[#allocation6 + $0x60] sm:$0xf]
        %v723 = vld [vmem:[#allocation6 + $0x64] sm:$0xf]
        %v724 = vld [vmem:[#allocation6 + $0x68] sm:$0xf]
        %v725 = vld [vmem:[#allocation6 + $0x6c] sm:$0xf]
        %v726 = vld [vmem:[#allocation6 + $0x70] sm:$0xf]
        %v727 = vld [vmem:[#allocation6 + $0x74] sm:$0xf]
        %v728 = vld [vmem:[#allocation6 + $0x78] sm:$0xf]
        %v729 = vld [vmem:[#allocation6 + $0x7c] sm:$0xf]
        %v746 = vunpack.c.l.b16 %v714
        %v747 = vunpack.c.l.b16 %v715
        %v748 = vunpack.c.l.b16 %v716
        %v749 = vunpack.c.l.b16 %v717
        %v750 = vunpack.c.l.b16 %v718
        %v751 = vunpack.c.l.b16 %v719
        %v752 = vunpack.c.l.b16 %v720
        %v753 = vunpack.c.l.b16 %v721
        %v754 = vunpack.c.l.b16 %v722
        %v755 = vunpack.c.l.b16 %v723
        %v756 = vunpack.c.l.b16 %v724
        %v757 = vunpack.c.l.b16 %v725
        %v758 = vunpack.c.l.b16 %v726
        %v759 = vunpack.c.l.b16 %v727
        %v760 = vunpack.c.l.b16 %v728
        %v761 = vunpack.c.l.b16 %v729
        %v762 = vpack.c.b16 %v747, %v746
        %v763 = vpack.c.b16 %v749, %v748
        %v764 = vpack.c.b16 %v751, %v750
        %v765 = vpack.c.b16 %v753, %v752
        %v766 = vpack.c.b16 %v755, %v754
        %v767 = vpack.c.b16 %v757, %v756
        %v768 = vpack.c.b16 %v759, %v758
        %v769 = vpack.c.b16 %v761, %v760
        %778 = vmatprep.subr.bf16.mxu0 0
        %779 = vmatpush1.bf16.msra.mxu0 %v762
        %780 = vmatprep.subr.bf16.mxu0 0
        %781 = vmatpush1.bf16.msra.mxu0 %v763
        %782 = vmatprep.subr.bf16.mxu0 0
        %783 = vmatpush1.bf16.msra.mxu0 %v764
        %784 = vmatprep.subr.bf16.mxu0 0
        %785 = vmatpush1.bf16.msra.mxu0 %v765
        %786 = vmatprep.subr.bf16.mxu0 0
        %787 = vmatpush1.bf16.msra.mxu0 %v766
        %788 = vmatprep.subr.bf16.mxu0 0
        %789 = vmatpush1.bf16.msra.mxu0 %v767
        %790 = vmatprep.subr.bf16.mxu0 0
        %791 = vmatpush1.bf16.msra.mxu0 %v768
        %792 = vmatprep.subr.bf16.mxu0 0
        %793 = vmatpush1.bf16.msra.mxu0 %v769
        %794 = vmatprep.subr.bf16.mxu0 0
        %795 = vmatpush1.bf16.msra.mxu0 0
        %796 = vmatprep.subr.bf16.mxu0 0
        %797 = vmatpush1.bf16.msra.mxu0 0
        %798 = vmatprep.subr.bf16.mxu0 0
        %799 = vmatpush1.bf16.msra.mxu0 0
        %800 = vmatprep.subr.bf16.mxu0 0
        %801 = vmatpush1.bf16.msra.mxu0 0
        %802 = vmatprep.subr.bf16.mxu0 0
        %803 = vmatpush1.bf16.msra.mxu0 0
        %804 = vmatprep.subr.bf16.mxu0 0
        %805 = vmatpush1.bf16.msra.mxu0 0
        %806 = vmatprep.subr.bf16.mxu0 0
        %807 = vmatpush1.bf16.msra.mxu0 0
        %808 = vmatprep.subr.bf16.mxu0 0
        %809 = vmatpush1.bf16.msra.mxu0 0
        %810 = vmatprep.mubr.bf16.mxu0 0
        %811 = vmatmul.mubr.bf16.gmra.mrb[0].mxu0 %v698
        %v812 = vpop.f32.mrb[0].mxu0
        %v813 = vadd.f32 0.0, %v812
        %v814 = vpop.f32.mrb[0].mxu0
        %v815 = vpop.f32.mrb[0].mxu0
        %v816 = vadd.f32 0.0, %v815
        %v817 = vpop.f32.mrb[0].mxu0
        %818 = vmatprep.mubr.bf16.mxu0 0
        %819 = vmatmul.mubr.bf16.gmra.mrb[0].mxu0 %v699
        %v820 = vpop.f32.mrb[0].mxu0
        %v821 = vadd.f32 0.0, %v820
        %v822 = vpop.f32.mrb[0].mxu0
        %v823 = vpop.f32.mrb[0].mxu0
        %v824 = vadd.f32 0.0, %v823
        %v825 = vpop.f32.mrb[0].mxu0
        %826 = vmatprep.mubr.bf16.mxu0 0
        %827 = vmatmul.mubr.bf16.gmra.mrb[0].mxu0 %v700
        %v828 = vpop.f32.mrb[0].mxu0
        %v829 = vadd.f32 0.0, %v828
        %v830 = vpop.f32.mrb[0].mxu0
        %v831 = vpop.f32.mrb[0].mxu0
        %v832 = vadd.f32 0.0, %v831
        %v833 = vpop.f32.mrb[0].mxu0
        %834 = vmatprep.mubr.bf16.mxu0 0
        %835 = vmatmul.mubr.bf16.gmra.mrb[0].mxu0 %v701
        %v836 = vpop.f32.mrb[0].mxu0
        %v837 = vadd.f32 0.0, %v836
        %v838 = vpop.f32.mrb[0].mxu0
        %v839 = vpop.f32.mrb[0].mxu0
        %v840 = vadd.f32 0.0, %v839
        %v841 = vpop.f32.mrb[0].mxu0
        %842 = vmatprep.mubr.bf16.mxu0 0
        %843 = vmatmul.mubr.bf16.gmra.mrb[0].mxu0 %v702
        %v844 = vpop.f32.mrb[0].mxu0
        %v845 = vadd.f32 0.0, %v844
        %v846 = vpop.f32.mrb[0].mxu0
        %v847 = vpop.f32.mrb[0].mxu0
        %v848 = vadd.f32 0.0, %v847
        %v849 = vpop.f32.mrb[0].mxu0
        %850 = vmatprep.mubr.bf16.mxu0 0
        %851 = vmatmul.mubr.bf16.gmra.mrb[0].mxu0 %v703
        %v852 = vpop.f32.mrb[0].mxu0
        %v853 = vadd.f32 0.0, %v852
        %v854 = vpop.f32.mrb[0].mxu0
        %v855 = vpop.f32.mrb[0].mxu0
        %v856 = vadd.f32 0.0, %v855
        %v857 = vpop.f32.mrb[0].mxu0
        %858 = vmatprep.mubr.bf16.mxu0 0
        %859 = vmatmul.mubr.bf16.gmra.mrb[0].mxu0 %v704
        %v860 = vpop.f32.mrb[0].mxu0
        %v861 = vadd.f32 0.0, %v860
        %v862 = vpop.f32.mrb[0].mxu0
        %v863 = vpop.f32.mrb[0].mxu0
        %v864 = vadd.f32 0.0, %v863
        %v865 = vpop.f32.mrb[0].mxu0
        %866 = vmatprep.mubr.bf16.mxu0 0
        %867 = vmatmul.mubr.bf16.gmra.mrb[0].mxu0 %v705
        %v868 = vpop.f32.mrb[0].mxu0
        %v869 = vadd.f32 0.0, %v868
        %v870 = vpop.f32.mrb[0].mxu0
        %v871 = vpop.f32.mrb[0].mxu0
        %v872 = vadd.f32 0.0, %v871
        %v873 = vpop.f32.mrb[0].mxu0
        %874 = vmatprep.mubr.bf16.mxu0 0
        %875 = vmatmul.mubr.bf16.gmra.mrb[0].mxu0 %v706
        %v876 = vpop.f32.mrb[0].mxu0
        %v877 = vadd.f32 0.0, %v876
        %v878 = vpop.f32.mrb[0].mxu0
        %v879 = vpop.f32.mrb[0].mxu0
        %v880 = vadd.f32 0.0, %v879
        %v881 = vpop.f32.mrb[0].mxu0
        %882 = vmatprep.mubr.bf16.mxu0 0
        %883 = vmatmul.mubr.bf16.gmra.mrb[0].mxu0 %v707
        %v884 = vpop.f32.mrb[0].mxu0
        %v885 = vadd.f32 0.0, %v884
        %v886 = vpop.f32.mrb[0].mxu0
        %v887 = vpop.f32.mrb[0].mxu0
        %v888 = vadd.f32 0.0, %v887
        %v889 = vpop.f32.mrb[0].mxu0
        %890 = vmatprep.mubr.bf16.mxu0 0
        %891 = vmatmul.mubr.bf16.gmra.mrb[0].mxu0 %v708
        %v892 = vpop.f32.mrb[0].mxu0
        %v893 = vadd.f32 0.0, %v892
        %v894 = vpop.f32.mrb[0].mxu0
        %v895 = vpop.f32.mrb[0].mxu0
        %v896 = vadd.f32 0.0, %v895
        %v897 = vpop.f32.mrb[0].mxu0
        %898 = vmatprep.mubr.bf16.mxu0 0
        %899 = vmatmul.mubr.bf16.gmra.mrb[0].mxu0 %v709
        %v900 = vpop.f32.mrb[0].mxu0
        %v901 = vadd.f32 0.0, %v900
        %v902 = vpop.f32.mrb[0].mxu0
        %v903 = vpop.f32.mrb[0].mxu0
        %v904 = vadd.f32 0.0, %v903
        %v905 = vpop.f32.mrb[0].mxu0
        %906 = vmatprep.mubr.bf16.mxu0 0
        %907 = vmatmul.mubr.bf16.gmra.mrb[0].mxu0 %v710
        %v908 = vpop.f32.mrb[0].mxu0
        %v909 = vadd.f32 0.0, %v908
        %v910 = vpop.f32.mrb[0].mxu0
        %v911 = vpop.f32.mrb[0].mxu0
        %v912 = vadd.f32 0.0, %v911
        %v913 = vpop.f32.mrb[0].mxu0
        %914 = vmatprep.mubr.bf16.mxu0 0
        %915 = vmatmul.mubr.bf16.gmra.mrb[0].mxu0 %v711
        %v916 = vpop.f32.mrb[0].mxu0
        %v917 = vadd.f32 0.0, %v916
        %v918 = vpop.f32.mrb[0].mxu0
        %v919 = vpop.f32.mrb[0].mxu0
        %v920 = vadd.f32 0.0, %v919
        %v921 = vpop.f32.mrb[0].mxu0
        %922 = vmatprep.mubr.bf16.mxu0 0
        %923 = vmatmul.mubr.bf16.gmra.mrb[0].mxu0 %v712
        %v924 = vpop.f32.mrb[0].mxu0
        %v925 = vadd.f32 0.0, %v924
        %v926 = vpop.f32.mrb[0].mxu0
        %v927 = vpop.f32.mrb[0].mxu0
        %v928 = vadd.f32 0.0, %v927
        %v929 = vpop.f32.mrb[0].mxu0
        %930 = vmatprep.mubr.bf16.mxu0 0
        %931 = vmatmul.mubr.bf16.gmra.mrb[0].mxu0 %v713
        %v932 = vpop.f32.mrb[0].mxu0
        %v933 = vadd.f32 0.0, %v932
        %v934 = vpop.f32.mrb[0].mxu0
        %v935 = vpop.f32.mrb[0].mxu0
        %v936 = vadd.f32 0.0, %v935
        %v937 = vpop.f32.mrb[0].mxu0
        %938 = vdwg.mxu0
        %v955 = vunpack.c.l.b16 %v650
        %v956 = vunpack.c.l.b16 %v651
        %v957 = vunpack.c.l.b16 %v652
        %v958 = vunpack.c.l.b16 %v653
        %v959 = vunpack.c.l.b16 %v654
        %v960 = vunpack.c.l.b16 %v655
        %v961 = vunpack.c.l.b16 %v656
        %v962 = vunpack.c.l.b16 %v657
        %v963 = vunpack.c.l.b16 %v658
        %v964 = vunpack.c.l.b16 %v659
        %v965 = vunpack.c.l.b16 %v660
        %v966 = vunpack.c.l.b16 %v661
        %v967 = vunpack.c.l.b16 %v662
        %v968 = vunpack.c.l.b16 %v663
        %v969 = vunpack.c.l.b16 %v664
        %v970 = vunpack.c.l.b16 %v665
        %v971 = vpack.c.b16 %v956, %v955
        %v972 = vpack.c.b16 %v958, %v957
        %v973 = vpack.c.b16 %v960, %v959
        %v974 = vpack.c.b16 %v962, %v961
        %v975 = vpack.c.b16 %v964, %v963
        %v976 = vpack.c.b16 %v966, %v965
        %v977 = vpack.c.b16 %v968, %v967
        %v978 = vpack.c.b16 %v970, %v969
        %987 = vmatprep.subr.bf16.mxu0 0
        %988 = vmatpush1.bf16.msra.mxu0 %v971
        %989 = vmatprep.subr.bf16.mxu0 0
        %990 = vmatpush1.bf16.msra.mxu0 %v972
        %991 = vmatprep.subr.bf16.mxu0 0
        %992 = vmatpush1.bf16.msra.mxu0 %v973
        %993 = vmatprep.subr.bf16.mxu0 0
        %994 = vmatpush1.bf16.msra.mxu0 %v974
        %995 = vmatprep.subr.bf16.mxu0 0
        %996 = vmatpush1.bf16.msra.mxu0 %v975
        %997 = vmatprep.subr.bf16.mxu0 0
        %998 = vmatpush1.bf16.msra.mxu0 %v976
        %999 = vmatprep.subr.bf16.mxu0 0
        %1000 = vmatpush1.bf16.msra.mxu0 %v977
        %1001 = vmatprep.subr.bf16.mxu0 0
        %1002 = vmatpush1.bf16.msra.mxu0 %v978
        %1003 = vmatprep.subr.bf16.mxu0 0
        %1004 = vmatpush1.bf16.msra.mxu0 0
        %1005 = vmatprep.subr.bf16.mxu0 0
        %1006 = vmatpush1.bf16.msra.mxu0 0
        %1007 = vmatprep.subr.bf16.mxu0 0
        %1008 = vmatpush1.bf16.msra.mxu0 0
        %1009 = vmatprep.subr.bf16.mxu0 0
        %1010 = vmatpush1.bf16.msra.mxu0 0
        %1011 = vmatprep.subr.bf16.mxu0 0
        %1012 = vmatpush1.bf16.msra.mxu0 0
        %1013 = vmatprep.subr.bf16.mxu0 0
        %1014 = vmatpush1.bf16.msra.mxu0 0
        %1015 = vmatprep.subr.bf16.mxu0 0
        %1016 = vmatpush1.bf16.msra.mxu0 0
        %1017 = vmatprep.subr.bf16.mxu0 0
        %1018 = vmatpush1.bf16.msra.mxu0 0
        %1019 = vmatprep.mubr.bf16.mxu0 0
        %1020 = vmatmul.mubr.bf16.gmra.mrb[0].mxu0 %v634
        %v1021 = vpop.f32.mrb[0].mxu0
        %v1022 = vadd.f32 %v813, %v1021
        %v1023 = vpop.f32.mrb[0].mxu0
        %v1024 = vpop.f32.mrb[0].mxu0
        %v1025 = vadd.f32 %v816, %v1024
        %v1026 = vpop.f32.mrb[0].mxu0
        %1027 = vmatprep.mubr.bf16.mxu0 0
        %1028 = vmatmul.mubr.bf16.gmra.mrb[0].mxu0 %v635
        %v1029 = vpop.f32.mrb[0].mxu0
        %v1030 = vadd.f32 %v821, %v1029
        %v1031 = vpop.f32.mrb[0].mxu0
        %v1032 = vpop.f32.mrb[0].mxu0
        %v1033 = vadd.f32 %v824, %v1032
        %v1034 = vpop.f32.mrb[0].mxu0
        %1035 = vmatprep.mubr.bf16.mxu0 0
        %1036 = vmatmul.mubr.bf16.gmra.mrb[0].mxu0 %v636
        %v1037 = vpop.f32.mrb[0].mxu0
        %v1038 = vadd.f32 %v829, %v1037
        %v1039 = vpop.f32.mrb[0].mxu0
        %v1040 = vpop.f32.mrb[0].mxu0
        %v1041 = vadd.f32 %v832, %v1040
        %v1042 = vpop.f32.mrb[0].mxu0
        %1043 = vmatprep.mubr.bf16.mxu0 0
        %1044 = vmatmul.mubr.bf16.gmra.mrb[0].mxu0 %v637
        %v1045 = vpop.f32.mrb[0].mxu0
        %v1046 = vadd.f32 %v837, %v1045
        %v1047 = vpop.f32.mrb[0].mxu0
        %v1048 = vpop.f32.mrb[0].mxu0
        %v1049 = vadd.f32 %v840, %v1048
        %v1050 = vpop.f32.mrb[0].mxu0
        %1051 = vmatprep.mubr.bf16.mxu0 0
        %1052 = vmatmul.mubr.bf16.gmra.mrb[0].mxu0 %v638
        %v1053 = vpop.f32.mrb[0].mxu0
        %v1054 = vadd.f32 %v845, %v1053
        %v1055 = vpop.f32.mrb[0].mxu0
        %v1056 = vpop.f32.mrb[0].mxu0
        %v1057 = vadd.f32 %v848, %v1056
        %v1058 = vpop.f32.mrb[0].mxu0
        %1059 = vmatprep.mubr.bf16.mxu0 0
        %1060 = vmatmul.mubr.bf16.gmra.mrb[0].mxu0 %v639
        %v1061 = vpop.f32.mrb[0].mxu0
        %v1062 = vadd.f32 %v853, %v1061
        %v1063 = vpop.f32.mrb[0].mxu0
        %v1064 = vpop.f32.mrb[0].mxu0
        %v1065 = vadd.f32 %v856, %v1064
        %v1066 = vpop.f32.mrb[0].mxu0
        %1067 = vmatprep.mubr.bf16.mxu0 0
        %1068 = vmatmul.mubr.bf16.gmra.mrb[0].mxu0 %v640
        %v1069 = vpop.f32.mrb[0].mxu0
        %v1070 = vadd.f32 %v861, %v1069
        %v1071 = vpop.f32.mrb[0].mxu0
        %v1072 = vpop.f32.mrb[0].mxu0
        %v1073 = vadd.f32 %v864, %v1072
        %v1074 = vpop.f32.mrb[0].mxu0
        %1075 = vmatprep.mubr.bf16.mxu0 0
        %1076 = vmatmul.mubr.bf16.gmra.mrb[0].mxu0 %v641
        %v1077 = vpop.f32.mrb[0].mxu0
        %v1078 = vadd.f32 %v869, %v1077
        %v1079 = vpop.f32.mrb[0].mxu0
        %v1080 = vpop.f32.mrb[0].mxu0
        %v1081 = vadd.f32 %v872, %v1080
        %v1082 = vpop.f32.mrb[0].mxu0
        %1083 = vmatprep.mubr.bf16.mxu0 0
        %1084 = vmatmul.mubr.bf16.gmra.mrb[0].mxu0 %v642
        %v1085 = vpop.f32.mrb[0].mxu0
        %v1086 = vadd.f32 %v877, %v1085
        %v1087 = vpop.f32.mrb[0].mxu0
        %v1088 = vpop.f32.mrb[0].mxu0
        %v1089 = vadd.f32 %v880, %v1088
        %v1090 = vpop.f32.mrb[0].mxu0
        %1091 = vmatprep.mubr.bf16.mxu0 0
        %1092 = vmatmul.mubr.bf16.gmra.mrb[0].mxu0 %v643
        %v1093 = vpop.f32.mrb[0].mxu0
        %v1094 = vadd.f32 %v885, %v1093
        %v1095 = vpop.f32.mrb[0].mxu0
        %v1096 = vpop.f32.mrb[0].mxu0
        %v1097 = vadd.f32 %v888, %v1096
        %v1098 = vpop.f32.mrb[0].mxu0
        %1099 = vmatprep.mubr.bf16.mxu0 0
        %1100 = vmatmul.mubr.bf16.gmra.mrb[0].mxu0 %v644
        %v1101 = vpop.f32.mrb[0].mxu0
        %v1102 = vadd.f32 %v893, %v1101
        %v1103 = vpop.f32.mrb[0].mxu0
        %v1104 = vpop.f32.mrb[0].mxu0
        %v1105 = vadd.f32 %v896, %v1104
        %v1106 = vpop.f32.mrb[0].mxu0
        %1107 = vmatprep.mubr.bf16.mxu0 0
        %1108 = vmatmul.mubr.bf16.gmra.mrb[0].mxu0 %v645
        %v1109 = vpop.f32.mrb[0].mxu0
        %v1110 = vadd.f32 %v901, %v1109
        %v1111 = vpop.f32.mrb[0].mxu0
        %v1112 = vpop.f32.mrb[0].mxu0
        %v1113 = vadd.f32 %v904, %v1112
        %v1114 = vpop.f32.mrb[0].mxu0
        %1115 = vmatprep.mubr.bf16.mxu0 0
        %1116 = vmatmul.mubr.bf16.gmra.mrb[0].mxu0 %v646
        %v1117 = vpop.f32.mrb[0].mxu0
        %v1118 = vadd.f32 %v909, %v1117
        %v1119 = vpop.f32.mrb[0].mxu0
        %v1120 = vpop.f32.mrb[0].mxu0
        %v1121 = vadd.f32 %v912, %v1120
        %v1122 = vpop.f32.mrb[0].mxu0
        %1123 = vmatprep.mubr.bf16.mxu0 0
        %1124 = vmatmul.mubr.bf16.gmra.mrb[0].mxu0 %v647
        %v1125 = vpop.f32.mrb[0].mxu0
        %v1126 = vadd.f32 %v917, %v1125
        %v1127 = vpop.f32.mrb[0].mxu0
        %v1128 = vpop.f32.mrb[0].mxu0
        %v1129 = vadd.f32 %v920, %v1128
        %v1130 = vpop.f32.mrb[0].mxu0
        %1131 = vmatprep.mubr.bf16.mxu0 0
        %1132 = vmatmul.mubr.bf16.gmra.mrb[0].mxu0 %v648
        %v1133 = vpop.f32.mrb[0].mxu0
        %v1134 = vadd.f32 %v925, %v1133
        %v1135 = vpop.f32.mrb[0].mxu0
        %v1136 = vpop.f32.mrb[0].mxu0
        %v1137 = vadd.f32 %v928, %v1136
        %v1138 = vpop.f32.mrb[0].mxu0
        %1139 = vmatprep.mubr.bf16.mxu0 0
        %1140 = vmatmul.mubr.bf16.gmra.mrb[0].mxu0 %v649
        %v1141 = vpop.f32.mrb[0].mxu0
        %v1142 = vadd.f32 %v933, %v1141
        %v1143 = vpop.f32.mrb[0].mxu0
        %v1144 = vpop.f32.mrb[0].mxu0
        %v1145 = vadd.f32 %v936, %v1144
        %v1146 = vpop.f32.mrb[0].mxu0
        %1147 = vdwg.mxu0
        %v1148 = vld [vmem:[#allocation2 + $0x2] sm:$0xff]
        %v1149 = vld [vmem:[#allocation2 + $0xa] sm:$0xff]
        %v1150 = vld [vmem:[#allocation2 + $0x1a] sm:$0xff]
        %v1151 = vld [vmem:[#allocation2 + $0x22] sm:$0xff]
        %v1152 = vld [vmem:[#allocation2 + $0x32] sm:$0xff]
        %v1153 = vld [vmem:[#allocation2 + $0x3a] sm:$0xff]
        %v1154 = vld [vmem:[#allocation2 + $0x4a] sm:$0xff]
        %v1155 = vld [vmem:[#allocation2 + $0x52] sm:$0xff]
        %v1156 = vld [vmem:[#allocation2 + $0x62] sm:$0xff]
        %v1157 = vld [vmem:[#allocation2 + $0x6a] sm:$0xff]
        %v1158 = vld [vmem:[#allocation2 + $0x7a] sm:$0xff]
        %v1159 = vld [vmem:[#allocation2 + $0x82] sm:$0xff]
        %v1160 = vld [vmem:[#allocation2 + $0x92] sm:$0xff]
        %v1161 = vld [vmem:[#allocation2 + $0x9a] sm:$0xff]
        %v1162 = vld [vmem:[#allocation2 + $0xaa] sm:$0xff]
        %v1163 = vld [vmem:[#allocation2 + $0xb2] sm:$0xff]
        %v1164 = vld [vmem:[#allocation2 + $0xc2] sm:$0xff]
        %v1165 = vld [vmem:[#allocation2 + $0xca] sm:$0xff]
        %v1166 = vld [vmem:[#allocation2 + $0xda] sm:$0xff]
        %v1167 = vld [vmem:[#allocation2 + $0xe2] sm:$0xff]
        %v1168 = vld [vmem:[#allocation2 + $0xf2] sm:$0xff]
        %v1169 = vld [vmem:[#allocation2 + $0xfa] sm:$0xff]
        %v1170 = vld [vmem:[#allocation2 + $0x10a] sm:$0xff]
        %v1171 = vld [vmem:[#allocation2 + $0x112] sm:$0xff]
        %v1172 = vld [vmem:[#allocation2 + $0x122] sm:$0xff]
        %v1173 = vld [vmem:[#allocation2 + $0x12a] sm:$0xff]
        %v1174 = vld [vmem:[#allocation2 + $0x13a] sm:$0xff]
        %v1175 = vld [vmem:[#allocation2 + $0x142] sm:$0xff]
        %v1176 = vld [vmem:[#allocation2 + $0x152] sm:$0xff]
        %v1177 = vld [vmem:[#allocation2 + $0x15a] sm:$0xff]
        %v1178 = vld [vmem:[#allocation2 + $0x16a] sm:$0xff]
        %v1179 = vld [vmem:[#allocation2 + $0x172] sm:$0xff]
        %v1180 = vpack.c.bf16 %v1149, %v1148
        %v1181 = vpack.c.bf16 %v1151, %v1150
        %v1182 = vpack.c.bf16 %v1153, %v1152
        %v1183 = vpack.c.bf16 %v1155, %v1154
        %v1184 = vpack.c.bf16 %v1157, %v1156
        %v1185 = vpack.c.bf16 %v1159, %v1158
        %v1186 = vpack.c.bf16 %v1161, %v1160
        %v1187 = vpack.c.bf16 %v1163, %v1162
        %v1188 = vpack.c.bf16 %v1165, %v1164
        %v1189 = vpack.c.bf16 %v1167, %v1166
        %v1190 = vpack.c.bf16 %v1169, %v1168
        %v1191 = vpack.c.bf16 %v1171, %v1170
        %v1192 = vpack.c.bf16 %v1173, %v1172
        %v1193 = vpack.c.bf16 %v1175, %v1174
        %v1194 = vpack.c.bf16 %v1177, %v1176
        %v1195 = vpack.c.bf16 %v1179, %v1178
        %v1196 = vld [vmem:[#allocation6 + $0x80] sm:$0xf]
        %v1197 = vld [vmem:[#allocation6 + $0x84] sm:$0xf]
        %v1198 = vld [vmem:[#allocation6 + $0x88] sm:$0xf]
        %v1199 = vld [vmem:[#allocation6 + $0x8c] sm:$0xf]
        %v1200 = vld [vmem:[#allocation6 + $0x90] sm:$0xf]
        %v1201 = vld [vmem:[#allocation6 + $0x94] sm:$0xf]
        %v1202 = vld [vmem:[#allocation6 + $0x98] sm:$0xf]
        %v1203 = vld [vmem:[#allocation6 + $0x9c] sm:$0xf]
        %v1204 = vld [vmem:[#allocation6 + $0xa0] sm:$0xf]
        %v1205 = vld [vmem:[#allocation6 + $0xa4] sm:$0xf]
        %v1206 = vld [vmem:[#allocation6 + $0xa8] sm:$0xf]
        %v1207 = vld [vmem:[#allocation6 + $0xac] sm:$0xf]
        %v1208 = vld [vmem:[#allocation6 + $0xb0] sm:$0xf]
        %v1209 = vld [vmem:[#allocation6 + $0xb4] sm:$0xf]
        %v1210 = vld [vmem:[#allocation6 + $0xb8] sm:$0xf]
        %v1211 = vld [vmem:[#allocation6 + $0xbc] sm:$0xf]
        %v1228 = vunpack.c.l.b16 %v1196
        %v1229 = vunpack.c.l.b16 %v1197
        %v1230 = vunpack.c.l.b16 %v1198
        %v1231 = vunpack.c.l.b16 %v1199
        %v1232 = vunpack.c.l.b16 %v1200
        %v1233 = vunpack.c.l.b16 %v1201
        %v1234 = vunpack.c.l.b16 %v1202
        %v1235 = vunpack.c.l.b16 %v1203
        %v1236 = vunpack.c.l.b16 %v1204
        %v1237 = vunpack.c.l.b16 %v1205
        %v1238 = vunpack.c.l.b16 %v1206
        %v1239 = vunpack.c.l.b16 %v1207
        %v1240 = vunpack.c.l.b16 %v1208
        %v1241 = vunpack.c.l.b16 %v1209
        %v1242 = vunpack.c.l.b16 %v1210
        %v1243 = vunpack.c.l.b16 %v1211
        %v1244 = vpack.c.b16 %v1229, %v1228
        %v1245 = vpack.c.b16 %v1231, %v1230
        %v1246 = vpack.c.b16 %v1233, %v1232
        %v1247 = vpack.c.b16 %v1235, %v1234
        %v1248 = vpack.c.b16 %v1237, %v1236
        %v1249 = vpack.c.b16 %v1239, %v1238
        %v1250 = vpack.c.b16 %v1241, %v1240
        %v1251 = vpack.c.b16 %v1243, %v1242
        %1260 = vmatprep.subr.bf16.mxu0 0
        %1261 = vmatpush1.bf16.msra.mxu0 %v1244
        %1262 = vmatprep.subr.bf16.mxu0 0
        %1263 = vmatpush1.bf16.msra.mxu0 %v1245
        %1264 = vmatprep.subr.bf16.mxu0 0
        %1265 = vmatpush1.bf16.msra.mxu0 %v1246
        %1266 = vmatprep.subr.bf16.mxu0 0
        %1267 = vmatpush1.bf16.msra.mxu0 %v1247
        %1268 = vmatprep.subr.bf16.mxu0 0
        %1269 = vmatpush1.bf16.msra.mxu0 %v1248
        %1270 = vmatprep.subr.bf16.mxu0 0
        %1271 = vmatpush1.bf16.msra.mxu0 %v1249
        %1272 = vmatprep.subr.bf16.mxu0 0
        %1273 = vmatpush1.bf16.msra.mxu0 %v1250
        %1274 = vmatprep.subr.bf16.mxu0 0
        %1275 = vmatpush1.bf16.msra.mxu0 %v1251
        %1276 = vmatprep.subr.bf16.mxu0 0
        %1277 = vmatpush1.bf16.msra.mxu0 0
        %1278 = vmatprep.subr.bf16.mxu0 0
        %1279 = vmatpush1.bf16.msra.mxu0 0
        %1280 = vmatprep.subr.bf16.mxu0 0
        %1281 = vmatpush1.bf16.msra.mxu0 0
        %1282 = vmatprep.subr.bf16.mxu0 0
        %1283 = vmatpush1.bf16.msra.mxu0 0
        %1284 = vmatprep.subr.bf16.mxu0 0
        %1285 = vmatpush1.bf16.msra.mxu0 0
        %1286 = vmatprep.subr.bf16.mxu0 0
        %1287 = vmatpush1.bf16.msra.mxu0 0
        %1288 = vmatprep.subr.bf16.mxu0 0
        %1289 = vmatpush1.bf16.msra.mxu0 0
        %1290 = vmatprep.subr.bf16.mxu0 0
        %1291 = vmatpush1.bf16.msra.mxu0 0
        %1292 = vmatprep.mubr.bf16.mxu0 0
        %1293 = vmatmul.mubr.bf16.gmra.mrb[0].mxu0 %v1180
        %v1294 = vpop.f32.mrb[0].mxu0
        %v1295 = vadd.f32 0.0, %v1294
        %v1296 = vpop.f32.mrb[0].mxu0
        %v1297 = vpop.f32.mrb[0].mxu0
        %v1298 = vadd.f32 0.0, %v1297
        %v1299 = vpop.f32.mrb[0].mxu0
        %1300 = vmatprep.mubr.bf16.mxu0 0
        %1301 = vmatmul.mubr.bf16.gmra.mrb[0].mxu0 %v1181
        %v1302 = vpop.f32.mrb[0].mxu0
        %v1303 = vadd.f32 0.0, %v1302
        %v1304 = vpop.f32.mrb[0].mxu0
        %v1305 = vpop.f32.mrb[0].mxu0
        %v1306 = vadd.f32 0.0, %v1305
        %v1307 = vpop.f32.mrb[0].mxu0
        %1308 = vmatprep.mubr.bf16.mxu0 0
        %1309 = vmatmul.mubr.bf16.gmra.mrb[0].mxu0 %v1182
        %v1310 = vpop.f32.mrb[0].mxu0
        %v1311 = vadd.f32 0.0, %v1310
        %v1312 = vpop.f32.mrb[0].mxu0
        %v1313 = vpop.f32.mrb[0].mxu0
        %v1314 = vadd.f32 0.0, %v1313
        %v1315 = vpop.f32.mrb[0].mxu0
        %1316 = vmatprep.mubr.bf16.mxu0 0
        %1317 = vmatmul.mubr.bf16.gmra.mrb[0].mxu0 %v1183
        %v1318 = vpop.f32.mrb[0].mxu0
        %v1319 = vadd.f32 0.0, %v1318
        %v1320 = vpop.f32.mrb[0].mxu0
        %v1321 = vpop.f32.mrb[0].mxu0
        %v1322 = vadd.f32 0.0, %v1321
        %v1323 = vpop.f32.mrb[0].mxu0
        %1324 = vmatprep.mubr.bf16.mxu0 0
        %1325 = vmatmul.mubr.bf16.gmra.mrb[0].mxu0 %v1184
        %v1326 = vpop.f32.mrb[0].mxu0
        %v1327 = vadd.f32 0.0, %v1326
        %v1328 = vpop.f32.mrb[0].mxu0
        %v1329 = vpop.f32.mrb[0].mxu0
        %v1330 = vadd.f32 0.0, %v1329
        %v1331 = vpop.f32.mrb[0].mxu0
        %1332 = vmatprep.mubr.bf16.mxu0 0
        %1333 = vmatmul.mubr.bf16.gmra.mrb[0].mxu0 %v1185
        %v1334 = vpop.f32.mrb[0].mxu0
        %v1335 = vadd.f32 0.0, %v1334
        %v1336 = vpop.f32.mrb[0].mxu0
        %v1337 = vpop.f32.mrb[0].mxu0
        %v1338 = vadd.f32 0.0, %v1337
        %v1339 = vpop.f32.mrb[0].mxu0
        %1340 = vmatprep.mubr.bf16.mxu0 0
        %1341 = vmatmul.mubr.bf16.gmra.mrb[0].mxu0 %v1186
        %v1342 = vpop.f32.mrb[0].mxu0
        %v1343 = vadd.f32 0.0, %v1342
        %v1344 = vpop.f32.mrb[0].mxu0
        %v1345 = vpop.f32.mrb[0].mxu0
        %v1346 = vadd.f32 0.0, %v1345
        %v1347 = vpop.f32.mrb[0].mxu0
        %1348 = vmatprep.mubr.bf16.mxu0 0
        %1349 = vmatmul.mubr.bf16.gmra.mrb[0].mxu0 %v1187
        %v1350 = vpop.f32.mrb[0].mxu0
        %v1351 = vadd.f32 0.0, %v1350
        %v1352 = vpop.f32.mrb[0].mxu0
        %v1353 = vpop.f32.mrb[0].mxu0
        %v1354 = vadd.f32 0.0, %v1353
        %v1355 = vpop.f32.mrb[0].mxu0
        %1356 = vmatprep.mubr.bf16.mxu0 0
        %1357 = vmatmul.mubr.bf16.gmra.mrb[0].mxu0 %v1188
        %v1358 = vpop.f32.mrb[0].mxu0
        %v1359 = vadd.f32 0.0, %v1358
        %v1360 = vpop.f32.mrb[0].mxu0
        %v1361 = vpop.f32.mrb[0].mxu0
        %v1362 = vadd.f32 0.0, %v1361
        %v1363 = vpop.f32.mrb[0].mxu0
        %1364 = vmatprep.mubr.bf16.mxu0 0
        %1365 = vmatmul.mubr.bf16.gmra.mrb[0].mxu0 %v1189
        %v1366 = vpop.f32.mrb[0].mxu0
        %v1367 = vadd.f32 0.0, %v1366
        %v1368 = vpop.f32.mrb[0].mxu0
        %v1369 = vpop.f32.mrb[0].mxu0
        %v1370 = vadd.f32 0.0, %v1369
        %v1371 = vpop.f32.mrb[0].mxu0
        %1372 = vmatprep.mubr.bf16.mxu0 0
        %1373 = vmatmul.mubr.bf16.gmra.mrb[0].mxu0 %v1190
        %v1374 = vpop.f32.mrb[0].mxu0
        %v1375 = vadd.f32 0.0, %v1374
        %v1376 = vpop.f32.mrb[0].mxu0
        %v1377 = vpop.f32.mrb[0].mxu0
        %v1378 = vadd.f32 0.0, %v1377
        %v1379 = vpop.f32.mrb[0].mxu0
        %1380 = vmatprep.mubr.bf16.mxu0 0
        %1381 = vmatmul.mubr.bf16.gmra.mrb[0].mxu0 %v1191
        %v1382 = vpop.f32.mrb[0].mxu0
        %v1383 = vadd.f32 0.0, %v1382
        %v1384 = vpop.f32.mrb[0].mxu0
        %v1385 = vpop.f32.mrb[0].mxu0
        %v1386 = vadd.f32 0.0, %v1385
        %v1387 = vpop.f32.mrb[0].mxu0
        %1388 = vmatprep.mubr.bf16.mxu0 0
        %1389 = vmatmul.mubr.bf16.gmra.mrb[0].mxu0 %v1192
        %v1390 = vpop.f32.mrb[0].mxu0
        %v1391 = vadd.f32 0.0, %v1390
        %v1392 = vpop.f32.mrb[0].mxu0
        %v1393 = vpop.f32.mrb[0].mxu0
        %v1394 = vadd.f32 0.0, %v1393
        %v1395 = vpop.f32.mrb[0].mxu0
        %1396 = vmatprep.mubr.bf16.mxu0 0
        %1397 = vmatmul.mubr.bf16.gmra.mrb[0].mxu0 %v1193
        %v1398 = vpop.f32.mrb[0].mxu0
        %v1399 = vadd.f32 0.0, %v1398
        %v1400 = vpop.f32.mrb[0].mxu0
        %v1401 = vpop.f32.mrb[0].mxu0
        %v1402 = vadd.f32 0.0, %v1401
        %v1403 = vpop.f32.mrb[0].mxu0
        %1404 = vmatprep.mubr.bf16.mxu0 0
        %1405 = vmatmul.mubr.bf16.gmra.mrb[0].mxu0 %v1194
        %v1406 = vpop.f32.mrb[0].mxu0
        %v1407 = vadd.f32 0.0, %v1406
        %v1408 = vpop.f32.mrb[0].mxu0
        %v1409 = vpop.f32.mrb[0].mxu0
        %v1410 = vadd.f32 0.0, %v1409
        %v1411 = vpop.f32.mrb[0].mxu0
        %1412 = vmatprep.mubr.bf16.mxu0 0
        %1413 = vmatmul.mubr.bf16.gmra.mrb[0].mxu0 %v1195
        %v1414 = vpop.f32.mrb[0].mxu0
        %v1415 = vadd.f32 0.0, %v1414
        %v1416 = vpop.f32.mrb[0].mxu0
        %v1417 = vpop.f32.mrb[0].mxu0
        %v1418 = vadd.f32 0.0, %v1417
        %v1419 = vpop.f32.mrb[0].mxu0
        %1420 = vdwg.mxu0
        %v1421 = vadd.f32 %v1022, %v1295
        %v1422 = vadd.f32 %v1025, %v1298
        %v1423 = vadd.f32 %v1030, %v1303
        %v1424 = vadd.f32 %v1033, %v1306
        %v1425 = vadd.f32 %v1038, %v1311
        %v1426 = vadd.f32 %v1041, %v1314
        %v1427 = vadd.f32 %v1046, %v1319
        %v1428 = vadd.f32 %v1049, %v1322
        %v1429 = vadd.f32 %v1054, %v1327
        %v1430 = vadd.f32 %v1057, %v1330
        %v1431 = vadd.f32 %v1062, %v1335
        %v1432 = vadd.f32 %v1065, %v1338
        %v1433 = vadd.f32 %v1070, %v1343
        %v1434 = vadd.f32 %v1073, %v1346
        %v1435 = vadd.f32 %v1078, %v1351
        %v1436 = vadd.f32 %v1081, %v1354
        %v1437 = vadd.f32 %v1086, %v1359
        %v1438 = vadd.f32 %v1089, %v1362
        %v1439 = vadd.f32 %v1094, %v1367
        %v1440 = vadd.f32 %v1097, %v1370
        %v1441 = vadd.f32 %v1102, %v1375
        %v1442 = vadd.f32 %v1105, %v1378
        %v1443 = vadd.f32 %v1110, %v1383
        %v1444 = vadd.f32 %v1113, %v1386
        %v1445 = vadd.f32 %v1118, %v1391
        %v1446 = vadd.f32 %v1121, %v1394
        %v1447 = vadd.f32 %v1126, %v1399
        %v1448 = vadd.f32 %v1129, %v1402
        %v1449 = vadd.f32 %v1134, %v1407
        %v1450 = vadd.f32 %v1137, %v1410
        %v1451 = vadd.f32 %v1142, %v1415
        %v1452 = vadd.f32 %v1145, %v1418
        %v1453 = vld [vmem:[%s569] sm:$0xff]
        %v1454 = vld [vmem:[%s569 + $0x8] sm:$0xff]
        %v1455 = vld [vmem:[%s569 + $0x18] sm:$0xff]
        %v1456 = vld [vmem:[%s569 + $0x20] sm:$0xff]
        %v1457 = vld [vmem:[%s569 + $0x30] sm:$0xff]
        %v1458 = vld [vmem:[%s569 + $0x38] sm:$0xff]
        %v1459 = vld [vmem:[%s569 + $0x48] sm:$0xff]
        %v1460 = vld [vmem:[%s569 + $0x50] sm:$0xff]
        %v1461 = vld [vmem:[%s569 + $0x60] sm:$0xff]
        %v1462 = vld [vmem:[%s569 + $0x68] sm:$0xff]
        %v1463 = vld [vmem:[%s569 + $0x78] sm:$0xff]
        %v1464 = vld [vmem:[%s569 + $0x80] sm:$0xff]
        %v1465 = vld [vmem:[%s569 + $0x90] sm:$0xff]
        %v1466 = vld [vmem:[%s569 + $0x98] sm:$0xff]
        %v1467 = vld [vmem:[%s569 + $0xa8] sm:$0xff]
        %v1468 = vld [vmem:[%s569 + $0xb0] sm:$0xff]
        %v1469 = vld [vmem:[%s569 + $0xc0] sm:$0xff]
        %v1470 = vld [vmem:[%s569 + $0xc8] sm:$0xff]
        %v1471 = vld [vmem:[%s569 + $0xd8] sm:$0xff]
        %v1472 = vld [vmem:[%s569 + $0xe0] sm:$0xff]
        %v1473 = vld [vmem:[%s569 + $0xf0] sm:$0xff]
        %v1474 = vld [vmem:[%s569 + $0xf8] sm:$0xff]
        %v1475 = vld [vmem:[%s569 + $0x108] sm:$0xff]
        %v1476 = vld [vmem:[%s569 + $0x110] sm:$0xff]
        %v1477 = vld [vmem:[%s569 + $0x120] sm:$0xff]
        %v1478 = vld [vmem:[%s569 + $0x128] sm:$0xff]
        %v1479 = vld [vmem:[%s569 + $0x138] sm:$0xff]
        %v1480 = vld [vmem:[%s569 + $0x140] sm:$0xff]
        %v1481 = vld [vmem:[%s569 + $0x150] sm:$0xff]
        %v1482 = vld [vmem:[%s569 + $0x158] sm:$0xff]
        %v1483 = vld [vmem:[%s569 + $0x168] sm:$0xff]
        %v1484 = vld [vmem:[%s569 + $0x170] sm:$0xff]
        %v1485 = vpack.c.bf16 %v1454, %v1453
        %v1486 = vpack.c.bf16 %v1456, %v1455
        %v1487 = vpack.c.bf16 %v1458, %v1457
        %v1488 = vpack.c.bf16 %v1460, %v1459
        %v1489 = vpack.c.bf16 %v1462, %v1461
        %v1490 = vpack.c.bf16 %v1464, %v1463
        %v1491 = vpack.c.bf16 %v1466, %v1465
        %v1492 = vpack.c.bf16 %v1468, %v1467
        %v1493 = vpack.c.bf16 %v1470, %v1469
        %v1494 = vpack.c.bf16 %v1472, %v1471
        %v1495 = vpack.c.bf16 %v1474, %v1473
        %v1496 = vpack.c.bf16 %v1476, %v1475
        %v1497 = vpack.c.bf16 %v1478, %v1477
        %v1498 = vpack.c.bf16 %v1480, %v1479
        %v1499 = vpack.c.bf16 %v1482, %v1481
        %v1500 = vpack.c.bf16 %v1484, %v1483
        %v1501 = vld [vmem:[#allocation6 + $0xc0] sm:$0xf]
        %v1502 = vld [vmem:[#allocation6 + $0xc4] sm:$0xf]
        %v1503 = vld [vmem:[#allocation6 + $0xc8] sm:$0xf]
        %v1504 = vld [vmem:[#allocation6 + $0xcc] sm:$0xf]
        %v1505 = vld [vmem:[#allocation6 + $0xd0] sm:$0xf]
        %v1506 = vld [vmem:[#allocation6 + $0xd4] sm:$0xf]
        %v1507 = vld [vmem:[#allocation6 + $0xd8] sm:$0xf]
        %v1508 = vld [vmem:[#allocation6 + $0xdc] sm:$0xf]
        %v1509 = vld [vmem:[#allocation6 + $0xe0] sm:$0xf]
        %v1510 = vld [vmem:[#allocation6 + $0xe4] sm:$0xf]
        %v1511 = vld [vmem:[#allocation6 + $0xe8] sm:$0xf]
        %v1512 = vld [vmem:[#allocation6 + $0xec] sm:$0xf]
        %v1513 = vld [vmem:[#allocation6 + $0xf0] sm:$0xf]
        %v1514 = vld [vmem:[#allocation6 + $0xf4] sm:$0xf]
        %v1515 = vld [vmem:[#allocation6 + $0xf8] sm:$0xf]
        %v1516 = vld [vmem:[#allocation6 + $0xfc] sm:$0xf]
        %v1533 = vunpack.c.l.b16 %v1501
        %v1534 = vunpack.c.l.b16 %v1502
        %v1535 = vunpack.c.l.b16 %v1503
        %v1536 = vunpack.c.l.b16 %v1504
        %v1537 = vunpack.c.l.b16 %v1505
        %v1538 = vunpack.c.l.b16 %v1506
        %v1539 = vunpack.c.l.b16 %v1507
        %v1540 = vunpack.c.l.b16 %v1508
        %v1541 = vunpack.c.l.b16 %v1509
        %v1542 = vunpack.c.l.b16 %v1510
        %v1543 = vunpack.c.l.b16 %v1511
        %v1544 = vunpack.c.l.b16 %v1512
        %v1545 = vunpack.c.l.b16 %v1513
        %v1546 = vunpack.c.l.b16 %v1514
        %v1547 = vunpack.c.l.b16 %v1515
        %v1548 = vunpack.c.l.b16 %v1516
        %v1549 = vpack.c.b16 %v1534, %v1533
        %v1550 = vpack.c.b16 %v1536, %v1535
        %v1551 = vpack.c.b16 %v1538, %v1537
        %v1552 = vpack.c.b16 %v1540, %v1539
        %v1553 = vpack.c.b16 %v1542, %v1541
        %v1554 = vpack.c.b16 %v1544, %v1543
        %v1555 = vpack.c.b16 %v1546, %v1545
        %v1556 = vpack.c.b16 %v1548, %v1547
        %1565 = vmatprep.subr.bf16.mxu0 0
        %1566 = vmatpush1.bf16.msra.mxu0 %v1549
        %1567 = vmatprep.subr.bf16.mxu0 0
        %1568 = vmatpush1.bf16.msra.mxu0 %v1550
        %1569 = vmatprep.subr.bf16.mxu0 0
        %1570 = vmatpush1.bf16.msra.mxu0 %v1551
        %1571 = vmatprep.subr.bf16.mxu0 0
        %1572 = vmatpush1.bf16.msra.mxu0 %v1552
        %1573 = vmatprep.subr.bf16.mxu0 0
        %1574 = vmatpush1.bf16.msra.mxu0 %v1553
        %1575 = vmatprep.subr.bf16.mxu0 0
        %1576 = vmatpush1.bf16.msra.mxu0 %v1554
        %1577 = vmatprep.subr.bf16.mxu0 0
        %1578 = vmatpush1.bf16.msra.mxu0 %v1555
        %1579 = vmatprep.subr.bf16.mxu0 0
        %1580 = vmatpush1.bf16.msra.mxu0 %v1556
        %1581 = vmatprep.subr.bf16.mxu0 0
        %1582 = vmatpush1.bf16.msra.mxu0 0
        %1583 = vmatprep.subr.bf16.mxu0 0
        %1584 = vmatpush1.bf16.msra.mxu0 0
        %1585 = vmatprep.subr.bf16.mxu0 0
        %1586 = vmatpush1.bf16.msra.mxu0 0
        %1587 = vmatprep.subr.bf16.mxu0 0
        %1588 = vmatpush1.bf16.msra.mxu0 0
        %1589 = vmatprep.subr.bf16.mxu0 0
        %1590 = vmatpush1.bf16.msra.mxu0 0
        %1591 = vmatprep.subr.bf16.mxu0 0
        %1592 = vmatpush1.bf16.msra.mxu0 0
        %1593 = vmatprep.subr.bf16.mxu0 0
        %1594 = vmatpush1.bf16.msra.mxu0 0
        %1595 = vmatprep.subr.bf16.mxu0 0
        %1596 = vmatpush1.bf16.msra.mxu0 0
        %1597 = vmatprep.mubr.bf16.mxu0 0
        %1598 = vmatmul.mubr.bf16.gmra.mrb[0].mxu0 %v1485
        %v1599 = vpop.f32.mrb[0].mxu0
        %v1600 = vadd.f32 0.0, %v1599
        %v1601 = vpop.f32.mrb[0].mxu0
        %v1602 = vpop.f32.mrb[0].mxu0
        %v1603 = vadd.f32 0.0, %v1602
        %v1604 = vpop.f32.mrb[0].mxu0
        %1605 = vmatprep.mubr.bf16.mxu0 0
        %1606 = vmatmul.mubr.bf16.gmra.mrb[0].mxu0 %v1486
        %v1607 = vpop.f32.mrb[0].mxu0
        %v1608 = vadd.f32 0.0, %v1607
        %v1609 = vpop.f32.mrb[0].mxu0
        %v1610 = vpop.f32.mrb[0].mxu0
        %v1611 = vadd.f32 0.0, %v1610
        %v1612 = vpop.f32.mrb[0].mxu0
        %1613 = vmatprep.mubr.bf16.mxu0 0
        %1614 = vmatmul.mubr.bf16.gmra.mrb[0].mxu0 %v1487
        %v1615 = vpop.f32.mrb[0].mxu0
        %v1616 = vadd.f32 0.0, %v1615
        %v1617 = vpop.f32.mrb[0].mxu0
        %v1618 = vpop.f32.mrb[0].mxu0
        %v1619 = vadd.f32 0.0, %v1618
        %v1620 = vpop.f32.mrb[0].mxu0
        %1621 = vmatprep.mubr.bf16.mxu0 0
        %1622 = vmatmul.mubr.bf16.gmra.mrb[0].mxu0 %v1488
        %v1623 = vpop.f32.mrb[0].mxu0
        %v1624 = vadd.f32 0.0, %v1623
        %v1625 = vpop.f32.mrb[0].mxu0
        %v1626 = vpop.f32.mrb[0].mxu0
        %v1627 = vadd.f32 0.0, %v1626
        %v1628 = vpop.f32.mrb[0].mxu0
        %1629 = vmatprep.mubr.bf16.mxu0 0
        %1630 = vmatmul.mubr.bf16.gmra.mrb[0].mxu0 %v1489
        %v1631 = vpop.f32.mrb[0].mxu0
        %v1632 = vadd.f32 0.0, %v1631
        %v1633 = vpop.f32.mrb[0].mxu0
        %v1634 = vpop.f32.mrb[0].mxu0
        %v1635 = vadd.f32 0.0, %v1634
        %v1636 = vpop.f32.mrb[0].mxu0
        %1637 = vmatprep.mubr.bf16.mxu0 0
        %1638 = vmatmul.mubr.bf16.gmra.mrb[0].mxu0 %v1490
        %v1639 = vpop.f32.mrb[0].mxu0
        %v1640 = vadd.f32 0.0, %v1639
        %v1641 = vpop.f32.mrb[0].mxu0
        %v1642 = vpop.f32.mrb[0].mxu0
        %v1643 = vadd.f32 0.0, %v1642
        %v1644 = vpop.f32.mrb[0].mxu0
        %1645 = vmatprep.mubr.bf16.mxu0 0
        %1646 = vmatmul.mubr.bf16.gmra.mrb[0].mxu0 %v1491
        %v1647 = vpop.f32.mrb[0].mxu0
        %v1648 = vadd.f32 0.0, %v1647
        %v1649 = vpop.f32.mrb[0].mxu0
        %v1650 = vpop.f32.mrb[0].mxu0
        %v1651 = vadd.f32 0.0, %v1650
        %v1652 = vpop.f32.mrb[0].mxu0
        %1653 = vmatprep.mubr.bf16.mxu0 0
        %1654 = vmatmul.mubr.bf16.gmra.mrb[0].mxu0 %v1492
        %v1655 = vpop.f32.mrb[0].mxu0
        %v1656 = vadd.f32 0.0, %v1655
        %v1657 = vpop.f32.mrb[0].mxu0
        %v1658 = vpop.f32.mrb[0].mxu0
        %v1659 = vadd.f32 0.0, %v1658
        %v1660 = vpop.f32.mrb[0].mxu0
        %1661 = vmatprep.mubr.bf16.mxu0 0
        %1662 = vmatmul.mubr.bf16.gmra.mrb[0].mxu0 %v1493
        %v1663 = vpop.f32.mrb[0].mxu0
        %v1664 = vadd.f32 0.0, %v1663
        %v1665 = vpop.f32.mrb[0].mxu0
        %v1666 = vpop.f32.mrb[0].mxu0
        %v1667 = vadd.f32 0.0, %v1666
        %v1668 = vpop.f32.mrb[0].mxu0
        %1669 = vmatprep.mubr.bf16.mxu0 0
        %1670 = vmatmul.mubr.bf16.gmra.mrb[0].mxu0 %v1494
        %v1671 = vpop.f32.mrb[0].mxu0
        %v1672 = vadd.f32 0.0, %v1671
        %v1673 = vpop.f32.mrb[0].mxu0
        %v1674 = vpop.f32.mrb[0].mxu0
        %v1675 = vadd.f32 0.0, %v1674
        %v1676 = vpop.f32.mrb[0].mxu0
        %1677 = vmatprep.mubr.bf16.mxu0 0
        %1678 = vmatmul.mubr.bf16.gmra.mrb[0].mxu0 %v1495
        %v1679 = vpop.f32.mrb[0].mxu0
        %v1680 = vadd.f32 0.0, %v1679
        %v1681 = vpop.f32.mrb[0].mxu0
        %v1682 = vpop.f32.mrb[0].mxu0
        %v1683 = vadd.f32 0.0, %v1682
        %v1684 = vpop.f32.mrb[0].mxu0
        %1685 = vmatprep.mubr.bf16.mxu0 0
        %1686 = vmatmul.mubr.bf16.gmra.mrb[0].mxu0 %v1496
        %v1687 = vpop.f32.mrb[0].mxu0
        %v1688 = vadd.f32 0.0, %v1687
        %v1689 = vpop.f32.mrb[0].mxu0
        %v1690 = vpop.f32.mrb[0].mxu0
        %v1691 = vadd.f32 0.0, %v1690
        %v1692 = vpop.f32.mrb[0].mxu0
        %1693 = vmatprep.mubr.bf16.mxu0 0
        %1694 = vmatmul.mubr.bf16.gmra.mrb[0].mxu0 %v1497
        %v1695 = vpop.f32.mrb[0].mxu0
        %v1696 = vadd.f32 0.0, %v1695
        %v1697 = vpop.f32.mrb[0].mxu0
        %v1698 = vpop.f32.mrb[0].mxu0
        %v1699 = vadd.f32 0.0, %v1698
        %v1700 = vpop.f32.mrb[0].mxu0
        %1701 = vmatprep.mubr.bf16.mxu0 0
        %1702 = vmatmul.mubr.bf16.gmra.mrb[0].mxu0 %v1498
        %v1703 = vpop.f32.mrb[0].mxu0
        %v1704 = vadd.f32 0.0, %v1703
        %v1705 = vpop.f32.mrb[0].mxu0
        %v1706 = vpop.f32.mrb[0].mxu0
        %v1707 = vadd.f32 0.0, %v1706
        %v1708 = vpop.f32.mrb[0].mxu0
        %1709 = vmatprep.mubr.bf16.mxu0 0
        %1710 = vmatmul.mubr.bf16.gmra.mrb[0].mxu0 %v1499
        %v1711 = vpop.f32.mrb[0].mxu0
        %v1712 = vadd.f32 0.0, %v1711
        %v1713 = vpop.f32.mrb[0].mxu0
        %v1714 = vpop.f32.mrb[0].mxu0
        %v1715 = vadd.f32 0.0, %v1714
        %v1716 = vpop.f32.mrb[0].mxu0
        %1717 = vmatprep.mubr.bf16.mxu0 0
        %1718 = vmatmul.mubr.bf16.gmra.mrb[0].mxu0 %v1500
        %v1719 = vpop.f32.mrb[0].mxu0
        %v1720 = vadd.f32 0.0, %v1719
        %v1721 = vpop.f32.mrb[0].mxu0
        %v1722 = vpop.f32.mrb[0].mxu0
        %v1723 = vadd.f32 0.0, %v1722
        %v1724 = vpop.f32.mrb[0].mxu0
        %1725 = vdwg.mxu0
        %v1726 = vadd.f32 %v1421, %v1600
        %v1727 = vadd.f32 %v1422, %v1603
        %v1728 = vadd.f32 %v1423, %v1608
        %v1729 = vadd.f32 %v1424, %v1611
        %v1730 = vadd.f32 %v1425, %v1616
        %v1731 = vadd.f32 %v1426, %v1619
        %v1732 = vadd.f32 %v1427, %v1624
        %v1733 = vadd.f32 %v1428, %v1627
        %v1734 = vadd.f32 %v1429, %v1632
        %v1735 = vadd.f32 %v1430, %v1635
        %v1736 = vadd.f32 %v1431, %v1640
        %v1737 = vadd.f32 %v1432, %v1643
        %v1738 = vadd.f32 %v1433, %v1648
        %v1739 = vadd.f32 %v1434, %v1651
        %v1740 = vadd.f32 %v1435, %v1656
        %v1741 = vadd.f32 %v1436, %v1659
        %v1742 = vadd.f32 %v1437, %v1664
        %v1743 = vadd.f32 %v1438, %v1667
        %v1744 = vadd.f32 %v1439, %v1672
        %v1745 = vadd.f32 %v1440, %v1675
        %v1746 = vadd.f32 %v1441, %v1680
        %v1747 = vadd.f32 %v1442, %v1683
        %v1748 = vadd.f32 %v1443, %v1688
        %v1749 = vadd.f32 %v1444, %v1691
        %v1750 = vadd.f32 %v1445, %v1696
        %v1751 = vadd.f32 %v1446, %v1699
        %v1752 = vadd.f32 %v1447, %v1704
        %v1753 = vadd.f32 %v1448, %v1707
        %v1754 = vadd.f32 %v1449, %v1712
        %v1755 = vadd.f32 %v1450, %v1715
        %v1756 = vadd.f32 %v1451, %v1720
        %v1757 = vadd.f32 %v1452, %v1723
        %v1758 = vld [vmem:[%s569 + $0x1] sm:$0xff]
        %v1759 = vld [vmem:[%s569 + $0x9] sm:$0xff]
        %v1760 = vld [vmem:[%s569 + $0x19] sm:$0xff]
        %v1761 = vld [vmem:[%s569 + $0x21] sm:$0xff]
        %v1762 = vld [vmem:[%s569 + $0x31] sm:$0xff]
        %v1763 = vld [vmem:[%s569 + $0x39] sm:$0xff]
        %v1764 = vld [vmem:[%s569 + $0x49] sm:$0xff]
        %v1765 = vld [vmem:[%s569 + $0x51] sm:$0xff]
        %v1766 = vld [vmem:[%s569 + $0x61] sm:$0xff]
        %v1767 = vld [vmem:[%s569 + $0x69] sm:$0xff]
        %v1768 = vld [vmem:[%s569 + $0x79] sm:$0xff]
        %v1769 = vld [vmem:[%s569 + $0x81] sm:$0xff]
        %v1770 = vld [vmem:[%s569 + $0x91] sm:$0xff]
        %v1771 = vld [vmem:[%s569 + $0x99] sm:$0xff]
        %v1772 = vld [vmem:[%s569 + $0xa9] sm:$0xff]
        %v1773 = vld [vmem:[%s569 + $0xb1] sm:$0xff]
        %v1774 = vld [vmem:[%s569 + $0xc1] sm:$0xff]
        %v1775 = vld [vmem:[%s569 + $0xc9] sm:$0xff]
        %v1776 = vld [vmem:[%s569 + $0xd9] sm:$0xff]
        %v1777 = vld [vmem:[%s569 + $0xe1] sm:$0xff]
        %v1778 = vld [vmem:[%s569 + $0xf1] sm:$0xff]
        %v1779 = vld [vmem:[%s569 + $0xf9] sm:$0xff]
        %v1780 = vld [vmem:[%s569 + $0x109] sm:$0xff]
        %v1781 = vld [vmem:[%s569 + $0x111] sm:$0xff]
        %v1782 = vld [vmem:[%s569 + $0x121] sm:$0xff]
        %v1783 = vld [vmem:[%s569 + $0x129] sm:$0xff]
        %v1784 = vld [vmem:[%s569 + $0x139] sm:$0xff]
        %v1785 = vld [vmem:[%s569 + $0x141] sm:$0xff]
        %v1786 = vld [vmem:[%s569 + $0x151] sm:$0xff]
        %v1787 = vld [vmem:[%s569 + $0x159] sm:$0xff]
        %v1788 = vld [vmem:[%s569 + $0x169] sm:$0xff]
        %v1789 = vld [vmem:[%s569 + $0x171] sm:$0xff]
        %v1790 = vpack.c.bf16 %v1759, %v1758
        %v1791 = vpack.c.bf16 %v1761, %v1760
        %v1792 = vpack.c.bf16 %v1763, %v1762
        %v1793 = vpack.c.bf16 %v1765, %v1764
        %v1794 = vpack.c.bf16 %v1767, %v1766
        %v1795 = vpack.c.bf16 %v1769, %v1768
        %v1796 = vpack.c.bf16 %v1771, %v1770
        %v1797 = vpack.c.bf16 %v1773, %v1772
        %v1798 = vpack.c.bf16 %v1775, %v1774
        %v1799 = vpack.c.bf16 %v1777, %v1776
        %v1800 = vpack.c.bf16 %v1779, %v1778
        %v1801 = vpack.c.bf16 %v1781, %v1780
        %v1802 = vpack.c.bf16 %v1783, %v1782
        %v1803 = vpack.c.bf16 %v1785, %v1784
        %v1804 = vpack.c.bf16 %v1787, %v1786
        %v1805 = vpack.c.bf16 %v1789, %v1788
        %v1806 = vld [vmem:[#allocation6 + $0x100] sm:$0xf]
        %v1807 = vld [vmem:[#allocation6 + $0x104] sm:$0xf]
        %v1808 = vld [vmem:[#allocation6 + $0x108] sm:$0xf]
        %v1809 = vld [vmem:[#allocation6 + $0x10c] sm:$0xf]
        %v1810 = vld [vmem:[#allocation6 + $0x110] sm:$0xf]
        %v1811 = vld [vmem:[#allocation6 + $0x114] sm:$0xf]
        %v1812 = vld [vmem:[#allocation6 + $0x118] sm:$0xf]
        %v1813 = vld [vmem:[#allocation6 + $0x11c] sm:$0xf]
        %v1814 = vld [vmem:[#allocation6 + $0x120] sm:$0xf]
        %v1815 = vld [vmem:[#allocation6 + $0x124] sm:$0xf]
        %v1816 = vld [vmem:[#allocation6 + $0x128] sm:$0xf]
        %v1817 = vld [vmem:[#allocation6 + $0x12c] sm:$0xf]
        %v1818 = vld [vmem:[#allocation6 + $0x130] sm:$0xf]
        %v1819 = vld [vmem:[#allocation6 + $0x134] sm:$0xf]
        %v1820 = vld [vmem:[#allocation6 + $0x138] sm:$0xf]
        %v1821 = vld [vmem:[#allocation6 + $0x13c] sm:$0xf]
        %v1838 = vunpack.c.l.b16 %v1806
        %v1839 = vunpack.c.l.b16 %v1807
        %v1840 = vunpack.c.l.b16 %v1808
        %v1841 = vunpack.c.l.b16 %v1809
        %v1842 = vunpack.c.l.b16 %v1810
        %v1843 = vunpack.c.l.b16 %v1811
        %v1844 = vunpack.c.l.b16 %v1812
        %v1845 = vunpack.c.l.b16 %v1813
        %v1846 = vunpack.c.l.b16 %v1814
        %v1847 = vunpack.c.l.b16 %v1815
        %v1848 = vunpack.c.l.b16 %v1816
        %v1849 = vunpack.c.l.b16 %v1817
        %v1850 = vunpack.c.l.b16 %v1818
        %v1851 = vunpack.c.l.b16 %v1819
        %v1852 = vunpack.c.l.b16 %v1820
        %v1853 = vunpack.c.l.b16 %v1821
        %v1854 = vpack.c.b16 %v1839, %v1838
        %v1855 = vpack.c.b16 %v1841, %v1840
        %v1856 = vpack.c.b16 %v1843, %v1842
        %v1857 = vpack.c.b16 %v1845, %v1844
        %v1858 = vpack.c.b16 %v1847, %v1846
        %v1859 = vpack.c.b16 %v1849, %v1848
        %v1860 = vpack.c.b16 %v1851, %v1850
        %v1861 = vpack.c.b16 %v1853, %v1852
        %1870 = vmatprep.subr.bf16.mxu0 0
        %1871 = vmatpush1.bf16.msra.mxu0 %v1854
        %1872 = vmatprep.subr.bf16.mxu0 0
        %1873 = vmatpush1.bf16.msra.mxu0 %v1855
        %1874 = vmatprep.subr.bf16.mxu0 0
        %1875 = vmatpush1.bf16.msra.mxu0 %v1856
        %1876 = vmatprep.subr.bf16.mxu0 0
        %1877 = vmatpush1.bf16.msra.mxu0 %v1857
        %1878 = vmatprep.subr.bf16.mxu0 0
        %1879 = vmatpush1.bf16.msra.mxu0 %v1858
        %1880 = vmatprep.subr.bf16.mxu0 0
        %1881 = vmatpush1.bf16.msra.mxu0 %v1859
        %1882 = vmatprep.subr.bf16.mxu0 0
        %1883 = vmatpush1.bf16.msra.mxu0 %v1860
        %1884 = vmatprep.subr.bf16.mxu0 0
        %1885 = vmatpush1.bf16.msra.mxu0 %v1861
        %1886 = vmatprep.subr.bf16.mxu0 0
        %1887 = vmatpush1.bf16.msra.mxu0 0
        %1888 = vmatprep.subr.bf16.mxu0 0
        %1889 = vmatpush1.bf16.msra.mxu0 0
        %1890 = vmatprep.subr.bf16.mxu0 0
        %1891 = vmatpush1.bf16.msra.mxu0 0
        %1892 = vmatprep.subr.bf16.mxu0 0
        %1893 = vmatpush1.bf16.msra.mxu0 0
        %1894 = vmatprep.subr.bf16.mxu0 0
        %1895 = vmatpush1.bf16.msra.mxu0 0
        %1896 = vmatprep.subr.bf16.mxu0 0
        %1897 = vmatpush1.bf16.msra.mxu0 0
        %1898 = vmatprep.subr.bf16.mxu0 0
        %1899 = vmatpush1.bf16.msra.mxu0 0
        %1900 = vmatprep.subr.bf16.mxu0 0
        %1901 = vmatpush1.bf16.msra.mxu0 0
        %1902 = vmatprep.mubr.bf16.mxu0 0
        %1903 = vmatmul.mubr.bf16.gmra.mrb[0].mxu0 %v1790
        %v1904 = vpop.f32.mrb[0].mxu0
        %v1905 = vadd.f32 0.0, %v1904
        %v1906 = vpop.f32.mrb[0].mxu0
        %v1907 = vpop.f32.mrb[0].mxu0
        %v1908 = vadd.f32 0.0, %v1907
        %v1909 = vpop.f32.mrb[0].mxu0
        %1910 = vmatprep.mubr.bf16.mxu0 0
        %1911 = vmatmul.mubr.bf16.gmra.mrb[0].mxu0 %v1791
        %v1912 = vpop.f32.mrb[0].mxu0
        %v1913 = vadd.f32 0.0, %v1912
        %v1914 = vpop.f32.mrb[0].mxu0
        %v1915 = vpop.f32.mrb[0].mxu0
        %v1916 = vadd.f32 0.0, %v1915
        %v1917 = vpop.f32.mrb[0].mxu0
        %1918 = vmatprep.mubr.bf16.mxu0 0
        %1919 = vmatmul.mubr.bf16.gmra.mrb[0].mxu0 %v1792
        %v1920 = vpop.f32.mrb[0].mxu0
        %v1921 = vadd.f32 0.0, %v1920
        %v1922 = vpop.f32.mrb[0].mxu0
        %v1923 = vpop.f32.mrb[0].mxu0
        %v1924 = vadd.f32 0.0, %v1923
        %v1925 = vpop.f32.mrb[0].mxu0
        %1926 = vmatprep.mubr.bf16.mxu0 0
        %1927 = vmatmul.mubr.bf16.gmra.mrb[0].mxu0 %v1793
        %v1928 = vpop.f32.mrb[0].mxu0
        %v1929 = vadd.f32 0.0, %v1928
        %v1930 = vpop.f32.mrb[0].mxu0
        %v1931 = vpop.f32.mrb[0].mxu0
        %v1932 = vadd.f32 0.0, %v1931
        %v1933 = vpop.f32.mrb[0].mxu0
        %1934 = vmatprep.mubr.bf16.mxu0 0
        %1935 = vmatmul.mubr.bf16.gmra.mrb[0].mxu0 %v1794
        %v1936 = vpop.f32.mrb[0].mxu0
        %v1937 = vadd.f32 0.0, %v1936
        %v1938 = vpop.f32.mrb[0].mxu0
        %v1939 = vpop.f32.mrb[0].mxu0
        %v1940 = vadd.f32 0.0, %v1939
        %v1941 = vpop.f32.mrb[0].mxu0
        %1942 = vmatprep.mubr.bf16.mxu0 0
        %1943 = vmatmul.mubr.bf16.gmra.mrb[0].mxu0 %v1795
        %v1944 = vpop.f32.mrb[0].mxu0
        %v1945 = vadd.f32 0.0, %v1944
        %v1946 = vpop.f32.mrb[0].mxu0
        %v1947 = vpop.f32.mrb[0].mxu0
        %v1948 = vadd.f32 0.0, %v1947
        %v1949 = vpop.f32.mrb[0].mxu0
        %1950 = vmatprep.mubr.bf16.mxu0 0
        %1951 = vmatmul.mubr.bf16.gmra.mrb[0].mxu0 %v1796
        %v1952 = vpop.f32.mrb[0].mxu0
        %v1953 = vadd.f32 0.0, %v1952
        %v1954 = vpop.f32.mrb[0].mxu0
        %v1955 = vpop.f32.mrb[0].mxu0
        %v1956 = vadd.f32 0.0, %v1955
        %v1957 = vpop.f32.mrb[0].mxu0
        %1958 = vmatprep.mubr.bf16.mxu0 0
        %1959 = vmatmul.mubr.bf16.gmra.mrb[0].mxu0 %v1797
        %v1960 = vpop.f32.mrb[0].mxu0
        %v1961 = vadd.f32 0.0, %v1960
        %v1962 = vpop.f32.mrb[0].mxu0
        %v1963 = vpop.f32.mrb[0].mxu0
        %v1964 = vadd.f32 0.0, %v1963
        %v1965 = vpop.f32.mrb[0].mxu0
        %1966 = vmatprep.mubr.bf16.mxu0 0
        %1967 = vmatmul.mubr.bf16.gmra.mrb[0].mxu0 %v1798
        %v1968 = vpop.f32.mrb[0].mxu0
        %v1969 = vadd.f32 0.0, %v1968
        %v1970 = vpop.f32.mrb[0].mxu0
        %v1971 = vpop.f32.mrb[0].mxu0
        %v1972 = vadd.f32 0.0, %v1971
        %v1973 = vpop.f32.mrb[0].mxu0
        %1974 = vmatprep.mubr.bf16.mxu0 0
        %1975 = vmatmul.mubr.bf16.gmra.mrb[0].mxu0 %v1799
        %v1976 = vpop.f32.mrb[0].mxu0
        %v1977 = vadd.f32 0.0, %v1976
        %v1978 = vpop.f32.mrb[0].mxu0
        %v1979 = vpop.f32.mrb[0].mxu0
        %v1980 = vadd.f32 0.0, %v1979
        %v1981 = vpop.f32.mrb[0].mxu0
        %1982 = vmatprep.mubr.bf16.mxu0 0
        %1983 = vmatmul.mubr.bf16.gmra.mrb[0].mxu0 %v1800
        %v1984 = vpop.f32.mrb[0].mxu0
        %v1985 = vadd.f32 0.0, %v1984
        %v1986 = vpop.f32.mrb[0].mxu0
        %v1987 = vpop.f32.mrb[0].mxu0
        %v1988 = vadd.f32 0.0, %v1987
        %v1989 = vpop.f32.mrb[0].mxu0
        %1990 = vmatprep.mubr.bf16.mxu0 0
        %1991 = vmatmul.mubr.bf16.gmra.mrb[0].mxu0 %v1801
        %v1992 = vpop.f32.mrb[0].mxu0
        %v1993 = vadd.f32 0.0, %v1992
        %v1994 = vpop.f32.mrb[0].mxu0
        %v1995 = vpop.f32.mrb[0].mxu0
        %v1996 = vadd.f32 0.0, %v1995
        %v1997 = vpop.f32.mrb[0].mxu0
        %1998 = vmatprep.mubr.bf16.mxu0 0
        %1999 = vmatmul.mubr.bf16.gmra.mrb[0].mxu0 %v1802
        %v2000 = vpop.f32.mrb[0].mxu0
        %v2001 = vadd.f32 0.0, %v2000
        %v2002 = vpop.f32.mrb[0].mxu0
        %v2003 = vpop.f32.mrb[0].mxu0
        %v2004 = vadd.f32 0.0, %v2003
        %v2005 = vpop.f32.mrb[0].mxu0
        %2006 = vmatprep.mubr.bf16.mxu0 0
        %2007 = vmatmul.mubr.bf16.gmra.mrb[0].mxu0 %v1803
        %v2008 = vpop.f32.mrb[0].mxu0
        %v2009 = vadd.f32 0.0, %v2008
        %v2010 = vpop.f32.mrb[0].mxu0
        %v2011 = vpop.f32.mrb[0].mxu0
        %v2012 = vadd.f32 0.0, %v2011
        %v2013 = vpop.f32.mrb[0].mxu0
        %2014 = vmatprep.mubr.bf16.mxu0 0
        %2015 = vmatmul.mubr.bf16.gmra.mrb[0].mxu0 %v1804
        %v2016 = vpop.f32.mrb[0].mxu0
        %v2017 = vadd.f32 0.0, %v2016
        %v2018 = vpop.f32.mrb[0].mxu0
        %v2019 = vpop.f32.mrb[0].mxu0
        %v2020 = vadd.f32 0.0, %v2019
        %v2021 = vpop.f32.mrb[0].mxu0
        %2022 = vmatprep.mubr.bf16.mxu0 0
        %2023 = vmatmul.mubr.bf16.gmra.mrb[0].mxu0 %v1805
        %v2024 = vpop.f32.mrb[0].mxu0
        %v2025 = vadd.f32 0.0, %v2024
        %v2026 = vpop.f32.mrb[0].mxu0
        %v2027 = vpop.f32.mrb[0].mxu0
        %v2028 = vadd.f32 0.0, %v2027
        %v2029 = vpop.f32.mrb[0].mxu0
        %2030 = vdwg.mxu0
        %v2031 = vadd.f32 %v1726, %v1905
        %v2032 = vadd.f32 %v1727, %v1908
        %v2033 = vadd.f32 %v1728, %v1913
        %v2034 = vadd.f32 %v1729, %v1916
        %v2035 = vadd.f32 %v1730, %v1921
        %v2036 = vadd.f32 %v1731, %v1924
        %v2037 = vadd.f32 %v1732, %v1929
        %v2038 = vadd.f32 %v1733, %v1932
        %v2039 = vadd.f32 %v1734, %v1937
        %v2040 = vadd.f32 %v1735, %v1940
        %v2041 = vadd.f32 %v1736, %v1945
        %v2042 = vadd.f32 %v1737, %v1948
        %v2043 = vadd.f32 %v1738, %v1953
        %v2044 = vadd.f32 %v1739, %v1956
        %v2045 = vadd.f32 %v1740, %v1961
        %v2046 = vadd.f32 %v1741, %v1964
        %v2047 = vadd.f32 %v1742, %v1969
        %v2048 = vadd.f32 %v1743, %v1972
        %v2049 = vadd.f32 %v1744, %v1977
        %v2050 = vadd.f32 %v1745, %v1980
        %v2051 = vadd.f32 %v1746, %v1985
        %v2052 = vadd.f32 %v1747, %v1988
        %v2053 = vadd.f32 %v1748, %v1993
        %v2054 = vadd.f32 %v1749, %v1996
        %v2055 = vadd.f32 %v1750, %v2001
        %v2056 = vadd.f32 %v1751, %v2004
        %v2057 = vadd.f32 %v1752, %v2009
        %v2058 = vadd.f32 %v1753, %v2012
        %v2059 = vadd.f32 %v1754, %v2017
        %v2060 = vadd.f32 %v1755, %v2020
        %v2061 = vadd.f32 %v1756, %v2025
        %v2062 = vadd.f32 %v1757, %v2028
        %v2063 = vld [vmem:[%s569 + $0x2] sm:$0xff]
        %v2064 = vld [vmem:[%s569 + $0xa] sm:$0xff]
        %v2065 = vld [vmem:[%s569 + $0x1a] sm:$0xff]
        %v2066 = vld [vmem:[%s569 + $0x22] sm:$0xff]
        %v2067 = vld [vmem:[%s569 + $0x32] sm:$0xff]
        %v2068 = vld [vmem:[%s569 + $0x3a] sm:$0xff]
        %v2069 = vld [vmem:[%s569 + $0x4a] sm:$0xff]
        %v2070 = vld [vmem:[%s569 + $0x52] sm:$0xff]
        %v2071 = vld [vmem:[%s569 + $0x62] sm:$0xff]
        %v2072 = vld [vmem:[%s569 + $0x6a] sm:$0xff]
        %v2073 = vld [vmem:[%s569 + $0x7a] sm:$0xff]
        %v2074 = vld [vmem:[%s569 + $0x82] sm:$0xff]
        %v2075 = vld [vmem:[%s569 + $0x92] sm:$0xff]
        %v2076 = vld [vmem:[%s569 + $0x9a] sm:$0xff]
        %v2077 = vld [vmem:[%s569 + $0xaa] sm:$0xff]
        %v2078 = vld [vmem:[%s569 + $0xb2] sm:$0xff]
        %v2079 = vld [vmem:[%s569 + $0xc2] sm:$0xff]
        %v2080 = vld [vmem:[%s569 + $0xca] sm:$0xff]
        %v2081 = vld [vmem:[%s569 + $0xda] sm:$0xff]
        %v2082 = vld [vmem:[%s569 + $0xe2] sm:$0xff]
        %v2083 = vld [vmem:[%s569 + $0xf2] sm:$0xff]
        %v2084 = vld [vmem:[%s569 + $0xfa] sm:$0xff]
        %v2085 = vld [vmem:[%s569 + $0x10a] sm:$0xff]
        %v2086 = vld [vmem:[%s569 + $0x112] sm:$0xff]
        %v2087 = vld [vmem:[%s569 + $0x122] sm:$0xff]
        %v2088 = vld [vmem:[%s569 + $0x12a] sm:$0xff]
        %v2089 = vld [vmem:[%s569 + $0x13a] sm:$0xff]
        %v2090 = vld [vmem:[%s569 + $0x142] sm:$0xff]
        %v2091 = vld [vmem:[%s569 + $0x152] sm:$0xff]
        %v2092 = vld [vmem:[%s569 + $0x15a] sm:$0xff]
        %v2093 = vld [vmem:[%s569 + $0x16a] sm:$0xff]
        %v2094 = vld [vmem:[%s569 + $0x172] sm:$0xff]
        %v2095 = vpack.c.bf16 %v2064, %v2063
        %v2096 = vpack.c.bf16 %v2066, %v2065
        %v2097 = vpack.c.bf16 %v2068, %v2067
        %v2098 = vpack.c.bf16 %v2070, %v2069
        %v2099 = vpack.c.bf16 %v2072, %v2071
        %v2100 = vpack.c.bf16 %v2074, %v2073
        %v2101 = vpack.c.bf16 %v2076, %v2075
        %v2102 = vpack.c.bf16 %v2078, %v2077
        %v2103 = vpack.c.bf16 %v2080, %v2079
        %v2104 = vpack.c.bf16 %v2082, %v2081
        %v2105 = vpack.c.bf16 %v2084, %v2083
        %v2106 = vpack.c.bf16 %v2086, %v2085
        %v2107 = vpack.c.bf16 %v2088, %v2087
        %v2108 = vpack.c.bf16 %v2090, %v2089
        %v2109 = vpack.c.bf16 %v2092, %v2091
        %v2110 = vpack.c.bf16 %v2094, %v2093
        %v2111 = vld [vmem:[#allocation6 + $0x140] sm:$0xf]
        %v2112 = vld [vmem:[#allocation6 + $0x144] sm:$0xf]
        %v2113 = vld [vmem:[#allocation6 + $0x148] sm:$0xf]
        %v2114 = vld [vmem:[#allocation6 + $0x14c] sm:$0xf]
        %v2115 = vld [vmem:[#allocation6 + $0x150] sm:$0xf]
        %v2116 = vld [vmem:[#allocation6 + $0x154] sm:$0xf]
        %v2117 = vld [vmem:[#allocation6 + $0x158] sm:$0xf]
        %v2118 = vld [vmem:[#allocation6 + $0x15c] sm:$0xf]
        %v2119 = vld [vmem:[#allocation6 + $0x160] sm:$0xf]
        %v2120 = vld [vmem:[#allocation6 + $0x164] sm:$0xf]
        %v2121 = vld [vmem:[#allocation6 + $0x168] sm:$0xf]
        %v2122 = vld [vmem:[#allocation6 + $0x16c] sm:$0xf]
        %v2123 = vld [vmem:[#allocation6 + $0x170] sm:$0xf]
        %v2124 = vld [vmem:[#allocation6 + $0x174] sm:$0xf]
        %v2125 = vld [vmem:[#allocation6 + $0x178] sm:$0xf]
        %v2126 = vld [vmem:[#allocation6 + $0x17c] sm:$0xf]
        %v2143 = vunpack.c.l.b16 %v2111
        %v2144 = vunpack.c.l.b16 %v2112
        %v2145 = vunpack.c.l.b16 %v2113
        %v2146 = vunpack.c.l.b16 %v2114
        %v2147 = vunpack.c.l.b16 %v2115
        %v2148 = vunpack.c.l.b16 %v2116
        %v2149 = vunpack.c.l.b16 %v2117
        %v2150 = vunpack.c.l.b16 %v2118
        %v2151 = vunpack.c.l.b16 %v2119
        %v2152 = vunpack.c.l.b16 %v2120
        %v2153 = vunpack.c.l.b16 %v2121
        %v2154 = vunpack.c.l.b16 %v2122
        %v2155 = vunpack.c.l.b16 %v2123
        %v2156 = vunpack.c.l.b16 %v2124
        %v2157 = vunpack.c.l.b16 %v2125
        %v2158 = vunpack.c.l.b16 %v2126
        %v2159 = vpack.c.b16 %v2144, %v2143
        %v2160 = vpack.c.b16 %v2146, %v2145
        %v2161 = vpack.c.b16 %v2148, %v2147
        %v2162 = vpack.c.b16 %v2150, %v2149
        %v2163 = vpack.c.b16 %v2152, %v2151
        %v2164 = vpack.c.b16 %v2154, %v2153
        %v2165 = vpack.c.b16 %v2156, %v2155
        %v2166 = vpack.c.b16 %v2158, %v2157
        %2175 = vmatprep.subr.bf16.mxu0 0
        %2176 = vmatpush1.bf16.msra.mxu0 %v2159
        %2177 = vmatprep.subr.bf16.mxu0 0
        %2178 = vmatpush1.bf16.msra.mxu0 %v2160
        %2179 = vmatprep.subr.bf16.mxu0 0
        %2180 = vmatpush1.bf16.msra.mxu0 %v2161
        %2181 = vmatprep.subr.bf16.mxu0 0
        %2182 = vmatpush1.bf16.msra.mxu0 %v2162
        %2183 = vmatprep.subr.bf16.mxu0 0
        %2184 = vmatpush1.bf16.msra.mxu0 %v2163
        %2185 = vmatprep.subr.bf16.mxu0 0
        %2186 = vmatpush1.bf16.msra.mxu0 %v2164
        %2187 = vmatprep.subr.bf16.mxu0 0
        %2188 = vmatpush1.bf16.msra.mxu0 %v2165
        %2189 = vmatprep.subr.bf16.mxu0 0
        %2190 = vmatpush1.bf16.msra.mxu0 %v2166
        %2191 = vmatprep.subr.bf16.mxu0 0
        %2192 = vmatpush1.bf16.msra.mxu0 0
        %2193 = vmatprep.subr.bf16.mxu0 0
        %2194 = vmatpush1.bf16.msra.mxu0 0
        %2195 = vmatprep.subr.bf16.mxu0 0
        %2196 = vmatpush1.bf16.msra.mxu0 0
        %2197 = vmatprep.subr.bf16.mxu0 0
        %2198 = vmatpush1.bf16.msra.mxu0 0
        %2199 = vmatprep.subr.bf16.mxu0 0
        %2200 = vmatpush1.bf16.msra.mxu0 0
        %2201 = vmatprep.subr.bf16.mxu0 0
        %2202 = vmatpush1.bf16.msra.mxu0 0
        %2203 = vmatprep.subr.bf16.mxu0 0
        %2204 = vmatpush1.bf16.msra.mxu0 0
        %2205 = vmatprep.subr.bf16.mxu0 0
        %2206 = vmatpush1.bf16.msra.mxu0 0
        %2207 = vmatprep.mubr.bf16.mxu0 0
        %2208 = vmatmul.mubr.bf16.gmra.mrb[0].mxu0 %v2095
        %v2209 = vpop.f32.mrb[0].mxu0
        %v2210 = vadd.f32 0.0, %v2209
        %v2211 = vpop.f32.mrb[0].mxu0
        %v2212 = vpop.f32.mrb[0].mxu0
        %v2213 = vadd.f32 0.0, %v2212
        %v2214 = vpop.f32.mrb[0].mxu0
        %2215 = vmatprep.mubr.bf16.mxu0 0
        %2216 = vmatmul.mubr.bf16.gmra.mrb[0].mxu0 %v2096
        %v2217 = vpop.f32.mrb[0].mxu0
        %v2218 = vadd.f32 0.0, %v2217
        %v2219 = vpop.f32.mrb[0].mxu0
        %v2220 = vpop.f32.mrb[0].mxu0
        %v2221 = vadd.f32 0.0, %v2220
        %v2222 = vpop.f32.mrb[0].mxu0
        %2223 = vmatprep.mubr.bf16.mxu0 0
        %2224 = vmatmul.mubr.bf16.gmra.mrb[0].mxu0 %v2097
        %v2225 = vpop.f32.mrb[0].mxu0
        %v2226 = vadd.f32 0.0, %v2225
        %v2227 = vpop.f32.mrb[0].mxu0
        %v2228 = vpop.f32.mrb[0].mxu0
        %v2229 = vadd.f32 0.0, %v2228
        %v2230 = vpop.f32.mrb[0].mxu0
        %2231 = vmatprep.mubr.bf16.mxu0 0
        %2232 = vmatmul.mubr.bf16.gmra.mrb[0].mxu0 %v2098
        %v2233 = vpop.f32.mrb[0].mxu0
        %v2234 = vadd.f32 0.0, %v2233
        %v2235 = vpop.f32.mrb[0].mxu0
        %v2236 = vpop.f32.mrb[0].mxu0
        %v2237 = vadd.f32 0.0, %v2236
        %v2238 = vpop.f32.mrb[0].mxu0
        %2239 = vmatprep.mubr.bf16.mxu0 0
        %2240 = vmatmul.mubr.bf16.gmra.mrb[0].mxu0 %v2099
        %v2241 = vpop.f32.mrb[0].mxu0
        %v2242 = vadd.f32 0.0, %v2241
        %v2243 = vpop.f32.mrb[0].mxu0
        %v2244 = vpop.f32.mrb[0].mxu0
        %v2245 = vadd.f32 0.0, %v2244
        %v2246 = vpop.f32.mrb[0].mxu0
        %2247 = vmatprep.mubr.bf16.mxu0 0
        %2248 = vmatmul.mubr.bf16.gmra.mrb[0].mxu0 %v2100
        %v2249 = vpop.f32.mrb[0].mxu0
        %v2250 = vadd.f32 0.0, %v2249
        %v2251 = vpop.f32.mrb[0].mxu0
        %v2252 = vpop.f32.mrb[0].mxu0
        %v2253 = vadd.f32 0.0, %v2252
        %v2254 = vpop.f32.mrb[0].mxu0
        %2255 = vmatprep.mubr.bf16.mxu0 0
        %2256 = vmatmul.mubr.bf16.gmra.mrb[0].mxu0 %v2101
        %v2257 = vpop.f32.mrb[0].mxu0
        %v2258 = vadd.f32 0.0, %v2257
        %v2259 = vpop.f32.mrb[0].mxu0
        %v2260 = vpop.f32.mrb[0].mxu0
        %v2261 = vadd.f32 0.0, %v2260
        %v2262 = vpop.f32.mrb[0].mxu0
        %2263 = vmatprep.mubr.bf16.mxu0 0
        %2264 = vmatmul.mubr.bf16.gmra.mrb[0].mxu0 %v2102
        %v2265 = vpop.f32.mrb[0].mxu0
        %v2266 = vadd.f32 0.0, %v2265
        %v2267 = vpop.f32.mrb[0].mxu0
        %v2268 = vpop.f32.mrb[0].mxu0
        %v2269 = vadd.f32 0.0, %v2268
        %v2270 = vpop.f32.mrb[0].mxu0
        %2271 = vmatprep.mubr.bf16.mxu0 0
        %2272 = vmatmul.mubr.bf16.gmra.mrb[0].mxu0 %v2103
        %v2273 = vpop.f32.mrb[0].mxu0
        %v2274 = vadd.f32 0.0, %v2273
        %v2275 = vpop.f32.mrb[0].mxu0
        %v2276 = vpop.f32.mrb[0].mxu0
        %v2277 = vadd.f32 0.0, %v2276
        %v2278 = vpop.f32.mrb[0].mxu0
        %2279 = vmatprep.mubr.bf16.mxu0 0
        %2280 = vmatmul.mubr.bf16.gmra.mrb[0].mxu0 %v2104
        %v2281 = vpop.f32.mrb[0].mxu0
        %v2282 = vadd.f32 0.0, %v2281
        %v2283 = vpop.f32.mrb[0].mxu0
        %v2284 = vpop.f32.mrb[0].mxu0
        %v2285 = vadd.f32 0.0, %v2284
        %v2286 = vpop.f32.mrb[0].mxu0
        %2287 = vmatprep.mubr.bf16.mxu0 0
        %2288 = vmatmul.mubr.bf16.gmra.mrb[0].mxu0 %v2105
        %v2289 = vpop.f32.mrb[0].mxu0
        %v2290 = vadd.f32 0.0, %v2289
        %v2291 = vpop.f32.mrb[0].mxu0
        %v2292 = vpop.f32.mrb[0].mxu0
        %v2293 = vadd.f32 0.0, %v2292
        %v2294 = vpop.f32.mrb[0].mxu0
        %2295 = vmatprep.mubr.bf16.mxu0 0
        %2296 = vmatmul.mubr.bf16.gmra.mrb[0].mxu0 %v2106
        %v2297 = vpop.f32.mrb[0].mxu0
        %v2298 = vadd.f32 0.0, %v2297
        %v2299 = vpop.f32.mrb[0].mxu0
        %v2300 = vpop.f32.mrb[0].mxu0
        %v2301 = vadd.f32 0.0, %v2300
        %v2302 = vpop.f32.mrb[0].mxu0
        %2303 = vmatprep.mubr.bf16.mxu0 0
        %2304 = vmatmul.mubr.bf16.gmra.mrb[0].mxu0 %v2107
        %v2305 = vpop.f32.mrb[0].mxu0
        %v2306 = vadd.f32 0.0, %v2305
        %v2307 = vpop.f32.mrb[0].mxu0
        %v2308 = vpop.f32.mrb[0].mxu0
        %v2309 = vadd.f32 0.0, %v2308
        %v2310 = vpop.f32.mrb[0].mxu0
        %2311 = vmatprep.mubr.bf16.mxu0 0
        %2312 = vmatmul.mubr.bf16.gmra.mrb[0].mxu0 %v2108
        %v2313 = vpop.f32.mrb[0].mxu0
        %v2314 = vadd.f32 0.0, %v2313
        %v2315 = vpop.f32.mrb[0].mxu0
        %v2316 = vpop.f32.mrb[0].mxu0
        %v2317 = vadd.f32 0.0, %v2316
        %v2318 = vpop.f32.mrb[0].mxu0
        %2319 = vmatprep.mubr.bf16.mxu0 0
        %2320 = vmatmul.mubr.bf16.gmra.mrb[0].mxu0 %v2109
        %v2321 = vpop.f32.mrb[0].mxu0
        %v2322 = vadd.f32 0.0, %v2321
        %v2323 = vpop.f32.mrb[0].mxu0
        %v2324 = vpop.f32.mrb[0].mxu0
        %v2325 = vadd.f32 0.0, %v2324
        %v2326 = vpop.f32.mrb[0].mxu0
        %2327 = vmatprep.mubr.bf16.mxu0 0
        %2328 = vmatmul.mubr.bf16.gmra.mrb[0].mxu0 %v2110
        %v2329 = vpop.f32.mrb[0].mxu0
        %v2330 = vadd.f32 0.0, %v2329
        %v2331 = vpop.f32.mrb[0].mxu0
        %v2332 = vpop.f32.mrb[0].mxu0
        %v2333 = vadd.f32 0.0, %v2332
        %v2334 = vpop.f32.mrb[0].mxu0
        %2335 = vdwg.mxu0
        %v2336 = vadd.f32 %v2031, %v2210
        %v2337 = vadd.f32 %v2032, %v2213
        %v2338 = vadd.f32 %v2033, %v2218
        %v2339 = vadd.f32 %v2034, %v2221
        %v2340 = vadd.f32 %v2035, %v2226
        %v2341 = vadd.f32 %v2036, %v2229
        %v2342 = vadd.f32 %v2037, %v2234
        %v2343 = vadd.f32 %v2038, %v2237
        %v2344 = vadd.f32 %v2039, %v2242
        %v2345 = vadd.f32 %v2040, %v2245
        %v2346 = vadd.f32 %v2041, %v2250
        %v2347 = vadd.f32 %v2042, %v2253
        %v2348 = vadd.f32 %v2043, %v2258
        %v2349 = vadd.f32 %v2044, %v2261
        %v2350 = vadd.f32 %v2045, %v2266
        %v2351 = vadd.f32 %v2046, %v2269
        %v2352 = vadd.f32 %v2047, %v2274
        %v2353 = vadd.f32 %v2048, %v2277
        %v2354 = vadd.f32 %v2049, %v2282
        %v2355 = vadd.f32 %v2050, %v2285
        %v2356 = vadd.f32 %v2051, %v2290
        %v2357 = vadd.f32 %v2052, %v2293
        %v2358 = vadd.f32 %v2053, %v2298
        %v2359 = vadd.f32 %v2054, %v2301
        %v2360 = vadd.f32 %v2055, %v2306
        %v2361 = vadd.f32 %v2056, %v2309
        %v2362 = vadd.f32 %v2057, %v2314
        %v2363 = vadd.f32 %v2058, %v2317
        %v2364 = vadd.f32 %v2059, %v2322
        %v2365 = vadd.f32 %v2060, %v2325
        %v2366 = vadd.f32 %v2061, %v2330
        %v2367 = vadd.f32 %v2062, %v2333
        %s2368 = scalar_lea.vmem [#allocation2], 48
        %v2369 = vld [vmem:[%s2368] sm:$0xff]
        %v2370 = vld [vmem:[%s2368 + $0x8] sm:$0xff]
        %v2371 = vld [vmem:[%s2368 + $0x18] sm:$0xff]
        %v2372 = vld [vmem:[%s2368 + $0x20] sm:$0xff]
        %v2373 = vld [vmem:[%s2368 + $0x30] sm:$0xff]
        %v2374 = vld [vmem:[%s2368 + $0x38] sm:$0xff]
        %v2375 = vld [vmem:[%s2368 + $0x48] sm:$0xff]
        %v2376 = vld [vmem:[%s2368 + $0x50] sm:$0xff]
        %v2377 = vld [vmem:[%s2368 + $0x60] sm:$0xff]
        %v2378 = vld [vmem:[%s2368 + $0x68] sm:$0xff]
        %v2379 = vld [vmem:[%s2368 + $0x78] sm:$0xff]
        %v2380 = vld [vmem:[%s2368 + $0x80] sm:$0xff]
        %v2381 = vld [vmem:[%s2368 + $0x90] sm:$0xff]
        %v2382 = vld [vmem:[%s2368 + $0x98] sm:$0xff]
        %v2383 = vld [vmem:[%s2368 + $0xa8] sm:$0xff]
        %v2384 = vld [vmem:[%s2368 + $0xb0] sm:$0xff]
        %v2385 = vld [vmem:[%s2368 + $0xc0] sm:$0xff]
        %v2386 = vld [vmem:[%s2368 + $0xc8] sm:$0xff]
        %v2387 = vld [vmem:[%s2368 + $0xd8] sm:$0xff]
        %v2388 = vld [vmem:[%s2368 + $0xe0] sm:$0xff]
        %v2389 = vld [vmem:[%s2368 + $0xf0] sm:$0xff]
        %v2390 = vld [vmem:[%s2368 + $0xf8] sm:$0xff]
        %v2391 = vld [vmem:[%s2368 + $0x108] sm:$0xff]
        %v2392 = vld [vmem:[%s2368 + $0x110] sm:$0xff]
        %v2393 = vld [vmem:[%s2368 + $0x120] sm:$0xff]
        %v2394 = vld [vmem:[%s2368 + $0x128] sm:$0xff]
        %v2395 = vld [vmem:[%s2368 + $0x138] sm:$0xff]
        %v2396 = vld [vmem:[%s2368 + $0x140] sm:$0xff]
        %v2397 = vld [vmem:[%s2368 + $0x150] sm:$0xff]
        %v2398 = vld [vmem:[%s2368 + $0x158] sm:$0xff]
        %v2399 = vld [vmem:[%s2368 + $0x168] sm:$0xff]
        %v2400 = vld [vmem:[%s2368 + $0x170] sm:$0xff]
        %v2401 = vpack.c.bf16 %v2370, %v2369
        %v2402 = vpack.c.bf16 %v2372, %v2371
        %v2403 = vpack.c.bf16 %v2374, %v2373
        %v2404 = vpack.c.bf16 %v2376, %v2375
        %v2405 = vpack.c.bf16 %v2378, %v2377
        %v2406 = vpack.c.bf16 %v2380, %v2379
        %v2407 = vpack.c.bf16 %v2382, %v2381
        %v2408 = vpack.c.bf16 %v2384, %v2383
        %v2409 = vpack.c.bf16 %v2386, %v2385
        %v2410 = vpack.c.bf16 %v2388, %v2387
        %v2411 = vpack.c.bf16 %v2390, %v2389
        %v2412 = vpack.c.bf16 %v2392, %v2391
        %v2413 = vpack.c.bf16 %v2394, %v2393
        %v2414 = vpack.c.bf16 %v2396, %v2395
        %v2415 = vpack.c.bf16 %v2398, %v2397
        %v2416 = vpack.c.bf16 %v2400, %v2399
        %v2417 = vld [vmem:[#allocation6 + $0x180] sm:$0xf]
        %v2418 = vld [vmem:[#allocation6 + $0x184] sm:$0xf]
        %v2419 = vld [vmem:[#allocation6 + $0x188] sm:$0xf]
        %v2420 = vld [vmem:[#allocation6 + $0x18c] sm:$0xf]
        %v2421 = vld [vmem:[#allocation6 + $0x190] sm:$0xf]
        %v2422 = vld [vmem:[#allocation6 + $0x194] sm:$0xf]
        %v2423 = vld [vmem:[#allocation6 + $0x198] sm:$0xf]
        %v2424 = vld [vmem:[#allocation6 + $0x19c] sm:$0xf]
        %v2425 = vld [vmem:[#allocation6 + $0x1a0] sm:$0xf]
        %v2426 = vld [vmem:[#allocation6 + $0x1a4] sm:$0xf]
        %v2427 = vld [vmem:[#allocation6 + $0x1a8] sm:$0xf]
        %v2428 = vld [vmem:[#allocation6 + $0x1ac] sm:$0xf]
        %v2429 = vld [vmem:[#allocation6 + $0x1b0] sm:$0xf]
        %v2430 = vld [vmem:[#allocation6 + $0x1b4] sm:$0xf]
        %v2431 = vld [vmem:[#allocation6 + $0x1b8] sm:$0xf]
        %v2432 = vld [vmem:[#allocation6 + $0x1bc] sm:$0xf]
        %v2449 = vunpack.c.l.b16 %v2417
        %v2450 = vunpack.c.l.b16 %v2418
        %v2451 = vunpack.c.l.b16 %v2419
        %v2452 = vunpack.c.l.b16 %v2420
        %v2453 = vunpack.c.l.b16 %v2421
        %v2454 = vunpack.c.l.b16 %v2422
        %v2455 = vunpack.c.l.b16 %v2423
        %v2456 = vunpack.c.l.b16 %v2424
        %v2457 = vunpack.c.l.b16 %v2425
        %v2458 = vunpack.c.l.b16 %v2426
        %v2459 = vunpack.c.l.b16 %v2427
        %v2460 = vunpack.c.l.b16 %v2428
        %v2461 = vunpack.c.l.b16 %v2429
        %v2462 = vunpack.c.l.b16 %v2430
        %v2463 = vunpack.c.l.b16 %v2431
        %v2464 = vunpack.c.l.b16 %v2432
        %v2465 = vpack.c.b16 %v2450, %v2449
        %v2466 = vpack.c.b16 %v2452, %v2451
        %v2467 = vpack.c.b16 %v2454, %v2453
        %v2468 = vpack.c.b16 %v2456, %v2455
        %v2469 = vpack.c.b16 %v2458, %v2457
        %v2470 = vpack.c.b16 %v2460, %v2459
        %v2471 = vpack.c.b16 %v2462, %v2461
        %v2472 = vpack.c.b16 %v2464, %v2463
        %2481 = vmatprep.subr.bf16.mxu0 0
        %2482 = vmatpush1.bf16.msra.mxu0 %v2465
        %2483 = vmatprep.subr.bf16.mxu0 0
        %2484 = vmatpush1.bf16.msra.mxu0 %v2466
        %2485 = vmatprep.subr.bf16.mxu0 0
        %2486 = vmatpush1.bf16.msra.mxu0 %v2467
        %2487 = vmatprep.subr.bf16.mxu0 0
        %2488 = vmatpush1.bf16.msra.mxu0 %v2468
        %2489 = vmatprep.subr.bf16.mxu0 0
        %2490 = vmatpush1.bf16.msra.mxu0 %v2469
        %2491 = vmatprep.subr.bf16.mxu0 0
        %2492 = vmatpush1.bf16.msra.mxu0 %v2470
        %2493 = vmatprep.subr.bf16.mxu0 0
        %2494 = vmatpush1.bf16.msra.mxu0 %v2471
        %2495 = vmatprep.subr.bf16.mxu0 0
        %2496 = vmatpush1.bf16.msra.mxu0 %v2472
        %2497 = vmatprep.subr.bf16.mxu0 0
        %2498 = vmatpush1.bf16.msra.mxu0 0
        %2499 = vmatprep.subr.bf16.mxu0 0
        %2500 = vmatpush1.bf16.msra.mxu0 0
        %2501 = vmatprep.subr.bf16.mxu0 0
        %2502 = vmatpush1.bf16.msra.mxu0 0
        %2503 = vmatprep.subr.bf16.mxu0 0
        %2504 = vmatpush1.bf16.msra.mxu0 0
        %2505 = vmatprep.subr.bf16.mxu0 0
        %2506 = vmatpush1.bf16.msra.mxu0 0
        %2507 = vmatprep.subr.bf16.mxu0 0
        %2508 = vmatpush1.bf16.msra.mxu0 0
        %2509 = vmatprep.subr.bf16.mxu0 0
        %2510 = vmatpush1.bf16.msra.mxu0 0
        %2511 = vmatprep.subr.bf16.mxu0 0
        %2512 = vmatpush1.bf16.msra.mxu0 0
        %2513 = vmatprep.mubr.bf16.mxu0 0
        %2514 = vmatmul.mubr.bf16.gmra.mrb[0].mxu0 %v2401
        %v2515 = vpop.f32.mrb[0].mxu0
        %v2516 = vadd.f32 0.0, %v2515
        %v2517 = vpop.f32.mrb[0].mxu0
        %v2518 = vpop.f32.mrb[0].mxu0
        %v2519 = vadd.f32 0.0, %v2518
        %v2520 = vpop.f32.mrb[0].mxu0
        %2521 = vmatprep.mubr.bf16.mxu0 0
        %2522 = vmatmul.mubr.bf16.gmra.mrb[0].mxu0 %v2402
        %v2523 = vpop.f32.mrb[0].mxu0
        %v2524 = vadd.f32 0.0, %v2523
        %v2525 = vpop.f32.mrb[0].mxu0
        %v2526 = vpop.f32.mrb[0].mxu0
        %v2527 = vadd.f32 0.0, %v2526
        %v2528 = vpop.f32.mrb[0].mxu0
        %2529 = vmatprep.mubr.bf16.mxu0 0
        %2530 = vmatmul.mubr.bf16.gmra.mrb[0].mxu0 %v2403
        %v2531 = vpop.f32.mrb[0].mxu0
        %v2532 = vadd.f32 0.0, %v2531
        %v2533 = vpop.f32.mrb[0].mxu0
        %v2534 = vpop.f32.mrb[0].mxu0
        %v2535 = vadd.f32 0.0, %v2534
        %v2536 = vpop.f32.mrb[0].mxu0
        %2537 = vmatprep.mubr.bf16.mxu0 0
        %2538 = vmatmul.mubr.bf16.gmra.mrb[0].mxu0 %v2404
        %v2539 = vpop.f32.mrb[0].mxu0
        %v2540 = vadd.f32 0.0, %v2539
        %v2541 = vpop.f32.mrb[0].mxu0
        %v2542 = vpop.f32.mrb[0].mxu0
        %v2543 = vadd.f32 0.0, %v2542
        %v2544 = vpop.f32.mrb[0].mxu0
        %2545 = vmatprep.mubr.bf16.mxu0 0
        %2546 = vmatmul.mubr.bf16.gmra.mrb[0].mxu0 %v2405
        %v2547 = vpop.f32.mrb[0].mxu0
        %v2548 = vadd.f32 0.0, %v2547
        %v2549 = vpop.f32.mrb[0].mxu0
        %v2550 = vpop.f32.mrb[0].mxu0
        %v2551 = vadd.f32 0.0, %v2550
        %v2552 = vpop.f32.mrb[0].mxu0
        %2553 = vmatprep.mubr.bf16.mxu0 0
        %2554 = vmatmul.mubr.bf16.gmra.mrb[0].mxu0 %v2406
        %v2555 = vpop.f32.mrb[0].mxu0
        %v2556 = vadd.f32 0.0, %v2555
        %v2557 = vpop.f32.mrb[0].mxu0
        %v2558 = vpop.f32.mrb[0].mxu0
        %v2559 = vadd.f32 0.0, %v2558
        %v2560 = vpop.f32.mrb[0].mxu0
        %2561 = vmatprep.mubr.bf16.mxu0 0
        %2562 = vmatmul.mubr.bf16.gmra.mrb[0].mxu0 %v2407
        %v2563 = vpop.f32.mrb[0].mxu0
        %v2564 = vadd.f32 0.0, %v2563
        %v2565 = vpop.f32.mrb[0].mxu0
        %v2566 = vpop.f32.mrb[0].mxu0
        %v2567 = vadd.f32 0.0, %v2566
        %v2568 = vpop.f32.mrb[0].mxu0
        %2569 = vmatprep.mubr.bf16.mxu0 0
        %2570 = vmatmul.mubr.bf16.gmra.mrb[0].mxu0 %v2408
        %v2571 = vpop.f32.mrb[0].mxu0
        %v2572 = vadd.f32 0.0, %v2571
        %v2573 = vpop.f32.mrb[0].mxu0
        %v2574 = vpop.f32.mrb[0].mxu0
        %v2575 = vadd.f32 0.0, %v2574
        %v2576 = vpop.f32.mrb[0].mxu0
        %2577 = vmatprep.mubr.bf16.mxu0 0
        %2578 = vmatmul.mubr.bf16.gmra.mrb[0].mxu0 %v2409
        %v2579 = vpop.f32.mrb[0].mxu0
        %v2580 = vadd.f32 0.0, %v2579
        %v2581 = vpop.f32.mrb[0].mxu0
        %v2582 = vpop.f32.mrb[0].mxu0
        %v2583 = vadd.f32 0.0, %v2582
        %v2584 = vpop.f32.mrb[0].mxu0
        %2585 = vmatprep.mubr.bf16.mxu0 0
        %2586 = vmatmul.mubr.bf16.gmra.mrb[0].mxu0 %v2410
        %v2587 = vpop.f32.mrb[0].mxu0
        %v2588 = vadd.f32 0.0, %v2587
        %v2589 = vpop.f32.mrb[0].mxu0
        %v2590 = vpop.f32.mrb[0].mxu0
        %v2591 = vadd.f32 0.0, %v2590
        %v2592 = vpop.f32.mrb[0].mxu0
        %2593 = vmatprep.mubr.bf16.mxu0 0
        %2594 = vmatmul.mubr.bf16.gmra.mrb[0].mxu0 %v2411
        %v2595 = vpop.f32.mrb[0].mxu0
        %v2596 = vadd.f32 0.0, %v2595
        %v2597 = vpop.f32.mrb[0].mxu0
        %v2598 = vpop.f32.mrb[0].mxu0
        %v2599 = vadd.f32 0.0, %v2598
        %v2600 = vpop.f32.mrb[0].mxu0
        %2601 = vmatprep.mubr.bf16.mxu0 0
        %2602 = vmatmul.mubr.bf16.gmra.mrb[0].mxu0 %v2412
        %v2603 = vpop.f32.mrb[0].mxu0
        %v2604 = vadd.f32 0.0, %v2603
        %v2605 = vpop.f32.mrb[0].mxu0
        %v2606 = vpop.f32.mrb[0].mxu0
        %v2607 = vadd.f32 0.0, %v2606
        %v2608 = vpop.f32.mrb[0].mxu0
        %2609 = vmatprep.mubr.bf16.mxu0 0
        %2610 = vmatmul.mubr.bf16.gmra.mrb[0].mxu0 %v2413
        %v2611 = vpop.f32.mrb[0].mxu0
        %v2612 = vadd.f32 0.0, %v2611
        %v2613 = vpop.f32.mrb[0].mxu0
        %v2614 = vpop.f32.mrb[0].mxu0
        %v2615 = vadd.f32 0.0, %v2614
        %v2616 = vpop.f32.mrb[0].mxu0
        %2617 = vmatprep.mubr.bf16.mxu0 0
        %2618 = vmatmul.mubr.bf16.gmra.mrb[0].mxu0 %v2414
        %v2619 = vpop.f32.mrb[0].mxu0
        %v2620 = vadd.f32 0.0, %v2619
        %v2621 = vpop.f32.mrb[0].mxu0
        %v2622 = vpop.f32.mrb[0].mxu0
        %v2623 = vadd.f32 0.0, %v2622
        %v2624 = vpop.f32.mrb[0].mxu0
        %2625 = vmatprep.mubr.bf16.mxu0 0
        %2626 = vmatmul.mubr.bf16.gmra.mrb[0].mxu0 %v2415
        %v2627 = vpop.f32.mrb[0].mxu0
        %v2628 = vadd.f32 0.0, %v2627
        %v2629 = vpop.f32.mrb[0].mxu0
        %v2630 = vpop.f32.mrb[0].mxu0
        %v2631 = vadd.f32 0.0, %v2630
        %v2632 = vpop.f32.mrb[0].mxu0
        %2633 = vmatprep.mubr.bf16.mxu0 0
        %2634 = vmatmul.mubr.bf16.gmra.mrb[0].mxu0 %v2416
        %v2635 = vpop.f32.mrb[0].mxu0
        %v2636 = vadd.f32 0.0, %v2635
        %v2637 = vpop.f32.mrb[0].mxu0
        %v2638 = vpop.f32.mrb[0].mxu0
        %v2639 = vadd.f32 0.0, %v2638
        %v2640 = vpop.f32.mrb[0].mxu0
        %2641 = vdwg.mxu0
        %v2642 = vadd.f32 %v2336, %v2516
        %v2643 = vadd.f32 %v2337, %v2519
        %v2644 = vadd.f32 %v2338, %v2524
        %v2645 = vadd.f32 %v2339, %v2527
        %v2646 = vadd.f32 %v2340, %v2532
        %v2647 = vadd.f32 %v2341, %v2535
        %v2648 = vadd.f32 %v2342, %v2540
        %v2649 = vadd.f32 %v2343, %v2543
        %v2650 = vadd.f32 %v2344, %v2548
        %v2651 = vadd.f32 %v2345, %v2551
        %v2652 = vadd.f32 %v2346, %v2556
        %v2653 = vadd.f32 %v2347, %v2559
        %v2654 = vadd.f32 %v2348, %v2564
        %v2655 = vadd.f32 %v2349, %v2567
        %v2656 = vadd.f32 %v2350, %v2572
        %v2657 = vadd.f32 %v2351, %v2575
        %v2658 = vadd.f32 %v2352, %v2580
        %v2659 = vadd.f32 %v2353, %v2583
        %v2660 = vadd.f32 %v2354, %v2588
        %v2661 = vadd.f32 %v2355, %v2591
        %v2662 = vadd.f32 %v2356, %v2596
        %v2663 = vadd.f32 %v2357, %v2599
        %v2664 = vadd.f32 %v2358, %v2604
        %v2665 = vadd.f32 %v2359, %v2607
        %v2666 = vadd.f32 %v2360, %v2612
        %v2667 = vadd.f32 %v2361, %v2615
        %v2668 = vadd.f32 %v2362, %v2620
        %v2669 = vadd.f32 %v2363, %v2623
        %v2670 = vadd.f32 %v2364, %v2628
        %v2671 = vadd.f32 %v2365, %v2631
        %v2672 = vadd.f32 %v2366, %v2636
        %v2673 = vadd.f32 %v2367, %v2639
        %v2674 = vld [vmem:[%s2368 + $0x1] sm:$0xff]
        %v2675 = vld [vmem:[%s2368 + $0x9] sm:$0xff]
        %v2676 = vld [vmem:[%s2368 + $0x19] sm:$0xff]
        %v2677 = vld [vmem:[%s2368 + $0x21] sm:$0xff]
        %v2678 = vld [vmem:[%s2368 + $0x31] sm:$0xff]
        %v2679 = vld [vmem:[%s2368 + $0x39] sm:$0xff]
        %v2680 = vld [vmem:[%s2368 + $0x49] sm:$0xff]
        %v2681 = vld [vmem:[%s2368 + $0x51] sm:$0xff]
        %v2682 = vld [vmem:[%s2368 + $0x61] sm:$0xff]
        %v2683 = vld [vmem:[%s2368 + $0x69] sm:$0xff]
        %v2684 = vld [vmem:[%s2368 + $0x79] sm:$0xff]
        %v2685 = vld [vmem:[%s2368 + $0x81] sm:$0xff]
        %v2686 = vld [vmem:[%s2368 + $0x91] sm:$0xff]
        %v2687 = vld [vmem:[%s2368 + $0x99] sm:$0xff]
        %v2688 = vld [vmem:[%s2368 + $0xa9] sm:$0xff]
        %v2689 = vld [vmem:[%s2368 + $0xb1] sm:$0xff]
        %v2690 = vld [vmem:[%s2368 + $0xc1] sm:$0xff]
        %v2691 = vld [vmem:[%s2368 + $0xc9] sm:$0xff]
        %v2692 = vld [vmem:[%s2368 + $0xd9] sm:$0xff]
        %v2693 = vld [vmem:[%s2368 + $0xe1] sm:$0xff]
        %v2694 = vld [vmem:[%s2368 + $0xf1] sm:$0xff]
        %v2695 = vld [vmem:[%s2368 + $0xf9] sm:$0xff]
        %v2696 = vld [vmem:[%s2368 + $0x109] sm:$0xff]
        %v2697 = vld [vmem:[%s2368 + $0x111] sm:$0xff]
        %v2698 = vld [vmem:[%s2368 + $0x121] sm:$0xff]
        %v2699 = vld [vmem:[%s2368 + $0x129] sm:$0xff]
        %v2700 = vld [vmem:[%s2368 + $0x139] sm:$0xff]
        %v2701 = vld [vmem:[%s2368 + $0x141] sm:$0xff]
        %v2702 = vld [vmem:[%s2368 + $0x151] sm:$0xff]
        %v2703 = vld [vmem:[%s2368 + $0x159] sm:$0xff]
        %v2704 = vld [vmem:[%s2368 + $0x169] sm:$0xff]
        %v2705 = vld [vmem:[%s2368 + $0x171] sm:$0xff]
        %v2706 = vpack.c.bf16 %v2675, %v2674
        %v2707 = vpack.c.bf16 %v2677, %v2676
        %v2708 = vpack.c.bf16 %v2679, %v2678
        %v2709 = vpack.c.bf16 %v2681, %v2680
        %v2710 = vpack.c.bf16 %v2683, %v2682
        %v2711 = vpack.c.bf16 %v2685, %v2684
        %v2712 = vpack.c.bf16 %v2687, %v2686
        %v2713 = vpack.c.bf16 %v2689, %v2688
        %v2714 = vpack.c.bf16 %v2691, %v2690
        %v2715 = vpack.c.bf16 %v2693, %v2692
        %v2716 = vpack.c.bf16 %v2695, %v2694
        %v2717 = vpack.c.bf16 %v2697, %v2696
        %v2718 = vpack.c.bf16 %v2699, %v2698
        %v2719 = vpack.c.bf16 %v2701, %v2700
        %v2720 = vpack.c.bf16 %v2703, %v2702
        %v2721 = vpack.c.bf16 %v2705, %v2704
        %v2722 = vld [vmem:[#allocation6 + $0x1c0] sm:$0xf]
        %v2723 = vld [vmem:[#allocation6 + $0x1c4] sm:$0xf]
        %v2724 = vld [vmem:[#allocation6 + $0x1c8] sm:$0xf]
        %v2725 = vld [vmem:[#allocation6 + $0x1cc] sm:$0xf]
        %v2726 = vld [vmem:[#allocation6 + $0x1d0] sm:$0xf]
        %v2727 = vld [vmem:[#allocation6 + $0x1d4] sm:$0xf]
        %v2728 = vld [vmem:[#allocation6 + $0x1d8] sm:$0xf]
        %v2729 = vld [vmem:[#allocation6 + $0x1dc] sm:$0xf]
        %v2730 = vld [vmem:[#allocation6 + $0x1e0] sm:$0xf]
        %v2731 = vld [vmem:[#allocation6 + $0x1e4] sm:$0xf]
        %v2732 = vld [vmem:[#allocation6 + $0x1e8] sm:$0xf]
        %v2733 = vld [vmem:[#allocation6 + $0x1ec] sm:$0xf]
        %v2734 = vld [vmem:[#allocation6 + $0x1f0] sm:$0xf]
        %v2735 = vld [vmem:[#allocation6 + $0x1f4] sm:$0xf]
        %v2736 = vld [vmem:[#allocation6 + $0x1f8] sm:$0xf]
        %v2737 = vld [vmem:[#allocation6 + $0x1fc] sm:$0xf]
        %v2754 = vunpack.c.l.b16 %v2722
        %v2755 = vunpack.c.l.b16 %v2723
        %v2756 = vunpack.c.l.b16 %v2724
        %v2757 = vunpack.c.l.b16 %v2725
        %v2758 = vunpack.c.l.b16 %v2726
        %v2759 = vunpack.c.l.b16 %v2727
        %v2760 = vunpack.c.l.b16 %v2728
        %v2761 = vunpack.c.l.b16 %v2729
        %v2762 = vunpack.c.l.b16 %v2730
        %v2763 = vunpack.c.l.b16 %v2731
        %v2764 = vunpack.c.l.b16 %v2732
        %v2765 = vunpack.c.l.b16 %v2733
        %v2766 = vunpack.c.l.b16 %v2734
        %v2767 = vunpack.c.l.b16 %v2735
        %v2768 = vunpack.c.l.b16 %v2736
        %v2769 = vunpack.c.l.b16 %v2737
        %v2770 = vpack.c.b16 %v2755, %v2754
        %v2771 = vpack.c.b16 %v2757, %v2756
        %v2772 = vpack.c.b16 %v2759, %v2758
        %v2773 = vpack.c.b16 %v2761, %v2760
        %v2774 = vpack.c.b16 %v2763, %v2762
        %v2775 = vpack.c.b16 %v2765, %v2764
        %v2776 = vpack.c.b16 %v2767, %v2766
        %v2777 = vpack.c.b16 %v2769, %v2768
        %2786 = vmatprep.subr.bf16.mxu0 0
        %2787 = vmatpush1.bf16.msra.mxu0 %v2770
        %2788 = vmatprep.subr.bf16.mxu0 0
        %2789 = vmatpush1.bf16.msra.mxu0 %v2771
        %2790 = vmatprep.subr.bf16.mxu0 0
        %2791 = vmatpush1.bf16.msra.mxu0 %v2772
        %2792 = vmatprep.subr.bf16.mxu0 0
        %2793 = vmatpush1.bf16.msra.mxu0 %v2773
        %2794 = vmatprep.subr.bf16.mxu0 0
        %2795 = vmatpush1.bf16.msra.mxu0 %v2774
        %2796 = vmatprep.subr.bf16.mxu0 0
        %2797 = vmatpush1.bf16.msra.mxu0 %v2775
        %2798 = vmatprep.subr.bf16.mxu0 0
        %2799 = vmatpush1.bf16.msra.mxu0 %v2776
        %2800 = vmatprep.subr.bf16.mxu0 0
        %2801 = vmatpush1.bf16.msra.mxu0 %v2777
        %2802 = vmatprep.subr.bf16.mxu0 0
        %2803 = vmatpush1.bf16.msra.mxu0 0
        %2804 = vmatprep.subr.bf16.mxu0 0
        %2805 = vmatpush1.bf16.msra.mxu0 0
        %2806 = vmatprep.subr.bf16.mxu0 0
        %2807 = vmatpush1.bf16.msra.mxu0 0
        %2808 = vmatprep.subr.bf16.mxu0 0
        %2809 = vmatpush1.bf16.msra.mxu0 0
        %2810 = vmatprep.subr.bf16.mxu0 0
        %2811 = vmatpush1.bf16.msra.mxu0 0
        %2812 = vmatprep.subr.bf16.mxu0 0
        %2813 = vmatpush1.bf16.msra.mxu0 0
        %2814 = vmatprep.subr.bf16.mxu0 0
        %2815 = vmatpush1.bf16.msra.mxu0 0
        %2816 = vmatprep.subr.bf16.mxu0 0
        %2817 = vmatpush1.bf16.msra.mxu0 0
        %2818 = vmatprep.mubr.bf16.mxu0 0
        %2819 = vmatmul.mubr.bf16.gmra.mrb[0].mxu0 %v2706
        %v2820 = vpop.f32.mrb[0].mxu0
        %v2821 = vadd.f32 0.0, %v2820
        %v2822 = vpop.f32.mrb[0].mxu0
        %v2823 = vpop.f32.mrb[0].mxu0
        %v2824 = vadd.f32 0.0, %v2823
        %v2825 = vpop.f32.mrb[0].mxu0
        %2826 = vmatprep.mubr.bf16.mxu0 0
        %2827 = vmatmul.mubr.bf16.gmra.mrb[0].mxu0 %v2707
        %v2828 = vpop.f32.mrb[0].mxu0
        %v2829 = vadd.f32 0.0, %v2828
        %v2830 = vpop.f32.mrb[0].mxu0
        %v2831 = vpop.f32.mrb[0].mxu0
        %v2832 = vadd.f32 0.0, %v2831
        %v2833 = vpop.f32.mrb[0].mxu0
        %2834 = vmatprep.mubr.bf16.mxu0 0
        %2835 = vmatmul.mubr.bf16.gmra.mrb[0].mxu0 %v2708
        %v2836 = vpop.f32.mrb[0].mxu0
        %v2837 = vadd.f32 0.0, %v2836
        %v2838 = vpop.f32.mrb[0].mxu0
        %v2839 = vpop.f32.mrb[0].mxu0
        %v2840 = vadd.f32 0.0, %v2839
        %v2841 = vpop.f32.mrb[0].mxu0
        %2842 = vmatprep.mubr.bf16.mxu0 0
        %2843 = vmatmul.mubr.bf16.gmra.mrb[0].mxu0 %v2709
        %v2844 = vpop.f32.mrb[0].mxu0
        %v2845 = vadd.f32 0.0, %v2844
        %v2846 = vpop.f32.mrb[0].mxu0
        %v2847 = vpop.f32.mrb[0].mxu0
        %v2848 = vadd.f32 0.0, %v2847
        %v2849 = vpop.f32.mrb[0].mxu0
        %2850 = vmatprep.mubr.bf16.mxu0 0
        %2851 = vmatmul.mubr.bf16.gmra.mrb[0].mxu0 %v2710
        %v2852 = vpop.f32.mrb[0].mxu0
        %v2853 = vadd.f32 0.0, %v2852
        %v2854 = vpop.f32.mrb[0].mxu0
        %v2855 = vpop.f32.mrb[0].mxu0
        %v2856 = vadd.f32 0.0, %v2855
        %v2857 = vpop.f32.mrb[0].mxu0
        %2858 = vmatprep.mubr.bf16.mxu0 0
        %2859 = vmatmul.mubr.bf16.gmra.mrb[0].mxu0 %v2711
        %v2860 = vpop.f32.mrb[0].mxu0
        %v2861 = vadd.f32 0.0, %v2860
        %v2862 = vpop.f32.mrb[0].mxu0
        %v2863 = vpop.f32.mrb[0].mxu0
        %v2864 = vadd.f32 0.0, %v2863
        %v2865 = vpop.f32.mrb[0].mxu0
        %2866 = vmatprep.mubr.bf16.mxu0 0
        %2867 = vmatmul.mubr.bf16.gmra.mrb[0].mxu0 %v2712
        %v2868 = vpop.f32.mrb[0].mxu0
        %v2869 = vadd.f32 0.0, %v2868
        %v2870 = vpop.f32.mrb[0].mxu0
        %v2871 = vpop.f32.mrb[0].mxu0
        %v2872 = vadd.f32 0.0, %v2871
        %v2873 = vpop.f32.mrb[0].mxu0
        %2874 = vmatprep.mubr.bf16.mxu0 0
        %2875 = vmatmul.mubr.bf16.gmra.mrb[0].mxu0 %v2713
        %v2876 = vpop.f32.mrb[0].mxu0
        %v2877 = vadd.f32 0.0, %v2876
        %v2878 = vpop.f32.mrb[0].mxu0
        %v2879 = vpop.f32.mrb[0].mxu0
        %v2880 = vadd.f32 0.0, %v2879
        %v2881 = vpop.f32.mrb[0].mxu0
        %2882 = vmatprep.mubr.bf16.mxu0 0
        %2883 = vmatmul.mubr.bf16.gmra.mrb[0].mxu0 %v2714
        %v2884 = vpop.f32.mrb[0].mxu0
        %v2885 = vadd.f32 0.0, %v2884
        %v2886 = vpop.f32.mrb[0].mxu0
        %v2887 = vpop.f32.mrb[0].mxu0
        %v2888 = vadd.f32 0.0, %v2887
        %v2889 = vpop.f32.mrb[0].mxu0
        %2890 = vmatprep.mubr.bf16.mxu0 0
        %2891 = vmatmul.mubr.bf16.gmra.mrb[0].mxu0 %v2715
        %v2892 = vpop.f32.mrb[0].mxu0
        %v2893 = vadd.f32 0.0, %v2892
        %v2894 = vpop.f32.mrb[0].mxu0
        %v2895 = vpop.f32.mrb[0].mxu0
        %v2896 = vadd.f32 0.0, %v2895
        %v2897 = vpop.f32.mrb[0].mxu0
        %2898 = vmatprep.mubr.bf16.mxu0 0
        %2899 = vmatmul.mubr.bf16.gmra.mrb[0].mxu0 %v2716
        %v2900 = vpop.f32.mrb[0].mxu0
        %v2901 = vadd.f32 0.0, %v2900
        %v2902 = vpop.f32.mrb[0].mxu0
        %v2903 = vpop.f32.mrb[0].mxu0
        %v2904 = vadd.f32 0.0, %v2903
        %v2905 = vpop.f32.mrb[0].mxu0
        %2906 = vmatprep.mubr.bf16.mxu0 0
        %2907 = vmatmul.mubr.bf16.gmra.mrb[0].mxu0 %v2717
        %v2908 = vpop.f32.mrb[0].mxu0
        %v2909 = vadd.f32 0.0, %v2908
        %v2910 = vpop.f32.mrb[0].mxu0
        %v2911 = vpop.f32.mrb[0].mxu0
        %v2912 = vadd.f32 0.0, %v2911
        %v2913 = vpop.f32.mrb[0].mxu0
        %2914 = vmatprep.mubr.bf16.mxu0 0
        %2915 = vmatmul.mubr.bf16.gmra.mrb[0].mxu0 %v2718
        %v2916 = vpop.f32.mrb[0].mxu0
        %v2917 = vadd.f32 0.0, %v2916
        %v2918 = vpop.f32.mrb[0].mxu0
        %v2919 = vpop.f32.mrb[0].mxu0
        %v2920 = vadd.f32 0.0, %v2919
        %v2921 = vpop.f32.mrb[0].mxu0
        %2922 = vmatprep.mubr.bf16.mxu0 0
        %2923 = vmatmul.mubr.bf16.gmra.mrb[0].mxu0 %v2719
        %v2924 = vpop.f32.mrb[0].mxu0
        %v2925 = vadd.f32 0.0, %v2924
        %v2926 = vpop.f32.mrb[0].mxu0
        %v2927 = vpop.f32.mrb[0].mxu0
        %v2928 = vadd.f32 0.0, %v2927
        %v2929 = vpop.f32.mrb[0].mxu0
        %2930 = vmatprep.mubr.bf16.mxu0 0
        %2931 = vmatmul.mubr.bf16.gmra.mrb[0].mxu0 %v2720
        %v2932 = vpop.f32.mrb[0].mxu0
        %v2933 = vadd.f32 0.0, %v2932
        %v2934 = vpop.f32.mrb[0].mxu0
        %v2935 = vpop.f32.mrb[0].mxu0
        %v2936 = vadd.f32 0.0, %v2935
        %v2937 = vpop.f32.mrb[0].mxu0
        %2938 = vmatprep.mubr.bf16.mxu0 0
        %2939 = vmatmul.mubr.bf16.gmra.mrb[0].mxu0 %v2721
        %v2940 = vpop.f32.mrb[0].mxu0
        %v2941 = vadd.f32 0.0, %v2940
        %v2942 = vpop.f32.mrb[0].mxu0
        %v2943 = vpop.f32.mrb[0].mxu0
        %v2944 = vadd.f32 0.0, %v2943
        %v2945 = vpop.f32.mrb[0].mxu0
        %2946 = vdwg.mxu0
        %v2947 = vadd.f32 %v2642, %v2821
        %v2948 = vadd.f32 %v2643, %v2824
        %v2949 = vadd.f32 %v2644, %v2829
        %v2950 = vadd.f32 %v2645, %v2832
        %v2951 = vadd.f32 %v2646, %v2837
        %v2952 = vadd.f32 %v2647, %v2840
        %v2953 = vadd.f32 %v2648, %v2845
        %v2954 = vadd.f32 %v2649, %v2848
        %v2955 = vadd.f32 %v2650, %v2853
        %v2956 = vadd.f32 %v2651, %v2856
        %v2957 = vadd.f32 %v2652, %v2861
        %v2958 = vadd.f32 %v2653, %v2864
        %v2959 = vadd.f32 %v2654, %v2869
        %v2960 = vadd.f32 %v2655, %v2872
        %v2961 = vadd.f32 %v2656, %v2877
        %v2962 = vadd.f32 %v2657, %v2880
        %v2963 = vadd.f32 %v2658, %v2885
        %v2964 = vadd.f32 %v2659, %v2888
        %v2965 = vadd.f32 %v2660, %v2893
        %v2966 = vadd.f32 %v2661, %v2896
        %v2967 = vadd.f32 %v2662, %v2901
        %v2968 = vadd.f32 %v2663, %v2904
        %v2969 = vadd.f32 %v2664, %v2909
        %v2970 = vadd.f32 %v2665, %v2912
        %v2971 = vadd.f32 %v2666, %v2917
        %v2972 = vadd.f32 %v2667, %v2920
        %v2973 = vadd.f32 %v2668, %v2925
        %v2974 = vadd.f32 %v2669, %v2928
        %v2975 = vadd.f32 %v2670, %v2933
        %v2976 = vadd.f32 %v2671, %v2936
        %v2977 = vadd.f32 %v2672, %v2941
        %v2978 = vadd.f32 %v2673, %v2944
        %v2979 = vld [vmem:[%s2368 + $0x2] sm:$0xff]
        %v2980 = vld [vmem:[%s2368 + $0xa] sm:$0xff]
        %v2981 = vld [vmem:[%s2368 + $0x1a] sm:$0xff]
        %v2982 = vld [vmem:[%s2368 + $0x22] sm:$0xff]
        %v2983 = vld [vmem:[%s2368 + $0x32] sm:$0xff]
        %v2984 = vld [vmem:[%s2368 + $0x3a] sm:$0xff]
        %v2985 = vld [vmem:[%s2368 + $0x4a] sm:$0xff]
        %v2986 = vld [vmem:[%s2368 + $0x52] sm:$0xff]
        %v2987 = vld [vmem:[%s2368 + $0x62] sm:$0xff]
        %v2988 = vld [vmem:[%s2368 + $0x6a] sm:$0xff]
        %v2989 = vld [vmem:[%s2368 + $0x7a] sm:$0xff]
        %v2990 = vld [vmem:[%s2368 + $0x82] sm:$0xff]
        %v2991 = vld [vmem:[%s2368 + $0x92] sm:$0xff]
        %v2992 = vld [vmem:[%s2368 + $0x9a] sm:$0xff]
        %v2993 = vld [vmem:[%s2368 + $0xaa] sm:$0xff]
        %v2994 = vld [vmem:[%s2368 + $0xb2] sm:$0xff]
        %v2995 = vld [vmem:[%s2368 + $0xc2] sm:$0xff]
        %v2996 = vld [vmem:[%s2368 + $0xca] sm:$0xff]
        %v2997 = vld [vmem:[%s2368 + $0xda] sm:$0xff]
        %v2998 = vld [vmem:[%s2368 + $0xe2] sm:$0xff]
        %v2999 = vld [vmem:[%s2368 + $0xf2] sm:$0xff]
        %v3000 = vld [vmem:[%s2368 + $0xfa] sm:$0xff]
        %v3001 = vld [vmem:[%s2368 + $0x10a] sm:$0xff]
        %v3002 = vld [vmem:[%s2368 + $0x112] sm:$0xff]
        %v3003 = vld [vmem:[%s2368 + $0x122] sm:$0xff]
        %v3004 = vld [vmem:[%s2368 + $0x12a] sm:$0xff]
        %v3005 = vld [vmem:[%s2368 + $0x13a] sm:$0xff]
        %v3006 = vld [vmem:[%s2368 + $0x142] sm:$0xff]
        %v3007 = vld [vmem:[%s2368 + $0x152] sm:$0xff]
        %v3008 = vld [vmem:[%s2368 + $0x15a] sm:$0xff]
        %v3009 = vld [vmem:[%s2368 + $0x16a] sm:$0xff]
        %v3010 = vld [vmem:[%s2368 + $0x172] sm:$0xff]
        %v3011 = vpack.c.bf16 %v2980, %v2979
        %v3012 = vpack.c.bf16 %v2982, %v2981
        %v3013 = vpack.c.bf16 %v2984, %v2983
        %v3014 = vpack.c.bf16 %v2986, %v2985
        %v3015 = vpack.c.bf16 %v2988, %v2987
        %v3016 = vpack.c.bf16 %v2990, %v2989
        %v3017 = vpack.c.bf16 %v2992, %v2991
        %v3018 = vpack.c.bf16 %v2994, %v2993
        %v3019 = vpack.c.bf16 %v2996, %v2995
        %v3020 = vpack.c.bf16 %v2998, %v2997
        %v3021 = vpack.c.bf16 %v3000, %v2999
        %v3022 = vpack.c.bf16 %v3002, %v3001
        %v3023 = vpack.c.bf16 %v3004, %v3003
        %v3024 = vpack.c.bf16 %v3006, %v3005
        %v3025 = vpack.c.bf16 %v3008, %v3007
        %v3026 = vpack.c.bf16 %v3010, %v3009
        %v3027 = vld [vmem:[#allocation6 + $0x200] sm:$0xf]
        %v3028 = vld [vmem:[#allocation6 + $0x204] sm:$0xf]
        %v3029 = vld [vmem:[#allocation6 + $0x208] sm:$0xf]
        %v3030 = vld [vmem:[#allocation6 + $0x20c] sm:$0xf]
        %v3031 = vld [vmem:[#allocation6 + $0x210] sm:$0xf]
        %v3032 = vld [vmem:[#allocation6 + $0x214] sm:$0xf]
        %v3033 = vld [vmem:[#allocation6 + $0x218] sm:$0xf]
        %v3034 = vld [vmem:[#allocation6 + $0x21c] sm:$0xf]
        %v3035 = vld [vmem:[#allocation6 + $0x220] sm:$0xf]
        %v3036 = vld [vmem:[#allocation6 + $0x224] sm:$0xf]
        %v3037 = vld [vmem:[#allocation6 + $0x228] sm:$0xf]
        %v3038 = vld [vmem:[#allocation6 + $0x22c] sm:$0xf]
        %v3039 = vld [vmem:[#allocation6 + $0x230] sm:$0xf]
        %v3040 = vld [vmem:[#allocation6 + $0x234] sm:$0xf]
        %v3041 = vld [vmem:[#allocation6 + $0x238] sm:$0xf]
        %v3042 = vld [vmem:[#allocation6 + $0x23c] sm:$0xf]
        %v3059 = vunpack.c.l.b16 %v3027
        %v3060 = vunpack.c.l.b16 %v3028
        %v3061 = vunpack.c.l.b16 %v3029
        %v3062 = vunpack.c.l.b16 %v3030
        %v3063 = vunpack.c.l.b16 %v3031
        %v3064 = vunpack.c.l.b16 %v3032
        %v3065 = vunpack.c.l.b16 %v3033
        %v3066 = vunpack.c.l.b16 %v3034
        %v3067 = vunpack.c.l.b16 %v3035
        %v3068 = vunpack.c.l.b16 %v3036
        %v3069 = vunpack.c.l.b16 %v3037
        %v3070 = vunpack.c.l.b16 %v3038
        %v3071 = vunpack.c.l.b16 %v3039
        %v3072 = vunpack.c.l.b16 %v3040
        %v3073 = vunpack.c.l.b16 %v3041
        %v3074 = vunpack.c.l.b16 %v3042
        %v3075 = vpack.c.b16 %v3060, %v3059
        %v3076 = vpack.c.b16 %v3062, %v3061
        %v3077 = vpack.c.b16 %v3064, %v3063
        %v3078 = vpack.c.b16 %v3066, %v3065
        %v3079 = vpack.c.b16 %v3068, %v3067
        %v3080 = vpack.c.b16 %v3070, %v3069
        %v3081 = vpack.c.b16 %v3072, %v3071
        %v3082 = vpack.c.b16 %v3074, %v3073
        %3091 = vmatprep.subr.bf16.mxu0 0
        %3092 = vmatpush1.bf16.msra.mxu0 %v3075
        %3093 = vmatprep.subr.bf16.mxu0 0
        %3094 = vmatpush1.bf16.msra.mxu0 %v3076
        %3095 = vmatprep.subr.bf16.mxu0 0
        %3096 = vmatpush1.bf16.msra.mxu0 %v3077
        %3097 = vmatprep.subr.bf16.mxu0 0
        %3098 = vmatpush1.bf16.msra.mxu0 %v3078
        %3099 = vmatprep.subr.bf16.mxu0 0
        %3100 = vmatpush1.bf16.msra.mxu0 %v3079
        %3101 = vmatprep.subr.bf16.mxu0 0
        %3102 = vmatpush1.bf16.msra.mxu0 %v3080
        %3103 = vmatprep.subr.bf16.mxu0 0
        %3104 = vmatpush1.bf16.msra.mxu0 %v3081
        %3105 = vmatprep.subr.bf16.mxu0 0
        %3106 = vmatpush1.bf16.msra.mxu0 %v3082
        %3107 = vmatprep.subr.bf16.mxu0 0
        %3108 = vmatpush1.bf16.msra.mxu0 0
        %3109 = vmatprep.subr.bf16.mxu0 0
        %3110 = vmatpush1.bf16.msra.mxu0 0
        %3111 = vmatprep.subr.bf16.mxu0 0
        %3112 = vmatpush1.bf16.msra.mxu0 0
        %3113 = vmatprep.subr.bf16.mxu0 0
        %3114 = vmatpush1.bf16.msra.mxu0 0
        %3115 = vmatprep.subr.bf16.mxu0 0
        %3116 = vmatpush1.bf16.msra.mxu0 0
        %3117 = vmatprep.subr.bf16.mxu0 0
        %3118 = vmatpush1.bf16.msra.mxu0 0
        %3119 = vmatprep.subr.bf16.mxu0 0
        %3120 = vmatpush1.bf16.msra.mxu0 0
        %3121 = vmatprep.subr.bf16.mxu0 0
        %3122 = vmatpush1.bf16.msra.mxu0 0
        %3123 = vmatprep.mubr.bf16.mxu0 0
        %3124 = vmatmul.mubr.bf16.gmra.mrb[0].mxu0 %v3011
        %v3125 = vpop.f32.mrb[0].mxu0
        %v3126 = vadd.f32 0.0, %v3125
        %v3127 = vpop.f32.mrb[0].mxu0
        %v3128 = vpop.f32.mrb[0].mxu0
        %v3129 = vadd.f32 0.0, %v3128
        %v3130 = vpop.f32.mrb[0].mxu0
        %3131 = vmatprep.mubr.bf16.mxu0 0
        %3132 = vmatmul.mubr.bf16.gmra.mrb[0].mxu0 %v3012
        %v3133 = vpop.f32.mrb[0].mxu0
        %v3134 = vadd.f32 0.0, %v3133
        %v3135 = vpop.f32.mrb[0].mxu0
        %v3136 = vpop.f32.mrb[0].mxu0
        %v3137 = vadd.f32 0.0, %v3136
        %v3138 = vpop.f32.mrb[0].mxu0
        %3139 = vmatprep.mubr.bf16.mxu0 0
        %3140 = vmatmul.mubr.bf16.gmra.mrb[0].mxu0 %v3013
        %v3141 = vpop.f32.mrb[0].mxu0
        %v3142 = vadd.f32 0.0, %v3141
        %v3143 = vpop.f32.mrb[0].mxu0
        %v3144 = vpop.f32.mrb[0].mxu0
        %v3145 = vadd.f32 0.0, %v3144
        %v3146 = vpop.f32.mrb[0].mxu0
        %3147 = vmatprep.mubr.bf16.mxu0 0
        %3148 = vmatmul.mubr.bf16.gmra.mrb[0].mxu0 %v3014
        %v3149 = vpop.f32.mrb[0].mxu0
        %v3150 = vadd.f32 0.0, %v3149
        %v3151 = vpop.f32.mrb[0].mxu0
        %v3152 = vpop.f32.mrb[0].mxu0
        %v3153 = vadd.f32 0.0, %v3152
        %v3154 = vpop.f32.mrb[0].mxu0
        %3155 = vmatprep.mubr.bf16.mxu0 0
        %3156 = vmatmul.mubr.bf16.gmra.mrb[0].mxu0 %v3015
        %v3157 = vpop.f32.mrb[0].mxu0
        %v3158 = vadd.f32 0.0, %v3157
        %v3159 = vpop.f32.mrb[0].mxu0
        %v3160 = vpop.f32.mrb[0].mxu0
        %v3161 = vadd.f32 0.0, %v3160
        %v3162 = vpop.f32.mrb[0].mxu0
        %3163 = vmatprep.mubr.bf16.mxu0 0
        %3164 = vmatmul.mubr.bf16.gmra.mrb[0].mxu0 %v3016
        %v3165 = vpop.f32.mrb[0].mxu0
        %v3166 = vadd.f32 0.0, %v3165
        %v3167 = vpop.f32.mrb[0].mxu0
        %v3168 = vpop.f32.mrb[0].mxu0
        %v3169 = vadd.f32 0.0, %v3168
        %v3170 = vpop.f32.mrb[0].mxu0
        %3171 = vmatprep.mubr.bf16.mxu0 0
        %3172 = vmatmul.mubr.bf16.gmra.mrb[0].mxu0 %v3017
        %v3173 = vpop.f32.mrb[0].mxu0
        %v3174 = vadd.f32 0.0, %v3173
        %v3175 = vpop.f32.mrb[0].mxu0
        %v3176 = vpop.f32.mrb[0].mxu0
        %v3177 = vadd.f32 0.0, %v3176
        %v3178 = vpop.f32.mrb[0].mxu0
        %3179 = vmatprep.mubr.bf16.mxu0 0
        %3180 = vmatmul.mubr.bf16.gmra.mrb[0].mxu0 %v3018
        %v3181 = vpop.f32.mrb[0].mxu0
        %v3182 = vadd.f32 0.0, %v3181
        %v3183 = vpop.f32.mrb[0].mxu0
        %v3184 = vpop.f32.mrb[0].mxu0
        %v3185 = vadd.f32 0.0, %v3184
        %v3186 = vpop.f32.mrb[0].mxu0
        %3187 = vmatprep.mubr.bf16.mxu0 0
        %3188 = vmatmul.mubr.bf16.gmra.mrb[0].mxu0 %v3019
        %v3189 = vpop.f32.mrb[0].mxu0
        %v3190 = vadd.f32 0.0, %v3189
        %v3191 = vpop.f32.mrb[0].mxu0
        %v3192 = vpop.f32.mrb[0].mxu0
        %v3193 = vadd.f32 0.0, %v3192
        %v3194 = vpop.f32.mrb[0].mxu0
        %3195 = vmatprep.mubr.bf16.mxu0 0
        %3196 = vmatmul.mubr.bf16.gmra.mrb[0].mxu0 %v3020
        %v3197 = vpop.f32.mrb[0].mxu0
        %v3198 = vadd.f32 0.0, %v3197
        %v3199 = vpop.f32.mrb[0].mxu0
        %v3200 = vpop.f32.mrb[0].mxu0
        %v3201 = vadd.f32 0.0, %v3200
        %v3202 = vpop.f32.mrb[0].mxu0
        %3203 = vmatprep.mubr.bf16.mxu0 0
        %3204 = vmatmul.mubr.bf16.gmra.mrb[0].mxu0 %v3021
        %v3205 = vpop.f32.mrb[0].mxu0
        %v3206 = vadd.f32 0.0, %v3205
        %v3207 = vpop.f32.mrb[0].mxu0
        %v3208 = vpop.f32.mrb[0].mxu0
        %v3209 = vadd.f32 0.0, %v3208
        %v3210 = vpop.f32.mrb[0].mxu0
        %3211 = vmatprep.mubr.bf16.mxu0 0
        %3212 = vmatmul.mubr.bf16.gmra.mrb[0].mxu0 %v3022
        %v3213 = vpop.f32.mrb[0].mxu0
        %v3214 = vadd.f32 0.0, %v3213
        %v3215 = vpop.f32.mrb[0].mxu0
        %v3216 = vpop.f32.mrb[0].mxu0
        %v3217 = vadd.f32 0.0, %v3216
        %v3218 = vpop.f32.mrb[0].mxu0
        %3219 = vmatprep.mubr.bf16.mxu0 0
        %3220 = vmatmul.mubr.bf16.gmra.mrb[0].mxu0 %v3023
        %v3221 = vpop.f32.mrb[0].mxu0
        %v3222 = vadd.f32 0.0, %v3221
        %v3223 = vpop.f32.mrb[0].mxu0
        %v3224 = vpop.f32.mrb[0].mxu0
        %v3225 = vadd.f32 0.0, %v3224
        %v3226 = vpop.f32.mrb[0].mxu0
        %3227 = vmatprep.mubr.bf16.mxu0 0
        %3228 = vmatmul.mubr.bf16.gmra.mrb[0].mxu0 %v3024
        %v3229 = vpop.f32.mrb[0].mxu0
        %v3230 = vadd.f32 0.0, %v3229
        %v3231 = vpop.f32.mrb[0].mxu0
        %v3232 = vpop.f32.mrb[0].mxu0
        %v3233 = vadd.f32 0.0, %v3232
        %v3234 = vpop.f32.mrb[0].mxu0
        %3235 = vmatprep.mubr.bf16.mxu0 0
        %3236 = vmatmul.mubr.bf16.gmra.mrb[0].mxu0 %v3025
        %v3237 = vpop.f32.mrb[0].mxu0
        %v3238 = vadd.f32 0.0, %v3237
        %v3239 = vpop.f32.mrb[0].mxu0
        %v3240 = vpop.f32.mrb[0].mxu0
        %v3241 = vadd.f32 0.0, %v3240
        %v3242 = vpop.f32.mrb[0].mxu0
        %3243 = vmatprep.mubr.bf16.mxu0 0
        %3244 = vmatmul.mubr.bf16.gmra.mrb[0].mxu0 %v3026
        %v3245 = vpop.f32.mrb[0].mxu0
        %v3246 = vadd.f32 0.0, %v3245
        %v3247 = vpop.f32.mrb[0].mxu0
        %v3248 = vpop.f32.mrb[0].mxu0
        %v3249 = vadd.f32 0.0, %v3248
        %v3250 = vpop.f32.mrb[0].mxu0
        %3251 = vdwg.mxu0
        %v3252 = vadd.f32 %v2947, %v3126
        %v3253 = vadd.f32 %v2948, %v3129
        %v3254 = vadd.f32 %v2949, %v3134
        %v3255 = vadd.f32 %v2950, %v3137
        %v3256 = vadd.f32 %v2951, %v3142
        %v3257 = vadd.f32 %v2952, %v3145
        %v3258 = vadd.f32 %v2953, %v3150
        %v3259 = vadd.f32 %v2954, %v3153
        %v3260 = vadd.f32 %v2955, %v3158
        %v3261 = vadd.f32 %v2956, %v3161
        %v3262 = vadd.f32 %v2957, %v3166
        %v3263 = vadd.f32 %v2958, %v3169
        %v3264 = vadd.f32 %v2959, %v3174
        %v3265 = vadd.f32 %v2960, %v3177
        %v3266 = vadd.f32 %v2961, %v3182
        %v3267 = vadd.f32 %v2962, %v3185
        %v3268 = vadd.f32 %v2963, %v3190
        %v3269 = vadd.f32 %v2964, %v3193
        %v3270 = vadd.f32 %v2965, %v3198
        %v3271 = vadd.f32 %v2966, %v3201
        %v3272 = vadd.f32 %v2967, %v3206
        %v3273 = vadd.f32 %v2968, %v3209
        %v3274 = vadd.f32 %v2969, %v3214
        %v3275 = vadd.f32 %v2970, %v3217
        %v3276 = vadd.f32 %v2971, %v3222
        %v3277 = vadd.f32 %v2972, %v3225
        %v3278 = vadd.f32 %v2973, %v3230
        %v3279 = vadd.f32 %v2974, %v3233
        %v3280 = vadd.f32 %v2975, %v3238
        %v3281 = vadd.f32 %v2976, %v3241
        %v3282 = vadd.f32 %v2977, %v3246
        %v3283 = vadd.f32 %v2978, %v3249
        %v3284 = vld [vmem:[%s2] sm:$0x1]
        %v3286 = vlaneseq
        %v3287 = vshrl.u32 %v3286, 7
        %v3288 = vsub.s32 0, %v3287
        %v3289 = vrot.slane %v3284, %v3288
        %v3291 = vmul.f32 %v3252, %v3289
        %v3292 = vmul.f32 %v3253, %v3289
        %v3293 = vmul.f32 %v3254, %v3289
        %v3294 = vmul.f32 %v3255, %v3289
        %v3295 = vmul.f32 %v3256, %v3289
        %v3296 = vmul.f32 %v3257, %v3289
        %v3297 = vmul.f32 %v3258, %v3289
        %v3298 = vmul.f32 %v3259, %v3289
        %v3299 = vmul.f32 %v3260, %v3289
        %v3300 = vmul.f32 %v3261, %v3289
        %v3301 = vmul.f32 %v3262, %v3289
        %v3302 = vmul.f32 %v3263, %v3289
        %v3303 = vmul.f32 %v3264, %v3289
        %v3304 = vmul.f32 %v3265, %v3289
        %v3305 = vmul.f32 %v3266, %v3289
        %v3306 = vmul.f32 %v3267, %v3289
        %v3307 = vmul.f32 %v3268, %v3289
        %v3308 = vmul.f32 %v3269, %v3289
        %v3309 = vmul.f32 %v3270, %v3289
        %v3310 = vmul.f32 %v3271, %v3289
        %v3311 = vmul.f32 %v3272, %v3289
        %v3312 = vmul.f32 %v3273, %v3289
        %v3313 = vmul.f32 %v3274, %v3289
        %v3314 = vmul.f32 %v3275, %v3289
        %v3315 = vmul.f32 %v3276, %v3289
        %v3316 = vmul.f32 %v3277, %v3289
        %v3317 = vmul.f32 %v3278, %v3289
        %v3318 = vmul.f32 %v3279, %v3289
        %v3319 = vmul.f32 %v3280, %v3289
        %v3320 = vmul.f32 %v3281, %v3289
        %v3321 = vmul.f32 %v3282, %v3289
        %v3322 = vmul.f32 %v3283, %v3289
        %v3323 = vld [vmem:[%s3] sm:$0x1]
        %v3325 = vlaneseq
        %v3326 = vshrl.u32 %v3325, 7
        %v3327 = vsub.s32 0, %v3326
        %v3328 = vrot.slane %v3323, %v3327
        %v3330 = vadd.f32 %v3291, %v3328
        %v3331 = vadd.f32 %v3292, %v3328
        %v3332 = vadd.f32 %v3293, %v3328
        %v3333 = vadd.f32 %v3294, %v3328
        %v3334 = vadd.f32 %v3295, %v3328
        %v3335 = vadd.f32 %v3296, %v3328
        %v3336 = vadd.f32 %v3297, %v3328
        %v3337 = vadd.f32 %v3298, %v3328
        %v3338 = vadd.f32 %v3299, %v3328
        %v3339 = vadd.f32 %v3300, %v3328
        %v3340 = vadd.f32 %v3301, %v3328
        %v3341 = vadd.f32 %v3302, %v3328
        %v3342 = vadd.f32 %v3303, %v3328
        %v3343 = vadd.f32 %v3304, %v3328
        %v3344 = vadd.f32 %v3305, %v3328
        %v3345 = vadd.f32 %v3306, %v3328
        %v3346 = vadd.f32 %v3307, %v3328
        %v3347 = vadd.f32 %v3308, %v3328
        %v3348 = vadd.f32 %v3309, %v3328
        %v3349 = vadd.f32 %v3310, %v3328
        %v3350 = vadd.f32 %v3311, %v3328
        %v3351 = vadd.f32 %v3312, %v3328
        %v3352 = vadd.f32 %v3313, %v3328
        %v3353 = vadd.f32 %v3314, %v3328
        %v3354 = vadd.f32 %v3315, %v3328
        %v3355 = vadd.f32 %v3316, %v3328
        %v3356 = vadd.f32 %v3317, %v3328
        %v3357 = vadd.f32 %v3318, %v3328
        %v3358 = vadd.f32 %v3319, %v3328
        %v3359 = vadd.f32 %v3320, %v3328
        %v3360 = vadd.f32 %v3321, %v3328
        %v3361 = vadd.f32 %v3322, %v3328
        %vm3362 = vcmp.gt.f32.partialorder %v3330, 0.0
        %vm3363 = vcmp.gt.f32.partialorder %v3331, 0.0
        %vm3364 = vcmp.gt.f32.partialorder %v3332, 0.0
        %vm3365 = vcmp.gt.f32.partialorder %v3333, 0.0
        %vm3366 = vcmp.gt.f32.partialorder %v3334, 0.0
        %vm3367 = vcmp.gt.f32.partialorder %v3335, 0.0
        %vm3368 = vcmp.gt.f32.partialorder %v3336, 0.0
        %vm3369 = vcmp.gt.f32.partialorder %v3337, 0.0
        %vm3370 = vcmp.gt.f32.partialorder %v3338, 0.0
        %vm3371 = vcmp.gt.f32.partialorder %v3339, 0.0
        %vm3372 = vcmp.gt.f32.partialorder %v3340, 0.0
        %vm3373 = vcmp.gt.f32.partialorder %v3341, 0.0
        %vm3374 = vcmp.gt.f32.partialorder %v3342, 0.0
        %vm3375 = vcmp.gt.f32.partialorder %v3343, 0.0
        %vm3376 = vcmp.gt.f32.partialorder %v3344, 0.0
        %vm3377 = vcmp.gt.f32.partialorder %v3345, 0.0
        %vm3378 = vcmp.gt.f32.partialorder %v3346, 0.0
        %vm3379 = vcmp.gt.f32.partialorder %v3347, 0.0
        %vm3380 = vcmp.gt.f32.partialorder %v3348, 0.0
        %vm3381 = vcmp.gt.f32.partialorder %v3349, 0.0
        %vm3382 = vcmp.gt.f32.partialorder %v3350, 0.0
        %vm3383 = vcmp.gt.f32.partialorder %v3351, 0.0
        %vm3384 = vcmp.gt.f32.partialorder %v3352, 0.0
        %vm3385 = vcmp.gt.f32.partialorder %v3353, 0.0
        %vm3386 = vcmp.gt.f32.partialorder %v3354, 0.0
        %vm3387 = vcmp.gt.f32.partialorder %v3355, 0.0
        %vm3388 = vcmp.gt.f32.partialorder %v3356, 0.0
        %vm3389 = vcmp.gt.f32.partialorder %v3357, 0.0
        %vm3390 = vcmp.gt.f32.partialorder %v3358, 0.0
        %vm3391 = vcmp.gt.f32.partialorder %v3359, 0.0
        %vm3392 = vcmp.gt.f32.partialorder %v3360, 0.0
        %vm3393 = vcmp.gt.f32.partialorder %v3361, 0.0
        %v3394 = vmul.f32 %v3330, 0.2
        %v3395 = vmul.f32 %v3331, 0.2
        %v3396 = vmul.f32 %v3332, 0.2
        %v3397 = vmul.f32 %v3333, 0.2
        %v3398 = vmul.f32 %v3334, 0.2
        %v3399 = vmul.f32 %v3335, 0.2
        %v3400 = vmul.f32 %v3336, 0.2
        %v3401 = vmul.f32 %v3337, 0.2
        %v3402 = vmul.f32 %v3338, 0.2
        %v3403 = vmul.f32 %v3339, 0.2
        %v3404 = vmul.f32 %v3340, 0.2
        %v3405 = vmul.f32 %v3341, 0.2
        %v3406 = vmul.f32 %v3342, 0.2
        %v3407 = vmul.f32 %v3343, 0.2
        %v3408 = vmul.f32 %v3344, 0.2
        %v3409 = vmul.f32 %v3345, 0.2
        %v3410 = vmul.f32 %v3346, 0.2
        %v3411 = vmul.f32 %v3347, 0.2
        %v3412 = vmul.f32 %v3348, 0.2
        %v3413 = vmul.f32 %v3349, 0.2
        %v3414 = vmul.f32 %v3350, 0.2
        %v3415 = vmul.f32 %v3351, 0.2
        %v3416 = vmul.f32 %v3352, 0.2
        %v3417 = vmul.f32 %v3353, 0.2
        %v3418 = vmul.f32 %v3354, 0.2
        %v3419 = vmul.f32 %v3355, 0.2
        %v3420 = vmul.f32 %v3356, 0.2
        %v3421 = vmul.f32 %v3357, 0.2
        %v3422 = vmul.f32 %v3358, 0.2
        %v3423 = vmul.f32 %v3359, 0.2
        %v3424 = vmul.f32 %v3360, 0.2
        %v3425 = vmul.f32 %v3361, 0.2
        %v3426 = vsel %vm3362, %v3330, %v3394
        %v3427 = vsel %vm3363, %v3331, %v3395
        %v3428 = vsel %vm3364, %v3332, %v3396
        %v3429 = vsel %vm3365, %v3333, %v3397
        %v3430 = vsel %vm3366, %v3334, %v3398
        %v3431 = vsel %vm3367, %v3335, %v3399
        %v3432 = vsel %vm3368, %v3336, %v3400
        %v3433 = vsel %vm3369, %v3337, %v3401
        %v3434 = vsel %vm3370, %v3338, %v3402
        %v3435 = vsel %vm3371, %v3339, %v3403
        %v3436 = vsel %vm3372, %v3340, %v3404
        %v3437 = vsel %vm3373, %v3341, %v3405
        %v3438 = vsel %vm3374, %v3342, %v3406
        %v3439 = vsel %vm3375, %v3343, %v3407
        %v3440 = vsel %vm3376, %v3344, %v3408
        %v3441 = vsel %vm3377, %v3345, %v3409
        %v3442 = vsel %vm3378, %v3346, %v3410
        %v3443 = vsel %vm3379, %v3347, %v3411
        %v3444 = vsel %vm3380, %v3348, %v3412
        %v3445 = vsel %vm3381, %v3349, %v3413
        %v3446 = vsel %vm3382, %v3350, %v3414
        %v3447 = vsel %vm3383, %v3351, %v3415
        %v3448 = vsel %vm3384, %v3352, %v3416
        %v3449 = vsel %vm3385, %v3353, %v3417
        %v3450 = vsel %vm3386, %v3354, %v3418
        %v3451 = vsel %vm3387, %v3355, %v3419
        %v3452 = vsel %vm3388, %v3356, %v3420
        %v3453 = vsel %vm3389, %v3357, %v3421
        %v3454 = vsel %vm3390, %v3358, %v3422
        %v3455 = vsel %vm3391, %v3359, %v3423
        %v3456 = vsel %vm3392, %v3360, %v3424
        %v3457 = vsel %vm3393, %v3361, %v3425
        %s3458 = scalar_lea.vmem [#allocation3], 24
        %3459 = vst [vmem:[%s3458 + $0x1] sm:$0xff] %v3426
        %3460 = vst [vmem:[%s3458 + $0x9] sm:$0xff] %v3427
        %3461 = vst [vmem:[%s3458 + $0x19] sm:$0xff] %v3428
        %3462 = vst [vmem:[%s3458 + $0x21] sm:$0xff] %v3429
        %3463 = vst [vmem:[%s3458 + $0x31] sm:$0xff] %v3430
        %3464 = vst [vmem:[%s3458 + $0x39] sm:$0xff] %v3431
        %3465 = vst [vmem:[%s3458 + $0x49] sm:$0xff] %v3432
        %3466 = vst [vmem:[%s3458 + $0x51] sm:$0xff] %v3433
        %3467 = vst [vmem:[%s3458 + $0x61] sm:$0xff] %v3434
        %3468 = vst [vmem:[%s3458 + $0x69] sm:$0xff] %v3435
        %3469 = vst [vmem:[%s3458 + $0x79] sm:$0xff] %v3436
        %3470 = vst [vmem:[%s3458 + $0x81] sm:$0xff] %v3437
        %3471 = vst [vmem:[%s3458 + $0x91] sm:$0xff] %v3438
        %3472 = vst [vmem:[%s3458 + $0x99] sm:$0xff] %v3439
        %3473 = vst [vmem:[%s3458 + $0xa9] sm:$0xff] %v3440
        %3474 = vst [vmem:[%s3458 + $0xb1] sm:$0xff] %v3441
        %3475 = vst [vmem:[%s3458 + $0xc1] sm:$0xff] %v3442
        %3476 = vst [vmem:[%s3458 + $0xc9] sm:$0xff] %v3443
        %3477 = vst [vmem:[%s3458 + $0xd9] sm:$0xff] %v3444
        %3478 = vst [vmem:[%s3458 + $0xe1] sm:$0xff] %v3445
        %3479 = vst [vmem:[%s3458 + $0xf1] sm:$0xff] %v3446
        %3480 = vst [vmem:[%s3458 + $0xf9] sm:$0xff] %v3447
        %3481 = vst [vmem:[%s3458 + $0x109] sm:$0xff] %v3448
        %3482 = vst [vmem:[%s3458 + $0x111] sm:$0xff] %v3449
        %3483 = vst [vmem:[%s3458 + $0x121] sm:$0xff] %v3450
        %3484 = vst [vmem:[%s3458 + $0x129] sm:$0xff] %v3451
        %3485 = vst [vmem:[%s3458 + $0x139] sm:$0xff] %v3452
        %3486 = vst [vmem:[%s3458 + $0x141] sm:$0xff] %v3453
        %3487 = vst [vmem:[%s3458 + $0x151] sm:$0xff] %v3454
        %3488 = vst [vmem:[%s3458 + $0x159] sm:$0xff] %v3455
        %3489 = vst [vmem:[%s3458 + $0x169] sm:$0xff] %v3456
        %3490 = vst [vmem:[%s3458 + $0x171] sm:$0xff] %v3457
        %v3491 = vld [vmem:[#allocation3] sm:$0xff]
        %v3492 = vld [vmem:[#allocation3 + $0x8] sm:$0xff]
        %v3493 = vld [vmem:[#allocation3 + $0x18] sm:$0xff]
        %v3494 = vld [vmem:[#allocation3 + $0x20] sm:$0xff]
        %v3495 = vld [vmem:[#allocation3 + $0x30] sm:$0xff]
        %v3496 = vld [vmem:[#allocation3 + $0x38] sm:$0xff]
        %v3497 = vld [vmem:[#allocation3 + $0x48] sm:$0xff]
        %v3498 = vld [vmem:[#allocation3 + $0x50] sm:$0xff]
        %v3499 = vld [vmem:[#allocation3 + $0x60] sm:$0xff]
        %v3500 = vld [vmem:[#allocation3 + $0x68] sm:$0xff]
        %v3501 = vld [vmem:[#allocation3 + $0x78] sm:$0xff]
        %v3502 = vld [vmem:[#allocation3 + $0x80] sm:$0xff]
        %v3503 = vld [vmem:[#allocation3 + $0x90] sm:$0xff]
        %v3504 = vld [vmem:[#allocation3 + $0x98] sm:$0xff]
        %v3505 = vld [vmem:[#allocation3 + $0xa8] sm:$0xff]
        %v3506 = vld [vmem:[#allocation3 + $0xb0] sm:$0xff]
        %v3507 = vld [vmem:[#allocation3 + $0xc0] sm:$0xff]
        %v3508 = vld [vmem:[#allocation3 + $0xc8] sm:$0xff]
        %v3509 = vld [vmem:[#allocation3 + $0xd8] sm:$0xff]
        %v3510 = vld [vmem:[#allocation3 + $0xe0] sm:$0xff]
        %v3511 = vld [vmem:[#allocation3 + $0xf0] sm:$0xff]
        %v3512 = vld [vmem:[#allocation3 + $0xf8] sm:$0xff]
        %v3513 = vld [vmem:[#allocation3 + $0x108] sm:$0xff]
        %v3514 = vld [vmem:[#allocation3 + $0x110] sm:$0xff]
        %v3515 = vld [vmem:[#allocation3 + $0x120] sm:$0xff]
        %v3516 = vld [vmem:[#allocation3 + $0x128] sm:$0xff]
        %v3517 = vld [vmem:[#allocation3 + $0x138] sm:$0xff]
        %v3518 = vld [vmem:[#allocation3 + $0x140] sm:$0xff]
        %v3519 = vld [vmem:[#allocation3 + $0x150] sm:$0xff]
        %v3520 = vld [vmem:[#allocation3 + $0x158] sm:$0xff]
        %v3521 = vld [vmem:[#allocation3 + $0x168] sm:$0xff]
        %v3522 = vld [vmem:[#allocation3 + $0x170] sm:$0xff]
        %v3523 = vpack.c.bf16 %v3492, %v3491
        %v3524 = vpack.c.bf16 %v3494, %v3493
        %v3525 = vpack.c.bf16 %v3496, %v3495
        %v3526 = vpack.c.bf16 %v3498, %v3497
        %v3527 = vpack.c.bf16 %v3500, %v3499
        %v3528 = vpack.c.bf16 %v3502, %v3501
        %v3529 = vpack.c.bf16 %v3504, %v3503
        %v3530 = vpack.c.bf16 %v3506, %v3505
        %v3531 = vpack.c.bf16 %v3508, %v3507
        %v3532 = vpack.c.bf16 %v3510, %v3509
        %v3533 = vpack.c.bf16 %v3512, %v3511
        %v3534 = vpack.c.bf16 %v3514, %v3513
        %v3535 = vpack.c.bf16 %v3516, %v3515
        %v3536 = vpack.c.bf16 %v3518, %v3517
        %v3537 = vpack.c.bf16 %v3520, %v3519
        %v3538 = vpack.c.bf16 %v3522, %v3521
        %v3539 = vld [vmem:[#allocation8] sm:$0xf]
        %v3540 = vld [vmem:[#allocation8 + $0x4] sm:$0xf]
        %v3541 = vld [vmem:[#allocation8 + $0x8] sm:$0xf]
        %v3542 = vld [vmem:[#allocation8 + $0xc] sm:$0xf]
        %v3543 = vld [vmem:[#allocation8 + $0x10] sm:$0xf]
        %v3544 = vld [vmem:[#allocation8 + $0x14] sm:$0xf]
        %v3545 = vld [vmem:[#allocation8 + $0x18] sm:$0xf]
        %v3546 = vld [vmem:[#allocation8 + $0x1c] sm:$0xf]
        %v3547 = vld [vmem:[#allocation8 + $0x20] sm:$0xf]
        %v3548 = vld [vmem:[#allocation8 + $0x24] sm:$0xf]
        %v3549 = vld [vmem:[#allocation8 + $0x28] sm:$0xf]
        %v3550 = vld [vmem:[#allocation8 + $0x2c] sm:$0xf]
        %v3551 = vld [vmem:[#allocation8 + $0x30] sm:$0xf]
        %v3552 = vld [vmem:[#allocation8 + $0x34] sm:$0xf]
        %v3553 = vld [vmem:[#allocation8 + $0x38] sm:$0xf]
        %v3554 = vld [vmem:[#allocation8 + $0x3c] sm:$0xf]
        %v3555 = vld [vmem:[#allocation3 + $0x1] sm:$0xff]
        %v3556 = vld [vmem:[#allocation3 + $0x9] sm:$0xff]
        %v3557 = vld [vmem:[#allocation3 + $0x19] sm:$0xff]
        %v3558 = vld [vmem:[#allocation3 + $0x21] sm:$0xff]
        %v3559 = vld [vmem:[#allocation3 + $0x31] sm:$0xff]
        %v3560 = vld [vmem:[#allocation3 + $0x39] sm:$0xff]
        %v3561 = vld [vmem:[#allocation3 + $0x49] sm:$0xff]
        %v3562 = vld [vmem:[#allocation3 + $0x51] sm:$0xff]
        %v3563 = vld [vmem:[#allocation3 + $0x61] sm:$0xff]
        %v3564 = vld [vmem:[#allocation3 + $0x69] sm:$0xff]
        %v3565 = vld [vmem:[#allocation3 + $0x79] sm:$0xff]
        %v3566 = vld [vmem:[#allocation3 + $0x81] sm:$0xff]
        %v3567 = vld [vmem:[#allocation3 + $0x91] sm:$0xff]
        %v3568 = vld [vmem:[#allocation3 + $0x99] sm:$0xff]
        %v3569 = vld [vmem:[#allocation3 + $0xa9] sm:$0xff]
        %v3570 = vld [vmem:[#allocation3 + $0xb1] sm:$0xff]
        %v3571 = vld [vmem:[#allocation3 + $0xc1] sm:$0xff]
        %v3572 = vld [vmem:[#allocation3 + $0xc9] sm:$0xff]
        %v3573 = vld [vmem:[#allocation3 + $0xd9] sm:$0xff]
        %v3574 = vld [vmem:[#allocation3 + $0xe1] sm:$0xff]
        %v3575 = vld [vmem:[#allocation3 + $0xf1] sm:$0xff]
        %v3576 = vld [vmem:[#allocation3 + $0xf9] sm:$0xff]
        %v3577 = vld [vmem:[#allocation3 + $0x109] sm:$0xff]
        %v3578 = vld [vmem:[#allocation3 + $0x111] sm:$0xff]
        %v3579 = vld [vmem:[#allocation3 + $0x121] sm:$0xff]
        %v3580 = vld [vmem:[#allocation3 + $0x129] sm:$0xff]
        %v3581 = vld [vmem:[#allocation3 + $0x139] sm:$0xff]
        %v3582 = vld [vmem:[#allocation3 + $0x141] sm:$0xff]
        %v3583 = vld [vmem:[#allocation3 + $0x151] sm:$0xff]
        %v3584 = vld [vmem:[#allocation3 + $0x159] sm:$0xff]
        %v3585 = vld [vmem:[#allocation3 + $0x169] sm:$0xff]
        %v3586 = vld [vmem:[#allocation3 + $0x171] sm:$0xff]
        %v3587 = vpack.c.bf16 %v3556, %v3555
        %v3588 = vpack.c.bf16 %v3558, %v3557
        %v3589 = vpack.c.bf16 %v3560, %v3559
        %v3590 = vpack.c.bf16 %v3562, %v3561
        %v3591 = vpack.c.bf16 %v3564, %v3563
        %v3592 = vpack.c.bf16 %v3566, %v3565
        %v3593 = vpack.c.bf16 %v3568, %v3567
        %v3594 = vpack.c.bf16 %v3570, %v3569
        %v3595 = vpack.c.bf16 %v3572, %v3571
        %v3596 = vpack.c.bf16 %v3574, %v3573
        %v3597 = vpack.c.bf16 %v3576, %v3575
        %v3598 = vpack.c.bf16 %v3578, %v3577
        %v3599 = vpack.c.bf16 %v3580, %v3579
        %v3600 = vpack.c.bf16 %v3582, %v3581
        %v3601 = vpack.c.bf16 %v3584, %v3583
        %v3602 = vpack.c.bf16 %v3586, %v3585
        %v3603 = vld [vmem:[#allocation8 + $0x40] sm:$0xf]
        %v3604 = vld [vmem:[#allocation8 + $0x44] sm:$0xf]
        %v3605 = vld [vmem:[#allocation8 + $0x48] sm:$0xf]
        %v3606 = vld [vmem:[#allocation8 + $0x4c] sm:$0xf]
        %v3607 = vld [vmem:[#allocation8 + $0x50] sm:$0xf]
        %v3608 = vld [vmem:[#allocation8 + $0x54] sm:$0xf]
        %v3609 = vld [vmem:[#allocation8 + $0x58] sm:$0xf]
        %v3610 = vld [vmem:[#allocation8 + $0x5c] sm:$0xf]
        %v3611 = vld [vmem:[#allocation8 + $0x60] sm:$0xf]
        %v3612 = vld [vmem:[#allocation8 + $0x64] sm:$0xf]
        %v3613 = vld [vmem:[#allocation8 + $0x68] sm:$0xf]
        %v3614 = vld [vmem:[#allocation8 + $0x6c] sm:$0xf]
        %v3615 = vld [vmem:[#allocation8 + $0x70] sm:$0xf]
        %v3616 = vld [vmem:[#allocation8 + $0x74] sm:$0xf]
        %v3617 = vld [vmem:[#allocation8 + $0x78] sm:$0xf]
        %v3618 = vld [vmem:[#allocation8 + $0x7c] sm:$0xf]
        %v3635 = vunpack.c.l.b16 %v3603
        %v3636 = vunpack.c.l.b16 %v3604
        %v3637 = vunpack.c.l.b16 %v3605
        %v3638 = vunpack.c.l.b16 %v3606
        %v3639 = vunpack.c.l.b16 %v3607
        %v3640 = vunpack.c.l.b16 %v3608
        %v3641 = vunpack.c.l.b16 %v3609
        %v3642 = vunpack.c.l.b16 %v3610
        %v3643 = vunpack.c.l.b16 %v3611
        %v3644 = vunpack.c.l.b16 %v3612
        %v3645 = vunpack.c.l.b16 %v3613
        %v3646 = vunpack.c.l.b16 %v3614
        %v3647 = vunpack.c.l.b16 %v3615
        %v3648 = vunpack.c.l.b16 %v3616
        %v3649 = vunpack.c.l.b16 %v3617
        %v3650 = vunpack.c.l.b16 %v3618
        %v3651 = vpack.c.b16 %v3636, %v3635
        %v3652 = vpack.c.b16 %v3638, %v3637
        %v3653 = vpack.c.b16 %v3640, %v3639
        %v3654 = vpack.c.b16 %v3642, %v3641
        %v3655 = vpack.c.b16 %v3644, %v3643
        %v3656 = vpack.c.b16 %v3646, %v3645
        %v3657 = vpack.c.b16 %v3648, %v3647
        %v3658 = vpack.c.b16 %v3650, %v3649
        %3667 = vmatprep.subr.bf16.mxu0 0
        %3668 = vmatpush1.bf16.msra.mxu0 %v3651
        %3669 = vmatprep.subr.bf16.mxu0 0
        %3670 = vmatpush1.bf16.msra.mxu0 %v3652
        %3671 = vmatprep.subr.bf16.mxu0 0
        %3672 = vmatpush1.bf16.msra.mxu0 %v3653
        %3673 = vmatprep.subr.bf16.mxu0 0
        %3674 = vmatpush1.bf16.msra.mxu0 %v3654
        %3675 = vmatprep.subr.bf16.mxu0 0
        %3676 = vmatpush1.bf16.msra.mxu0 %v3655
        %3677 = vmatprep.subr.bf16.mxu0 0
        %3678 = vmatpush1.bf16.msra.mxu0 %v3656
        %3679 = vmatprep.subr.bf16.mxu0 0
        %3680 = vmatpush1.bf16.msra.mxu0 %v3657
        %3681 = vmatprep.subr.bf16.mxu0 0
        %3682 = vmatpush1.bf16.msra.mxu0 %v3658
        %3683 = vmatprep.subr.bf16.mxu0 0
        %3684 = vmatpush1.bf16.msra.mxu0 0
        %3685 = vmatprep.subr.bf16.mxu0 0
        %3686 = vmatpush1.bf16.msra.mxu0 0
        %3687 = vmatprep.subr.bf16.mxu0 0
        %3688 = vmatpush1.bf16.msra.mxu0 0
        %3689 = vmatprep.subr.bf16.mxu0 0
        %3690 = vmatpush1.bf16.msra.mxu0 0
        %3691 = vmatprep.subr.bf16.mxu0 0
        %3692 = vmatpush1.bf16.msra.mxu0 0
        %3693 = vmatprep.subr.bf16.mxu0 0
        %3694 = vmatpush1.bf16.msra.mxu0 0
        %3695 = vmatprep.subr.bf16.mxu0 0
        %3696 = vmatpush1.bf16.msra.mxu0 0
        %3697 = vmatprep.subr.bf16.mxu0 0
        %3698 = vmatpush1.bf16.msra.mxu0 0
        %3699 = vmatprep.mubr.bf16.mxu0 0
        %3700 = vmatmul.mubr.bf16.gmra.mrb[0].mxu0 %v3587
        %v3701 = vpop.f32.mrb[0].mxu0
        %v3702 = vadd.f32 0.0, %v3701
        %v3703 = vpop.f32.mrb[0].mxu0
        %v3704 = vpop.f32.mrb[0].mxu0
        %v3705 = vadd.f32 0.0, %v3704
        %v3706 = vpop.f32.mrb[0].mxu0
        %3707 = vmatprep.mubr.bf16.mxu0 0
        %3708 = vmatmul.mubr.bf16.gmra.mrb[0].mxu0 %v3588
        %v3709 = vpop.f32.mrb[0].mxu0
        %v3710 = vadd.f32 0.0, %v3709
        %v3711 = vpop.f32.mrb[0].mxu0
        %v3712 = vpop.f32.mrb[0].mxu0
        %v3713 = vadd.f32 0.0, %v3712
        %v3714 = vpop.f32.mrb[0].mxu0
        %3715 = vmatprep.mubr.bf16.mxu0 0
        %3716 = vmatmul.mubr.bf16.gmra.mrb[0].mxu0 %v3589
        %v3717 = vpop.f32.mrb[0].mxu0
        %v3718 = vadd.f32 0.0, %v3717
        %v3719 = vpop.f32.mrb[0].mxu0
        %v3720 = vpop.f32.mrb[0].mxu0
        %v3721 = vadd.f32 0.0, %v3720
        %v3722 = vpop.f32.mrb[0].mxu0
        %3723 = vmatprep.mubr.bf16.mxu0 0
        %3724 = vmatmul.mubr.bf16.gmra.mrb[0].mxu0 %v3590
        %v3725 = vpop.f32.mrb[0].mxu0
        %v3726 = vadd.f32 0.0, %v3725
        %v3727 = vpop.f32.mrb[0].mxu0
        %v3728 = vpop.f32.mrb[0].mxu0
        %v3729 = vadd.f32 0.0, %v3728
        %v3730 = vpop.f32.mrb[0].mxu0
        %3731 = vmatprep.mubr.bf16.mxu0 0
        %3732 = vmatmul.mubr.bf16.gmra.mrb[0].mxu0 %v3591
        %v3733 = vpop.f32.mrb[0].mxu0
        %v3734 = vadd.f32 0.0, %v3733
        %v3735 = vpop.f32.mrb[0].mxu0
        %v3736 = vpop.f32.mrb[0].mxu0
        %v3737 = vadd.f32 0.0, %v3736
        %v3738 = vpop.f32.mrb[0].mxu0
        %3739 = vmatprep.mubr.bf16.mxu0 0
        %3740 = vmatmul.mubr.bf16.gmra.mrb[0].mxu0 %v3592
        %v3741 = vpop.f32.mrb[0].mxu0
        %v3742 = vadd.f32 0.0, %v3741
        %v3743 = vpop.f32.mrb[0].mxu0
        %v3744 = vpop.f32.mrb[0].mxu0
        %v3745 = vadd.f32 0.0, %v3744
        %v3746 = vpop.f32.mrb[0].mxu0
        %3747 = vmatprep.mubr.bf16.mxu0 0
        %3748 = vmatmul.mubr.bf16.gmra.mrb[0].mxu0 %v3593
        %v3749 = vpop.f32.mrb[0].mxu0
        %v3750 = vadd.f32 0.0, %v3749
        %v3751 = vpop.f32.mrb[0].mxu0
        %v3752 = vpop.f32.mrb[0].mxu0
        %v3753 = vadd.f32 0.0, %v3752
        %v3754 = vpop.f32.mrb[0].mxu0
        %3755 = vmatprep.mubr.bf16.mxu0 0
        %3756 = vmatmul.mubr.bf16.gmra.mrb[0].mxu0 %v3594
        %v3757 = vpop.f32.mrb[0].mxu0
        %v3758 = vadd.f32 0.0, %v3757
        %v3759 = vpop.f32.mrb[0].mxu0
        %v3760 = vpop.f32.mrb[0].mxu0
        %v3761 = vadd.f32 0.0, %v3760
        %v3762 = vpop.f32.mrb[0].mxu0
        %3763 = vmatprep.mubr.bf16.mxu0 0
        %3764 = vmatmul.mubr.bf16.gmra.mrb[0].mxu0 %v3595
        %v3765 = vpop.f32.mrb[0].mxu0
        %v3766 = vadd.f32 0.0, %v3765
        %v3767 = vpop.f32.mrb[0].mxu0
        %v3768 = vpop.f32.mrb[0].mxu0
        %v3769 = vadd.f32 0.0, %v3768
        %v3770 = vpop.f32.mrb[0].mxu0
        %3771 = vmatprep.mubr.bf16.mxu0 0
        %3772 = vmatmul.mubr.bf16.gmra.mrb[0].mxu0 %v3596
        %v3773 = vpop.f32.mrb[0].mxu0
        %v3774 = vadd.f32 0.0, %v3773
        %v3775 = vpop.f32.mrb[0].mxu0
        %v3776 = vpop.f32.mrb[0].mxu0
        %v3777 = vadd.f32 0.0, %v3776
        %v3778 = vpop.f32.mrb[0].mxu0
        %3779 = vmatprep.mubr.bf16.mxu0 0
        %3780 = vmatmul.mubr.bf16.gmra.mrb[0].mxu0 %v3597
        %v3781 = vpop.f32.mrb[0].mxu0
        %v3782 = vadd.f32 0.0, %v3781
        %v3783 = vpop.f32.mrb[0].mxu0
        %v3784 = vpop.f32.mrb[0].mxu0
        %v3785 = vadd.f32 0.0, %v3784
        %v3786 = vpop.f32.mrb[0].mxu0
        %3787 = vmatprep.mubr.bf16.mxu0 0
        %3788 = vmatmul.mubr.bf16.gmra.mrb[0].mxu0 %v3598
        %v3789 = vpop.f32.mrb[0].mxu0
        %v3790 = vadd.f32 0.0, %v3789
        %v3791 = vpop.f32.mrb[0].mxu0
        %v3792 = vpop.f32.mrb[0].mxu0
        %v3793 = vadd.f32 0.0, %v3792
        %v3794 = vpop.f32.mrb[0].mxu0
        %3795 = vmatprep.mubr.bf16.mxu0 0
        %3796 = vmatmul.mubr.bf16.gmra.mrb[0].mxu0 %v3599
        %v3797 = vpop.f32.mrb[0].mxu0
        %v3798 = vadd.f32 0.0, %v3797
        %v3799 = vpop.f32.mrb[0].mxu0
        %v3800 = vpop.f32.mrb[0].mxu0
        %v3801 = vadd.f32 0.0, %v3800
        %v3802 = vpop.f32.mrb[0].mxu0
        %3803 = vmatprep.mubr.bf16.mxu0 0
        %3804 = vmatmul.mubr.bf16.gmra.mrb[0].mxu0 %v3600
        %v3805 = vpop.f32.mrb[0].mxu0
        %v3806 = vadd.f32 0.0, %v3805
        %v3807 = vpop.f32.mrb[0].mxu0
        %v3808 = vpop.f32.mrb[0].mxu0
        %v3809 = vadd.f32 0.0, %v3808
        %v3810 = vpop.f32.mrb[0].mxu0
        %3811 = vmatprep.mubr.bf16.mxu0 0
        %3812 = vmatmul.mubr.bf16.gmra.mrb[0].mxu0 %v3601
        %v3813 = vpop.f32.mrb[0].mxu0
        %v3814 = vadd.f32 0.0, %v3813
        %v3815 = vpop.f32.mrb[0].mxu0
        %v3816 = vpop.f32.mrb[0].mxu0
        %v3817 = vadd.f32 0.0, %v3816
        %v3818 = vpop.f32.mrb[0].mxu0
        %3819 = vmatprep.mubr.bf16.mxu0 0
        %3820 = vmatmul.mubr.bf16.gmra.mrb[0].mxu0 %v3602
        %v3821 = vpop.f32.mrb[0].mxu0
        %v3822 = vadd.f32 0.0, %v3821
        %v3823 = vpop.f32.mrb[0].mxu0
        %v3824 = vpop.f32.mrb[0].mxu0
        %v3825 = vadd.f32 0.0, %v3824
        %v3826 = vpop.f32.mrb[0].mxu0
        %3827 = vdwg.mxu0
        %v3844 = vunpack.c.l.b16 %v3539
        %v3845 = vunpack.c.l.b16 %v3540
        %v3846 = vunpack.c.l.b16 %v3541
        %v3847 = vunpack.c.l.b16 %v3542
        %v3848 = vunpack.c.l.b16 %v3543
        %v3849 = vunpack.c.l.b16 %v3544
        %v3850 = vunpack.c.l.b16 %v3545
        %v3851 = vunpack.c.l.b16 %v3546
        %v3852 = vunpack.c.l.b16 %v3547
        %v3853 = vunpack.c.l.b16 %v3548
        %v3854 = vunpack.c.l.b16 %v3549
        %v3855 = vunpack.c.l.b16 %v3550
        %v3856 = vunpack.c.l.b16 %v3551
        %v3857 = vunpack.c.l.b16 %v3552
        %v3858 = vunpack.c.l.b16 %v3553
        %v3859 = vunpack.c.l.b16 %v3554
        %v3860 = vpack.c.b16 %v3845, %v3844
        %v3861 = vpack.c.b16 %v3847, %v3846
        %v3862 = vpack.c.b16 %v3849, %v3848
        %v3863 = vpack.c.b16 %v3851, %v3850
        %v3864 = vpack.c.b16 %v3853, %v3852
        %v3865 = vpack.c.b16 %v3855, %v3854
        %v3866 = vpack.c.b16 %v3857, %v3856
        %v3867 = vpack.c.b16 %v3859, %v3858
        %3876 = vmatprep.subr.bf16.mxu0 0
        %3877 = vmatpush1.bf16.msra.mxu0 %v3860
        %3878 = vmatprep.subr.bf16.mxu0 0
        %3879 = vmatpush1.bf16.msra.mxu0 %v3861
        %3880 = vmatprep.subr.bf16.mxu0 0
        %3881 = vmatpush1.bf16.msra.mxu0 %v3862
        %3882 = vmatprep.subr.bf16.mxu0 0
        %3883 = vmatpush1.bf16.msra.mxu0 %v3863
        %3884 = vmatprep.subr.bf16.mxu0 0
        %3885 = vmatpush1.bf16.msra.mxu0 %v3864
        %3886 = vmatprep.subr.bf16.mxu0 0
        %3887 = vmatpush1.bf16.msra.mxu0 %v3865
        %3888 = vmatprep.subr.bf16.mxu0 0
        %3889 = vmatpush1.bf16.msra.mxu0 %v3866
        %3890 = vmatprep.subr.bf16.mxu0 0
        %3891 = vmatpush1.bf16.msra.mxu0 %v3867
        %3892 = vmatprep.subr.bf16.mxu0 0
        %3893 = vmatpush1.bf16.msra.mxu0 0
        %3894 = vmatprep.subr.bf16.mxu0 0
        %3895 = vmatpush1.bf16.msra.mxu0 0
        %3896 = vmatprep.subr.bf16.mxu0 0
        %3897 = vmatpush1.bf16.msra.mxu0 0
        %3898 = vmatprep.subr.bf16.mxu0 0
        %3899 = vmatpush1.bf16.msra.mxu0 0
        %3900 = vmatprep.subr.bf16.mxu0 0
        %3901 = vmatpush1.bf16.msra.mxu0 0
        %3902 = vmatprep.subr.bf16.mxu0 0
        %3903 = vmatpush1.bf16.msra.mxu0 0
        %3904 = vmatprep.subr.bf16.mxu0 0
        %3905 = vmatpush1.bf16.msra.mxu0 0
        %3906 = vmatprep.subr.bf16.mxu0 0
        %3907 = vmatpush1.bf16.msra.mxu0 0
        %3908 = vmatprep.mubr.bf16.mxu0 0
        %3909 = vmatmul.mubr.bf16.gmra.mrb[0].mxu0 %v3523
        %v3910 = vpop.f32.mrb[0].mxu0
        %v3911 = vadd.f32 %v3702, %v3910
        %v3912 = vpop.f32.mrb[0].mxu0
        %v3913 = vpop.f32.mrb[0].mxu0
        %v3914 = vadd.f32 %v3705, %v3913
        %v3915 = vpop.f32.mrb[0].mxu0
        %3916 = vmatprep.mubr.bf16.mxu0 0
        %3917 = vmatmul.mubr.bf16.gmra.mrb[0].mxu0 %v3524
        %v3918 = vpop.f32.mrb[0].mxu0
        %v3919 = vadd.f32 %v3710, %v3918
        %v3920 = vpop.f32.mrb[0].mxu0
        %v3921 = vpop.f32.mrb[0].mxu0
        %v3922 = vadd.f32 %v3713, %v3921
        %v3923 = vpop.f32.mrb[0].mxu0
        %3924 = vmatprep.mubr.bf16.mxu0 0
        %3925 = vmatmul.mubr.bf16.gmra.mrb[0].mxu0 %v3525
        %v3926 = vpop.f32.mrb[0].mxu0
        %v3927 = vadd.f32 %v3718, %v3926
        %v3928 = vpop.f32.mrb[0].mxu0
        %v3929 = vpop.f32.mrb[0].mxu0
        %v3930 = vadd.f32 %v3721, %v3929
        %v3931 = vpop.f32.mrb[0].mxu0
        %3932 = vmatprep.mubr.bf16.mxu0 0
        %3933 = vmatmul.mubr.bf16.gmra.mrb[0].mxu0 %v3526
        %v3934 = vpop.f32.mrb[0].mxu0
        %v3935 = vadd.f32 %v3726, %v3934
        %v3936 = vpop.f32.mrb[0].mxu0
        %v3937 = vpop.f32.mrb[0].mxu0
        %v3938 = vadd.f32 %v3729, %v3937
        %v3939 = vpop.f32.mrb[0].mxu0
        %3940 = vmatprep.mubr.bf16.mxu0 0
        %3941 = vmatmul.mubr.bf16.gmra.mrb[0].mxu0 %v3527
        %v3942 = vpop.f32.mrb[0].mxu0
        %v3943 = vadd.f32 %v3734, %v3942
        %v3944 = vpop.f32.mrb[0].mxu0
        %v3945 = vpop.f32.mrb[0].mxu0
        %v3946 = vadd.f32 %v3737, %v3945
        %v3947 = vpop.f32.mrb[0].mxu0
        %3948 = vmatprep.mubr.bf16.mxu0 0
        %3949 = vmatmul.mubr.bf16.gmra.mrb[0].mxu0 %v3528
        %v3950 = vpop.f32.mrb[0].mxu0
        %v3951 = vadd.f32 %v3742, %v3950
        %v3952 = vpop.f32.mrb[0].mxu0
        %v3953 = vpop.f32.mrb[0].mxu0
        %v3954 = vadd.f32 %v3745, %v3953
        %v3955 = vpop.f32.mrb[0].mxu0
        %3956 = vmatprep.mubr.bf16.mxu0 0
        %3957 = vmatmul.mubr.bf16.gmra.mrb[0].mxu0 %v3529
        %v3958 = vpop.f32.mrb[0].mxu0
        %v3959 = vadd.f32 %v3750, %v3958
        %v3960 = vpop.f32.mrb[0].mxu0
        %v3961 = vpop.f32.mrb[0].mxu0
        %v3962 = vadd.f32 %v3753, %v3961
        %v3963 = vpop.f32.mrb[0].mxu0
        %3964 = vmatprep.mubr.bf16.mxu0 0
        %3965 = vmatmul.mubr.bf16.gmra.mrb[0].mxu0 %v3530
        %v3966 = vpop.f32.mrb[0].mxu0
        %v3967 = vadd.f32 %v3758, %v3966
        %v3968 = vpop.f32.mrb[0].mxu0
        %v3969 = vpop.f32.mrb[0].mxu0
        %v3970 = vadd.f32 %v3761, %v3969
        %v3971 = vpop.f32.mrb[0].mxu0
        %3972 = vmatprep.mubr.bf16.mxu0 0
        %3973 = vmatmul.mubr.bf16.gmra.mrb[0].mxu0 %v3531
        %v3974 = vpop.f32.mrb[0].mxu0
        %v3975 = vadd.f32 %v3766, %v3974
        %v3976 = vpop.f32.mrb[0].mxu0
        %v3977 = vpop.f32.mrb[0].mxu0
        %v3978 = vadd.f32 %v3769, %v3977
        %v3979 = vpop.f32.mrb[0].mxu0
        %3980 = vmatprep.mubr.bf16.mxu0 0
        %3981 = vmatmul.mubr.bf16.gmra.mrb[0].mxu0 %v3532
        %v3982 = vpop.f32.mrb[0].mxu0
        %v3983 = vadd.f32 %v3774, %v3982
        %v3984 = vpop.f32.mrb[0].mxu0
        %v3985 = vpop.f32.mrb[0].mxu0
        %v3986 = vadd.f32 %v3777, %v3985
        %v3987 = vpop.f32.mrb[0].mxu0
        %3988 = vmatprep.mubr.bf16.mxu0 0
        %3989 = vmatmul.mubr.bf16.gmra.mrb[0].mxu0 %v3533
        %v3990 = vpop.f32.mrb[0].mxu0
        %v3991 = vadd.f32 %v3782, %v3990
        %v3992 = vpop.f32.mrb[0].mxu0
        %v3993 = vpop.f32.mrb[0].mxu0
        %v3994 = vadd.f32 %v3785, %v3993
        %v3995 = vpop.f32.mrb[0].mxu0
        %3996 = vmatprep.mubr.bf16.mxu0 0
        %3997 = vmatmul.mubr.bf16.gmra.mrb[0].mxu0 %v3534
        %v3998 = vpop.f32.mrb[0].mxu0
        %v3999 = vadd.f32 %v3790, %v3998
        %v4000 = vpop.f32.mrb[0].mxu0
        %v4001 = vpop.f32.mrb[0].mxu0
        %v4002 = vadd.f32 %v3793, %v4001
        %v4003 = vpop.f32.mrb[0].mxu0
        %4004 = vmatprep.mubr.bf16.mxu0 0
        %4005 = vmatmul.mubr.bf16.gmra.mrb[0].mxu0 %v3535
        %v4006 = vpop.f32.mrb[0].mxu0
        %v4007 = vadd.f32 %v3798, %v4006
        %v4008 = vpop.f32.mrb[0].mxu0
        %v4009 = vpop.f32.mrb[0].mxu0
        %v4010 = vadd.f32 %v3801, %v4009
        %v4011 = vpop.f32.mrb[0].mxu0
        %4012 = vmatprep.mubr.bf16.mxu0 0
        %4013 = vmatmul.mubr.bf16.gmra.mrb[0].mxu0 %v3536
        %v4014 = vpop.f32.mrb[0].mxu0
        %v4015 = vadd.f32 %v3806, %v4014
        %v4016 = vpop.f32.mrb[0].mxu0
        %v4017 = vpop.f32.mrb[0].mxu0
        %v4018 = vadd.f32 %v3809, %v4017
        %v4019 = vpop.f32.mrb[0].mxu0
        %4020 = vmatprep.mubr.bf16.mxu0 0
        %4021 = vmatmul.mubr.bf16.gmra.mrb[0].mxu0 %v3537
        %v4022 = vpop.f32.mrb[0].mxu0
        %v4023 = vadd.f32 %v3814, %v4022
        %v4024 = vpop.f32.mrb[0].mxu0
        %v4025 = vpop.f32.mrb[0].mxu0
        %v4026 = vadd.f32 %v3817, %v4025
        %v4027 = vpop.f32.mrb[0].mxu0
        %4028 = vmatprep.mubr.bf16.mxu0 0
        %4029 = vmatmul.mubr.bf16.gmra.mrb[0].mxu0 %v3538
        %v4030 = vpop.f32.mrb[0].mxu0
        %v4031 = vadd.f32 %v3822, %v4030
        %v4032 = vpop.f32.mrb[0].mxu0
        %v4033 = vpop.f32.mrb[0].mxu0
        %v4034 = vadd.f32 %v3825, %v4033
        %v4035 = vpop.f32.mrb[0].mxu0
        %4036 = vdwg.mxu0
        %v4037 = vld [vmem:[#allocation3 + $0x2] sm:$0xff]
        %v4038 = vld [vmem:[#allocation3 + $0xa] sm:$0xff]
        %v4039 = vld [vmem:[#allocation3 + $0x1a] sm:$0xff]
        %v4040 = vld [vmem:[#allocation3 + $0x22] sm:$0xff]
        %v4041 = vld [vmem:[#allocation3 + $0x32] sm:$0xff]
        %v4042 = vld [vmem:[#allocation3 + $0x3a] sm:$0xff]
        %v4043 = vld [vmem:[#allocation3 + $0x4a] sm:$0xff]
        %v4044 = vld [vmem:[#allocation3 + $0x52] sm:$0xff]
        %v4045 = vld [vmem:[#allocation3 + $0x62] sm:$0xff]
        %v4046 = vld [vmem:[#allocation3 + $0x6a] sm:$0xff]
        %v4047 = vld [vmem:[#allocation3 + $0x7a] sm:$0xff]
        %v4048 = vld [vmem:[#allocation3 + $0x82] sm:$0xff]
        %v4049 = vld [vmem:[#allocation3 + $0x92] sm:$0xff]
        %v4050 = vld [vmem:[#allocation3 + $0x9a] sm:$0xff]
        %v4051 = vld [vmem:[#allocation3 + $0xaa] sm:$0xff]
        %v4052 = vld [vmem:[#allocation3 + $0xb2] sm:$0xff]
        %v4053 = vld [vmem:[#allocation3 + $0xc2] sm:$0xff]
        %v4054 = vld [vmem:[#allocation3 + $0xca] sm:$0xff]
        %v4055 = vld [vmem:[#allocation3 + $0xda] sm:$0xff]
        %v4056 = vld [vmem:[#allocation3 + $0xe2] sm:$0xff]
        %v4057 = vld [vmem:[#allocation3 + $0xf2] sm:$0xff]
        %v4058 = vld [vmem:[#allocation3 + $0xfa] sm:$0xff]
        %v4059 = vld [vmem:[#allocation3 + $0x10a] sm:$0xff]
        %v4060 = vld [vmem:[#allocation3 + $0x112] sm:$0xff]
        %v4061 = vld [vmem:[#allocation3 + $0x122] sm:$0xff]
        %v4062 = vld [vmem:[#allocation3 + $0x12a] sm:$0xff]
        %v4063 = vld [vmem:[#allocation3 + $0x13a] sm:$0xff]
        %v4064 = vld [vmem:[#allocation3 + $0x142] sm:$0xff]
        %v4065 = vld [vmem:[#allocation3 + $0x152] sm:$0xff]
        %v4066 = vld [vmem:[#allocation3 + $0x15a] sm:$0xff]
        %v4067 = vld [vmem:[#allocation3 + $0x16a] sm:$0xff]
        %v4068 = vld [vmem:[#allocation3 + $0x172] sm:$0xff]
        %v4069 = vpack.c.bf16 %v4038, %v4037
        %v4070 = vpack.c.bf16 %v4040, %v4039
        %v4071 = vpack.c.bf16 %v4042, %v4041
        %v4072 = vpack.c.bf16 %v4044, %v4043
        %v4073 = vpack.c.bf16 %v4046, %v4045
        %v4074 = vpack.c.bf16 %v4048, %v4047
        %v4075 = vpack.c.bf16 %v4050, %v4049
        %v4076 = vpack.c.bf16 %v4052, %v4051
        %v4077 = vpack.c.bf16 %v4054, %v4053
        %v4078 = vpack.c.bf16 %v4056, %v4055
        %v4079 = vpack.c.bf16 %v4058, %v4057
        %v4080 = vpack.c.bf16 %v4060, %v4059
        %v4081 = vpack.c.bf16 %v4062, %v4061
        %v4082 = vpack.c.bf16 %v4064, %v4063
        %v4083 = vpack.c.bf16 %v4066, %v4065
        %v4084 = vpack.c.bf16 %v4068, %v4067
        %v4085 = vld [vmem:[#allocation8 + $0x80] sm:$0xf]
        %v4086 = vld [vmem:[#allocation8 + $0x84] sm:$0xf]
        %v4087 = vld [vmem:[#allocation8 + $0x88] sm:$0xf]
        %v4088 = vld [vmem:[#allocation8 + $0x8c] sm:$0xf]
        %v4089 = vld [vmem:[#allocation8 + $0x90] sm:$0xf]
        %v4090 = vld [vmem:[#allocation8 + $0x94] sm:$0xf]
        %v4091 = vld [vmem:[#allocation8 + $0x98] sm:$0xf]
        %v4092 = vld [vmem:[#allocation8 + $0x9c] sm:$0xf]
        %v4093 = vld [vmem:[#allocation8 + $0xa0] sm:$0xf]
        %v4094 = vld [vmem:[#allocation8 + $0xa4] sm:$0xf]
        %v4095 = vld [vmem:[#allocation8 + $0xa8] sm:$0xf]
        %v4096 = vld [vmem:[#allocation8 + $0xac] sm:$0xf]
        %v4097 = vld [vmem:[#allocation8 + $0xb0] sm:$0xf]
        %v4098 = vld [vmem:[#allocation8 + $0xb4] sm:$0xf]
        %v4099 = vld [vmem:[#allocation8 + $0xb8] sm:$0xf]
        %v4100 = vld [vmem:[#allocation8 + $0xbc] sm:$0xf]
        %v4117 = vunpack.c.l.b16 %v4085
        %v4118 = vunpack.c.l.b16 %v4086
        %v4119 = vunpack.c.l.b16 %v4087
        %v4120 = vunpack.c.l.b16 %v4088
        %v4121 = vunpack.c.l.b16 %v4089
        %v4122 = vunpack.c.l.b16 %v4090
        %v4123 = vunpack.c.l.b16 %v4091
        %v4124 = vunpack.c.l.b16 %v4092
        %v4125 = vunpack.c.l.b16 %v4093
        %v4126 = vunpack.c.l.b16 %v4094
        %v4127 = vunpack.c.l.b16 %v4095
        %v4128 = vunpack.c.l.b16 %v4096
        %v4129 = vunpack.c.l.b16 %v4097
        %v4130 = vunpack.c.l.b16 %v4098
        %v4131 = vunpack.c.l.b16 %v4099
        %v4132 = vunpack.c.l.b16 %v4100
        %v4133 = vpack.c.b16 %v4118, %v4117
        %v4134 = vpack.c.b16 %v4120, %v4119
        %v4135 = vpack.c.b16 %v4122, %v4121
        %v4136 = vpack.c.b16 %v4124, %v4123
        %v4137 = vpack.c.b16 %v4126, %v4125
        %v4138 = vpack.c.b16 %v4128, %v4127
        %v4139 = vpack.c.b16 %v4130, %v4129
        %v4140 = vpack.c.b16 %v4132, %v4131
        %4149 = vmatprep.subr.bf16.mxu0 0
        %4150 = vmatpush1.bf16.msra.mxu0 %v4133
        %4151 = vmatprep.subr.bf16.mxu0 0
        %4152 = vmatpush1.bf16.msra.mxu0 %v4134
        %4153 = vmatprep.subr.bf16.mxu0 0
        %4154 = vmatpush1.bf16.msra.mxu0 %v4135
        %4155 = vmatprep.subr.bf16.mxu0 0
        %4156 = vmatpush1.bf16.msra.mxu0 %v4136
        %4157 = vmatprep.subr.bf16.mxu0 0
        %4158 = vmatpush1.bf16.msra.mxu0 %v4137
        %4159 = vmatprep.subr.bf16.mxu0 0
        %4160 = vmatpush1.bf16.msra.mxu0 %v4138
        %4161 = vmatprep.subr.bf16.mxu0 0
        %4162 = vmatpush1.bf16.msra.mxu0 %v4139
        %4163 = vmatprep.subr.bf16.mxu0 0
        %4164 = vmatpush1.bf16.msra.mxu0 %v4140
        %4165 = vmatprep.subr.bf16.mxu0 0
        %4166 = vmatpush1.bf16.msra.mxu0 0
        %4167 = vmatprep.subr.bf16.mxu0 0
        %4168 = vmatpush1.bf16.msra.mxu0 0
        %4169 = vmatprep.subr.bf16.mxu0 0
        %4170 = vmatpush1.bf16.msra.mxu0 0
        %4171 = vmatprep.subr.bf16.mxu0 0
        %4172 = vmatpush1.bf16.msra.mxu0 0
        %4173 = vmatprep.subr.bf16.mxu0 0
        %4174 = vmatpush1.bf16.msra.mxu0 0
        %4175 = vmatprep.subr.bf16.mxu0 0
        %4176 = vmatpush1.bf16.msra.mxu0 0
        %4177 = vmatprep.subr.bf16.mxu0 0
        %4178 = vmatpush1.bf16.msra.mxu0 0
        %4179 = vmatprep.subr.bf16.mxu0 0
        %4180 = vmatpush1.bf16.msra.mxu0 0
        %4181 = vmatprep.mubr.bf16.mxu0 0
        %4182 = vmatmul.mubr.bf16.gmra.mrb[0].mxu0 %v4069
        %v4183 = vpop.f32.mrb[0].mxu0
        %v4184 = vadd.f32 0.0, %v4183
        %v4185 = vpop.f32.mrb[0].mxu0
        %v4186 = vpop.f32.mrb[0].mxu0
        %v4187 = vadd.f32 0.0, %v4186
        %v4188 = vpop.f32.mrb[0].mxu0
        %4189 = vmatprep.mubr.bf16.mxu0 0
        %4190 = vmatmul.mubr.bf16.gmra.mrb[0].mxu0 %v4070
        %v4191 = vpop.f32.mrb[0].mxu0
        %v4192 = vadd.f32 0.0, %v4191
        %v4193 = vpop.f32.mrb[0].mxu0
        %v4194 = vpop.f32.mrb[0].mxu0
        %v4195 = vadd.f32 0.0, %v4194
        %v4196 = vpop.f32.mrb[0].mxu0
        %4197 = vmatprep.mubr.bf16.mxu0 0
        %4198 = vmatmul.mubr.bf16.gmra.mrb[0].mxu0 %v4071
        %v4199 = vpop.f32.mrb[0].mxu0
        %v4200 = vadd.f32 0.0, %v4199
        %v4201 = vpop.f32.mrb[0].mxu0
        %v4202 = vpop.f32.mrb[0].mxu0
        %v4203 = vadd.f32 0.0, %v4202
        %v4204 = vpop.f32.mrb[0].mxu0
        %4205 = vmatprep.mubr.bf16.mxu0 0
        %4206 = vmatmul.mubr.bf16.gmra.mrb[0].mxu0 %v4072
        %v4207 = vpop.f32.mrb[0].mxu0
        %v4208 = vadd.f32 0.0, %v4207
        %v4209 = vpop.f32.mrb[0].mxu0
        %v4210 = vpop.f32.mrb[0].mxu0
        %v4211 = vadd.f32 0.0, %v4210
        %v4212 = vpop.f32.mrb[0].mxu0
        %4213 = vmatprep.mubr.bf16.mxu0 0
        %4214 = vmatmul.mubr.bf16.gmra.mrb[0].mxu0 %v4073
        %v4215 = vpop.f32.mrb[0].mxu0
        %v4216 = vadd.f32 0.0, %v4215
        %v4217 = vpop.f32.mrb[0].mxu0
        %v4218 = vpop.f32.mrb[0].mxu0
        %v4219 = vadd.f32 0.0, %v4218
        %v4220 = vpop.f32.mrb[0].mxu0
        %4221 = vmatprep.mubr.bf16.mxu0 0
        %4222 = vmatmul.mubr.bf16.gmra.mrb[0].mxu0 %v4074
        %v4223 = vpop.f32.mrb[0].mxu0
        %v4224 = vadd.f32 0.0, %v4223
        %v4225 = vpop.f32.mrb[0].mxu0
        %v4226 = vpop.f32.mrb[0].mxu0
        %v4227 = vadd.f32 0.0, %v4226
        %v4228 = vpop.f32.mrb[0].mxu0
        %4229 = vmatprep.mubr.bf16.mxu0 0
        %4230 = vmatmul.mubr.bf16.gmra.mrb[0].mxu0 %v4075
        %v4231 = vpop.f32.mrb[0].mxu0
        %v4232 = vadd.f32 0.0, %v4231
        %v4233 = vpop.f32.mrb[0].mxu0
        %v4234 = vpop.f32.mrb[0].mxu0
        %v4235 = vadd.f32 0.0, %v4234
        %v4236 = vpop.f32.mrb[0].mxu0
        %4237 = vmatprep.mubr.bf16.mxu0 0
        %4238 = vmatmul.mubr.bf16.gmra.mrb[0].mxu0 %v4076
        %v4239 = vpop.f32.mrb[0].mxu0
        %v4240 = vadd.f32 0.0, %v4239
        %v4241 = vpop.f32.mrb[0].mxu0
        %v4242 = vpop.f32.mrb[0].mxu0
        %v4243 = vadd.f32 0.0, %v4242
        %v4244 = vpop.f32.mrb[0].mxu0
        %4245 = vmatprep.mubr.bf16.mxu0 0
        %4246 = vmatmul.mubr.bf16.gmra.mrb[0].mxu0 %v4077
        %v4247 = vpop.f32.mrb[0].mxu0
        %v4248 = vadd.f32 0.0, %v4247
        %v4249 = vpop.f32.mrb[0].mxu0
        %v4250 = vpop.f32.mrb[0].mxu0
        %v4251 = vadd.f32 0.0, %v4250
        %v4252 = vpop.f32.mrb[0].mxu0
        %4253 = vmatprep.mubr.bf16.mxu0 0
        %4254 = vmatmul.mubr.bf16.gmra.mrb[0].mxu0 %v4078
        %v4255 = vpop.f32.mrb[0].mxu0
        %v4256 = vadd.f32 0.0, %v4255
        %v4257 = vpop.f32.mrb[0].mxu0
        %v4258 = vpop.f32.mrb[0].mxu0
        %v4259 = vadd.f32 0.0, %v4258
        %v4260 = vpop.f32.mrb[0].mxu0
        %4261 = vmatprep.mubr.bf16.mxu0 0
        %4262 = vmatmul.mubr.bf16.gmra.mrb[0].mxu0 %v4079
        %v4263 = vpop.f32.mrb[0].mxu0
        %v4264 = vadd.f32 0.0, %v4263
        %v4265 = vpop.f32.mrb[0].mxu0
        %v4266 = vpop.f32.mrb[0].mxu0
        %v4267 = vadd.f32 0.0, %v4266
        %v4268 = vpop.f32.mrb[0].mxu0
        %4269 = vmatprep.mubr.bf16.mxu0 0
        %4270 = vmatmul.mubr.bf16.gmra.mrb[0].mxu0 %v4080
        %v4271 = vpop.f32.mrb[0].mxu0
        %v4272 = vadd.f32 0.0, %v4271
        %v4273 = vpop.f32.mrb[0].mxu0
        %v4274 = vpop.f32.mrb[0].mxu0
        %v4275 = vadd.f32 0.0, %v4274
        %v4276 = vpop.f32.mrb[0].mxu0
        %4277 = vmatprep.mubr.bf16.mxu0 0
        %4278 = vmatmul.mubr.bf16.gmra.mrb[0].mxu0 %v4081
        %v4279 = vpop.f32.mrb[0].mxu0
        %v4280 = vadd.f32 0.0, %v4279
        %v4281 = vpop.f32.mrb[0].mxu0
        %v4282 = vpop.f32.mrb[0].mxu0
        %v4283 = vadd.f32 0.0, %v4282
        %v4284 = vpop.f32.mrb[0].mxu0
        %4285 = vmatprep.mubr.bf16.mxu0 0
        %4286 = vmatmul.mubr.bf16.gmra.mrb[0].mxu0 %v4082
        %v4287 = vpop.f32.mrb[0].mxu0
        %v4288 = vadd.f32 0.0, %v4287
        %v4289 = vpop.f32.mrb[0].mxu0
        %v4290 = vpop.f32.mrb[0].mxu0
        %v4291 = vadd.f32 0.0, %v4290
        %v4292 = vpop.f32.mrb[0].mxu0
        %4293 = vmatprep.mubr.bf16.mxu0 0
        %4294 = vmatmul.mubr.bf16.gmra.mrb[0].mxu0 %v4083
        %v4295 = vpop.f32.mrb[0].mxu0
        %v4296 = vadd.f32 0.0, %v4295
        %v4297 = vpop.f32.mrb[0].mxu0
        %v4298 = vpop.f32.mrb[0].mxu0
        %v4299 = vadd.f32 0.0, %v4298
        %v4300 = vpop.f32.mrb[0].mxu0
        %4301 = vmatprep.mubr.bf16.mxu0 0
        %4302 = vmatmul.mubr.bf16.gmra.mrb[0].mxu0 %v4084
        %v4303 = vpop.f32.mrb[0].mxu0
        %v4304 = vadd.f32 0.0, %v4303
        %v4305 = vpop.f32.mrb[0].mxu0
        %v4306 = vpop.f32.mrb[0].mxu0
        %v4307 = vadd.f32 0.0, %v4306
        %v4308 = vpop.f32.mrb[0].mxu0
        %4309 = vdwg.mxu0
        %v4310 = vadd.f32 %v3911, %v4184
        %v4311 = vadd.f32 %v3914, %v4187
        %v4312 = vadd.f32 %v3919, %v4192
        %v4313 = vadd.f32 %v3922, %v4195
        %v4314 = vadd.f32 %v3927, %v4200
        %v4315 = vadd.f32 %v3930, %v4203
        %v4316 = vadd.f32 %v3935, %v4208
        %v4317 = vadd.f32 %v3938, %v4211
        %v4318 = vadd.f32 %v3943, %v4216
        %v4319 = vadd.f32 %v3946, %v4219
        %v4320 = vadd.f32 %v3951, %v4224
        %v4321 = vadd.f32 %v3954, %v4227
        %v4322 = vadd.f32 %v3959, %v4232
        %v4323 = vadd.f32 %v3962, %v4235
        %v4324 = vadd.f32 %v3967, %v4240
        %v4325 = vadd.f32 %v3970, %v4243
        %v4326 = vadd.f32 %v3975, %v4248
        %v4327 = vadd.f32 %v3978, %v4251
        %v4328 = vadd.f32 %v3983, %v4256
        %v4329 = vadd.f32 %v3986, %v4259
        %v4330 = vadd.f32 %v3991, %v4264
        %v4331 = vadd.f32 %v3994, %v4267
        %v4332 = vadd.f32 %v3999, %v4272
        %v4333 = vadd.f32 %v4002, %v4275
        %v4334 = vadd.f32 %v4007, %v4280
        %v4335 = vadd.f32 %v4010, %v4283
        %v4336 = vadd.f32 %v4015, %v4288
        %v4337 = vadd.f32 %v4018, %v4291
        %v4338 = vadd.f32 %v4023, %v4296
        %v4339 = vadd.f32 %v4026, %v4299
        %v4340 = vadd.f32 %v4031, %v4304
        %v4341 = vadd.f32 %v4034, %v4307
        %v4342 = vld [vmem:[%s3458] sm:$0xff]
        %v4343 = vld [vmem:[%s3458 + $0x8] sm:$0xff]
        %v4344 = vld [vmem:[%s3458 + $0x18] sm:$0xff]
        %v4345 = vld [vmem:[%s3458 + $0x20] sm:$0xff]
        %v4346 = vld [vmem:[%s3458 + $0x30] sm:$0xff]
        %v4347 = vld [vmem:[%s3458 + $0x38] sm:$0xff]
        %v4348 = vld [vmem:[%s3458 + $0x48] sm:$0xff]
        %v4349 = vld [vmem:[%s3458 + $0x50] sm:$0xff]
        %v4350 = vld [vmem:[%s3458 + $0x60] sm:$0xff]
        %v4351 = vld [vmem:[%s3458 + $0x68] sm:$0xff]
        %v4352 = vld [vmem:[%s3458 + $0x78] sm:$0xff]
        %v4353 = vld [vmem:[%s3458 + $0x80] sm:$0xff]
        %v4354 = vld [vmem:[%s3458 + $0x90] sm:$0xff]
        %v4355 = vld [vmem:[%s3458 + $0x98] sm:$0xff]
        %v4356 = vld [vmem:[%s3458 + $0xa8] sm:$0xff]
        %v4357 = vld [vmem:[%s3458 + $0xb0] sm:$0xff]
        %v4358 = vld [vmem:[%s3458 + $0xc0] sm:$0xff]
        %v4359 = vld [vmem:[%s3458 + $0xc8] sm:$0xff]
        %v4360 = vld [vmem:[%s3458 + $0xd8] sm:$0xff]
        %v4361 = vld [vmem:[%s3458 + $0xe0] sm:$0xff]
        %v4362 = vld [vmem:[%s3458 + $0xf0] sm:$0xff]
        %v4363 = vld [vmem:[%s3458 + $0xf8] sm:$0xff]
        %v4364 = vld [vmem:[%s3458 + $0x108] sm:$0xff]
        %v4365 = vld [vmem:[%s3458 + $0x110] sm:$0xff]
        %v4366 = vld [vmem:[%s3458 + $0x120] sm:$0xff]
        %v4367 = vld [vmem:[%s3458 + $0x128] sm:$0xff]
        %v4368 = vld [vmem:[%s3458 + $0x138] sm:$0xff]
        %v4369 = vld [vmem:[%s3458 + $0x140] sm:$0xff]
        %v4370 = vld [vmem:[%s3458 + $0x150] sm:$0xff]
        %v4371 = vld [vmem:[%s3458 + $0x158] sm:$0xff]
        %v4372 = vld [vmem:[%s3458 + $0x168] sm:$0xff]
        %v4373 = vld [vmem:[%s3458 + $0x170] sm:$0xff]
        %v4374 = vpack.c.bf16 %v4343, %v4342
        %v4375 = vpack.c.bf16 %v4345, %v4344
        %v4376 = vpack.c.bf16 %v4347, %v4346
        %v4377 = vpack.c.bf16 %v4349, %v4348
        %v4378 = vpack.c.bf16 %v4351, %v4350
        %v4379 = vpack.c.bf16 %v4353, %v4352
        %v4380 = vpack.c.bf16 %v4355, %v4354
        %v4381 = vpack.c.bf16 %v4357, %v4356
        %v4382 = vpack.c.bf16 %v4359, %v4358
        %v4383 = vpack.c.bf16 %v4361, %v4360
        %v4384 = vpack.c.bf16 %v4363, %v4362
        %v4385 = vpack.c.bf16 %v4365, %v4364
        %v4386 = vpack.c.bf16 %v4367, %v4366
        %v4387 = vpack.c.bf16 %v4369, %v4368
        %v4388 = vpack.c.bf16 %v4371, %v4370
        %v4389 = vpack.c.bf16 %v4373, %v4372
        %v4390 = vld [vmem:[#allocation8 + $0xc0] sm:$0xf]
        %v4391 = vld [vmem:[#allocation8 + $0xc4] sm:$0xf]
        %v4392 = vld [vmem:[#allocation8 + $0xc8] sm:$0xf]
        %v4393 = vld [vmem:[#allocation8 + $0xcc] sm:$0xf]
        %v4394 = vld [vmem:[#allocation8 + $0xd0] sm:$0xf]
        %v4395 = vld [vmem:[#allocation8 + $0xd4] sm:$0xf]
        %v4396 = vld [vmem:[#allocation8 + $0xd8] sm:$0xf]
        %v4397 = vld [vmem:[#allocation8 + $0xdc] sm:$0xf]
        %v4398 = vld [vmem:[#allocation8 + $0xe0] sm:$0xf]
        %v4399 = vld [vmem:[#allocation8 + $0xe4] sm:$0xf]
        %v4400 = vld [vmem:[#allocation8 + $0xe8] sm:$0xf]
        %v4401 = vld [vmem:[#allocation8 + $0xec] sm:$0xf]
        %v4402 = vld [vmem:[#allocation8 + $0xf0] sm:$0xf]
        %v4403 = vld [vmem:[#allocation8 + $0xf4] sm:$0xf]
        %v4404 = vld [vmem:[#allocation8 + $0xf8] sm:$0xf]
        %v4405 = vld [vmem:[#allocation8 + $0xfc] sm:$0xf]
        %v4422 = vunpack.c.l.b16 %v4390
        %v4423 = vunpack.c.l.b16 %v4391
        %v4424 = vunpack.c.l.b16 %v4392
        %v4425 = vunpack.c.l.b16 %v4393
        %v4426 = vunpack.c.l.b16 %v4394
        %v4427 = vunpack.c.l.b16 %v4395
        %v4428 = vunpack.c.l.b16 %v4396
        %v4429 = vunpack.c.l.b16 %v4397
        %v4430 = vunpack.c.l.b16 %v4398
        %v4431 = vunpack.c.l.b16 %v4399
        %v4432 = vunpack.c.l.b16 %v4400
        %v4433 = vunpack.c.l.b16 %v4401
        %v4434 = vunpack.c.l.b16 %v4402
        %v4435 = vunpack.c.l.b16 %v4403
        %v4436 = vunpack.c.l.b16 %v4404
        %v4437 = vunpack.c.l.b16 %v4405
        %v4438 = vpack.c.b16 %v4423, %v4422
        %v4439 = vpack.c.b16 %v4425, %v4424
        %v4440 = vpack.c.b16 %v4427, %v4426
        %v4441 = vpack.c.b16 %v4429, %v4428
        %v4442 = vpack.c.b16 %v4431, %v4430
        %v4443 = vpack.c.b16 %v4433, %v4432
        %v4444 = vpack.c.b16 %v4435, %v4434
        %v4445 = vpack.c.b16 %v4437, %v4436
        %4454 = vmatprep.subr.bf16.mxu0 0
        %4455 = vmatpush1.bf16.msra.mxu0 %v4438
        %4456 = vmatprep.subr.bf16.mxu0 0
        %4457 = vmatpush1.bf16.msra.mxu0 %v4439
        %4458 = vmatprep.subr.bf16.mxu0 0
        %4459 = vmatpush1.bf16.msra.mxu0 %v4440
        %4460 = vmatprep.subr.bf16.mxu0 0
        %4461 = vmatpush1.bf16.msra.mxu0 %v4441
        %4462 = vmatprep.subr.bf16.mxu0 0
        %4463 = vmatpush1.bf16.msra.mxu0 %v4442
        %4464 = vmatprep.subr.bf16.mxu0 0
        %4465 = vmatpush1.bf16.msra.mxu0 %v4443
        %4466 = vmatprep.subr.bf16.mxu0 0
        %4467 = vmatpush1.bf16.msra.mxu0 %v4444
        %4468 = vmatprep.subr.bf16.mxu0 0
        %4469 = vmatpush1.bf16.msra.mxu0 %v4445
        %4470 = vmatprep.subr.bf16.mxu0 0
        %4471 = vmatpush1.bf16.msra.mxu0 0
        %4472 = vmatprep.subr.bf16.mxu0 0
        %4473 = vmatpush1.bf16.msra.mxu0 0
        %4474 = vmatprep.subr.bf16.mxu0 0
        %4475 = vmatpush1.bf16.msra.mxu0 0
        %4476 = vmatprep.subr.bf16.mxu0 0
        %4477 = vmatpush1.bf16.msra.mxu0 0
        %4478 = vmatprep.subr.bf16.mxu0 0
        %4479 = vmatpush1.bf16.msra.mxu0 0
        %4480 = vmatprep.subr.bf16.mxu0 0
        %4481 = vmatpush1.bf16.msra.mxu0 0
        %4482 = vmatprep.subr.bf16.mxu0 0
        %4483 = vmatpush1.bf16.msra.mxu0 0
        %4484 = vmatprep.subr.bf16.mxu0 0
        %4485 = vmatpush1.bf16.msra.mxu0 0
        %4486 = vmatprep.mubr.bf16.mxu0 0
        %4487 = vmatmul.mubr.bf16.gmra.mrb[0].mxu0 %v4374
        %v4488 = vpop.f32.mrb[0].mxu0
        %v4489 = vadd.f32 0.0, %v4488
        %v4490 = vpop.f32.mrb[0].mxu0
        %v4491 = vpop.f32.mrb[0].mxu0
        %v4492 = vadd.f32 0.0, %v4491
        %v4493 = vpop.f32.mrb[0].mxu0
        %4494 = vmatprep.mubr.bf16.mxu0 0
        %4495 = vmatmul.mubr.bf16.gmra.mrb[0].mxu0 %v4375
        %v4496 = vpop.f32.mrb[0].mxu0
        %v4497 = vadd.f32 0.0, %v4496
        %v4498 = vpop.f32.mrb[0].mxu0
        %v4499 = vpop.f32.mrb[0].mxu0
        %v4500 = vadd.f32 0.0, %v4499
        %v4501 = vpop.f32.mrb[0].mxu0
        %4502 = vmatprep.mubr.bf16.mxu0 0
        %4503 = vmatmul.mubr.bf16.gmra.mrb[0].mxu0 %v4376
        %v4504 = vpop.f32.mrb[0].mxu0
        %v4505 = vadd.f32 0.0, %v4504
        %v4506 = vpop.f32.mrb[0].mxu0
        %v4507 = vpop.f32.mrb[0].mxu0
        %v4508 = vadd.f32 0.0, %v4507
        %v4509 = vpop.f32.mrb[0].mxu0
        %4510 = vmatprep.mubr.bf16.mxu0 0
        %4511 = vmatmul.mubr.bf16.gmra.mrb[0].mxu0 %v4377
        %v4512 = vpop.f32.mrb[0].mxu0
        %v4513 = vadd.f32 0.0, %v4512
        %v4514 = vpop.f32.mrb[0].mxu0
        %v4515 = vpop.f32.mrb[0].mxu0
        %v4516 = vadd.f32 0.0, %v4515
        %v4517 = vpop.f32.mrb[0].mxu0
        %4518 = vmatprep.mubr.bf16.mxu0 0
        %4519 = vmatmul.mubr.bf16.gmra.mrb[0].mxu0 %v4378
        %v4520 = vpop.f32.mrb[0].mxu0
        %v4521 = vadd.f32 0.0, %v4520
        %v4522 = vpop.f32.mrb[0].mxu0
        %v4523 = vpop.f32.mrb[0].mxu0
        %v4524 = vadd.f32 0.0, %v4523
        %v4525 = vpop.f32.mrb[0].mxu0
        %4526 = vmatprep.mubr.bf16.mxu0 0
        %4527 = vmatmul.mubr.bf16.gmra.mrb[0].mxu0 %v4379
        %v4528 = vpop.f32.mrb[0].mxu0
        %v4529 = vadd.f32 0.0, %v4528
        %v4530 = vpop.f32.mrb[0].mxu0
        %v4531 = vpop.f32.mrb[0].mxu0
        %v4532 = vadd.f32 0.0, %v4531
        %v4533 = vpop.f32.mrb[0].mxu0
        %4534 = vmatprep.mubr.bf16.mxu0 0
        %4535 = vmatmul.mubr.bf16.gmra.mrb[0].mxu0 %v4380
        %v4536 = vpop.f32.mrb[0].mxu0
        %v4537 = vadd.f32 0.0, %v4536
        %v4538 = vpop.f32.mrb[0].mxu0
        %v4539 = vpop.f32.mrb[0].mxu0
        %v4540 = vadd.f32 0.0, %v4539
        %v4541 = vpop.f32.mrb[0].mxu0
        %4542 = vmatprep.mubr.bf16.mxu0 0
        %4543 = vmatmul.mubr.bf16.gmra.mrb[0].mxu0 %v4381
        %v4544 = vpop.f32.mrb[0].mxu0
        %v4545 = vadd.f32 0.0, %v4544
        %v4546 = vpop.f32.mrb[0].mxu0
        %v4547 = vpop.f32.mrb[0].mxu0
        %v4548 = vadd.f32 0.0, %v4547
        %v4549 = vpop.f32.mrb[0].mxu0
        %4550 = vmatprep.mubr.bf16.mxu0 0
        %4551 = vmatmul.mubr.bf16.gmra.mrb[0].mxu0 %v4382
        %v4552 = vpop.f32.mrb[0].mxu0
        %v4553 = vadd.f32 0.0, %v4552
        %v4554 = vpop.f32.mrb[0].mxu0
        %v4555 = vpop.f32.mrb[0].mxu0
        %v4556 = vadd.f32 0.0, %v4555
        %v4557 = vpop.f32.mrb[0].mxu0
        %4558 = vmatprep.mubr.bf16.mxu0 0
        %4559 = vmatmul.mubr.bf16.gmra.mrb[0].mxu0 %v4383
        %v4560 = vpop.f32.mrb[0].mxu0
        %v4561 = vadd.f32 0.0, %v4560
        %v4562 = vpop.f32.mrb[0].mxu0
        %v4563 = vpop.f32.mrb[0].mxu0
        %v4564 = vadd.f32 0.0, %v4563
        %v4565 = vpop.f32.mrb[0].mxu0
        %4566 = vmatprep.mubr.bf16.mxu0 0
        %4567 = vmatmul.mubr.bf16.gmra.mrb[0].mxu0 %v4384
        %v4568 = vpop.f32.mrb[0].mxu0
        %v4569 = vadd.f32 0.0, %v4568
        %v4570 = vpop.f32.mrb[0].mxu0
        %v4571 = vpop.f32.mrb[0].mxu0
        %v4572 = vadd.f32 0.0, %v4571
        %v4573 = vpop.f32.mrb[0].mxu0
        %4574 = vmatprep.mubr.bf16.mxu0 0
        %4575 = vmatmul.mubr.bf16.gmra.mrb[0].mxu0 %v4385
        %v4576 = vpop.f32.mrb[0].mxu0
        %v4577 = vadd.f32 0.0, %v4576
        %v4578 = vpop.f32.mrb[0].mxu0
        %v4579 = vpop.f32.mrb[0].mxu0
        %v4580 = vadd.f32 0.0, %v4579
        %v4581 = vpop.f32.mrb[0].mxu0
        %4582 = vmatprep.mubr.bf16.mxu0 0
        %4583 = vmatmul.mubr.bf16.gmra.mrb[0].mxu0 %v4386
        %v4584 = vpop.f32.mrb[0].mxu0
        %v4585 = vadd.f32 0.0, %v4584
        %v4586 = vpop.f32.mrb[0].mxu0
        %v4587 = vpop.f32.mrb[0].mxu0
        %v4588 = vadd.f32 0.0, %v4587
        %v4589 = vpop.f32.mrb[0].mxu0
        %4590 = vmatprep.mubr.bf16.mxu0 0
        %4591 = vmatmul.mubr.bf16.gmra.mrb[0].mxu0 %v4387
        %v4592 = vpop.f32.mrb[0].mxu0
        %v4593 = vadd.f32 0.0, %v4592
        %v4594 = vpop.f32.mrb[0].mxu0
        %v4595 = vpop.f32.mrb[0].mxu0
        %v4596 = vadd.f32 0.0, %v4595
        %v4597 = vpop.f32.mrb[0].mxu0
        %4598 = vmatprep.mubr.bf16.mxu0 0
        %4599 = vmatmul.mubr.bf16.gmra.mrb[0].mxu0 %v4388
        %v4600 = vpop.f32.mrb[0].mxu0
        %v4601 = vadd.f32 0.0, %v4600
        %v4602 = vpop.f32.mrb[0].mxu0
        %v4603 = vpop.f32.mrb[0].mxu0
        %v4604 = vadd.f32 0.0, %v4603
        %v4605 = vpop.f32.mrb[0].mxu0
        %4606 = vmatprep.mubr.bf16.mxu0 0
        %4607 = vmatmul.mubr.bf16.gmra.mrb[0].mxu0 %v4389
        %v4608 = vpop.f32.mrb[0].mxu0
        %v4609 = vadd.f32 0.0, %v4608
        %v4610 = vpop.f32.mrb[0].mxu0
        %v4611 = vpop.f32.mrb[0].mxu0
        %v4612 = vadd.f32 0.0, %v4611
        %v4613 = vpop.f32.mrb[0].mxu0
        %4614 = vdwg.mxu0
        %v4615 = vadd.f32 %v4310, %v4489
        %v4616 = vadd.f32 %v4311, %v4492
        %v4617 = vadd.f32 %v4312, %v4497
        %v4618 = vadd.f32 %v4313, %v4500
        %v4619 = vadd.f32 %v4314, %v4505
        %v4620 = vadd.f32 %v4315, %v4508
        %v4621 = vadd.f32 %v4316, %v4513
        %v4622 = vadd.f32 %v4317, %v4516
        %v4623 = vadd.f32 %v4318, %v4521
        %v4624 = vadd.f32 %v4319, %v4524
        %v4625 = vadd.f32 %v4320, %v4529
        %v4626 = vadd.f32 %v4321, %v4532
        %v4627 = vadd.f32 %v4322, %v4537
        %v4628 = vadd.f32 %v4323, %v4540
        %v4629 = vadd.f32 %v4324, %v4545
        %v4630 = vadd.f32 %v4325, %v4548
        %v4631 = vadd.f32 %v4326, %v4553
        %v4632 = vadd.f32 %v4327, %v4556
        %v4633 = vadd.f32 %v4328, %v4561
        %v4634 = vadd.f32 %v4329, %v4564
        %v4635 = vadd.f32 %v4330, %v4569
        %v4636 = vadd.f32 %v4331, %v4572
        %v4637 = vadd.f32 %v4332, %v4577
        %v4638 = vadd.f32 %v4333, %v4580
        %v4639 = vadd.f32 %v4334, %v4585
        %v4640 = vadd.f32 %v4335, %v4588
        %v4641 = vadd.f32 %v4336, %v4593
        %v4642 = vadd.f32 %v4337, %v4596
        %v4643 = vadd.f32 %v4338, %v4601
        %v4644 = vadd.f32 %v4339, %v4604
        %v4645 = vadd.f32 %v4340, %v4609
        %v4646 = vadd.f32 %v4341, %v4612
        %v4647 = vld [vmem:[%s3458 + $0x1] sm:$0xff]
        %v4648 = vld [vmem:[%s3458 + $0x9] sm:$0xff]
        %v4649 = vld [vmem:[%s3458 + $0x19] sm:$0xff]
        %v4650 = vld [vmem:[%s3458 + $0x21] sm:$0xff]
        %v4651 = vld [vmem:[%s3458 + $0x31] sm:$0xff]
        %v4652 = vld [vmem:[%s3458 + $0x39] sm:$0xff]
        %v4653 = vld [vmem:[%s3458 + $0x49] sm:$0xff]
        %v4654 = vld [vmem:[%s3458 + $0x51] sm:$0xff]
        %v4655 = vld [vmem:[%s3458 + $0x61] sm:$0xff]
        %v4656 = vld [vmem:[%s3458 + $0x69] sm:$0xff]
        %v4657 = vld [vmem:[%s3458 + $0x79] sm:$0xff]
        %v4658 = vld [vmem:[%s3458 + $0x81] sm:$0xff]
        %v4659 = vld [vmem:[%s3458 + $0x91] sm:$0xff]
        %v4660 = vld [vmem:[%s3458 + $0x99] sm:$0xff]
        %v4661 = vld [vmem:[%s3458 + $0xa9] sm:$0xff]
        %v4662 = vld [vmem:[%s3458 + $0xb1] sm:$0xff]
        %v4663 = vld [vmem:[%s3458 + $0xc1] sm:$0xff]
        %v4664 = vld [vmem:[%s3458 + $0xc9] sm:$0xff]
        %v4665 = vld [vmem:[%s3458 + $0xd9] sm:$0xff]
        %v4666 = vld [vmem:[%s3458 + $0xe1] sm:$0xff]
        %v4667 = vld [vmem:[%s3458 + $0xf1] sm:$0xff]
        %v4668 = vld [vmem:[%s3458 + $0xf9] sm:$0xff]
        %v4669 = vld [vmem:[%s3458 + $0x109] sm:$0xff]
        %v4670 = vld [vmem:[%s3458 + $0x111] sm:$0xff]
        %v4671 = vld [vmem:[%s3458 + $0x121] sm:$0xff]
        %v4672 = vld [vmem:[%s3458 + $0x129] sm:$0xff]
        %v4673 = vld [vmem:[%s3458 + $0x139] sm:$0xff]
        %v4674 = vld [vmem:[%s3458 + $0x141] sm:$0xff]
        %v4675 = vld [vmem:[%s3458 + $0x151] sm:$0xff]
        %v4676 = vld [vmem:[%s3458 + $0x159] sm:$0xff]
        %v4677 = vld [vmem:[%s3458 + $0x169] sm:$0xff]
        %v4678 = vld [vmem:[%s3458 + $0x171] sm:$0xff]
        %v4679 = vpack.c.bf16 %v4648, %v4647
        %v4680 = vpack.c.bf16 %v4650, %v4649
        %v4681 = vpack.c.bf16 %v4652, %v4651
        %v4682 = vpack.c.bf16 %v4654, %v4653
        %v4683 = vpack.c.bf16 %v4656, %v4655
        %v4684 = vpack.c.bf16 %v4658, %v4657
        %v4685 = vpack.c.bf16 %v4660, %v4659
        %v4686 = vpack.c.bf16 %v4662, %v4661
        %v4687 = vpack.c.bf16 %v4664, %v4663
        %v4688 = vpack.c.bf16 %v4666, %v4665
        %v4689 = vpack.c.bf16 %v4668, %v4667
        %v4690 = vpack.c.bf16 %v4670, %v4669
        %v4691 = vpack.c.bf16 %v4672, %v4671
        %v4692 = vpack.c.bf16 %v4674, %v4673
        %v4693 = vpack.c.bf16 %v4676, %v4675
        %v4694 = vpack.c.bf16 %v4678, %v4677
        %v4695 = vld [vmem:[#allocation8 + $0x100] sm:$0xf]
        %v4696 = vld [vmem:[#allocation8 + $0x104] sm:$0xf]
        %v4697 = vld [vmem:[#allocation8 + $0x108] sm:$0xf]
        %v4698 = vld [vmem:[#allocation8 + $0x10c] sm:$0xf]
        %v4699 = vld [vmem:[#allocation8 + $0x110] sm:$0xf]
        %v4700 = vld [vmem:[#allocation8 + $0x114] sm:$0xf]
        %v4701 = vld [vmem:[#allocation8 + $0x118] sm:$0xf]
        %v4702 = vld [vmem:[#allocation8 + $0x11c] sm:$0xf]
        %v4703 = vld [vmem:[#allocation8 + $0x120] sm:$0xf]
        %v4704 = vld [vmem:[#allocation8 + $0x124] sm:$0xf]
        %v4705 = vld [vmem:[#allocation8 + $0x128] sm:$0xf]
        %v4706 = vld [vmem:[#allocation8 + $0x12c] sm:$0xf]
        %v4707 = vld [vmem:[#allocation8 + $0x130] sm:$0xf]
        %v4708 = vld [vmem:[#allocation8 + $0x134] sm:$0xf]
        %v4709 = vld [vmem:[#allocation8 + $0x138] sm:$0xf]
        %v4710 = vld [vmem:[#allocation8 + $0x13c] sm:$0xf]
        %v4727 = vunpack.c.l.b16 %v4695
        %v4728 = vunpack.c.l.b16 %v4696
        %v4729 = vunpack.c.l.b16 %v4697
        %v4730 = vunpack.c.l.b16 %v4698
        %v4731 = vunpack.c.l.b16 %v4699
        %v4732 = vunpack.c.l.b16 %v4700
        %v4733 = vunpack.c.l.b16 %v4701
        %v4734 = vunpack.c.l.b16 %v4702
        %v4735 = vunpack.c.l.b16 %v4703
        %v4736 = vunpack.c.l.b16 %v4704
        %v4737 = vunpack.c.l.b16 %v4705
        %v4738 = vunpack.c.l.b16 %v4706
        %v4739 = vunpack.c.l.b16 %v4707
        %v4740 = vunpack.c.l.b16 %v4708
        %v4741 = vunpack.c.l.b16 %v4709
        %v4742 = vunpack.c.l.b16 %v4710
        %v4743 = vpack.c.b16 %v4728, %v4727
        %v4744 = vpack.c.b16 %v4730, %v4729
        %v4745 = vpack.c.b16 %v4732, %v4731
        %v4746 = vpack.c.b16 %v4734, %v4733
        %v4747 = vpack.c.b16 %v4736, %v4735
        %v4748 = vpack.c.b16 %v4738, %v4737
        %v4749 = vpack.c.b16 %v4740, %v4739
        %v4750 = vpack.c.b16 %v4742, %v4741
        %4759 = vmatprep.subr.bf16.mxu0 0
        %4760 = vmatpush1.bf16.msra.mxu0 %v4743
        %4761 = vmatprep.subr.bf16.mxu0 0
        %4762 = vmatpush1.bf16.msra.mxu0 %v4744
        %4763 = vmatprep.subr.bf16.mxu0 0
        %4764 = vmatpush1.bf16.msra.mxu0 %v4745
        %4765 = vmatprep.subr.bf16.mxu0 0
        %4766 = vmatpush1.bf16.msra.mxu0 %v4746
        %4767 = vmatprep.subr.bf16.mxu0 0
        %4768 = vmatpush1.bf16.msra.mxu0 %v4747
        %4769 = vmatprep.subr.bf16.mxu0 0
        %4770 = vmatpush1.bf16.msra.mxu0 %v4748
        %4771 = vmatprep.subr.bf16.mxu0 0
        %4772 = vmatpush1.bf16.msra.mxu0 %v4749
        %4773 = vmatprep.subr.bf16.mxu0 0
        %4774 = vmatpush1.bf16.msra.mxu0 %v4750
        %4775 = vmatprep.subr.bf16.mxu0 0
        %4776 = vmatpush1.bf16.msra.mxu0 0
        %4777 = vmatprep.subr.bf16.mxu0 0
        %4778 = vmatpush1.bf16.msra.mxu0 0
        %4779 = vmatprep.subr.bf16.mxu0 0
        %4780 = vmatpush1.bf16.msra.mxu0 0
        %4781 = vmatprep.subr.bf16.mxu0 0
        %4782 = vmatpush1.bf16.msra.mxu0 0
        %4783 = vmatprep.subr.bf16.mxu0 0
        %4784 = vmatpush1.bf16.msra.mxu0 0
        %4785 = vmatprep.subr.bf16.mxu0 0
        %4786 = vmatpush1.bf16.msra.mxu0 0
        %4787 = vmatprep.subr.bf16.mxu0 0
        %4788 = vmatpush1.bf16.msra.mxu0 0
        %4789 = vmatprep.subr.bf16.mxu0 0
        %4790 = vmatpush1.bf16.msra.mxu0 0
        %4791 = vmatprep.mubr.bf16.mxu0 0
        %4792 = vmatmul.mubr.bf16.gmra.mrb[0].mxu0 %v4679
        %v4793 = vpop.f32.mrb[0].mxu0
        %v4794 = vadd.f32 0.0, %v4793
        %v4795 = vpop.f32.mrb[0].mxu0
        %v4796 = vpop.f32.mrb[0].mxu0
        %v4797 = vadd.f32 0.0, %v4796
        %v4798 = vpop.f32.mrb[0].mxu0
        %4799 = vmatprep.mubr.bf16.mxu0 0
        %4800 = vmatmul.mubr.bf16.gmra.mrb[0].mxu0 %v4680
        %v4801 = vpop.f32.mrb[0].mxu0
        %v4802 = vadd.f32 0.0, %v4801
        %v4803 = vpop.f32.mrb[0].mxu0
        %v4804 = vpop.f32.mrb[0].mxu0
        %v4805 = vadd.f32 0.0, %v4804
        %v4806 = vpop.f32.mrb[0].mxu0
        %4807 = vmatprep.mubr.bf16.mxu0 0
        %4808 = vmatmul.mubr.bf16.gmra.mrb[0].mxu0 %v4681
        %v4809 = vpop.f32.mrb[0].mxu0
        %v4810 = vadd.f32 0.0, %v4809
        %v4811 = vpop.f32.mrb[0].mxu0
        %v4812 = vpop.f32.mrb[0].mxu0
        %v4813 = vadd.f32 0.0, %v4812
        %v4814 = vpop.f32.mrb[0].mxu0
        %4815 = vmatprep.mubr.bf16.mxu0 0
        %4816 = vmatmul.mubr.bf16.gmra.mrb[0].mxu0 %v4682
        %v4817 = vpop.f32.mrb[0].mxu0
        %v4818 = vadd.f32 0.0, %v4817
        %v4819 = vpop.f32.mrb[0].mxu0
        %v4820 = vpop.f32.mrb[0].mxu0
        %v4821 = vadd.f32 0.0, %v4820
        %v4822 = vpop.f32.mrb[0].mxu0
        %4823 = vmatprep.mubr.bf16.mxu0 0
        %4824 = vmatmul.mubr.bf16.gmra.mrb[0].mxu0 %v4683
        %v4825 = vpop.f32.mrb[0].mxu0
        %v4826 = vadd.f32 0.0, %v4825
        %v4827 = vpop.f32.mrb[0].mxu0
        %v4828 = vpop.f32.mrb[0].mxu0
        %v4829 = vadd.f32 0.0, %v4828
        %v4830 = vpop.f32.mrb[0].mxu0
        %4831 = vmatprep.mubr.bf16.mxu0 0
        %4832 = vmatmul.mubr.bf16.gmra.mrb[0].mxu0 %v4684
        %v4833 = vpop.f32.mrb[0].mxu0
        %v4834 = vadd.f32 0.0, %v4833
        %v4835 = vpop.f32.mrb[0].mxu0
        %v4836 = vpop.f32.mrb[0].mxu0
        %v4837 = vadd.f32 0.0, %v4836
        %v4838 = vpop.f32.mrb[0].mxu0
        %4839 = vmatprep.mubr.bf16.mxu0 0
        %4840 = vmatmul.mubr.bf16.gmra.mrb[0].mxu0 %v4685
        %v4841 = vpop.f32.mrb[0].mxu0
        %v4842 = vadd.f32 0.0, %v4841
        %v4843 = vpop.f32.mrb[0].mxu0
        %v4844 = vpop.f32.mrb[0].mxu0
        %v4845 = vadd.f32 0.0, %v4844
        %v4846 = vpop.f32.mrb[0].mxu0
        %4847 = vmatprep.mubr.bf16.mxu0 0
        %4848 = vmatmul.mubr.bf16.gmra.mrb[0].mxu0 %v4686
        %v4849 = vpop.f32.mrb[0].mxu0
        %v4850 = vadd.f32 0.0, %v4849
        %v4851 = vpop.f32.mrb[0].mxu0
        %v4852 = vpop.f32.mrb[0].mxu0
        %v4853 = vadd.f32 0.0, %v4852
        %v4854 = vpop.f32.mrb[0].mxu0
        %4855 = vmatprep.mubr.bf16.mxu0 0
        %4856 = vmatmul.mubr.bf16.gmra.mrb[0].mxu0 %v4687
        %v4857 = vpop.f32.mrb[0].mxu0
        %v4858 = vadd.f32 0.0, %v4857
        %v4859 = vpop.f32.mrb[0].mxu0
        %v4860 = vpop.f32.mrb[0].mxu0
        %v4861 = vadd.f32 0.0, %v4860
        %v4862 = vpop.f32.mrb[0].mxu0
        %4863 = vmatprep.mubr.bf16.mxu0 0
        %4864 = vmatmul.mubr.bf16.gmra.mrb[0].mxu0 %v4688
        %v4865 = vpop.f32.mrb[0].mxu0
        %v4866 = vadd.f32 0.0, %v4865
        %v4867 = vpop.f32.mrb[0].mxu0
        %v4868 = vpop.f32.mrb[0].mxu0
        %v4869 = vadd.f32 0.0, %v4868
        %v4870 = vpop.f32.mrb[0].mxu0
        %4871 = vmatprep.mubr.bf16.mxu0 0
        %4872 = vmatmul.mubr.bf16.gmra.mrb[0].mxu0 %v4689
        %v4873 = vpop.f32.mrb[0].mxu0
        %v4874 = vadd.f32 0.0, %v4873
        %v4875 = vpop.f32.mrb[0].mxu0
        %v4876 = vpop.f32.mrb[0].mxu0
        %v4877 = vadd.f32 0.0, %v4876
        %v4878 = vpop.f32.mrb[0].mxu0
        %4879 = vmatprep.mubr.bf16.mxu0 0
        %4880 = vmatmul.mubr.bf16.gmra.mrb[0].mxu0 %v4690
        %v4881 = vpop.f32.mrb[0].mxu0
        %v4882 = vadd.f32 0.0, %v4881
        %v4883 = vpop.f32.mrb[0].mxu0
        %v4884 = vpop.f32.mrb[0].mxu0
        %v4885 = vadd.f32 0.0, %v4884
        %v4886 = vpop.f32.mrb[0].mxu0
        %4887 = vmatprep.mubr.bf16.mxu0 0
        %4888 = vmatmul.mubr.bf16.gmra.mrb[0].mxu0 %v4691
        %v4889 = vpop.f32.mrb[0].mxu0
        %v4890 = vadd.f32 0.0, %v4889
        %v4891 = vpop.f32.mrb[0].mxu0
        %v4892 = vpop.f32.mrb[0].mxu0
        %v4893 = vadd.f32 0.0, %v4892
        %v4894 = vpop.f32.mrb[0].mxu0
        %4895 = vmatprep.mubr.bf16.mxu0 0
        %4896 = vmatmul.mubr.bf16.gmra.mrb[0].mxu0 %v4692
        %v4897 = vpop.f32.mrb[0].mxu0
        %v4898 = vadd.f32 0.0, %v4897
        %v4899 = vpop.f32.mrb[0].mxu0
        %v4900 = vpop.f32.mrb[0].mxu0
        %v4901 = vadd.f32 0.0, %v4900
        %v4902 = vpop.f32.mrb[0].mxu0
        %4903 = vmatprep.mubr.bf16.mxu0 0
        %4904 = vmatmul.mubr.bf16.gmra.mrb[0].mxu0 %v4693
        %v4905 = vpop.f32.mrb[0].mxu0
        %v4906 = vadd.f32 0.0, %v4905
        %v4907 = vpop.f32.mrb[0].mxu0
        %v4908 = vpop.f32.mrb[0].mxu0
        %v4909 = vadd.f32 0.0, %v4908
        %v4910 = vpop.f32.mrb[0].mxu0
        %4911 = vmatprep.mubr.bf16.mxu0 0
        %4912 = vmatmul.mubr.bf16.gmra.mrb[0].mxu0 %v4694
        %v4913 = vpop.f32.mrb[0].mxu0
        %v4914 = vadd.f32 0.0, %v4913
        %v4915 = vpop.f32.mrb[0].mxu0
        %v4916 = vpop.f32.mrb[0].mxu0
        %v4917 = vadd.f32 0.0, %v4916
        %v4918 = vpop.f32.mrb[0].mxu0
        %4919 = vdwg.mxu0
        %v4920 = vadd.f32 %v4615, %v4794
        %v4921 = vadd.f32 %v4616, %v4797
        %v4922 = vadd.f32 %v4617, %v4802
        %v4923 = vadd.f32 %v4618, %v4805
        %v4924 = vadd.f32 %v4619, %v4810
        %v4925 = vadd.f32 %v4620, %v4813
        %v4926 = vadd.f32 %v4621, %v4818
        %v4927 = vadd.f32 %v4622, %v4821
        %v4928 = vadd.f32 %v4623, %v4826
        %v4929 = vadd.f32 %v4624, %v4829
        %v4930 = vadd.f32 %v4625, %v4834
        %v4931 = vadd.f32 %v4626, %v4837
        %v4932 = vadd.f32 %v4627, %v4842
        %v4933 = vadd.f32 %v4628, %v4845
        %v4934 = vadd.f32 %v4629, %v4850
        %v4935 = vadd.f32 %v4630, %v4853
        %v4936 = vadd.f32 %v4631, %v4858
        %v4937 = vadd.f32 %v4632, %v4861
        %v4938 = vadd.f32 %v4633, %v4866
        %v4939 = vadd.f32 %v4634, %v4869
        %v4940 = vadd.f32 %v4635, %v4874
        %v4941 = vadd.f32 %v4636, %v4877
        %v4942 = vadd.f32 %v4637, %v4882
        %v4943 = vadd.f32 %v4638, %v4885
        %v4944 = vadd.f32 %v4639, %v4890
        %v4945 = vadd.f32 %v4640, %v4893
        %v4946 = vadd.f32 %v4641, %v4898
        %v4947 = vadd.f32 %v4642, %v4901
        %v4948 = vadd.f32 %v4643, %v4906
        %v4949 = vadd.f32 %v4644, %v4909
        %v4950 = vadd.f32 %v4645, %v4914
        %v4951 = vadd.f32 %v4646, %v4917
        %v4952 = vld [vmem:[%s3458 + $0x2] sm:$0xff]
        %v4953 = vld [vmem:[%s3458 + $0xa] sm:$0xff]
        %v4954 = vld [vmem:[%s3458 + $0x1a] sm:$0xff]
        %v4955 = vld [vmem:[%s3458 + $0x22] sm:$0xff]
        %v4956 = vld [vmem:[%s3458 + $0x32] sm:$0xff]
        %v4957 = vld [vmem:[%s3458 + $0x3a] sm:$0xff]
        %v4958 = vld [vmem:[%s3458 + $0x4a] sm:$0xff]
        %v4959 = vld [vmem:[%s3458 + $0x52] sm:$0xff]
        %v4960 = vld [vmem:[%s3458 + $0x62] sm:$0xff]
        %v4961 = vld [vmem:[%s3458 + $0x6a] sm:$0xff]
        %v4962 = vld [vmem:[%s3458 + $0x7a] sm:$0xff]
        %v4963 = vld [vmem:[%s3458 + $0x82] sm:$0xff]
        %v4964 = vld [vmem:[%s3458 + $0x92] sm:$0xff]
        %v4965 = vld [vmem:[%s3458 + $0x9a] sm:$0xff]
        %v4966 = vld [vmem:[%s3458 + $0xaa] sm:$0xff]
        %v4967 = vld [vmem:[%s3458 + $0xb2] sm:$0xff]
        %v4968 = vld [vmem:[%s3458 + $0xc2] sm:$0xff]
        %v4969 = vld [vmem:[%s3458 + $0xca] sm:$0xff]
        %v4970 = vld [vmem:[%s3458 + $0xda] sm:$0xff]
        %v4971 = vld [vmem:[%s3458 + $0xe2] sm:$0xff]
        %v4972 = vld [vmem:[%s3458 + $0xf2] sm:$0xff]
        %v4973 = vld [vmem:[%s3458 + $0xfa] sm:$0xff]
        %v4974 = vld [vmem:[%s3458 + $0x10a] sm:$0xff]
        %v4975 = vld [vmem:[%s3458 + $0x112] sm:$0xff]
        %v4976 = vld [vmem:[%s3458 + $0x122] sm:$0xff]
        %v4977 = vld [vmem:[%s3458 + $0x12a] sm:$0xff]
        %v4978 = vld [vmem:[%s3458 + $0x13a] sm:$0xff]
        %v4979 = vld [vmem:[%s3458 + $0x142] sm:$0xff]
        %v4980 = vld [vmem:[%s3458 + $0x152] sm:$0xff]
        %v4981 = vld [vmem:[%s3458 + $0x15a] sm:$0xff]
        %v4982 = vld [vmem:[%s3458 + $0x16a] sm:$0xff]
        %v4983 = vld [vmem:[%s3458 + $0x172] sm:$0xff]
        %v4984 = vpack.c.bf16 %v4953, %v4952
        %v4985 = vpack.c.bf16 %v4955, %v4954
        %v4986 = vpack.c.bf16 %v4957, %v4956
        %v4987 = vpack.c.bf16 %v4959, %v4958
        %v4988 = vpack.c.bf16 %v4961, %v4960
        %v4989 = vpack.c.bf16 %v4963, %v4962
        %v4990 = vpack.c.bf16 %v4965, %v4964
        %v4991 = vpack.c.bf16 %v4967, %v4966
        %v4992 = vpack.c.bf16 %v4969, %v4968
        %v4993 = vpack.c.bf16 %v4971, %v4970
        %v4994 = vpack.c.bf16 %v4973, %v4972
        %v4995 = vpack.c.bf16 %v4975, %v4974
        %v4996 = vpack.c.bf16 %v4977, %v4976
        %v4997 = vpack.c.bf16 %v4979, %v4978
        %v4998 = vpack.c.bf16 %v4981, %v4980
        %v4999 = vpack.c.bf16 %v4983, %v4982
        %v5000 = vld [vmem:[#allocation8 + $0x140] sm:$0xf]
        %v5001 = vld [vmem:[#allocation8 + $0x144] sm:$0xf]
        %v5002 = vld [vmem:[#allocation8 + $0x148] sm:$0xf]
        %v5003 = vld [vmem:[#allocation8 + $0x14c] sm:$0xf]
        %v5004 = vld [vmem:[#allocation8 + $0x150] sm:$0xf]
        %v5005 = vld [vmem:[#allocation8 + $0x154] sm:$0xf]
        %v5006 = vld [vmem:[#allocation8 + $0x158] sm:$0xf]
        %v5007 = vld [vmem:[#allocation8 + $0x15c] sm:$0xf]
        %v5008 = vld [vmem:[#allocation8 + $0x160] sm:$0xf]
        %v5009 = vld [vmem:[#allocation8 + $0x164] sm:$0xf]
        %v5010 = vld [vmem:[#allocation8 + $0x168] sm:$0xf]
        %v5011 = vld [vmem:[#allocation8 + $0x16c] sm:$0xf]
        %v5012 = vld [vmem:[#allocation8 + $0x170] sm:$0xf]
        %v5013 = vld [vmem:[#allocation8 + $0x174] sm:$0xf]
        %v5014 = vld [vmem:[#allocation8 + $0x178] sm:$0xf]
        %v5015 = vld [vmem:[#allocation8 + $0x17c] sm:$0xf]
        %v5032 = vunpack.c.l.b16 %v5000
        %v5033 = vunpack.c.l.b16 %v5001
        %v5034 = vunpack.c.l.b16 %v5002
        %v5035 = vunpack.c.l.b16 %v5003
        %v5036 = vunpack.c.l.b16 %v5004
        %v5037 = vunpack.c.l.b16 %v5005
        %v5038 = vunpack.c.l.b16 %v5006
        %v5039 = vunpack.c.l.b16 %v5007
        %v5040 = vunpack.c.l.b16 %v5008
        %v5041 = vunpack.c.l.b16 %v5009
        %v5042 = vunpack.c.l.b16 %v5010
        %v5043 = vunpack.c.l.b16 %v5011
        %v5044 = vunpack.c.l.b16 %v5012
        %v5045 = vunpack.c.l.b16 %v5013
        %v5046 = vunpack.c.l.b16 %v5014
        %v5047 = vunpack.c.l.b16 %v5015
        %v5048 = vpack.c.b16 %v5033, %v5032
        %v5049 = vpack.c.b16 %v5035, %v5034
        %v5050 = vpack.c.b16 %v5037, %v5036
        %v5051 = vpack.c.b16 %v5039, %v5038
        %v5052 = vpack.c.b16 %v5041, %v5040
        %v5053 = vpack.c.b16 %v5043, %v5042
        %v5054 = vpack.c.b16 %v5045, %v5044
        %v5055 = vpack.c.b16 %v5047, %v5046
        %5064 = vmatprep.subr.bf16.mxu0 0
        %5065 = vmatpush1.bf16.msra.mxu0 %v5048
        %5066 = vmatprep.subr.bf16.mxu0 0
        %5067 = vmatpush1.bf16.msra.mxu0 %v5049
        %5068 = vmatprep.subr.bf16.mxu0 0
        %5069 = vmatpush1.bf16.msra.mxu0 %v5050
        %5070 = vmatprep.subr.bf16.mxu0 0
        %5071 = vmatpush1.bf16.msra.mxu0 %v5051
        %5072 = vmatprep.subr.bf16.mxu0 0
        %5073 = vmatpush1.bf16.msra.mxu0 %v5052
        %5074 = vmatprep.subr.bf16.mxu0 0
        %5075 = vmatpush1.bf16.msra.mxu0 %v5053
        %5076 = vmatprep.subr.bf16.mxu0 0
        %5077 = vmatpush1.bf16.msra.mxu0 %v5054
        %5078 = vmatprep.subr.bf16.mxu0 0
        %5079 = vmatpush1.bf16.msra.mxu0 %v5055
        %5080 = vmatprep.subr.bf16.mxu0 0
        %5081 = vmatpush1.bf16.msra.mxu0 0
        %5082 = vmatprep.subr.bf16.mxu0 0
        %5083 = vmatpush1.bf16.msra.mxu0 0
        %5084 = vmatprep.subr.bf16.mxu0 0
        %5085 = vmatpush1.bf16.msra.mxu0 0
        %5086 = vmatprep.subr.bf16.mxu0 0
        %5087 = vmatpush1.bf16.msra.mxu0 0
        %5088 = vmatprep.subr.bf16.mxu0 0
        %5089 = vmatpush1.bf16.msra.mxu0 0
        %5090 = vmatprep.subr.bf16.mxu0 0
        %5091 = vmatpush1.bf16.msra.mxu0 0
        %5092 = vmatprep.subr.bf16.mxu0 0
        %5093 = vmatpush1.bf16.msra.mxu0 0
        %5094 = vmatprep.subr.bf16.mxu0 0
        %5095 = vmatpush1.bf16.msra.mxu0 0
        %5096 = vmatprep.mubr.bf16.mxu0 0
        %5097 = vmatmul.mubr.bf16.gmra.mrb[0].mxu0 %v4984
        %v5098 = vpop.f32.mrb[0].mxu0
        %v5099 = vadd.f32 0.0, %v5098
        %v5100 = vpop.f32.mrb[0].mxu0
        %v5101 = vpop.f32.mrb[0].mxu0
        %v5102 = vadd.f32 0.0, %v5101
        %v5103 = vpop.f32.mrb[0].mxu0
        %5104 = vmatprep.mubr.bf16.mxu0 0
        %5105 = vmatmul.mubr.bf16.gmra.mrb[0].mxu0 %v4985
        %v5106 = vpop.f32.mrb[0].mxu0
        %v5107 = vadd.f32 0.0, %v5106
        %v5108 = vpop.f32.mrb[0].mxu0
        %v5109 = vpop.f32.mrb[0].mxu0
        %v5110 = vadd.f32 0.0, %v5109
        %v5111 = vpop.f32.mrb[0].mxu0
        %5112 = vmatprep.mubr.bf16.mxu0 0
        %5113 = vmatmul.mubr.bf16.gmra.mrb[0].mxu0 %v4986
        %v5114 = vpop.f32.mrb[0].mxu0
        %v5115 = vadd.f32 0.0, %v5114
        %v5116 = vpop.f32.mrb[0].mxu0
        %v5117 = vpop.f32.mrb[0].mxu0
        %v5118 = vadd.f32 0.0, %v5117
        %v5119 = vpop.f32.mrb[0].mxu0
        %5120 = vmatprep.mubr.bf16.mxu0 0
        %5121 = vmatmul.mubr.bf16.gmra.mrb[0].mxu0 %v4987
        %v5122 = vpop.f32.mrb[0].mxu0
        %v5123 = vadd.f32 0.0, %v5122
        %v5124 = vpop.f32.mrb[0].mxu0
        %v5125 = vpop.f32.mrb[0].mxu0
        %v5126 = vadd.f32 0.0, %v5125
        %v5127 = vpop.f32.mrb[0].mxu0
        %5128 = vmatprep.mubr.bf16.mxu0 0
        %5129 = vmatmul.mubr.bf16.gmra.mrb[0].mxu0 %v4988
        %v5130 = vpop.f32.mrb[0].mxu0
        %v5131 = vadd.f32 0.0, %v5130
        %v5132 = vpop.f32.mrb[0].mxu0
        %v5133 = vpop.f32.mrb[0].mxu0
        %v5134 = vadd.f32 0.0, %v5133
        %v5135 = vpop.f32.mrb[0].mxu0
        %5136 = vmatprep.mubr.bf16.mxu0 0
        %5137 = vmatmul.mubr.bf16.gmra.mrb[0].mxu0 %v4989
        %v5138 = vpop.f32.mrb[0].mxu0
        %v5139 = vadd.f32 0.0, %v5138
        %v5140 = vpop.f32.mrb[0].mxu0
        %v5141 = vpop.f32.mrb[0].mxu0
        %v5142 = vadd.f32 0.0, %v5141
        %v5143 = vpop.f32.mrb[0].mxu0
        %5144 = vmatprep.mubr.bf16.mxu0 0
        %5145 = vmatmul.mubr.bf16.gmra.mrb[0].mxu0 %v4990
        %v5146 = vpop.f32.mrb[0].mxu0
        %v5147 = vadd.f32 0.0, %v5146
        %v5148 = vpop.f32.mrb[0].mxu0
        %v5149 = vpop.f32.mrb[0].mxu0
        %v5150 = vadd.f32 0.0, %v5149
        %v5151 = vpop.f32.mrb[0].mxu0
        %5152 = vmatprep.mubr.bf16.mxu0 0
        %5153 = vmatmul.mubr.bf16.gmra.mrb[0].mxu0 %v4991
        %v5154 = vpop.f32.mrb[0].mxu0
        %v5155 = vadd.f32 0.0, %v5154
        %v5156 = vpop.f32.mrb[0].mxu0
        %v5157 = vpop.f32.mrb[0].mxu0
        %v5158 = vadd.f32 0.0, %v5157
        %v5159 = vpop.f32.mrb[0].mxu0
        %5160 = vmatprep.mubr.bf16.mxu0 0
        %5161 = vmatmul.mubr.bf16.gmra.mrb[0].mxu0 %v4992
        %v5162 = vpop.f32.mrb[0].mxu0
        %v5163 = vadd.f32 0.0, %v5162
        %v5164 = vpop.f32.mrb[0].mxu0
        %v5165 = vpop.f32.mrb[0].mxu0
        %v5166 = vadd.f32 0.0, %v5165
        %v5167 = vpop.f32.mrb[0].mxu0
        %5168 = vmatprep.mubr.bf16.mxu0 0
        %5169 = vmatmul.mubr.bf16.gmra.mrb[0].mxu0 %v4993
        %v5170 = vpop.f32.mrb[0].mxu0
        %v5171 = vadd.f32 0.0, %v5170
        %v5172 = vpop.f32.mrb[0].mxu0
        %v5173 = vpop.f32.mrb[0].mxu0
        %v5174 = vadd.f32 0.0, %v5173
        %v5175 = vpop.f32.mrb[0].mxu0
        %5176 = vmatprep.mubr.bf16.mxu0 0
        %5177 = vmatmul.mubr.bf16.gmra.mrb[0].mxu0 %v4994
        %v5178 = vpop.f32.mrb[0].mxu0
        %v5179 = vadd.f32 0.0, %v5178
        %v5180 = vpop.f32.mrb[0].mxu0
        %v5181 = vpop.f32.mrb[0].mxu0
        %v5182 = vadd.f32 0.0, %v5181
        %v5183 = vpop.f32.mrb[0].mxu0
        %5184 = vmatprep.mubr.bf16.mxu0 0
        %5185 = vmatmul.mubr.bf16.gmra.mrb[0].mxu0 %v4995
        %v5186 = vpop.f32.mrb[0].mxu0
        %v5187 = vadd.f32 0.0, %v5186
        %v5188 = vpop.f32.mrb[0].mxu0
        %v5189 = vpop.f32.mrb[0].mxu0
        %v5190 = vadd.f32 0.0, %v5189
        %v5191 = vpop.f32.mrb[0].mxu0
        %5192 = vmatprep.mubr.bf16.mxu0 0
        %5193 = vmatmul.mubr.bf16.gmra.mrb[0].mxu0 %v4996
        %v5194 = vpop.f32.mrb[0].mxu0
        %v5195 = vadd.f32 0.0, %v5194
        %v5196 = vpop.f32.mrb[0].mxu0
        %v5197 = vpop.f32.mrb[0].mxu0
        %v5198 = vadd.f32 0.0, %v5197
        %v5199 = vpop.f32.mrb[0].mxu0
        %5200 = vmatprep.mubr.bf16.mxu0 0
        %5201 = vmatmul.mubr.bf16.gmra.mrb[0].mxu0 %v4997
        %v5202 = vpop.f32.mrb[0].mxu0
        %v5203 = vadd.f32 0.0, %v5202
        %v5204 = vpop.f32.mrb[0].mxu0
        %v5205 = vpop.f32.mrb[0].mxu0
        %v5206 = vadd.f32 0.0, %v5205
        %v5207 = vpop.f32.mrb[0].mxu0
        %5208 = vmatprep.mubr.bf16.mxu0 0
        %5209 = vmatmul.mubr.bf16.gmra.mrb[0].mxu0 %v4998
        %v5210 = vpop.f32.mrb[0].mxu0
        %v5211 = vadd.f32 0.0, %v5210
        %v5212 = vpop.f32.mrb[0].mxu0
        %v5213 = vpop.f32.mrb[0].mxu0
        %v5214 = vadd.f32 0.0, %v5213
        %v5215 = vpop.f32.mrb[0].mxu0
        %5216 = vmatprep.mubr.bf16.mxu0 0
        %5217 = vmatmul.mubr.bf16.gmra.mrb[0].mxu0 %v4999
        %v5218 = vpop.f32.mrb[0].mxu0
        %v5219 = vadd.f32 0.0, %v5218
        %v5220 = vpop.f32.mrb[0].mxu0
        %v5221 = vpop.f32.mrb[0].mxu0
        %v5222 = vadd.f32 0.0, %v5221
        %v5223 = vpop.f32.mrb[0].mxu0
        %5224 = vdwg.mxu0
        %v5225 = vadd.f32 %v4920, %v5099
        %v5226 = vadd.f32 %v4921, %v5102
        %v5227 = vadd.f32 %v4922, %v5107
        %v5228 = vadd.f32 %v4923, %v5110
        %v5229 = vadd.f32 %v4924, %v5115
        %v5230 = vadd.f32 %v4925, %v5118
        %v5231 = vadd.f32 %v4926, %v5123
        %v5232 = vadd.f32 %v4927, %v5126
        %v5233 = vadd.f32 %v4928, %v5131
        %v5234 = vadd.f32 %v4929, %v5134
        %v5235 = vadd.f32 %v4930, %v5139
        %v5236 = vadd.f32 %v4931, %v5142
        %v5237 = vadd.f32 %v4932, %v5147
        %v5238 = vadd.f32 %v4933, %v5150
        %v5239 = vadd.f32 %v4934, %v5155
        %v5240 = vadd.f32 %v4935, %v5158
        %v5241 = vadd.f32 %v4936, %v5163
        %v5242 = vadd.f32 %v4937, %v5166
        %v5243 = vadd.f32 %v4938, %v5171
        %v5244 = vadd.f32 %v4939, %v5174
        %v5245 = vadd.f32 %v4940, %v5179
        %v5246 = vadd.f32 %v4941, %v5182
        %v5247 = vadd.f32 %v4942, %v5187
        %v5248 = vadd.f32 %v4943, %v5190
        %v5249 = vadd.f32 %v4944, %v5195
        %v5250 = vadd.f32 %v4945, %v5198
        %v5251 = vadd.f32 %v4946, %v5203
        %v5252 = vadd.f32 %v4947, %v5206
        %v5253 = vadd.f32 %v4948, %v5211
        %v5254 = vadd.f32 %v4949, %v5214
        %v5255 = vadd.f32 %v4950, %v5219
        %v5256 = vadd.f32 %v4951, %v5222
        %s5257 = scalar_lea.vmem [#allocation3], 48
        %v5258 = vld [vmem:[%s5257] sm:$0xff]
        %v5259 = vld [vmem:[%s5257 + $0x8] sm:$0xff]
        %v5260 = vld [vmem:[%s5257 + $0x18] sm:$0xff]
        %v5261 = vld [vmem:[%s5257 + $0x20] sm:$0xff]
        %v5262 = vld [vmem:[%s5257 + $0x30] sm:$0xff]
        %v5263 = vld [vmem:[%s5257 + $0x38] sm:$0xff]
        %v5264 = vld [vmem:[%s5257 + $0x48] sm:$0xff]
        %v5265 = vld [vmem:[%s5257 + $0x50] sm:$0xff]
        %v5266 = vld [vmem:[%s5257 + $0x60] sm:$0xff]
        %v5267 = vld [vmem:[%s5257 + $0x68] sm:$0xff]
        %v5268 = vld [vmem:[%s5257 + $0x78] sm:$0xff]
        %v5269 = vld [vmem:[%s5257 + $0x80] sm:$0xff]
        %v5270 = vld [vmem:[%s5257 + $0x90] sm:$0xff]
        %v5271 = vld [vmem:[%s5257 + $0x98] sm:$0xff]
        %v5272 = vld [vmem:[%s5257 + $0xa8] sm:$0xff]
        %v5273 = vld [vmem:[%s5257 + $0xb0] sm:$0xff]
        %v5274 = vld [vmem:[%s5257 + $0xc0] sm:$0xff]
        %v5275 = vld [vmem:[%s5257 + $0xc8] sm:$0xff]
        %v5276 = vld [vmem:[%s5257 + $0xd8] sm:$0xff]
        %v5277 = vld [vmem:[%s5257 + $0xe0] sm:$0xff]
        %v5278 = vld [vmem:[%s5257 + $0xf0] sm:$0xff]
        %v5279 = vld [vmem:[%s5257 + $0xf8] sm:$0xff]
        %v5280 = vld [vmem:[%s5257 + $0x108] sm:$0xff]
        %v5281 = vld [vmem:[%s5257 + $0x110] sm:$0xff]
        %v5282 = vld [vmem:[%s5257 + $0x120] sm:$0xff]
        %v5283 = vld [vmem:[%s5257 + $0x128] sm:$0xff]
        %v5284 = vld [vmem:[%s5257 + $0x138] sm:$0xff]
        %v5285 = vld [vmem:[%s5257 + $0x140] sm:$0xff]
        %v5286 = vld [vmem:[%s5257 + $0x150] sm:$0xff]
        %v5287 = vld [vmem:[%s5257 + $0x158] sm:$0xff]
        %v5288 = vld [vmem:[%s5257 + $0x168] sm:$0xff]
        %v5289 = vld [vmem:[%s5257 + $0x170] sm:$0xff]
        %v5290 = vpack.c.bf16 %v5259, %v5258
        %v5291 = vpack.c.bf16 %v5261, %v5260
        %v5292 = vpack.c.bf16 %v5263, %v5262
        %v5293 = vpack.c.bf16 %v5265, %v5264
        %v5294 = vpack.c.bf16 %v5267, %v5266
        %v5295 = vpack.c.bf16 %v5269, %v5268
        %v5296 = vpack.c.bf16 %v5271, %v5270
        %v5297 = vpack.c.bf16 %v5273, %v5272
        %v5298 = vpack.c.bf16 %v5275, %v5274
        %v5299 = vpack.c.bf16 %v5277, %v5276
        %v5300 = vpack.c.bf16 %v5279, %v5278
        %v5301 = vpack.c.bf16 %v5281, %v5280
        %v5302 = vpack.c.bf16 %v5283, %v5282
        %v5303 = vpack.c.bf16 %v5285, %v5284
        %v5304 = vpack.c.bf16 %v5287, %v5286
        %v5305 = vpack.c.bf16 %v5289, %v5288
        %v5306 = vld [vmem:[#allocation8 + $0x180] sm:$0xf]
        %v5307 = vld [vmem:[#allocation8 + $0x184] sm:$0xf]
        %v5308 = vld [vmem:[#allocation8 + $0x188] sm:$0xf]
        %v5309 = vld [vmem:[#allocation8 + $0x18c] sm:$0xf]
        %v5310 = vld [vmem:[#allocation8 + $0x190] sm:$0xf]
        %v5311 = vld [vmem:[#allocation8 + $0x194] sm:$0xf]
        %v5312 = vld [vmem:[#allocation8 + $0x198] sm:$0xf]
        %v5313 = vld [vmem:[#allocation8 + $0x19c] sm:$0xf]
        %v5314 = vld [vmem:[#allocation8 + $0x1a0] sm:$0xf]
        %v5315 = vld [vmem:[#allocation8 + $0x1a4] sm:$0xf]
        %v5316 = vld [vmem:[#allocation8 + $0x1a8] sm:$0xf]
        %v5317 = vld [vmem:[#allocation8 + $0x1ac] sm:$0xf]
        %v5318 = vld [vmem:[#allocation8 + $0x1b0] sm:$0xf]
        %v5319 = vld [vmem:[#allocation8 + $0x1b4] sm:$0xf]
        %v5320 = vld [vmem:[#allocation8 + $0x1b8] sm:$0xf]
        %v5321 = vld [vmem:[#allocation8 + $0x1bc] sm:$0xf]
        %v5338 = vunpack.c.l.b16 %v5306
        %v5339 = vunpack.c.l.b16 %v5307
        %v5340 = vunpack.c.l.b16 %v5308
        %v5341 = vunpack.c.l.b16 %v5309
        %v5342 = vunpack.c.l.b16 %v5310
        %v5343 = vunpack.c.l.b16 %v5311
        %v5344 = vunpack.c.l.b16 %v5312
        %v5345 = vunpack.c.l.b16 %v5313
        %v5346 = vunpack.c.l.b16 %v5314
        %v5347 = vunpack.c.l.b16 %v5315
        %v5348 = vunpack.c.l.b16 %v5316
        %v5349 = vunpack.c.l.b16 %v5317
        %v5350 = vunpack.c.l.b16 %v5318
        %v5351 = vunpack.c.l.b16 %v5319
        %v5352 = vunpack.c.l.b16 %v5320
        %v5353 = vunpack.c.l.b16 %v5321
        %v5354 = vpack.c.b16 %v5339, %v5338
        %v5355 = vpack.c.b16 %v5341, %v5340
        %v5356 = vpack.c.b16 %v5343, %v5342
        %v5357 = vpack.c.b16 %v5345, %v5344
        %v5358 = vpack.c.b16 %v5347, %v5346
        %v5359 = vpack.c.b16 %v5349, %v5348
        %v5360 = vpack.c.b16 %v5351, %v5350
        %v5361 = vpack.c.b16 %v5353, %v5352
        %5370 = vmatprep.subr.bf16.mxu0 0
        %5371 = vmatpush1.bf16.msra.mxu0 %v5354
        %5372 = vmatprep.subr.bf16.mxu0 0
        %5373 = vmatpush1.bf16.msra.mxu0 %v5355
        %5374 = vmatprep.subr.bf16.mxu0 0
        %5375 = vmatpush1.bf16.msra.mxu0 %v5356
        %5376 = vmatprep.subr.bf16.mxu0 0
        %5377 = vmatpush1.bf16.msra.mxu0 %v5357
        %5378 = vmatprep.subr.bf16.mxu0 0
        %5379 = vmatpush1.bf16.msra.mxu0 %v5358
        %5380 = vmatprep.subr.bf16.mxu0 0
        %5381 = vmatpush1.bf16.msra.mxu0 %v5359
        %5382 = vmatprep.subr.bf16.mxu0 0
        %5383 = vmatpush1.bf16.msra.mxu0 %v5360
        %5384 = vmatprep.subr.bf16.mxu0 0
        %5385 = vmatpush1.bf16.msra.mxu0 %v5361
        %5386 = vmatprep.subr.bf16.mxu0 0
        %5387 = vmatpush1.bf16.msra.mxu0 0
        %5388 = vmatprep.subr.bf16.mxu0 0
        %5389 = vmatpush1.bf16.msra.mxu0 0
        %5390 = vmatprep.subr.bf16.mxu0 0
        %5391 = vmatpush1.bf16.msra.mxu0 0
        %5392 = vmatprep.subr.bf16.mxu0 0
        %5393 = vmatpush1.bf16.msra.mxu0 0
        %5394 = vmatprep.subr.bf16.mxu0 0
        %5395 = vmatpush1.bf16.msra.mxu0 0
        %5396 = vmatprep.subr.bf16.mxu0 0
        %5397 = vmatpush1.bf16.msra.mxu0 0
        %5398 = vmatprep.subr.bf16.mxu0 0
        %5399 = vmatpush1.bf16.msra.mxu0 0
        %5400 = vmatprep.subr.bf16.mxu0 0
        %5401 = vmatpush1.bf16.msra.mxu0 0
        %5402 = vmatprep.mubr.bf16.mxu0 0
        %5403 = vmatmul.mubr.bf16.gmra.mrb[0].mxu0 %v5290
        %v5404 = vpop.f32.mrb[0].mxu0
        %v5405 = vadd.f32 0.0, %v5404
        %v5406 = vpop.f32.mrb[0].mxu0
        %v5407 = vpop.f32.mrb[0].mxu0
        %v5408 = vadd.f32 0.0, %v5407
        %v5409 = vpop.f32.mrb[0].mxu0
        %5410 = vmatprep.mubr.bf16.mxu0 0
        %5411 = vmatmul.mubr.bf16.gmra.mrb[0].mxu0 %v5291
        %v5412 = vpop.f32.mrb[0].mxu0
        %v5413 = vadd.f32 0.0, %v5412
        %v5414 = vpop.f32.mrb[0].mxu0
        %v5415 = vpop.f32.mrb[0].mxu0
        %v5416 = vadd.f32 0.0, %v5415
        %v5417 = vpop.f32.mrb[0].mxu0
        %5418 = vmatprep.mubr.bf16.mxu0 0
        %5419 = vmatmul.mubr.bf16.gmra.mrb[0].mxu0 %v5292
        %v5420 = vpop.f32.mrb[0].mxu0
        %v5421 = vadd.f32 0.0, %v5420
        %v5422 = vpop.f32.mrb[0].mxu0
        %v5423 = vpop.f32.mrb[0].mxu0
        %v5424 = vadd.f32 0.0, %v5423
        %v5425 = vpop.f32.mrb[0].mxu0
        %5426 = vmatprep.mubr.bf16.mxu0 0
        %5427 = vmatmul.mubr.bf16.gmra.mrb[0].mxu0 %v5293
        %v5428 = vpop.f32.mrb[0].mxu0
        %v5429 = vadd.f32 0.0, %v5428
        %v5430 = vpop.f32.mrb[0].mxu0
        %v5431 = vpop.f32.mrb[0].mxu0
        %v5432 = vadd.f32 0.0, %v5431
        %v5433 = vpop.f32.mrb[0].mxu0
        %5434 = vmatprep.mubr.bf16.mxu0 0
        %5435 = vmatmul.mubr.bf16.gmra.mrb[0].mxu0 %v5294
        %v5436 = vpop.f32.mrb[0].mxu0
        %v5437 = vadd.f32 0.0, %v5436
        %v5438 = vpop.f32.mrb[0].mxu0
        %v5439 = vpop.f32.mrb[0].mxu0
        %v5440 = vadd.f32 0.0, %v5439
        %v5441 = vpop.f32.mrb[0].mxu0
        %5442 = vmatprep.mubr.bf16.mxu0 0
        %5443 = vmatmul.mubr.bf16.gmra.mrb[0].mxu0 %v5295
        %v5444 = vpop.f32.mrb[0].mxu0
        %v5445 = vadd.f32 0.0, %v5444
        %v5446 = vpop.f32.mrb[0].mxu0
        %v5447 = vpop.f32.mrb[0].mxu0
        %v5448 = vadd.f32 0.0, %v5447
        %v5449 = vpop.f32.mrb[0].mxu0
        %5450 = vmatprep.mubr.bf16.mxu0 0
        %5451 = vmatmul.mubr.bf16.gmra.mrb[0].mxu0 %v5296
        %v5452 = vpop.f32.mrb[0].mxu0
        %v5453 = vadd.f32 0.0, %v5452
        %v5454 = vpop.f32.mrb[0].mxu0
        %v5455 = vpop.f32.mrb[0].mxu0
        %v5456 = vadd.f32 0.0, %v5455
        %v5457 = vpop.f32.mrb[0].mxu0
        %5458 = vmatprep.mubr.bf16.mxu0 0
        %5459 = vmatmul.mubr.bf16.gmra.mrb[0].mxu0 %v5297
        %v5460 = vpop.f32.mrb[0].mxu0
        %v5461 = vadd.f32 0.0, %v5460
        %v5462 = vpop.f32.mrb[0].mxu0
        %v5463 = vpop.f32.mrb[0].mxu0
        %v5464 = vadd.f32 0.0, %v5463
        %v5465 = vpop.f32.mrb[0].mxu0
        %5466 = vmatprep.mubr.bf16.mxu0 0
        %5467 = vmatmul.mubr.bf16.gmra.mrb[0].mxu0 %v5298
        %v5468 = vpop.f32.mrb[0].mxu0
        %v5469 = vadd.f32 0.0, %v5468
        %v5470 = vpop.f32.mrb[0].mxu0
        %v5471 = vpop.f32.mrb[0].mxu0
        %v5472 = vadd.f32 0.0, %v5471
        %v5473 = vpop.f32.mrb[0].mxu0
        %5474 = vmatprep.mubr.bf16.mxu0 0
        %5475 = vmatmul.mubr.bf16.gmra.mrb[0].mxu0 %v5299
        %v5476 = vpop.f32.mrb[0].mxu0
        %v5477 = vadd.f32 0.0, %v5476
        %v5478 = vpop.f32.mrb[0].mxu0
        %v5479 = vpop.f32.mrb[0].mxu0
        %v5480 = vadd.f32 0.0, %v5479
        %v5481 = vpop.f32.mrb[0].mxu0
        %5482 = vmatprep.mubr.bf16.mxu0 0
        %5483 = vmatmul.mubr.bf16.gmra.mrb[0].mxu0 %v5300
        %v5484 = vpop.f32.mrb[0].mxu0
        %v5485 = vadd.f32 0.0, %v5484
        %v5486 = vpop.f32.mrb[0].mxu0
        %v5487 = vpop.f32.mrb[0].mxu0
        %v5488 = vadd.f32 0.0, %v5487
        %v5489 = vpop.f32.mrb[0].mxu0
        %5490 = vmatprep.mubr.bf16.mxu0 0
        %5491 = vmatmul.mubr.bf16.gmra.mrb[0].mxu0 %v5301
        %v5492 = vpop.f32.mrb[0].mxu0
        %v5493 = vadd.f32 0.0, %v5492
        %v5494 = vpop.f32.mrb[0].mxu0
        %v5495 = vpop.f32.mrb[0].mxu0
        %v5496 = vadd.f32 0.0, %v5495
        %v5497 = vpop.f32.mrb[0].mxu0
        %5498 = vmatprep.mubr.bf16.mxu0 0
        %5499 = vmatmul.mubr.bf16.gmra.mrb[0].mxu0 %v5302
        %v5500 = vpop.f32.mrb[0].mxu0
        %v5501 = vadd.f32 0.0, %v5500
        %v5502 = vpop.f32.mrb[0].mxu0
        %v5503 = vpop.f32.mrb[0].mxu0
        %v5504 = vadd.f32 0.0, %v5503
        %v5505 = vpop.f32.mrb[0].mxu0
        %5506 = vmatprep.mubr.bf16.mxu0 0
        %5507 = vmatmul.mubr.bf16.gmra.mrb[0].mxu0 %v5303
        %v5508 = vpop.f32.mrb[0].mxu0
        %v5509 = vadd.f32 0.0, %v5508
        %v5510 = vpop.f32.mrb[0].mxu0
        %v5511 = vpop.f32.mrb[0].mxu0
        %v5512 = vadd.f32 0.0, %v5511
        %v5513 = vpop.f32.mrb[0].mxu0
        %5514 = vmatprep.mubr.bf16.mxu0 0
        %5515 = vmatmul.mubr.bf16.gmra.mrb[0].mxu0 %v5304
        %v5516 = vpop.f32.mrb[0].mxu0
        %v5517 = vadd.f32 0.0, %v5516
        %v5518 = vpop.f32.mrb[0].mxu0
        %v5519 = vpop.f32.mrb[0].mxu0
        %v5520 = vadd.f32 0.0, %v5519
        %v5521 = vpop.f32.mrb[0].mxu0
        %5522 = vmatprep.mubr.bf16.mxu0 0
        %5523 = vmatmul.mubr.bf16.gmra.mrb[0].mxu0 %v5305
        %v5524 = vpop.f32.mrb[0].mxu0
        %v5525 = vadd.f32 0.0, %v5524
        %v5526 = vpop.f32.mrb[0].mxu0
        %v5527 = vpop.f32.mrb[0].mxu0
        %v5528 = vadd.f32 0.0, %v5527
        %v5529 = vpop.f32.mrb[0].mxu0
        %5530 = vdwg.mxu0
        %v5531 = vadd.f32 %v5225, %v5405
        %v5532 = vadd.f32 %v5226, %v5408
        %v5533 = vadd.f32 %v5227, %v5413
        %v5534 = vadd.f32 %v5228, %v5416
        %v5535 = vadd.f32 %v5229, %v5421
        %v5536 = vadd.f32 %v5230, %v5424
        %v5537 = vadd.f32 %v5231, %v5429
        %v5538 = vadd.f32 %v5232, %v5432
        %v5539 = vadd.f32 %v5233, %v5437
        %v5540 = vadd.f32 %v5234, %v5440
        %v5541 = vadd.f32 %v5235, %v5445
        %v5542 = vadd.f32 %v5236, %v5448
        %v5543 = vadd.f32 %v5237, %v5453
        %v5544 = vadd.f32 %v5238, %v5456
        %v5545 = vadd.f32 %v5239, %v5461
        %v5546 = vadd.f32 %v5240, %v5464
        %v5547 = vadd.f32 %v5241, %v5469
        %v5548 = vadd.f32 %v5242, %v5472
        %v5549 = vadd.f32 %v5243, %v5477
        %v5550 = vadd.f32 %v5244, %v5480
        %v5551 = vadd.f32 %v5245, %v5485
        %v5552 = vadd.f32 %v5246, %v5488
        %v5553 = vadd.f32 %v5247, %v5493
        %v5554 = vadd.f32 %v5248, %v5496
        %v5555 = vadd.f32 %v5249, %v5501
        %v5556 = vadd.f32 %v5250, %v5504
        %v5557 = vadd.f32 %v5251, %v5509
        %v5558 = vadd.f32 %v5252, %v5512
        %v5559 = vadd.f32 %v5253, %v5517
        %v5560 = vadd.f32 %v5254, %v5520
        %v5561 = vadd.f32 %v5255, %v5525
        %v5562 = vadd.f32 %v5256, %v5528
        %v5563 = vld [vmem:[%s5257 + $0x1] sm:$0xff]
        %v5564 = vld [vmem:[%s5257 + $0x9] sm:$0xff]
        %v5565 = vld [vmem:[%s5257 + $0x19] sm:$0xff]
        %v5566 = vld [vmem:[%s5257 + $0x21] sm:$0xff]
        %v5567 = vld [vmem:[%s5257 + $0x31] sm:$0xff]
        %v5568 = vld [vmem:[%s5257 + $0x39] sm:$0xff]
        %v5569 = vld [vmem:[%s5257 + $0x49] sm:$0xff]
        %v5570 = vld [vmem:[%s5257 + $0x51] sm:$0xff]
        %v5571 = vld [vmem:[%s5257 + $0x61] sm:$0xff]
        %v5572 = vld [vmem:[%s5257 + $0x69] sm:$0xff]
        %v5573 = vld [vmem:[%s5257 + $0x79] sm:$0xff]
        %v5574 = vld [vmem:[%s5257 + $0x81] sm:$0xff]
        %v5575 = vld [vmem:[%s5257 + $0x91] sm:$0xff]
        %v5576 = vld [vmem:[%s5257 + $0x99] sm:$0xff]
        %v5577 = vld [vmem:[%s5257 + $0xa9] sm:$0xff]
        %v5578 = vld [vmem:[%s5257 + $0xb1] sm:$0xff]
        %v5579 = vld [vmem:[%s5257 + $0xc1] sm:$0xff]
        %v5580 = vld [vmem:[%s5257 + $0xc9] sm:$0xff]
        %v5581 = vld [vmem:[%s5257 + $0xd9] sm:$0xff]
        %v5582 = vld [vmem:[%s5257 + $0xe1] sm:$0xff]
        %v5583 = vld [vmem:[%s5257 + $0xf1] sm:$0xff]
        %v5584 = vld [vmem:[%s5257 + $0xf9] sm:$0xff]
        %v5585 = vld [vmem:[%s5257 + $0x109] sm:$0xff]
        %v5586 = vld [vmem:[%s5257 + $0x111] sm:$0xff]
        %v5587 = vld [vmem:[%s5257 + $0x121] sm:$0xff]
        %v5588 = vld [vmem:[%s5257 + $0x129] sm:$0xff]
        %v5589 = vld [vmem:[%s5257 + $0x139] sm:$0xff]
        %v5590 = vld [vmem:[%s5257 + $0x141] sm:$0xff]
        %v5591 = vld [vmem:[%s5257 + $0x151] sm:$0xff]
        %v5592 = vld [vmem:[%s5257 + $0x159] sm:$0xff]
        %v5593 = vld [vmem:[%s5257 + $0x169] sm:$0xff]
        %v5594 = vld [vmem:[%s5257 + $0x171] sm:$0xff]
        %v5595 = vpack.c.bf16 %v5564, %v5563
        %v5596 = vpack.c.bf16 %v5566, %v5565
        %v5597 = vpack.c.bf16 %v5568, %v5567
        %v5598 = vpack.c.bf16 %v5570, %v5569
        %v5599 = vpack.c.bf16 %v5572, %v5571
        %v5600 = vpack.c.bf16 %v5574, %v5573
        %v5601 = vpack.c.bf16 %v5576, %v5575
        %v5602 = vpack.c.bf16 %v5578, %v5577
        %v5603 = vpack.c.bf16 %v5580, %v5579
        %v5604 = vpack.c.bf16 %v5582, %v5581
        %v5605 = vpack.c.bf16 %v5584, %v5583
        %v5606 = vpack.c.bf16 %v5586, %v5585
        %v5607 = vpack.c.bf16 %v5588, %v5587
        %v5608 = vpack.c.bf16 %v5590, %v5589
        %v5609 = vpack.c.bf16 %v5592, %v5591
        %v5610 = vpack.c.bf16 %v5594, %v5593
        %v5611 = vld [vmem:[#allocation8 + $0x1c0] sm:$0xf]
        %v5612 = vld [vmem:[#allocation8 + $0x1c4] sm:$0xf]
        %v5613 = vld [vmem:[#allocation8 + $0x1c8] sm:$0xf]
        %v5614 = vld [vmem:[#allocation8 + $0x1cc] sm:$0xf]
        %v5615 = vld [vmem:[#allocation8 + $0x1d0] sm:$0xf]
        %v5616 = vld [vmem:[#allocation8 + $0x1d4] sm:$0xf]
        %v5617 = vld [vmem:[#allocation8 + $0x1d8] sm:$0xf]
        %v5618 = vld [vmem:[#allocation8 + $0x1dc] sm:$0xf]
        %v5619 = vld [vmem:[#allocation8 + $0x1e0] sm:$0xf]
        %v5620 = vld [vmem:[#allocation8 + $0x1e4] sm:$0xf]
        %v5621 = vld [vmem:[#allocation8 + $0x1e8] sm:$0xf]
        %v5622 = vld [vmem:[#allocation8 + $0x1ec] sm:$0xf]
        %v5623 = vld [vmem:[#allocation8 + $0x1f0] sm:$0xf]
        %v5624 = vld [vmem:[#allocation8 + $0x1f4] sm:$0xf]
        %v5625 = vld [vmem:[#allocation8 + $0x1f8] sm:$0xf]
        %v5626 = vld [vmem:[#allocation8 + $0x1fc] sm:$0xf]
        %v5643 = vunpack.c.l.b16 %v5611
        %v5644 = vunpack.c.l.b16 %v5612
        %v5645 = vunpack.c.l.b16 %v5613
        %v5646 = vunpack.c.l.b16 %v5614
        %v5647 = vunpack.c.l.b16 %v5615
        %v5648 = vunpack.c.l.b16 %v5616
        %v5649 = vunpack.c.l.b16 %v5617
        %v5650 = vunpack.c.l.b16 %v5618
        %v5651 = vunpack.c.l.b16 %v5619
        %v5652 = vunpack.c.l.b16 %v5620
        %v5653 = vunpack.c.l.b16 %v5621
        %v5654 = vunpack.c.l.b16 %v5622
        %v5655 = vunpack.c.l.b16 %v5623
        %v5656 = vunpack.c.l.b16 %v5624
        %v5657 = vunpack.c.l.b16 %v5625
        %v5658 = vunpack.c.l.b16 %v5626
        %v5659 = vpack.c.b16 %v5644, %v5643
        %v5660 = vpack.c.b16 %v5646, %v5645
        %v5661 = vpack.c.b16 %v5648, %v5647
        %v5662 = vpack.c.b16 %v5650, %v5649
        %v5663 = vpack.c.b16 %v5652, %v5651
        %v5664 = vpack.c.b16 %v5654, %v5653
        %v5665 = vpack.c.b16 %v5656, %v5655
        %v5666 = vpack.c.b16 %v5658, %v5657
        %5675 = vmatprep.subr.bf16.mxu0 0
        %5676 = vmatpush1.bf16.msra.mxu0 %v5659
        %5677 = vmatprep.subr.bf16.mxu0 0
        %5678 = vmatpush1.bf16.msra.mxu0 %v5660
        %5679 = vmatprep.subr.bf16.mxu0 0
        %5680 = vmatpush1.bf16.msra.mxu0 %v5661
        %5681 = vmatprep.subr.bf16.mxu0 0
        %5682 = vmatpush1.bf16.msra.mxu0 %v5662
        %5683 = vmatprep.subr.bf16.mxu0 0
        %5684 = vmatpush1.bf16.msra.mxu0 %v5663
        %5685 = vmatprep.subr.bf16.mxu0 0
        %5686 = vmatpush1.bf16.msra.mxu0 %v5664
        %5687 = vmatprep.subr.bf16.mxu0 0
        %5688 = vmatpush1.bf16.msra.mxu0 %v5665
        %5689 = vmatprep.subr.bf16.mxu0 0
        %5690 = vmatpush1.bf16.msra.mxu0 %v5666
        %5691 = vmatprep.subr.bf16.mxu0 0
        %5692 = vmatpush1.bf16.msra.mxu0 0
        %5693 = vmatprep.subr.bf16.mxu0 0
        %5694 = vmatpush1.bf16.msra.mxu0 0
        %5695 = vmatprep.subr.bf16.mxu0 0
        %5696 = vmatpush1.bf16.msra.mxu0 0
        %5697 = vmatprep.subr.bf16.mxu0 0
        %5698 = vmatpush1.bf16.msra.mxu0 0
        %5699 = vmatprep.subr.bf16.mxu0 0
        %5700 = vmatpush1.bf16.msra.mxu0 0
        %5701 = vmatprep.subr.bf16.mxu0 0
        %5702 = vmatpush1.bf16.msra.mxu0 0
        %5703 = vmatprep.subr.bf16.mxu0 0
        %5704 = vmatpush1.bf16.msra.mxu0 0
        %5705 = vmatprep.subr.bf16.mxu0 0
        %5706 = vmatpush1.bf16.msra.mxu0 0
        %5707 = vmatprep.mubr.bf16.mxu0 0
        %5708 = vmatmul.mubr.bf16.gmra.mrb[0].mxu0 %v5595
        %v5709 = vpop.f32.mrb[0].mxu0
        %v5710 = vadd.f32 0.0, %v5709
        %v5711 = vpop.f32.mrb[0].mxu0
        %v5712 = vpop.f32.mrb[0].mxu0
        %v5713 = vadd.f32 0.0, %v5712
        %v5714 = vpop.f32.mrb[0].mxu0
        %5715 = vmatprep.mubr.bf16.mxu0 0
        %5716 = vmatmul.mubr.bf16.gmra.mrb[0].mxu0 %v5596
        %v5717 = vpop.f32.mrb[0].mxu0
        %v5718 = vadd.f32 0.0, %v5717
        %v5719 = vpop.f32.mrb[0].mxu0
        %v5720 = vpop.f32.mrb[0].mxu0
        %v5721 = vadd.f32 0.0, %v5720
        %v5722 = vpop.f32.mrb[0].mxu0
        %5723 = vmatprep.mubr.bf16.mxu0 0
        %5724 = vmatmul.mubr.bf16.gmra.mrb[0].mxu0 %v5597
        %v5725 = vpop.f32.mrb[0].mxu0
        %v5726 = vadd.f32 0.0, %v5725
        %v5727 = vpop.f32.mrb[0].mxu0
        %v5728 = vpop.f32.mrb[0].mxu0
        %v5729 = vadd.f32 0.0, %v5728
        %v5730 = vpop.f32.mrb[0].mxu0
        %5731 = vmatprep.mubr.bf16.mxu0 0
        %5732 = vmatmul.mubr.bf16.gmra.mrb[0].mxu0 %v5598
        %v5733 = vpop.f32.mrb[0].mxu0
        %v5734 = vadd.f32 0.0, %v5733
        %v5735 = vpop.f32.mrb[0].mxu0
        %v5736 = vpop.f32.mrb[0].mxu0
        %v5737 = vadd.f32 0.0, %v5736
        %v5738 = vpop.f32.mrb[0].mxu0
        %5739 = vmatprep.mubr.bf16.mxu0 0
        %5740 = vmatmul.mubr.bf16.gmra.mrb[0].mxu0 %v5599
        %v5741 = vpop.f32.mrb[0].mxu0
        %v5742 = vadd.f32 0.0, %v5741
        %v5743 = vpop.f32.mrb[0].mxu0
        %v5744 = vpop.f32.mrb[0].mxu0
        %v5745 = vadd.f32 0.0, %v5744
        %v5746 = vpop.f32.mrb[0].mxu0
        %5747 = vmatprep.mubr.bf16.mxu0 0
        %5748 = vmatmul.mubr.bf16.gmra.mrb[0].mxu0 %v5600
        %v5749 = vpop.f32.mrb[0].mxu0
        %v5750 = vadd.f32 0.0, %v5749
        %v5751 = vpop.f32.mrb[0].mxu0
        %v5752 = vpop.f32.mrb[0].mxu0
        %v5753 = vadd.f32 0.0, %v5752
        %v5754 = vpop.f32.mrb[0].mxu0
        %5755 = vmatprep.mubr.bf16.mxu0 0
        %5756 = vmatmul.mubr.bf16.gmra.mrb[0].mxu0 %v5601
        %v5757 = vpop.f32.mrb[0].mxu0
        %v5758 = vadd.f32 0.0, %v5757
        %v5759 = vpop.f32.mrb[0].mxu0
        %v5760 = vpop.f32.mrb[0].mxu0
        %v5761 = vadd.f32 0.0, %v5760
        %v5762 = vpop.f32.mrb[0].mxu0
        %5763 = vmatprep.mubr.bf16.mxu0 0
        %5764 = vmatmul.mubr.bf16.gmra.mrb[0].mxu0 %v5602
        %v5765 = vpop.f32.mrb[0].mxu0
        %v5766 = vadd.f32 0.0, %v5765
        %v5767 = vpop.f32.mrb[0].mxu0
        %v5768 = vpop.f32.mrb[0].mxu0
        %v5769 = vadd.f32 0.0, %v5768
        %v5770 = vpop.f32.mrb[0].mxu0
        %5771 = vmatprep.mubr.bf16.mxu0 0
        %5772 = vmatmul.mubr.bf16.gmra.mrb[0].mxu0 %v5603
        %v5773 = vpop.f32.mrb[0].mxu0
        %v5774 = vadd.f32 0.0, %v5773
        %v5775 = vpop.f32.mrb[0].mxu0
        %v5776 = vpop.f32.mrb[0].mxu0
        %v5777 = vadd.f32 0.0, %v5776
        %v5778 = vpop.f32.mrb[0].mxu0
        %5779 = vmatprep.mubr.bf16.mxu0 0
        %5780 = vmatmul.mubr.bf16.gmra.mrb[0].mxu0 %v5604
        %v5781 = vpop.f32.mrb[0].mxu0
        %v5782 = vadd.f32 0.0, %v5781
        %v5783 = vpop.f32.mrb[0].mxu0
        %v5784 = vpop.f32.mrb[0].mxu0
        %v5785 = vadd.f32 0.0, %v5784
        %v5786 = vpop.f32.mrb[0].mxu0
        %5787 = vmatprep.mubr.bf16.mxu0 0
        %5788 = vmatmul.mubr.bf16.gmra.mrb[0].mxu0 %v5605
        %v5789 = vpop.f32.mrb[0].mxu0
        %v5790 = vadd.f32 0.0, %v5789
        %v5791 = vpop.f32.mrb[0].mxu0
        %v5792 = vpop.f32.mrb[0].mxu0
        %v5793 = vadd.f32 0.0, %v5792
        %v5794 = vpop.f32.mrb[0].mxu0
        %5795 = vmatprep.mubr.bf16.mxu0 0
        %5796 = vmatmul.mubr.bf16.gmra.mrb[0].mxu0 %v5606
        %v5797 = vpop.f32.mrb[0].mxu0
        %v5798 = vadd.f32 0.0, %v5797
        %v5799 = vpop.f32.mrb[0].mxu0
        %v5800 = vpop.f32.mrb[0].mxu0
        %v5801 = vadd.f32 0.0, %v5800
        %v5802 = vpop.f32.mrb[0].mxu0
        %5803 = vmatprep.mubr.bf16.mxu0 0
        %5804 = vmatmul.mubr.bf16.gmra.mrb[0].mxu0 %v5607
        %v5805 = vpop.f32.mrb[0].mxu0
        %v5806 = vadd.f32 0.0, %v5805
        %v5807 = vpop.f32.mrb[0].mxu0
        %v5808 = vpop.f32.mrb[0].mxu0
        %v5809 = vadd.f32 0.0, %v5808
        %v5810 = vpop.f32.mrb[0].mxu0
        %5811 = vmatprep.mubr.bf16.mxu0 0
        %5812 = vmatmul.mubr.bf16.gmra.mrb[0].mxu0 %v5608
        %v5813 = vpop.f32.mrb[0].mxu0
        %v5814 = vadd.f32 0.0, %v5813
        %v5815 = vpop.f32.mrb[0].mxu0
        %v5816 = vpop.f32.mrb[0].mxu0
        %v5817 = vadd.f32 0.0, %v5816
        %v5818 = vpop.f32.mrb[0].mxu0
        %5819 = vmatprep.mubr.bf16.mxu0 0
        %5820 = vmatmul.mubr.bf16.gmra.mrb[0].mxu0 %v5609
        %v5821 = vpop.f32.mrb[0].mxu0
        %v5822 = vadd.f32 0.0, %v5821
        %v5823 = vpop.f32.mrb[0].mxu0
        %v5824 = vpop.f32.mrb[0].mxu0
        %v5825 = vadd.f32 0.0, %v5824
        %v5826 = vpop.f32.mrb[0].mxu0
        %5827 = vmatprep.mubr.bf16.mxu0 0
        %5828 = vmatmul.mubr.bf16.gmra.mrb[0].mxu0 %v5610
        %v5829 = vpop.f32.mrb[0].mxu0
        %v5830 = vadd.f32 0.0, %v5829
        %v5831 = vpop.f32.mrb[0].mxu0
        %v5832 = vpop.f32.mrb[0].mxu0
        %v5833 = vadd.f32 0.0, %v5832
        %v5834 = vpop.f32.mrb[0].mxu0
        %5835 = vdwg.mxu0
        %v5836 = vadd.f32 %v5531, %v5710
        %v5837 = vadd.f32 %v5532, %v5713
        %v5838 = vadd.f32 %v5533, %v5718
        %v5839 = vadd.f32 %v5534, %v5721
        %v5840 = vadd.f32 %v5535, %v5726
        %v5841 = vadd.f32 %v5536, %v5729
        %v5842 = vadd.f32 %v5537, %v5734
        %v5843 = vadd.f32 %v5538, %v5737
        %v5844 = vadd.f32 %v5539, %v5742
        %v5845 = vadd.f32 %v5540, %v5745
        %v5846 = vadd.f32 %v5541, %v5750
        %v5847 = vadd.f32 %v5542, %v5753
        %v5848 = vadd.f32 %v5543, %v5758
        %v5849 = vadd.f32 %v5544, %v5761
        %v5850 = vadd.f32 %v5545, %v5766
        %v5851 = vadd.f32 %v5546, %v5769
        %v5852 = vadd.f32 %v5547, %v5774
        %v5853 = vadd.f32 %v5548, %v5777
        %v5854 = vadd.f32 %v5549, %v5782
        %v5855 = vadd.f32 %v5550, %v5785
        %v5856 = vadd.f32 %v5551, %v5790
        %v5857 = vadd.f32 %v5552, %v5793
        %v5858 = vadd.f32 %v5553, %v5798
        %v5859 = vadd.f32 %v5554, %v5801
        %v5860 = vadd.f32 %v5555, %v5806
        %v5861 = vadd.f32 %v5556, %v5809
        %v5862 = vadd.f32 %v5557, %v5814
        %v5863 = vadd.f32 %v5558, %v5817
        %v5864 = vadd.f32 %v5559, %v5822
        %v5865 = vadd.f32 %v5560, %v5825
        %v5866 = vadd.f32 %v5561, %v5830
        %v5867 = vadd.f32 %v5562, %v5833
        %v5868 = vld [vmem:[%s5257 + $0x2] sm:$0xff]
        %v5869 = vld [vmem:[%s5257 + $0xa] sm:$0xff]
        %v5870 = vld [vmem:[%s5257 + $0x1a] sm:$0xff]
        %v5871 = vld [vmem:[%s5257 + $0x22] sm:$0xff]
        %v5872 = vld [vmem:[%s5257 + $0x32] sm:$0xff]
        %v5873 = vld [vmem:[%s5257 + $0x3a] sm:$0xff]
        %v5874 = vld [vmem:[%s5257 + $0x4a] sm:$0xff]
        %v5875 = vld [vmem:[%s5257 + $0x52] sm:$0xff]
        %v5876 = vld [vmem:[%s5257 + $0x62] sm:$0xff]
        %v5877 = vld [vmem:[%s5257 + $0x6a] sm:$0xff]
        %v5878 = vld [vmem:[%s5257 + $0x7a] sm:$0xff]
        %v5879 = vld [vmem:[%s5257 + $0x82] sm:$0xff]
        %v5880 = vld [vmem:[%s5257 + $0x92] sm:$0xff]
        %v5881 = vld [vmem:[%s5257 + $0x9a] sm:$0xff]
        %v5882 = vld [vmem:[%s5257 + $0xaa] sm:$0xff]
        %v5883 = vld [vmem:[%s5257 + $0xb2] sm:$0xff]
        %v5884 = vld [vmem:[%s5257 + $0xc2] sm:$0xff]
        %v5885 = vld [vmem:[%s5257 + $0xca] sm:$0xff]
        %v5886 = vld [vmem:[%s5257 + $0xda] sm:$0xff]
        %v5887 = vld [vmem:[%s5257 + $0xe2] sm:$0xff]
        %v5888 = vld [vmem:[%s5257 + $0xf2] sm:$0xff]
        %v5889 = vld [vmem:[%s5257 + $0xfa] sm:$0xff]
        %v5890 = vld [vmem:[%s5257 + $0x10a] sm:$0xff]
        %v5891 = vld [vmem:[%s5257 + $0x112] sm:$0xff]
        %v5892 = vld [vmem:[%s5257 + $0x122] sm:$0xff]
        %v5893 = vld [vmem:[%s5257 + $0x12a] sm:$0xff]
        %v5894 = vld [vmem:[%s5257 + $0x13a] sm:$0xff]
        %v5895 = vld [vmem:[%s5257 + $0x142] sm:$0xff]
        %v5896 = vld [vmem:[%s5257 + $0x152] sm:$0xff]
        %v5897 = vld [vmem:[%s5257 + $0x15a] sm:$0xff]
        %v5898 = vld [vmem:[%s5257 + $0x16a] sm:$0xff]
        %v5899 = vld [vmem:[%s5257 + $0x172] sm:$0xff]
        %v5900 = vpack.c.bf16 %v5869, %v5868
        %v5901 = vpack.c.bf16 %v5871, %v5870
        %v5902 = vpack.c.bf16 %v5873, %v5872
        %v5903 = vpack.c.bf16 %v5875, %v5874
        %v5904 = vpack.c.bf16 %v5877, %v5876
        %v5905 = vpack.c.bf16 %v5879, %v5878
        %v5906 = vpack.c.bf16 %v5881, %v5880
        %v5907 = vpack.c.bf16 %v5883, %v5882
        %v5908 = vpack.c.bf16 %v5885, %v5884
        %v5909 = vpack.c.bf16 %v5887, %v5886
        %v5910 = vpack.c.bf16 %v5889, %v5888
        %v5911 = vpack.c.bf16 %v5891, %v5890
        %v5912 = vpack.c.bf16 %v5893, %v5892
        %v5913 = vpack.c.bf16 %v5895, %v5894
        %v5914 = vpack.c.bf16 %v5897, %v5896
        %v5915 = vpack.c.bf16 %v5899, %v5898
        %v5916 = vld [vmem:[#allocation8 + $0x200] sm:$0xf]
        %v5917 = vld [vmem:[#allocation8 + $0x204] sm:$0xf]
        %v5918 = vld [vmem:[#allocation8 + $0x208] sm:$0xf]
        %v5919 = vld [vmem:[#allocation8 + $0x20c] sm:$0xf]
        %v5920 = vld [vmem:[#allocation8 + $0x210] sm:$0xf]
        %v5921 = vld [vmem:[#allocation8 + $0x214] sm:$0xf]
        %v5922 = vld [vmem:[#allocation8 + $0x218] sm:$0xf]
        %v5923 = vld [vmem:[#allocation8 + $0x21c] sm:$0xf]
        %v5924 = vld [vmem:[#allocation8 + $0x220] sm:$0xf]
        %v5925 = vld [vmem:[#allocation8 + $0x224] sm:$0xf]
        %v5926 = vld [vmem:[#allocation8 + $0x228] sm:$0xf]
        %v5927 = vld [vmem:[#allocation8 + $0x22c] sm:$0xf]
        %v5928 = vld [vmem:[#allocation8 + $0x230] sm:$0xf]
        %v5929 = vld [vmem:[#allocation8 + $0x234] sm:$0xf]
        %v5930 = vld [vmem:[#allocation8 + $0x238] sm:$0xf]
        %v5931 = vld [vmem:[#allocation8 + $0x23c] sm:$0xf]
        %v5948 = vunpack.c.l.b16 %v5916
        %v5949 = vunpack.c.l.b16 %v5917
        %v5950 = vunpack.c.l.b16 %v5918
        %v5951 = vunpack.c.l.b16 %v5919
        %v5952 = vunpack.c.l.b16 %v5920
        %v5953 = vunpack.c.l.b16 %v5921
        %v5954 = vunpack.c.l.b16 %v5922
        %v5955 = vunpack.c.l.b16 %v5923
        %v5956 = vunpack.c.l.b16 %v5924
        %v5957 = vunpack.c.l.b16 %v5925
        %v5958 = vunpack.c.l.b16 %v5926
        %v5959 = vunpack.c.l.b16 %v5927
        %v5960 = vunpack.c.l.b16 %v5928
        %v5961 = vunpack.c.l.b16 %v5929
        %v5962 = vunpack.c.l.b16 %v5930
        %v5963 = vunpack.c.l.b16 %v5931
        %v5964 = vpack.c.b16 %v5949, %v5948
        %v5965 = vpack.c.b16 %v5951, %v5950
        %v5966 = vpack.c.b16 %v5953, %v5952
        %v5967 = vpack.c.b16 %v5955, %v5954
        %v5968 = vpack.c.b16 %v5957, %v5956
        %v5969 = vpack.c.b16 %v5959, %v5958
        %v5970 = vpack.c.b16 %v5961, %v5960
        %v5971 = vpack.c.b16 %v5963, %v5962
        %5980 = vmatprep.subr.bf16.mxu0 0
        %5981 = vmatpush1.bf16.msra.mxu0 %v5964
        %5982 = vmatprep.subr.bf16.mxu0 0
        %5983 = vmatpush1.bf16.msra.mxu0 %v5965
        %5984 = vmatprep.subr.bf16.mxu0 0
        %5985 = vmatpush1.bf16.msra.mxu0 %v5966
        %5986 = vmatprep.subr.bf16.mxu0 0
        %5987 = vmatpush1.bf16.msra.mxu0 %v5967
        %5988 = vmatprep.subr.bf16.mxu0 0
        %5989 = vmatpush1.bf16.msra.mxu0 %v5968
        %5990 = vmatprep.subr.bf16.mxu0 0
        %5991 = vmatpush1.bf16.msra.mxu0 %v5969
        %5992 = vmatprep.subr.bf16.mxu0 0
        %5993 = vmatpush1.bf16.msra.mxu0 %v5970
        %5994 = vmatprep.subr.bf16.mxu0 0
        %5995 = vmatpush1.bf16.msra.mxu0 %v5971
        %5996 = vmatprep.subr.bf16.mxu0 0
        %5997 = vmatpush1.bf16.msra.mxu0 0
        %5998 = vmatprep.subr.bf16.mxu0 0
        %5999 = vmatpush1.bf16.msra.mxu0 0
        %6000 = vmatprep.subr.bf16.mxu0 0
        %6001 = vmatpush1.bf16.msra.mxu0 0
        %6002 = vmatprep.subr.bf16.mxu0 0
        %6003 = vmatpush1.bf16.msra.mxu0 0
        %6004 = vmatprep.subr.bf16.mxu0 0
        %6005 = vmatpush1.bf16.msra.mxu0 0
        %6006 = vmatprep.subr.bf16.mxu0 0
        %6007 = vmatpush1.bf16.msra.mxu0 0
        %6008 = vmatprep.subr.bf16.mxu0 0
        %6009 = vmatpush1.bf16.msra.mxu0 0
        %6010 = vmatprep.subr.bf16.mxu0 0
        %6011 = vmatpush1.bf16.msra.mxu0 0
        %6012 = vmatprep.mubr.bf16.mxu0 0
        %6013 = vmatmul.mubr.bf16.gmra.mrb[0].mxu0 %v5900
        %v6014 = vpop.f32.mrb[0].mxu0
        %v6015 = vadd.f32 0.0, %v6014
        %v6016 = vpop.f32.mrb[0].mxu0
        %v6017 = vpop.f32.mrb[0].mxu0
        %v6018 = vadd.f32 0.0, %v6017
        %v6019 = vpop.f32.mrb[0].mxu0
        %6020 = vmatprep.mubr.bf16.mxu0 0
        %6021 = vmatmul.mubr.bf16.gmra.mrb[0].mxu0 %v5901
        %v6022 = vpop.f32.mrb[0].mxu0
        %v6023 = vadd.f32 0.0, %v6022
        %v6024 = vpop.f32.mrb[0].mxu0
        %v6025 = vpop.f32.mrb[0].mxu0
        %v6026 = vadd.f32 0.0, %v6025
        %v6027 = vpop.f32.mrb[0].mxu0
        %6028 = vmatprep.mubr.bf16.mxu0 0
        %6029 = vmatmul.mubr.bf16.gmra.mrb[0].mxu0 %v5902
        %v6030 = vpop.f32.mrb[0].mxu0
        %v6031 = vadd.f32 0.0, %v6030
        %v6032 = vpop.f32.mrb[0].mxu0
        %v6033 = vpop.f32.mrb[0].mxu0
        %v6034 = vadd.f32 0.0, %v6033
        %v6035 = vpop.f32.mrb[0].mxu0
        %6036 = vmatprep.mubr.bf16.mxu0 0
        %6037 = vmatmul.mubr.bf16.gmra.mrb[0].mxu0 %v5903
        %v6038 = vpop.f32.mrb[0].mxu0
        %v6039 = vadd.f32 0.0, %v6038
        %v6040 = vpop.f32.mrb[0].mxu0
        %v6041 = vpop.f32.mrb[0].mxu0
        %v6042 = vadd.f32 0.0, %v6041
        %v6043 = vpop.f32.mrb[0].mxu0
        %6044 = vmatprep.mubr.bf16.mxu0 0
        %6045 = vmatmul.mubr.bf16.gmra.mrb[0].mxu0 %v5904
        %v6046 = vpop.f32.mrb[0].mxu0
        %v6047 = vadd.f32 0.0, %v6046
        %v6048 = vpop.f32.mrb[0].mxu0
        %v6049 = vpop.f32.mrb[0].mxu0
        %v6050 = vadd.f32 0.0, %v6049
        %v6051 = vpop.f32.mrb[0].mxu0
        %6052 = vmatprep.mubr.bf16.mxu0 0
        %6053 = vmatmul.mubr.bf16.gmra.mrb[0].mxu0 %v5905
        %v6054 = vpop.f32.mrb[0].mxu0
        %v6055 = vadd.f32 0.0, %v6054
        %v6056 = vpop.f32.mrb[0].mxu0
        %v6057 = vpop.f32.mrb[0].mxu0
        %v6058 = vadd.f32 0.0, %v6057
        %v6059 = vpop.f32.mrb[0].mxu0
        %6060 = vmatprep.mubr.bf16.mxu0 0
        %6061 = vmatmul.mubr.bf16.gmra.mrb[0].mxu0 %v5906
        %v6062 = vpop.f32.mrb[0].mxu0
        %v6063 = vadd.f32 0.0, %v6062
        %v6064 = vpop.f32.mrb[0].mxu0
        %v6065 = vpop.f32.mrb[0].mxu0
        %v6066 = vadd.f32 0.0, %v6065
        %v6067 = vpop.f32.mrb[0].mxu0
        %6068 = vmatprep.mubr.bf16.mxu0 0
        %6069 = vmatmul.mubr.bf16.gmra.mrb[0].mxu0 %v5907
        %v6070 = vpop.f32.mrb[0].mxu0
        %v6071 = vadd.f32 0.0, %v6070
        %v6072 = vpop.f32.mrb[0].mxu0
        %v6073 = vpop.f32.mrb[0].mxu0
        %v6074 = vadd.f32 0.0, %v6073
        %v6075 = vpop.f32.mrb[0].mxu0
        %6076 = vmatprep.mubr.bf16.mxu0 0
        %6077 = vmatmul.mubr.bf16.gmra.mrb[0].mxu0 %v5908
        %v6078 = vpop.f32.mrb[0].mxu0
        %v6079 = vadd.f32 0.0, %v6078
        %v6080 = vpop.f32.mrb[0].mxu0
        %v6081 = vpop.f32.mrb[0].mxu0
        %v6082 = vadd.f32 0.0, %v6081
        %v6083 = vpop.f32.mrb[0].mxu0
        %6084 = vmatprep.mubr.bf16.mxu0 0
        %6085 = vmatmul.mubr.bf16.gmra.mrb[0].mxu0 %v5909
        %v6086 = vpop.f32.mrb[0].mxu0
        %v6087 = vadd.f32 0.0, %v6086
        %v6088 = vpop.f32.mrb[0].mxu0
        %v6089 = vpop.f32.mrb[0].mxu0
        %v6090 = vadd.f32 0.0, %v6089
        %v6091 = vpop.f32.mrb[0].mxu0
        %6092 = vmatprep.mubr.bf16.mxu0 0
        %6093 = vmatmul.mubr.bf16.gmra.mrb[0].mxu0 %v5910
        %v6094 = vpop.f32.mrb[0].mxu0
        %v6095 = vadd.f32 0.0, %v6094
        %v6096 = vpop.f32.mrb[0].mxu0
        %v6097 = vpop.f32.mrb[0].mxu0
        %v6098 = vadd.f32 0.0, %v6097
        %v6099 = vpop.f32.mrb[0].mxu0
        %6100 = vmatprep.mubr.bf16.mxu0 0
        %6101 = vmatmul.mubr.bf16.gmra.mrb[0].mxu0 %v5911
        %v6102 = vpop.f32.mrb[0].mxu0
        %v6103 = vadd.f32 0.0, %v6102
        %v6104 = vpop.f32.mrb[0].mxu0
        %v6105 = vpop.f32.mrb[0].mxu0
        %v6106 = vadd.f32 0.0, %v6105
        %v6107 = vpop.f32.mrb[0].mxu0
        %6108 = vmatprep.mubr.bf16.mxu0 0
        %6109 = vmatmul.mubr.bf16.gmra.mrb[0].mxu0 %v5912
        %v6110 = vpop.f32.mrb[0].mxu0
        %v6111 = vadd.f32 0.0, %v6110
        %v6112 = vpop.f32.mrb[0].mxu0
        %v6113 = vpop.f32.mrb[0].mxu0
        %v6114 = vadd.f32 0.0, %v6113
        %v6115 = vpop.f32.mrb[0].mxu0
        %6116 = vmatprep.mubr.bf16.mxu0 0
        %6117 = vmatmul.mubr.bf16.gmra.mrb[0].mxu0 %v5913
        %v6118 = vpop.f32.mrb[0].mxu0
        %v6119 = vadd.f32 0.0, %v6118
        %v6120 = vpop.f32.mrb[0].mxu0
        %v6121 = vpop.f32.mrb[0].mxu0
        %v6122 = vadd.f32 0.0, %v6121
        %v6123 = vpop.f32.mrb[0].mxu0
        %6124 = vmatprep.mubr.bf16.mxu0 0
        %6125 = vmatmul.mubr.bf16.gmra.mrb[0].mxu0 %v5914
        %v6126 = vpop.f32.mrb[0].mxu0
        %v6127 = vadd.f32 0.0, %v6126
        %v6128 = vpop.f32.mrb[0].mxu0
        %v6129 = vpop.f32.mrb[0].mxu0
        %v6130 = vadd.f32 0.0, %v6129
        %v6131 = vpop.f32.mrb[0].mxu0
        %6132 = vmatprep.mubr.bf16.mxu0 0
        %6133 = vmatmul.mubr.bf16.gmra.mrb[0].mxu0 %v5915
        %v6134 = vpop.f32.mrb[0].mxu0
        %v6135 = vadd.f32 0.0, %v6134
        %v6136 = vpop.f32.mrb[0].mxu0
        %v6137 = vpop.f32.mrb[0].mxu0
        %v6138 = vadd.f32 0.0, %v6137
        %v6139 = vpop.f32.mrb[0].mxu0
        %6140 = vdwg.mxu0
        %v6141 = vadd.f32 %v5836, %v6015
        %v6142 = vadd.f32 %v5837, %v6018
        %v6143 = vadd.f32 %v5838, %v6023
        %v6144 = vadd.f32 %v5839, %v6026
        %v6145 = vadd.f32 %v5840, %v6031
        %v6146 = vadd.f32 %v5841, %v6034
        %v6147 = vadd.f32 %v5842, %v6039
        %v6148 = vadd.f32 %v5843, %v6042
        %v6149 = vadd.f32 %v5844, %v6047
        %v6150 = vadd.f32 %v5845, %v6050
        %v6151 = vadd.f32 %v5846, %v6055
        %v6152 = vadd.f32 %v5847, %v6058
        %v6153 = vadd.f32 %v5848, %v6063
        %v6154 = vadd.f32 %v5849, %v6066
        %v6155 = vadd.f32 %v5850, %v6071
        %v6156 = vadd.f32 %v5851, %v6074
        %v6157 = vadd.f32 %v5852, %v6079
        %v6158 = vadd.f32 %v5853, %v6082
        %v6159 = vadd.f32 %v5854, %v6087
        %v6160 = vadd.f32 %v5855, %v6090
        %v6161 = vadd.f32 %v5856, %v6095
        %v6162 = vadd.f32 %v5857, %v6098
        %v6163 = vadd.f32 %v5858, %v6103
        %v6164 = vadd.f32 %v5859, %v6106
        %v6165 = vadd.f32 %v5860, %v6111
        %v6166 = vadd.f32 %v5861, %v6114
        %v6167 = vadd.f32 %v5862, %v6119
        %v6168 = vadd.f32 %v5863, %v6122
        %v6169 = vadd.f32 %v5864, %v6127
        %v6170 = vadd.f32 %v5865, %v6130
        %v6171 = vadd.f32 %v5866, %v6135
        %v6172 = vadd.f32 %v5867, %v6138
        %v6173 = vld [vmem:[%s5] sm:$0x1]
        %v6175 = vlaneseq
        %v6176 = vshrl.u32 %v6175, 7
        %v6177 = vsub.s32 0, %v6176
        %v6178 = vrot.slane %v6173, %v6177
        %v6180 = vmul.f32 %v6141, %v6178
        %v6181 = vmul.f32 %v6142, %v6178
        %v6182 = vmul.f32 %v6143, %v6178
        %v6183 = vmul.f32 %v6144, %v6178
        %v6184 = vmul.f32 %v6145, %v6178
        %v6185 = vmul.f32 %v6146, %v6178
        %v6186 = vmul.f32 %v6147, %v6178
        %v6187 = vmul.f32 %v6148, %v6178
        %v6188 = vmul.f32 %v6149, %v6178
        %v6189 = vmul.f32 %v6150, %v6178
        %v6190 = vmul.f32 %v6151, %v6178
        %v6191 = vmul.f32 %v6152, %v6178
        %v6192 = vmul.f32 %v6153, %v6178
        %v6193 = vmul.f32 %v6154, %v6178
        %v6194 = vmul.f32 %v6155, %v6178
        %v6195 = vmul.f32 %v6156, %v6178
        %v6196 = vmul.f32 %v6157, %v6178
        %v6197 = vmul.f32 %v6158, %v6178
        %v6198 = vmul.f32 %v6159, %v6178
        %v6199 = vmul.f32 %v6160, %v6178
        %v6200 = vmul.f32 %v6161, %v6178
        %v6201 = vmul.f32 %v6162, %v6178
        %v6202 = vmul.f32 %v6163, %v6178
        %v6203 = vmul.f32 %v6164, %v6178
        %v6204 = vmul.f32 %v6165, %v6178
        %v6205 = vmul.f32 %v6166, %v6178
        %v6206 = vmul.f32 %v6167, %v6178
        %v6207 = vmul.f32 %v6168, %v6178
        %v6208 = vmul.f32 %v6169, %v6178
        %v6209 = vmul.f32 %v6170, %v6178
        %v6210 = vmul.f32 %v6171, %v6178
        %v6211 = vmul.f32 %v6172, %v6178
        %v6212 = vld [vmem:[%s6] sm:$0x1]
        %v6214 = vlaneseq
        %v6215 = vshrl.u32 %v6214, 7
        %v6216 = vsub.s32 0, %v6215
        %v6217 = vrot.slane %v6212, %v6216
        %v6219 = vadd.f32 %v6180, %v6217
        %v6220 = vadd.f32 %v6181, %v6217
        %v6221 = vadd.f32 %v6182, %v6217
        %v6222 = vadd.f32 %v6183, %v6217
        %v6223 = vadd.f32 %v6184, %v6217
        %v6224 = vadd.f32 %v6185, %v6217
        %v6225 = vadd.f32 %v6186, %v6217
        %v6226 = vadd.f32 %v6187, %v6217
        %v6227 = vadd.f32 %v6188, %v6217
        %v6228 = vadd.f32 %v6189, %v6217
        %v6229 = vadd.f32 %v6190, %v6217
        %v6230 = vadd.f32 %v6191, %v6217
        %v6231 = vadd.f32 %v6192, %v6217
        %v6232 = vadd.f32 %v6193, %v6217
        %v6233 = vadd.f32 %v6194, %v6217
        %v6234 = vadd.f32 %v6195, %v6217
        %v6235 = vadd.f32 %v6196, %v6217
        %v6236 = vadd.f32 %v6197, %v6217
        %v6237 = vadd.f32 %v6198, %v6217
        %v6238 = vadd.f32 %v6199, %v6217
        %v6239 = vadd.f32 %v6200, %v6217
        %v6240 = vadd.f32 %v6201, %v6217
        %v6241 = vadd.f32 %v6202, %v6217
        %v6242 = vadd.f32 %v6203, %v6217
        %v6243 = vadd.f32 %v6204, %v6217
        %v6244 = vadd.f32 %v6205, %v6217
        %v6245 = vadd.f32 %v6206, %v6217
        %v6246 = vadd.f32 %v6207, %v6217
        %v6247 = vadd.f32 %v6208, %v6217
        %v6248 = vadd.f32 %v6209, %v6217
        %v6249 = vadd.f32 %v6210, %v6217
        %v6250 = vadd.f32 %v6211, %v6217
        %v6251 = vld [vmem:[%s370] sm:$0xff]
        %v6252 = vld [vmem:[%s370 + $0x8] sm:$0xff]
        %v6253 = vld [vmem:[%s370 + $0x10] sm:$0xff]
        %v6254 = vld [vmem:[%s370 + $0x18] sm:$0xff]
        %v6255 = vld [vmem:[%s370 + $0x20] sm:$0xff]
        %v6256 = vld [vmem:[%s370 + $0x28] sm:$0xff]
        %v6257 = vld [vmem:[%s370 + $0x30] sm:$0xff]
        %v6258 = vld [vmem:[%s370 + $0x38] sm:$0xff]
        %v6259 = vld [vmem:[%s370 + $0x40] sm:$0xff]
        %v6260 = vld [vmem:[%s370 + $0x48] sm:$0xff]
        %v6261 = vld [vmem:[%s370 + $0x50] sm:$0xff]
        %v6262 = vld [vmem:[%s370 + $0x58] sm:$0xff]
        %v6263 = vld [vmem:[%s370 + $0x60] sm:$0xff]
        %v6264 = vld [vmem:[%s370 + $0x68] sm:$0xff]
        %v6265 = vld [vmem:[%s370 + $0x70] sm:$0xff]
        %v6266 = vld [vmem:[%s370 + $0x78] sm:$0xff]
        %v6267 = vld [vmem:[%s370 + $0x80] sm:$0xff]
        %v6268 = vld [vmem:[%s370 + $0x88] sm:$0xff]
        %v6269 = vld [vmem:[%s370 + $0x90] sm:$0xff]
        %v6270 = vld [vmem:[%s370 + $0x98] sm:$0xff]
        %v6271 = vld [vmem:[%s370 + $0xa0] sm:$0xff]
        %v6272 = vld [vmem:[%s370 + $0xa8] sm:$0xff]
        %v6273 = vld [vmem:[%s370 + $0xb0] sm:$0xff]
        %v6274 = vld [vmem:[%s370 + $0xb8] sm:$0xff]
        %v6275 = vld [vmem:[%s370 + $0xc0] sm:$0xff]
        %v6276 = vld [vmem:[%s370 + $0xc8] sm:$0xff]
        %v6277 = vld [vmem:[%s370 + $0xd0] sm:$0xff]
        %v6278 = vld [vmem:[%s370 + $0xd8] sm:$0xff]
        %v6279 = vld [vmem:[%s370 + $0xe0] sm:$0xff]
        %v6280 = vld [vmem:[%s370 + $0xe8] sm:$0xff]
        %v6281 = vld [vmem:[%s370 + $0xf0] sm:$0xff]
        %v6282 = vld [vmem:[%s370 + $0xf8] sm:$0xff]
        %v6283 = vpack.c.bf16 %v6252, %v6251
        %v6284 = vpack.c.bf16 %v6254, %v6253
        %v6285 = vpack.c.bf16 %v6256, %v6255
        %v6286 = vpack.c.bf16 %v6258, %v6257
        %v6287 = vpack.c.bf16 %v6260, %v6259
        %v6288 = vpack.c.bf16 %v6262, %v6261
        %v6289 = vpack.c.bf16 %v6264, %v6263
        %v6290 = vpack.c.bf16 %v6266, %v6265
        %v6291 = vpack.c.bf16 %v6268, %v6267
        %v6292 = vpack.c.bf16 %v6270, %v6269
        %v6293 = vpack.c.bf16 %v6272, %v6271
        %v6294 = vpack.c.bf16 %v6274, %v6273
        %v6295 = vpack.c.bf16 %v6276, %v6275
        %v6296 = vpack.c.bf16 %v6278, %v6277
        %v6297 = vpack.c.bf16 %v6280, %v6279
        %v6298 = vpack.c.bf16 %v6282, %v6281
        %v6299 = vld [vmem:[#allocation9] sm:$0xf]
        %v6300 = vld [vmem:[#allocation9 + $0x4] sm:$0xf]
        %v6301 = vld [vmem:[#allocation9 + $0x8] sm:$0xf]
        %v6302 = vld [vmem:[#allocation9 + $0xc] sm:$0xf]
        %v6303 = vld [vmem:[#allocation9 + $0x10] sm:$0xf]
        %v6304 = vld [vmem:[#allocation9 + $0x14] sm:$0xf]
        %v6305 = vld [vmem:[#allocation9 + $0x18] sm:$0xf]
        %v6306 = vld [vmem:[#allocation9 + $0x1c] sm:$0xf]
        %v6307 = vld [vmem:[#allocation9 + $0x20] sm:$0xf]
        %v6308 = vld [vmem:[#allocation9 + $0x24] sm:$0xf]
        %v6309 = vld [vmem:[#allocation9 + $0x28] sm:$0xf]
        %v6310 = vld [vmem:[#allocation9 + $0x2c] sm:$0xf]
        %v6311 = vld [vmem:[#allocation9 + $0x30] sm:$0xf]
        %v6312 = vld [vmem:[#allocation9 + $0x34] sm:$0xf]
        %v6313 = vld [vmem:[#allocation9 + $0x38] sm:$0xf]
        %v6314 = vld [vmem:[#allocation9 + $0x3c] sm:$0xf]
        %v6331 = vunpack.c.l.b16 %v6299
        %v6332 = vunpack.c.l.b16 %v6300
        %v6333 = vunpack.c.l.b16 %v6301
        %v6334 = vunpack.c.l.b16 %v6302
        %v6335 = vunpack.c.l.b16 %v6303
        %v6336 = vunpack.c.l.b16 %v6304
        %v6337 = vunpack.c.l.b16 %v6305
        %v6338 = vunpack.c.l.b16 %v6306
        %v6339 = vunpack.c.l.b16 %v6307
        %v6340 = vunpack.c.l.b16 %v6308
        %v6341 = vunpack.c.l.b16 %v6309
        %v6342 = vunpack.c.l.b16 %v6310
        %v6343 = vunpack.c.l.b16 %v6311
        %v6344 = vunpack.c.l.b16 %v6312
        %v6345 = vunpack.c.l.b16 %v6313
        %v6346 = vunpack.c.l.b16 %v6314
        %v6347 = vpack.c.b16 %v6332, %v6331
        %v6348 = vpack.c.b16 %v6334, %v6333
        %v6349 = vpack.c.b16 %v6336, %v6335
        %v6350 = vpack.c.b16 %v6338, %v6337
        %v6351 = vpack.c.b16 %v6340, %v6339
        %v6352 = vpack.c.b16 %v6342, %v6341
        %v6353 = vpack.c.b16 %v6344, %v6343
        %v6354 = vpack.c.b16 %v6346, %v6345
        %6363 = vmatprep.subr.bf16.mxu0 0
        %6364 = vmatpush1.bf16.msra.mxu0 %v6347
        %6365 = vmatprep.subr.bf16.mxu0 0
        %6366 = vmatpush1.bf16.msra.mxu0 %v6348
        %6367 = vmatprep.subr.bf16.mxu0 0
        %6368 = vmatpush1.bf16.msra.mxu0 %v6349
        %6369 = vmatprep.subr.bf16.mxu0 0
        %6370 = vmatpush1.bf16.msra.mxu0 %v6350
        %6371 = vmatprep.subr.bf16.mxu0 0
        %6372 = vmatpush1.bf16.msra.mxu0 %v6351
        %6373 = vmatprep.subr.bf16.mxu0 0
        %6374 = vmatpush1.bf16.msra.mxu0 %v6352
        %6375 = vmatprep.subr.bf16.mxu0 0
        %6376 = vmatpush1.bf16.msra.mxu0 %v6353
        %6377 = vmatprep.subr.bf16.mxu0 0
        %6378 = vmatpush1.bf16.msra.mxu0 %v6354
        %6379 = vmatprep.subr.bf16.mxu0 0
        %6380 = vmatpush1.bf16.msra.mxu0 0
        %6381 = vmatprep.subr.bf16.mxu0 0
        %6382 = vmatpush1.bf16.msra.mxu0 0
        %6383 = vmatprep.subr.bf16.mxu0 0
        %6384 = vmatpush1.bf16.msra.mxu0 0
        %6385 = vmatprep.subr.bf16.mxu0 0
        %6386 = vmatpush1.bf16.msra.mxu0 0
        %6387 = vmatprep.subr.bf16.mxu0 0
        %6388 = vmatpush1.bf16.msra.mxu0 0
        %6389 = vmatprep.subr.bf16.mxu0 0
        %6390 = vmatpush1.bf16.msra.mxu0 0
        %6391 = vmatprep.subr.bf16.mxu0 0
        %6392 = vmatpush1.bf16.msra.mxu0 0
        %6393 = vmatprep.subr.bf16.mxu0 0
        %6394 = vmatpush1.bf16.msra.mxu0 0
        %6395 = vmatprep.mubr.bf16.mxu0 0
        %6396 = vmatmul.mubr.bf16.gmra.mrb[0].mxu0 %v6283
        %v6397 = vpop.f32.mrb[0].mxu0
        %v6398 = vadd.f32 0.0, %v6397
        %v6399 = vpop.f32.mrb[0].mxu0
        %v6400 = vpop.f32.mrb[0].mxu0
        %v6401 = vadd.f32 0.0, %v6400
        %v6402 = vpop.f32.mrb[0].mxu0
        %6403 = vmatprep.mubr.bf16.mxu0 0
        %6404 = vmatmul.mubr.bf16.gmra.mrb[0].mxu0 %v6284
        %v6405 = vpop.f32.mrb[0].mxu0
        %v6406 = vadd.f32 0.0, %v6405
        %v6407 = vpop.f32.mrb[0].mxu0
        %v6408 = vpop.f32.mrb[0].mxu0
        %v6409 = vadd.f32 0.0, %v6408
        %v6410 = vpop.f32.mrb[0].mxu0
        %6411 = vmatprep.mubr.bf16.mxu0 0
        %6412 = vmatmul.mubr.bf16.gmra.mrb[0].mxu0 %v6285
        %v6413 = vpop.f32.mrb[0].mxu0
        %v6414 = vadd.f32 0.0, %v6413
        %v6415 = vpop.f32.mrb[0].mxu0
        %v6416 = vpop.f32.mrb[0].mxu0
        %v6417 = vadd.f32 0.0, %v6416
        %v6418 = vpop.f32.mrb[0].mxu0
        %6419 = vmatprep.mubr.bf16.mxu0 0
        %6420 = vmatmul.mubr.bf16.gmra.mrb[0].mxu0 %v6286
        %v6421 = vpop.f32.mrb[0].mxu0
        %v6422 = vadd.f32 0.0, %v6421
        %v6423 = vpop.f32.mrb[0].mxu0
        %v6424 = vpop.f32.mrb[0].mxu0
        %v6425 = vadd.f32 0.0, %v6424
        %v6426 = vpop.f32.mrb[0].mxu0
        %6427 = vmatprep.mubr.bf16.mxu0 0
        %6428 = vmatmul.mubr.bf16.gmra.mrb[0].mxu0 %v6287
        %v6429 = vpop.f32.mrb[0].mxu0
        %v6430 = vadd.f32 0.0, %v6429
        %v6431 = vpop.f32.mrb[0].mxu0
        %v6432 = vpop.f32.mrb[0].mxu0
        %v6433 = vadd.f32 0.0, %v6432
        %v6434 = vpop.f32.mrb[0].mxu0
        %6435 = vmatprep.mubr.bf16.mxu0 0
        %6436 = vmatmul.mubr.bf16.gmra.mrb[0].mxu0 %v6288
        %v6437 = vpop.f32.mrb[0].mxu0
        %v6438 = vadd.f32 0.0, %v6437
        %v6439 = vpop.f32.mrb[0].mxu0
        %v6440 = vpop.f32.mrb[0].mxu0
        %v6441 = vadd.f32 0.0, %v6440
        %v6442 = vpop.f32.mrb[0].mxu0
        %6443 = vmatprep.mubr.bf16.mxu0 0
        %6444 = vmatmul.mubr.bf16.gmra.mrb[0].mxu0 %v6289
        %v6445 = vpop.f32.mrb[0].mxu0
        %v6446 = vadd.f32 0.0, %v6445
        %v6447 = vpop.f32.mrb[0].mxu0
        %v6448 = vpop.f32.mrb[0].mxu0
        %v6449 = vadd.f32 0.0, %v6448
        %v6450 = vpop.f32.mrb[0].mxu0
        %6451 = vmatprep.mubr.bf16.mxu0 0
        %6452 = vmatmul.mubr.bf16.gmra.mrb[0].mxu0 %v6290
        %v6453 = vpop.f32.mrb[0].mxu0
        %v6454 = vadd.f32 0.0, %v6453
        %v6455 = vpop.f32.mrb[0].mxu0
        %v6456 = vpop.f32.mrb[0].mxu0
        %v6457 = vadd.f32 0.0, %v6456
        %v6458 = vpop.f32.mrb[0].mxu0
        %6459 = vmatprep.mubr.bf16.mxu0 0
        %6460 = vmatmul.mubr.bf16.gmra.mrb[0].mxu0 %v6291
        %v6461 = vpop.f32.mrb[0].mxu0
        %v6462 = vadd.f32 0.0, %v6461
        %v6463 = vpop.f32.mrb[0].mxu0
        %v6464 = vpop.f32.mrb[0].mxu0
        %v6465 = vadd.f32 0.0, %v6464
        %v6466 = vpop.f32.mrb[0].mxu0
        %6467 = vmatprep.mubr.bf16.mxu0 0
        %6468 = vmatmul.mubr.bf16.gmra.mrb[0].mxu0 %v6292
        %v6469 = vpop.f32.mrb[0].mxu0
        %v6470 = vadd.f32 0.0, %v6469
        %v6471 = vpop.f32.mrb[0].mxu0
        %v6472 = vpop.f32.mrb[0].mxu0
        %v6473 = vadd.f32 0.0, %v6472
        %v6474 = vpop.f32.mrb[0].mxu0
        %6475 = vmatprep.mubr.bf16.mxu0 0
        %6476 = vmatmul.mubr.bf16.gmra.mrb[0].mxu0 %v6293
        %v6477 = vpop.f32.mrb[0].mxu0
        %v6478 = vadd.f32 0.0, %v6477
        %v6479 = vpop.f32.mrb[0].mxu0
        %v6480 = vpop.f32.mrb[0].mxu0
        %v6481 = vadd.f32 0.0, %v6480
        %v6482 = vpop.f32.mrb[0].mxu0
        %6483 = vmatprep.mubr.bf16.mxu0 0
        %6484 = vmatmul.mubr.bf16.gmra.mrb[0].mxu0 %v6294
        %v6485 = vpop.f32.mrb[0].mxu0
        %v6486 = vadd.f32 0.0, %v6485
        %v6487 = vpop.f32.mrb[0].mxu0
        %v6488 = vpop.f32.mrb[0].mxu0
        %v6489 = vadd.f32 0.0, %v6488
        %v6490 = vpop.f32.mrb[0].mxu0
        %6491 = vmatprep.mubr.bf16.mxu0 0
        %6492 = vmatmul.mubr.bf16.gmra.mrb[0].mxu0 %v6295
        %v6493 = vpop.f32.mrb[0].mxu0
        %v6494 = vadd.f32 0.0, %v6493
        %v6495 = vpop.f32.mrb[0].mxu0
        %v6496 = vpop.f32.mrb[0].mxu0
        %v6497 = vadd.f32 0.0, %v6496
        %v6498 = vpop.f32.mrb[0].mxu0
        %6499 = vmatprep.mubr.bf16.mxu0 0
        %6500 = vmatmul.mubr.bf16.gmra.mrb[0].mxu0 %v6296
        %v6501 = vpop.f32.mrb[0].mxu0
        %v6502 = vadd.f32 0.0, %v6501
        %v6503 = vpop.f32.mrb[0].mxu0
        %v6504 = vpop.f32.mrb[0].mxu0
        %v6505 = vadd.f32 0.0, %v6504
        %v6506 = vpop.f32.mrb[0].mxu0
        %6507 = vmatprep.mubr.bf16.mxu0 0
        %6508 = vmatmul.mubr.bf16.gmra.mrb[0].mxu0 %v6297
        %v6509 = vpop.f32.mrb[0].mxu0
        %v6510 = vadd.f32 0.0, %v6509
        %v6511 = vpop.f32.mrb[0].mxu0
        %v6512 = vpop.f32.mrb[0].mxu0
        %v6513 = vadd.f32 0.0, %v6512
        %v6514 = vpop.f32.mrb[0].mxu0
        %6515 = vmatprep.mubr.bf16.mxu0 0
        %6516 = vmatmul.mubr.bf16.gmra.mrb[0].mxu0 %v6298
        %v6517 = vpop.f32.mrb[0].mxu0
        %v6518 = vadd.f32 0.0, %v6517
        %v6519 = vpop.f32.mrb[0].mxu0
        %v6520 = vpop.f32.mrb[0].mxu0
        %v6521 = vadd.f32 0.0, %v6520
        %v6522 = vpop.f32.mrb[0].mxu0
        %6523 = vdwg.mxu0
        %v6524 = vld [vmem:[%s8] sm:$0x1]
        %v6526 = vlaneseq
        %v6527 = vshrl.u32 %v6526, 7
        %v6528 = vsub.s32 0, %v6527
        %v6529 = vrot.slane %v6524, %v6528
        %v6531 = vmul.f32 %v6398, %v6529
        %v6532 = vmul.f32 %v6401, %v6529
        %v6533 = vmul.f32 %v6406, %v6529
        %v6534 = vmul.f32 %v6409, %v6529
        %v6535 = vmul.f32 %v6414, %v6529
        %v6536 = vmul.f32 %v6417, %v6529
        %v6537 = vmul.f32 %v6422, %v6529
        %v6538 = vmul.f32 %v6425, %v6529
        %v6539 = vmul.f32 %v6430, %v6529
        %v6540 = vmul.f32 %v6433, %v6529
        %v6541 = vmul.f32 %v6438, %v6529
        %v6542 = vmul.f32 %v6441, %v6529
        %v6543 = vmul.f32 %v6446, %v6529
        %v6544 = vmul.f32 %v6449, %v6529
        %v6545 = vmul.f32 %v6454, %v6529
        %v6546 = vmul.f32 %v6457, %v6529
        %v6547 = vmul.f32 %v6462, %v6529
        %v6548 = vmul.f32 %v6465, %v6529
        %v6549 = vmul.f32 %v6470, %v6529
        %v6550 = vmul.f32 %v6473, %v6529
        %v6551 = vmul.f32 %v6478, %v6529
        %v6552 = vmul.f32 %v6481, %v6529
        %v6553 = vmul.f32 %v6486, %v6529
        %v6554 = vmul.f32 %v6489, %v6529
        %v6555 = vmul.f32 %v6494, %v6529
        %v6556 = vmul.f32 %v6497, %v6529
        %v6557 = vmul.f32 %v6502, %v6529
        %v6558 = vmul.f32 %v6505, %v6529
        %v6559 = vmul.f32 %v6510, %v6529
        %v6560 = vmul.f32 %v6513, %v6529
        %v6561 = vmul.f32 %v6518, %v6529
        %v6562 = vmul.f32 %v6521, %v6529
        %v6563 = vld [vmem:[%s9] sm:$0x1]
        %v6565 = vlaneseq
        %v6566 = vshrl.u32 %v6565, 7
        %v6567 = vsub.s32 0, %v6566
        %v6568 = vrot.slane %v6563, %v6567
        %v6570 = vadd.f32 %v6531, %v6568
        %v6571 = vadd.f32 %v6532, %v6568
        %v6572 = vadd.f32 %v6533, %v6568
        %v6573 = vadd.f32 %v6534, %v6568
        %v6574 = vadd.f32 %v6535, %v6568
        %v6575 = vadd.f32 %v6536, %v6568
        %v6576 = vadd.f32 %v6537, %v6568
        %v6577 = vadd.f32 %v6538, %v6568
        %v6578 = vadd.f32 %v6539, %v6568
        %v6579 = vadd.f32 %v6540, %v6568
        %v6580 = vadd.f32 %v6541, %v6568
        %v6581 = vadd.f32 %v6542, %v6568
        %v6582 = vadd.f32 %v6543, %v6568
        %v6583 = vadd.f32 %v6544, %v6568
        %v6584 = vadd.f32 %v6545, %v6568
        %v6585 = vadd.f32 %v6546, %v6568
        %v6586 = vadd.f32 %v6547, %v6568
        %v6587 = vadd.f32 %v6548, %v6568
        %v6588 = vadd.f32 %v6549, %v6568
        %v6589 = vadd.f32 %v6550, %v6568
        %v6590 = vadd.f32 %v6551, %v6568
        %v6591 = vadd.f32 %v6552, %v6568
        %v6592 = vadd.f32 %v6553, %v6568
        %v6593 = vadd.f32 %v6554, %v6568
        %v6594 = vadd.f32 %v6555, %v6568
        %v6595 = vadd.f32 %v6556, %v6568
        %v6596 = vadd.f32 %v6557, %v6568
        %v6597 = vadd.f32 %v6558, %v6568
        %v6598 = vadd.f32 %v6559, %v6568
        %v6599 = vadd.f32 %v6560, %v6568
        %v6600 = vadd.f32 %v6561, %v6568
        %v6601 = vadd.f32 %v6562, %v6568
        %v6602 = vadd.f32 %v6219, %v6570
        %v6603 = vadd.f32 %v6220, %v6571
        %v6604 = vadd.f32 %v6221, %v6572
        %v6605 = vadd.f32 %v6222, %v6573
        %v6606 = vadd.f32 %v6223, %v6574
        %v6607 = vadd.f32 %v6224, %v6575
        %v6608 = vadd.f32 %v6225, %v6576
        %v6609 = vadd.f32 %v6226, %v6577
        %v6610 = vadd.f32 %v6227, %v6578
        %v6611 = vadd.f32 %v6228, %v6579
        %v6612 = vadd.f32 %v6229, %v6580
        %v6613 = vadd.f32 %v6230, %v6581
        %v6614 = vadd.f32 %v6231, %v6582
        %v6615 = vadd.f32 %v6232, %v6583
        %v6616 = vadd.f32 %v6233, %v6584
        %v6617 = vadd.f32 %v6234, %v6585
        %v6618 = vadd.f32 %v6235, %v6586
        %v6619 = vadd.f32 %v6236, %v6587
        %v6620 = vadd.f32 %v6237, %v6588
        %v6621 = vadd.f32 %v6238, %v6589
        %v6622 = vadd.f32 %v6239, %v6590
        %v6623 = vadd.f32 %v6240, %v6591
        %v6624 = vadd.f32 %v6241, %v6592
        %v6625 = vadd.f32 %v6242, %v6593
        %v6626 = vadd.f32 %v6243, %v6594
        %v6627 = vadd.f32 %v6244, %v6595
        %v6628 = vadd.f32 %v6245, %v6596
        %v6629 = vadd.f32 %v6246, %v6597
        %v6630 = vadd.f32 %v6247, %v6598
        %v6631 = vadd.f32 %v6248, %v6599
        %v6632 = vadd.f32 %v6249, %v6600
        %v6633 = vadd.f32 %v6250, %v6601
        %vm6634 = vcmp.gt.f32.partialorder %v6602, 0.0
        %vm6635 = vcmp.gt.f32.partialorder %v6603, 0.0
        %vm6636 = vcmp.gt.f32.partialorder %v6604, 0.0
        %vm6637 = vcmp.gt.f32.partialorder %v6605, 0.0
        %vm6638 = vcmp.gt.f32.partialorder %v6606, 0.0
        %vm6639 = vcmp.gt.f32.partialorder %v6607, 0.0
        %vm6640 = vcmp.gt.f32.partialorder %v6608, 0.0
        %vm6641 = vcmp.gt.f32.partialorder %v6609, 0.0
        %vm6642 = vcmp.gt.f32.partialorder %v6610, 0.0
        %vm6643 = vcmp.gt.f32.partialorder %v6611, 0.0
        %vm6644 = vcmp.gt.f32.partialorder %v6612, 0.0
        %vm6645 = vcmp.gt.f32.partialorder %v6613, 0.0
        %vm6646 = vcmp.gt.f32.partialorder %v6614, 0.0
        %vm6647 = vcmp.gt.f32.partialorder %v6615, 0.0
        %vm6648 = vcmp.gt.f32.partialorder %v6616, 0.0
        %vm6649 = vcmp.gt.f32.partialorder %v6617, 0.0
        %vm6650 = vcmp.gt.f32.partialorder %v6618, 0.0
        %vm6651 = vcmp.gt.f32.partialorder %v6619, 0.0
        %vm6652 = vcmp.gt.f32.partialorder %v6620, 0.0
        %vm6653 = vcmp.gt.f32.partialorder %v6621, 0.0
        %vm6654 = vcmp.gt.f32.partialorder %v6622, 0.0
        %vm6655 = vcmp.gt.f32.partialorder %v6623, 0.0
        %vm6656 = vcmp.gt.f32.partialorder %v6624, 0.0
        %vm6657 = vcmp.gt.f32.partialorder %v6625, 0.0
        %vm6658 = vcmp.gt.f32.partialorder %v6626, 0.0
        %vm6659 = vcmp.gt.f32.partialorder %v6627, 0.0
        %vm6660 = vcmp.gt.f32.partialorder %v6628, 0.0
        %vm6661 = vcmp.gt.f32.partialorder %v6629, 0.0
        %vm6662 = vcmp.gt.f32.partialorder %v6630, 0.0
        %vm6663 = vcmp.gt.f32.partialorder %v6631, 0.0
        %vm6664 = vcmp.gt.f32.partialorder %v6632, 0.0
        %vm6665 = vcmp.gt.f32.partialorder %v6633, 0.0
        %v6666 = vmul.f32 %v6602, 0.2
        %v6667 = vmul.f32 %v6603, 0.2
        %v6668 = vmul.f32 %v6604, 0.2
        %v6669 = vmul.f32 %v6605, 0.2
        %v6670 = vmul.f32 %v6606, 0.2
        %v6671 = vmul.f32 %v6607, 0.2
        %v6672 = vmul.f32 %v6608, 0.2
        %v6673 = vmul.f32 %v6609, 0.2
        %v6674 = vmul.f32 %v6610, 0.2
        %v6675 = vmul.f32 %v6611, 0.2
        %v6676 = vmul.f32 %v6612, 0.2
        %v6677 = vmul.f32 %v6613, 0.2
        %v6678 = vmul.f32 %v6614, 0.2
        %v6679 = vmul.f32 %v6615, 0.2
        %v6680 = vmul.f32 %v6616, 0.2
        %v6681 = vmul.f32 %v6617, 0.2
        %v6682 = vmul.f32 %v6618, 0.2
        %v6683 = vmul.f32 %v6619, 0.2
        %v6684 = vmul.f32 %v6620, 0.2
        %v6685 = vmul.f32 %v6621, 0.2
        %v6686 = vmul.f32 %v6622, 0.2
        %v6687 = vmul.f32 %v6623, 0.2
        %v6688 = vmul.f32 %v6624, 0.2
        %v6689 = vmul.f32 %v6625, 0.2
        %v6690 = vmul.f32 %v6626, 0.2
        %v6691 = vmul.f32 %v6627, 0.2
        %v6692 = vmul.f32 %v6628, 0.2
        %v6693 = vmul.f32 %v6629, 0.2
        %v6694 = vmul.f32 %v6630, 0.2
        %v6695 = vmul.f32 %v6631, 0.2
        %v6696 = vmul.f32 %v6632, 0.2
        %v6697 = vmul.f32 %v6633, 0.2
        %v6698 = vsel %vm6634, %v6602, %v6666
        %v6699 = vsel %vm6635, %v6603, %v6667
        %v6700 = vsel %vm6636, %v6604, %v6668
        %v6701 = vsel %vm6637, %v6605, %v6669
        %v6702 = vsel %vm6638, %v6606, %v6670
        %v6703 = vsel %vm6639, %v6607, %v6671
        %v6704 = vsel %vm6640, %v6608, %v6672
        %v6705 = vsel %vm6641, %v6609, %v6673
        %v6706 = vsel %vm6642, %v6610, %v6674
        %v6707 = vsel %vm6643, %v6611, %v6675
        %v6708 = vsel %vm6644, %v6612, %v6676
        %v6709 = vsel %vm6645, %v6613, %v6677
        %v6710 = vsel %vm6646, %v6614, %v6678
        %v6711 = vsel %vm6647, %v6615, %v6679
        %v6712 = vsel %vm6648, %v6616, %v6680
        %v6713 = vsel %vm6649, %v6617, %v6681
        %v6714 = vsel %vm6650, %v6618, %v6682
        %v6715 = vsel %vm6651, %v6619, %v6683
        %v6716 = vsel %vm6652, %v6620, %v6684
        %v6717 = vsel %vm6653, %v6621, %v6685
        %v6718 = vsel %vm6654, %v6622, %v6686
        %v6719 = vsel %vm6655, %v6623, %v6687
        %v6720 = vsel %vm6656, %v6624, %v6688
        %v6721 = vsel %vm6657, %v6625, %v6689
        %v6722 = vsel %vm6658, %v6626, %v6690
        %v6723 = vsel %vm6659, %v6627, %v6691
        %v6724 = vsel %vm6660, %v6628, %v6692
        %v6725 = vsel %vm6661, %v6629, %v6693
        %v6726 = vsel %vm6662, %v6630, %v6694
        %v6727 = vsel %vm6663, %v6631, %v6695
        %v6728 = vsel %vm6664, %v6632, %v6696
        %v6729 = vsel %vm6665, %v6633, %v6697
        %vm6730 = vcmask 64512
        %6731 = vst.msk [vmem:[%s423] sm:$0xff] %vm6730, %v6698
        %6732 = vst.msk [vmem:[%s423 + $0x8] sm:$0xff] %vm6730, %v6699
        %6733 = vst.msk [vmem:[%s423 + $0x10] sm:$0xff] %vm6730, %v6700
        %6734 = vst.msk [vmem:[%s423 + $0x18] sm:$0xff] %vm6730, %v6701
        %6735 = vst.msk [vmem:[%s423 + $0x20] sm:$0xff] %vm6730, %v6702
        %6736 = vst.msk [vmem:[%s423 + $0x28] sm:$0xff] %vm6730, %v6703
        %6737 = vst.msk [vmem:[%s423 + $0x30] sm:$0xff] %vm6730, %v6704
        %6738 = vst.msk [vmem:[%s423 + $0x38] sm:$0xff] %vm6730, %v6705
        %6739 = vst.msk [vmem:[%s423 + $0x40] sm:$0xff] %vm6730, %v6706
        %6740 = vst.msk [vmem:[%s423 + $0x48] sm:$0xff] %vm6730, %v6707
        %6741 = vst.msk [vmem:[%s423 + $0x50] sm:$0xff] %vm6730, %v6708
        %6742 = vst.msk [vmem:[%s423 + $0x58] sm:$0xff] %vm6730, %v6709
        %6743 = vst.msk [vmem:[%s423 + $0x60] sm:$0xff] %vm6730, %v6710
        %6744 = vst.msk [vmem:[%s423 + $0x68] sm:$0xff] %vm6730, %v6711
        %6745 = vst.msk [vmem:[%s423 + $0x70] sm:$0xff] %vm6730, %v6712
        %6746 = vst.msk [vmem:[%s423 + $0x78] sm:$0xff] %vm6730, %v6713
        %6747 = vst.msk [vmem:[%s423 + $0x80] sm:$0xff] %vm6730, %v6714
        %6748 = vst.msk [vmem:[%s423 + $0x88] sm:$0xff] %vm6730, %v6715
        %6749 = vst.msk [vmem:[%s423 + $0x90] sm:$0xff] %vm6730, %v6716
        %6750 = vst.msk [vmem:[%s423 + $0x98] sm:$0xff] %vm6730, %v6717
        %6751 = vst.msk [vmem:[%s423 + $0xa0] sm:$0xff] %vm6730, %v6718
        %6752 = vst.msk [vmem:[%s423 + $0xa8] sm:$0xff] %vm6730, %v6719
        %6753 = vst.msk [vmem:[%s423 + $0xb0] sm:$0xff] %vm6730, %v6720
        %6754 = vst.msk [vmem:[%s423 + $0xb8] sm:$0xff] %vm6730, %v6721
        %6755 = vst.msk [vmem:[%s423 + $0xc0] sm:$0xff] %vm6730, %v6722
        %6756 = vst.msk [vmem:[%s423 + $0xc8] sm:$0xff] %vm6730, %v6723
        %6757 = vst.msk [vmem:[%s423 + $0xd0] sm:$0xff] %vm6730, %v6724
        %6758 = vst.msk [vmem:[%s423 + $0xd8] sm:$0xff] %vm6730, %v6725
        %6759 = vst.msk [vmem:[%s423 + $0xe0] sm:$0xff] %vm6730, %v6726
        %6760 = vst.msk [vmem:[%s423 + $0xe8] sm:$0xff] %vm6730, %v6727
        %6761 = vst.msk [vmem:[%s423 + $0xf0] sm:$0xff] %vm6730, %v6728
        %6762 = vst.msk [vmem:[%s423 + $0xf8] sm:$0xff] %vm6730, %v6729
        %p6763 = scmp.lt.s32.totalorder %s26, 1
        %s6764 = scalar_select %p6763, %s26, 1
        %s6765 = smul.addr %s6764, 32
        %s6766 = smul.addr %s6765, 8
        %s6767 = scalar_lea.vmem %s10, %s6766
        // Predicated region
        $region81: #{tpu_custom_call.1} parent=59 // pred_check
          %p6768 = pneg %p259
        $region82: #{tpu_custom_call.1} parent=59 // pred_check_branch
          %6770 = sbr.rel (%p6768) target = $region84
        $region83: #{tpu_custom_call.1} parent=59 // pred_region
          _
        $region84: #{tpu_custom_call.1} parent=59 // pred_fallthru
          _
      $region60: #{tpu_custom_call.1} parent=5 // pred_fallthru
        _
      %p6771 = scmp.le.s32.totalorder 2, %s21
      // Predicated region
      $region85: #{tpu_custom_call.1} parent=5 // pred_check
        %p6772 = pneg %p6771
      $region86: #{tpu_custom_call.1} parent=5 // pred_check_branch
        %6774 = sbr.rel (%p6772) target = $region88
      $region87: #{tpu_custom_call.1} parent=5 // pred_region
        %s6775 = ssub.s32 %s21, 2
        // Predicated region
        $region89: #{tpu_custom_call.1} parent=87 // pred_check
          %p6776 = pneg %p265
        $region90: #{tpu_custom_call.1} parent=87 // pred_check_branch
          %6778 = sbr.rel (%p6776) target = $region92
        $region91: #{tpu_custom_call.1} parent=87 // pred_region
          %p6779 = scmp.lt.s32.totalorder %s27, 1
          %s6780 = scalar_select %p6779, %s27, 1
          %s6781 = smul.addr %s6780, 32
          %s6782 = smul.addr %s6781, 8
          %s6783 = scalar_lea.vmem %s10, %s6782
        $region92: #{tpu_custom_call.1} parent=87 // pred_fallthru
          _
      $region88: #{tpu_custom_call.1} parent=5 // pred_fallthru
        _
    $region6: #{tpu_custom_call.1} parent=1 // loop_footer
      %s25 = sadd.s32 1, %s21
    $region7: #{tpu_custom_call.1} parent=1 // loop_footer_branch
      %20 = sbr.rel target = $region3
    $region8: #{tpu_custom_call.1} parent=1 // loop_exit
      _
    %6784 = vsyncpa [#allocation5], 1
    %s6785 = scalar_lea.sflag [#allocation5], 1
    %6786 = vsyncpa %s6785, 1
    %6787 = vsyncpa [#allocation7], 1
    %6788 = vsyncpa [#allocation10], 1

</llo_original>
